<compile_context>
chip_gen: v7x
topology: tpu7x:2x2x1
jax: 0.10.0
libtpu: 0.0.40
codegen_flags: <defaults>
</compile_context>

<pallas_src>
import numpy as np

import jax
import jax.numpy as jnp
from jax.experimental import pallas as pl
from jax.experimental.pallas import tpu as pltpu


# ----------------------------------------------------------------------------
# Fused Pallas kernel: one batch tile per grid step.
# Activation layout: rows = (batch, height), lanes = (channel, width).
# Row counts per sample stay multiples of 8/16 so every reshape to the 2-D
# matmul form (tb*rows, K) is a layout no-op.
# ----------------------------------------------------------------------------
def mycnn_kernel(x_ref, t1_ref, b1_ref, c1_ref, t2_ref, b2_ref, c2_ref,
                 w1f_ref, bf1_ref, w2f_ref, bf2_ref, sa_ref, sb_ref, o_ref):
    f32, bf16 = jnp.float32, jnp.bfloat16
    tb = x_ref.shape[0]

    def mm(a, b):  # 2-D MXU matmul, f32 accumulation
        return jnp.dot(a, b, preferred_element_type=f32)

    x = x_ref[...]                                                      # (tb, 36, 28) bf16

    # ---- conv1 (1->10, 5x5, valid) as one Toeplitz matmul over 5 row-shifted slices.
    # 32 output rows per sample (rows 0..23 valid, 24..31 slack from zero-padded input).
    xcat = jnp.concatenate([x[:, ki:ki + 32, :] for ki in range(5)], axis=-1)   # (tb,32,140)
    h1 = mm(xcat.reshape(tb * 32, 140), t1_ref[...]) + b1_ref[...]              # (tb*32,240) f32

    # ---- pool1 width max: exact 0/1 selection matmuls (bf16, exact selection).
    h1b = h1.astype(bf16)
    g1 = jnp.maximum(mm(h1b, c1_ref[0]), mm(h1b, c1_ref[1]))                    # (tb*32,120) f32
    g1 = g1.reshape(tb, 32, 120)

    # ---- pool1 height max (lazy): valid pooled rows stay at even indices; + ReLU.
    p1 = jnp.maximum(g1[:, 0:24, :], g1[:, 1:25, :])                            # (tb,24,120)
    p1 = jnp.maximum(p1, 0.0).astype(bf16)

    # ---- conv2 (10->20, 5x5, valid); conv2_drop (Dropout2d) is identity in eval mode.
    # Inputs are the even (valid) rows of p1; outputs valid at even physical rows.
    p1cat = jnp.concatenate([p1[:, 2 * ki:2 * ki + 16, :] for ki in range(5)],
                            axis=-1)                                            # (tb,16,600)
    h2 = mm(p1cat.reshape(tb * 16, 600), t2_ref[...]) + b2_ref[...]             # (tb*16,160) f32

    # ---- pool2 width max (bf16 selection matmuls).
    h2b = h2.astype(bf16)
    g2 = jnp.maximum(mm(h2b, c2_ref[0]), mm(h2b, c2_ref[1]))                    # (tb*16,80) f32

    # ---- pool2 height max + flatten: gather the two height operands of each valid
    # output row with exact 0/1 selection matmuls, max + ReLU, lane-concat -> (tb, 320).
    g2b = g2.astype(bf16)
    ya = mm(sa_ref[...], g2b)                                                   # (4*tb,80) f32
    yb = mm(sb_ref[...], g2b)
    p2 = jnp.maximum(jnp.maximum(ya, yb), 0.0).astype(bf16)                     # (4*tb,80)
    xf = jnp.concatenate([p2[j * tb:(j + 1) * tb, :] for j in range(4)],
                         axis=-1)                                               # (tb,320)

    # ---- fc1 + ReLU ; (F.dropout identity in eval) ; fc2 ; log_softmax (f32).
    z1 = jnp.maximum(mm(xf, w1f_ref[...]) + bf1_ref[...], 0.0)                  # (tb,50)
    z2 = mm(z1.astype(bf16), w2f_ref[...]) + bf2_ref[...]                       # (tb,128); cols>=10 are 0
    logits = z2[:, 0:10]
    m = jnp.max(logits, axis=-1, keepdims=True)
    lse = jnp.log(jnp.sum(jnp.exp(logits - m), axis=-1, keepdims=True)) + m
    o_ref[...] = z2 - lse                                                       # wrapper slices [:, :10]


# ----------------------------------------------------------------------------
# One-time weight preparation (Toeplitz conv matrices, pooling selection
# matrices, permuted / padded FC weights).
# ----------------------------------------------------------------------------
def _toeplitz_conv1(w, K=5, w_in=28, w_out=24):
    # w: (10, 1, 5, 5) -> T1: (K*w_in, 10*w_out), T1[(ki,w), (c,ow)] = w[c,0,ki,w-ow]
    c_out = w.shape[0]
    wi = jnp.arange(w_in)[:, None]
    oi = jnp.arange(w_out)[None, :]
    kj = wi - oi
    valid = ((kj >= 0) & (kj < K)).astype(jnp.float32)
    kj_c = jnp.clip(kj, 0, K - 1)
    w_kic = jnp.transpose(w[:, 0], (1, 0, 2))            # (ki, c, kj)
    t = w_kic[:, :, kj_c] * valid                        # (ki, c, w_in, w_out)
    t = jnp.transpose(t, (0, 2, 1, 3))                   # (ki, w_in, c, w_out)
    return t.reshape(K * w_in, c_out * w_out)            # (140, 240)


def _toeplitz_conv2(w, K=5, w_in=12, w_out=8):
    # w: (20, 10, 5, 5) -> T2: (K*10*w_in, 20*w_out), rows ordered (ki, cin, w)
    c_out, c_in = w.shape[0], w.shape[1]
    wi = jnp.arange(w_in)[:, None]
    oi = jnp.arange(w_out)[None, :]
    kj = wi - oi
    valid = ((kj >= 0) & (kj < K)).astype(jnp.float32)
    kj_c = jnp.clip(kj, 0, K - 1)
    w_r = jnp.transpose(w, (2, 1, 0, 3))                 # (ki, cin, cout, kj)
    t = w_r[:, :, :, kj_c] * valid                       # (ki, cin, cout, w_in, w_out)
    t = jnp.transpose(t, (0, 1, 3, 2, 4))                # (ki, cin, w_in, cout, w_out)
    return t.reshape(K * c_in * w_in, c_out * w_out)     # (600, 160)


def _pool_lane_sel(n_ch, w_in):
    w_out = w_in // 2
    c = np.zeros((2, n_ch * w_in, n_ch * w_out), np.float32)
    for ch in range(n_ch):
        for j in range(w_out):
            c[0, ch * w_in + 2 * j, ch * w_out + j] = 1.0
            c[1, ch * w_in + 2 * j + 1, ch * w_out + j] = 1.0
    return jnp.asarray(c)


def _pool2_row_gather(tb):
    # Exact 0/1 gather matrices picking the two height operands of pool2 row j
    # for every sample: row (j*tb + b) selects g2 2-D rows 16*b + 4*j (+2).
    sa = np.zeros((4 * tb, 16 * tb), np.float32)
    sb = np.zeros((4 * tb, 16 * tb), np.float32)
    for j in range(4):
        for b in range(tb):
            sa[j * tb + b, 16 * b + 4 * j] = 1.0
            sb[j * tb + b, 16 * b + 4 * j + 2] = 1.0
    return jnp.asarray(sa, jnp.bfloat16), jnp.asarray(sb, jnp.bfloat16)


def prepare_params(params):
    f32, bf16 = jnp.float32, jnp.bfloat16
    t1 = _toeplitz_conv1(params["w_conv1"].astype(f32)).astype(bf16)       # (140, 240)
    b1 = jnp.repeat(params["b_conv1"].astype(f32), 24).reshape(1, 240)
    t2 = _toeplitz_conv2(params["w_conv2"].astype(f32)).astype(bf16)       # (600, 160)
    b2 = jnp.repeat(params["b_conv2"].astype(f32), 8).reshape(1, 160)
    c1 = _pool_lane_sel(10, 24).astype(bf16)        # (2, 240, 120)
    c2 = _pool_lane_sel(20, 8).astype(bf16)         # (2, 160, 80)
    # fc1: permute torch's NCHW flatten order (c, i, j) to the kernel's (i, c, j) order.
    w1f = jnp.transpose(params["w_fc1"].astype(f32).reshape(50, 20, 4, 4),
                        (2, 1, 3, 0)).reshape(320, 50).astype(bf16)
    bf1 = params["b_fc1"].astype(f32).reshape(1, 50)
    # fc2 padded to 128 output lanes (classes 10..127 are zero; sliced off in wrapper).
    w2f = jnp.zeros((50, 128), bf16).at[:, :10].set(
        jnp.transpose(params["w_fc2"]).astype(bf16))
    bf2 = jnp.zeros((1, 128), f32).at[0, :10].set(params["b_fc2"].astype(f32))
    return dict(t1=t1, b1=b1, c1=c1, t2=t2, b2=b2, c2=c2,
                w1f=w1f, bf1=bf1, w2f=w2f, bf2=bf2)


# ----------------------------------------------------------------------------
# Forward wrapper: one pallas_call, grid over batch tiles.
# ----------------------------------------------------------------------------
def mycnn_forward(x, prepped, block_n=128):
    n = x.shape[0]
    assert x.shape[1:] == (1, 28, 28)
    # Clamp the batch tile to the (8-rounded) batch so tiny batches stay cheap.
    bn = int(min(block_n, ((n + 7) // 8) * 8))
    bn = max(8, min(bn, 256))

    xs = x.reshape(n, 28, 28).astype(jnp.bfloat16)
    pad_n = (-n) % bn
    # Pad batch to a multiple of bn and rows 28 -> 36 (zeros) so conv1 can emit
    # an aligned 32-row output tile per sample.
    xs = jnp.pad(xs, ((0, pad_n), (0, 8), (0, 0)))
    n_pad = xs.shape[0]
    steps = n_pad // bn

    p = prepped
    sa, sb = _pool2_row_gather(bn)
    consts = (p["t1"], p["b1"], p["c1"], p["t2"], p["b2"], p["c2"],
              p["w1f"], p["bf1"], p["w2f"], p["bf2"], sa, sb)

    def _const_spec(a):
        nd = a.ndim
        return pl.BlockSpec(a.shape, lambda i, _nd=nd: (0,) * _nd)

    flops_per_step = (2 * bn * (32 * 140 * 240 + 2 * 32 * 240 * 120 +
                                16 * 600 * 160 + 2 * 16 * 160 * 80 +
                                320 * 50 + 50 * 128)
                      + 2 * 2 * (4 * bn) * (16 * bn) * 80)
    weight_bytes = sum(int(np.prod(a.shape)) * a.dtype.itemsize for a in consts)
    cost = pl.CostEstimate(
        flops=int(steps * flops_per_step),
        transcendentals=int(11 * n_pad),
        bytes_accessed=int(xs.size * xs.dtype.itemsize + n_pad * 128 * 4 + weight_bytes))

    out = pl.pallas_call(
        mycnn_kernel,
        out_shape=jax.ShapeDtypeStruct((n_pad, 128), jnp.float32),
        grid=(steps,),
        in_specs=[pl.BlockSpec((bn, 36, 28), lambda i: (i, 0, 0))]
                 + [_const_spec(a) for a in consts],
        out_specs=pl.BlockSpec((bn, 128), lambda i: (i, 0)),
        compiler_params=pltpu.CompilerParams(
            dimension_semantics=("parallel",),
            vmem_limit_bytes=48 * 1024 * 1024),
        cost_estimate=cost,
    )(xs, *consts)
    return out[:n, :10]


# ----------------------------------------------------------------------------
# Pure-JAX reference (f32) and parameter init (PyTorch-style uniform).
# ----------------------------------------------------------------------------
def mycnn_reference(x, params):
    def conv(h, w, b):
        y = jax.lax.conv_general_dilated(h, w, (1, 1), "VALID",
                                         dimension_numbers=("NCHW", "OIHW", "NCHW"))
        return y + b[None, :, None, None]

    def pool2(h):
        return jax.lax.reduce_window(h, -jnp.inf, jax.lax.max,
                                     (1, 1, 2, 2), (1, 1, 2, 2), "VALID")

    h = jax.nn.relu(pool2(conv(x, params["w_conv1"], params["b_conv1"])))
    h = jax.nn.relu(pool2(conv(h, params["w_conv2"], params["b_conv2"])))
    h = h.reshape(h.shape[0], -1)
    h = jax.nn.relu(h @ params["w_fc1"].T + params["b_fc1"])
    logits = h @ params["w_fc2"].T + params["b_fc2"]
    return jax.nn.log_softmax(logits, axis=-1)


def init_params(key):
    ks = jax.random.split(key, 8)

    def uni(k, shape, fan_in):
        bound = 1.0 / jnp.sqrt(jnp.float32(fan_in))
        return jax.random.uniform(k, shape, jnp.float32, -bound, bound)

    return {
        "w_conv1": uni(ks[0], (10, 1, 5, 5), 1 * 5 * 5),
        "b_conv1": uni(ks[1], (10,), 1 * 5 * 5),
        "w_conv2": uni(ks[2], (20, 10, 5, 5), 10 * 5 * 5),
        "b_conv2": uni(ks[3], (20,), 10 * 5 * 5),
        "w_fc1": uni(ks[4], (50, 320), 320),
        "b_fc1": uni(ks[5], (50,), 320),
        "w_fc2": uni(ks[6], (10, 50), 50),
        "b_fc2": uni(ks[7], (10,), 50),
    }


if __name__ == "__main__":
    key = jax.random.PRNGKey(0)
    k_x, k_p = jax.random.split(key)
    # MNIST-shaped input: fc1 in_features=320 forces 1x28x28 inputs.
    x = jax.random.normal(k_x, (50, 1, 28, 28), jnp.float32)
    params = init_params(k_p)

    prepped = prepare_params(params)
    fwd = jax.jit(mycnn_forward, static_argnames=("block_n",))
    # block_n=32 on a batch of 50 -> padded to 64, grid of 2 steps.
    out = jax.block_until_ready(fwd(x, prepped, block_n=32))

    assert out.shape == (50, 10)
    assert bool(jnp.all(jnp.isfinite(out)))
    # log_softmax rows must exponentiate-sum to 1
    assert bool(jnp.allclose(jnp.sum(jnp.exp(out), axis=-1), 1.0, atol=1e-3))
    # match the pure-JAX f32 reference (kernel matmuls use bf16 inputs / f32 accum)
    ref = mycnn_reference(x, params)
    assert bool(jnp.max(jnp.abs(out - ref)) < 0.2)
    print("KERNEL_OK")
</pallas_src>

<mosaic_0001>
module attributes {stable_mosaic.version = 11 : i64} {
  func.func @mycnn_kernel(%arg0: i32, %arg1: memref<32x36x28xbf16, #tpu.memory_space<vmem>>, %arg2: memref<140x240xbf16, #tpu.memory_space<vmem>>, %arg3: memref<1x240xf32, #tpu.memory_space<vmem>>, %arg4: memref<2x240x120xbf16, #tpu.memory_space<vmem>>, %arg5: memref<600x160xbf16, #tpu.memory_space<vmem>>, %arg6: memref<1x160xf32, #tpu.memory_space<vmem>>, %arg7: memref<2x160x80xbf16, #tpu.memory_space<vmem>>, %arg8: memref<320x50xbf16, #tpu.memory_space<vmem>>, %arg9: memref<1x50xf32, #tpu.memory_space<vmem>>, %arg10: memref<50x128xbf16, #tpu.memory_space<vmem>>, %arg11: memref<1x128xf32, #tpu.memory_space<vmem>>, %arg12: memref<128x512xbf16, #tpu.memory_space<vmem>>, %arg13: memref<128x512xbf16, #tpu.memory_space<vmem>>, %arg14: memref<32x128xf32, #tpu.memory_space<vmem>>) attributes {dimension_semantics = [#tpu.dimension_semantics<parallel>], iteration_bounds = array<i64: 2>, scalar_prefetch = 0 : i64, scratch_operands = 0 : i64, tpu.core_type = #tpu.core_type<tc>, window_params = [{transform_indices = @transform_0, window_bounds = array<i64: 32, 36, 28>}, {pipeline_mode = #tpu.pipeline_mode<synchronous>, transform_indices = @transform_1, window_bounds = array<i64: 140, 240>}, {pipeline_mode = #tpu.pipeline_mode<synchronous>, transform_indices = @transform_2, window_bounds = array<i64: 1, 240>}, {pipeline_mode = #tpu.pipeline_mode<synchronous>, transform_indices = @transform_3, window_bounds = array<i64: 2, 240, 120>}, {pipeline_mode = #tpu.pipeline_mode<synchronous>, transform_indices = @transform_4, window_bounds = array<i64: 600, 160>}, {pipeline_mode = #tpu.pipeline_mode<synchronous>, transform_indices = @transform_5, window_bounds = array<i64: 1, 160>}, {pipeline_mode = #tpu.pipeline_mode<synchronous>, transform_indices = @transform_6, window_bounds = array<i64: 2, 160, 80>}, {pipeline_mode = #tpu.pipeline_mode<synchronous>, transform_indices = @transform_7, window_bounds = array<i64: 320, 50>}, {pipeline_mode = #tpu.pipeline_mode<synchronous>, transform_indices = @transform_8, window_bounds = array<i64: 1, 50>}, {pipeline_mode = #tpu.pipeline_mode<synchronous>, transform_indices = @transform_9, window_bounds = array<i64: 50, 128>}, {pipeline_mode = #tpu.pipeline_mode<synchronous>, transform_indices = @transform_10, window_bounds = array<i64: 1, 128>}, {pipeline_mode = #tpu.pipeline_mode<synchronous>, transform_indices = @transform_11, window_bounds = array<i64: 128, 512>}, {pipeline_mode = #tpu.pipeline_mode<synchronous>, transform_indices = @transform_12, window_bounds = array<i64: 128, 512>}, {transform_indices = @transform_13, window_bounds = array<i64: 32, 128>}]} {
    %c0 = arith.constant 0 : index
    %c0_0 = arith.constant 0 : index
    %c0_1 = arith.constant 0 : index
    %0 = vector.load %arg1[%c0, %c0_0, %c0_1] : memref<32x36x28xbf16, #tpu.memory_space<vmem>>, vector<32x36x28xbf16>
    %1 = vector.extract_strided_slice %0 {offsets = [0, 0, 0], sizes = [32, 32, 28], strides = [1, 1, 1]} : vector<32x36x28xbf16> to vector<32x32x28xbf16>
    %2 = vector.extract_strided_slice %0 {offsets = [0, 1, 0], sizes = [32, 32, 28], strides = [1, 1, 1]} : vector<32x36x28xbf16> to vector<32x32x28xbf16>
    %3 = vector.extract_strided_slice %0 {offsets = [0, 2, 0], sizes = [32, 32, 28], strides = [1, 1, 1]} : vector<32x36x28xbf16> to vector<32x32x28xbf16>
    %4 = vector.extract_strided_slice %0 {offsets = [0, 3, 0], sizes = [32, 32, 28], strides = [1, 1, 1]} : vector<32x36x28xbf16> to vector<32x32x28xbf16>
    %5 = vector.extract_strided_slice %0 {offsets = [0, 4, 0], sizes = [32, 32, 28], strides = [1, 1, 1]} : vector<32x36x28xbf16> to vector<32x32x28xbf16>
    %6 = tpu.concatenate %1, %2, %3, %4, %5 in 2 : vector<32x32x28xbf16>, vector<32x32x28xbf16>, vector<32x32x28xbf16>, vector<32x32x28xbf16>, vector<32x32x28xbf16> -> vector<32x32x140xbf16>
    %7 = vector.shape_cast %6 : vector<32x32x140xbf16> to vector<1024x140xbf16>
    %c0_2 = arith.constant 0 : index
    %c0_3 = arith.constant 0 : index
    %8 = vector.load %arg2[%c0_2, %c0_3] : memref<140x240xbf16, #tpu.memory_space<vmem>>, vector<140x240xbf16>
    %cst = arith.constant dense<0.000000e+00> : vector<1024x240xf32>
    %9 = tpu.matmul %7, %8, %cst {dimension_numbers = #tpu.dot_dimension_numbers<[1], [0], [0], [1], [0, 0, 1, 1], [], []>} : vector<1024x140xbf16>, vector<140x240xbf16>, vector<1024x240xf32> -> vector<1024x240xf32>
    %c0_4 = arith.constant 0 : index
    %c0_5 = arith.constant 0 : index
    %10 = vector.load %arg3[%c0_4, %c0_5] : memref<1x240xf32, #tpu.memory_space<vmem>>, vector<1x240xf32>
    %11 = vector.broadcast %10 : vector<1x240xf32> to vector<1024x240xf32>
    %12 = arith.addf %9, %11 : vector<1024x240xf32>
    %13 = arith.truncf %12 : vector<1024x240xf32> to vector<1024x240xbf16>
    %c0_6 = arith.constant 0 : index
    %c0_7 = arith.constant 0 : index
    %c0_8 = arith.constant 0 : index
    %14 = vector.load %arg4[%c0_6, %c0_7, %c0_8] : memref<2x240x120xbf16, #tpu.memory_space<vmem>>, vector<1x240x120xbf16>
    %15 = vector.shape_cast %14 : vector<1x240x120xbf16> to vector<240x120xbf16>
    %cst_9 = arith.constant dense<0.000000e+00> : vector<1024x120xf32>
    %16 = tpu.matmul %13, %15, %cst_9 {dimension_numbers = #tpu.dot_dimension_numbers<[1], [0], [0], [1], [0, 0, 1, 1], [], []>} : vector<1024x240xbf16>, vector<240x120xbf16>, vector<1024x120xf32> -> vector<1024x120xf32>
    %c1 = arith.constant 1 : index
    %c0_10 = arith.constant 0 : index
    %c0_11 = arith.constant 0 : index
    %17 = vector.load %arg4[%c1, %c0_10, %c0_11] : memref<2x240x120xbf16, #tpu.memory_space<vmem>>, vector<1x240x120xbf16>
    %18 = vector.shape_cast %17 : vector<1x240x120xbf16> to vector<240x120xbf16>
    %cst_12 = arith.constant dense<0.000000e+00> : vector<1024x120xf32>
    %19 = tpu.matmul %13, %18, %cst_12 {dimension_numbers = #tpu.dot_dimension_numbers<[1], [0], [0], [1], [0, 0, 1, 1], [], []>} : vector<1024x240xbf16>, vector<240x120xbf16>, vector<1024x120xf32> -> vector<1024x120xf32>
    %20 = arith.maximumf %16, %19 : vector<1024x120xf32>
    %21 = vector.shape_cast %20 : vector<1024x120xf32> to vector<32x32x120xf32>
    %22 = vector.extract_strided_slice %21 {offsets = [0, 0, 0], sizes = [32, 24, 120], strides = [1, 1, 1]} : vector<32x32x120xf32> to vector<32x24x120xf32>
    %23 = vector.extract_strided_slice %21 {offsets = [0, 1, 0], sizes = [32, 24, 120], strides = [1, 1, 1]} : vector<32x32x120xf32> to vector<32x24x120xf32>
    %24 = arith.maximumf %22, %23 : vector<32x24x120xf32>
    %cst_13 = arith.constant 0.000000e+00 : f32
    %25 = vector.broadcast %cst_13 : f32 to vector<32x24x120xf32>
    %26 = arith.maximumf %24, %25 : vector<32x24x120xf32>
    %27 = arith.truncf %26 : vector<32x24x120xf32> to vector<32x24x120xbf16>
    %28 = vector.extract_strided_slice %27 {offsets = [0, 0, 0], sizes = [32, 16, 120], strides = [1, 1, 1]} : vector<32x24x120xbf16> to vector<32x16x120xbf16>
    %29 = vector.extract_strided_slice %27 {offsets = [0, 2, 0], sizes = [32, 16, 120], strides = [1, 1, 1]} : vector<32x24x120xbf16> to vector<32x16x120xbf16>
    %30 = vector.extract_strided_slice %27 {offsets = [0, 4, 0], sizes = [32, 16, 120], strides = [1, 1, 1]} : vector<32x24x120xbf16> to vector<32x16x120xbf16>
    %31 = vector.extract_strided_slice %27 {offsets = [0, 6, 0], sizes = [32, 16, 120], strides = [1, 1, 1]} : vector<32x24x120xbf16> to vector<32x16x120xbf16>
    %32 = vector.extract_strided_slice %27 {offsets = [0, 8, 0], sizes = [32, 16, 120], strides = [1, 1, 1]} : vector<32x24x120xbf16> to vector<32x16x120xbf16>
    %33 = tpu.concatenate %28, %29, %30, %31, %32 in 2 : vector<32x16x120xbf16>, vector<32x16x120xbf16>, vector<32x16x120xbf16>, vector<32x16x120xbf16>, vector<32x16x120xbf16> -> vector<32x16x600xbf16>
    %34 = vector.shape_cast %33 : vector<32x16x600xbf16> to vector<512x600xbf16>
    %c0_14 = arith.constant 0 : index
    %c0_15 = arith.constant 0 : index
    %35 = vector.load %arg5[%c0_14, %c0_15] : memref<600x160xbf16, #tpu.memory_space<vmem>>, vector<600x160xbf16>
    %cst_16 = arith.constant dense<0.000000e+00> : vector<512x160xf32>
    %36 = tpu.matmul %34, %35, %cst_16 {dimension_numbers = #tpu.dot_dimension_numbers<[1], [0], [0], [1], [0, 0, 1, 1], [], []>} : vector<512x600xbf16>, vector<600x160xbf16>, vector<512x160xf32> -> vector<512x160xf32>
    %c0_17 = arith.constant 0 : index
    %c0_18 = arith.constant 0 : index
    %37 = vector.load %arg6[%c0_17, %c0_18] : memref<1x160xf32, #tpu.memory_space<vmem>>, vector<1x160xf32>
    %38 = vector.broadcast %37 : vector<1x160xf32> to vector<512x160xf32>
    %39 = arith.addf %36, %38 : vector<512x160xf32>
    %40 = arith.truncf %39 : vector<512x160xf32> to vector<512x160xbf16>
    %c0_19 = arith.constant 0 : index
    %c0_20 = arith.constant 0 : index
    %c0_21 = arith.constant 0 : index
    %41 = vector.load %arg7[%c0_19, %c0_20, %c0_21] : memref<2x160x80xbf16, #tpu.memory_space<vmem>>, vector<1x160x80xbf16>
    %42 = vector.shape_cast %41 : vector<1x160x80xbf16> to vector<160x80xbf16>
    %cst_22 = arith.constant dense<0.000000e+00> : vector<512x80xf32>
    %43 = tpu.matmul %40, %42, %cst_22 {dimension_numbers = #tpu.dot_dimension_numbers<[1], [0], [0], [1], [0, 0, 1, 1], [], []>} : vector<512x160xbf16>, vector<160x80xbf16>, vector<512x80xf32> -> vector<512x80xf32>
    %c1_23 = arith.constant 1 : index
    %c0_24 = arith.constant 0 : index
    %c0_25 = arith.constant 0 : index
    %44 = vector.load %arg7[%c1_23, %c0_24, %c0_25] : memref<2x160x80xbf16, #tpu.memory_space<vmem>>, vector<1x160x80xbf16>
    %45 = vector.shape_cast %44 : vector<1x160x80xbf16> to vector<160x80xbf16>
    %cst_26 = arith.constant dense<0.000000e+00> : vector<512x80xf32>
    %46 = tpu.matmul %40, %45, %cst_26 {dimension_numbers = #tpu.dot_dimension_numbers<[1], [0], [0], [1], [0, 0, 1, 1], [], []>} : vector<512x160xbf16>, vector<160x80xbf16>, vector<512x80xf32> -> vector<512x80xf32>
    %47 = arith.maximumf %43, %46 : vector<512x80xf32>
    %48 = arith.truncf %47 : vector<512x80xf32> to vector<512x80xbf16>
    %c0_27 = arith.constant 0 : index
    %c0_28 = arith.constant 0 : index
    %49 = vector.load %arg12[%c0_27, %c0_28] : memref<128x512xbf16, #tpu.memory_space<vmem>>, vector<128x512xbf16>
    %cst_29 = arith.constant dense<0.000000e+00> : vector<128x80xf32>
    %50 = tpu.matmul %49, %48, %cst_29 {dimension_numbers = #tpu.dot_dimension_numbers<[1], [0], [0], [1], [0, 0, 1, 1], [], []>} : vector<128x512xbf16>, vector<512x80xbf16>, vector<128x80xf32> -> vector<128x80xf32>
    %c0_30 = arith.constant 0 : index
    %c0_31 = arith.constant 0 : index
    %51 = vector.load %arg13[%c0_30, %c0_31] : memref<128x512xbf16, #tpu.memory_space<vmem>>, vector<128x512xbf16>
    %cst_32 = arith.constant dense<0.000000e+00> : vector<128x80xf32>
    %52 = tpu.matmul %51, %48, %cst_32 {dimension_numbers = #tpu.dot_dimension_numbers<[1], [0], [0], [1], [0, 0, 1, 1], [], []>} : vector<128x512xbf16>, vector<512x80xbf16>, vector<128x80xf32> -> vector<128x80xf32>
    %53 = arith.maximumf %50, %52 : vector<128x80xf32>
    %cst_33 = arith.constant 0.000000e+00 : f32
    %54 = vector.broadcast %cst_33 : f32 to vector<128x80xf32>
    %55 = arith.maximumf %53, %54 : vector<128x80xf32>
    %56 = arith.truncf %55 : vector<128x80xf32> to vector<128x80xbf16>
    %57 = vector.extract_strided_slice %56 {offsets = [0, 0], sizes = [32, 80], strides = [1, 1]} : vector<128x80xbf16> to vector<32x80xbf16>
    %58 = vector.extract_strided_slice %56 {offsets = [32, 0], sizes = [32, 80], strides = [1, 1]} : vector<128x80xbf16> to vector<32x80xbf16>
    %59 = vector.extract_strided_slice %56 {offsets = [64, 0], sizes = [32, 80], strides = [1, 1]} : vector<128x80xbf16> to vector<32x80xbf16>
    %60 = vector.extract_strided_slice %56 {offsets = [96, 0], sizes = [32, 80], strides = [1, 1]} : vector<128x80xbf16> to vector<32x80xbf16>
    %61 = tpu.concatenate %57, %58, %59, %60 in 1 : vector<32x80xbf16>, vector<32x80xbf16>, vector<32x80xbf16>, vector<32x80xbf16> -> vector<32x320xbf16>
    %c0_34 = arith.constant 0 : index
    %c0_35 = arith.constant 0 : index
    %62 = vector.load %arg8[%c0_34, %c0_35] : memref<320x50xbf16, #tpu.memory_space<vmem>>, vector<320x50xbf16>
    %cst_36 = arith.constant dense<0.000000e+00> : vector<32x50xf32>
    %63 = tpu.matmul %61, %62, %cst_36 {dimension_numbers = #tpu.dot_dimension_numbers<[1], [0], [0], [1], [0, 0, 1, 1], [], []>} : vector<32x320xbf16>, vector<320x50xbf16>, vector<32x50xf32> -> vector<32x50xf32>
    %c0_37 = arith.constant 0 : index
    %c0_38 = arith.constant 0 : index
    %64 = vector.load %arg9[%c0_37, %c0_38] : memref<1x50xf32, #tpu.memory_space<vmem>>, vector<1x50xf32>
    %65 = vector.broadcast %64 : vector<1x50xf32> to vector<32x50xf32>
    %66 = arith.addf %63, %65 : vector<32x50xf32>
    %cst_39 = arith.constant 0.000000e+00 : f32
    %67 = vector.broadcast %cst_39 : f32 to vector<32x50xf32>
    %68 = arith.maximumf %66, %67 : vector<32x50xf32>
    %69 = arith.truncf %68 : vector<32x50xf32> to vector<32x50xbf16>
    %c0_40 = arith.constant 0 : index
    %c0_41 = arith.constant 0 : index
    %70 = vector.load %arg10[%c0_40, %c0_41] : memref<50x128xbf16, #tpu.memory_space<vmem>>, vector<50x128xbf16>
    %cst_42 = arith.constant dense<0.000000e+00> : vector<32x128xf32>
    %71 = tpu.matmul %69, %70, %cst_42 {dimension_numbers = #tpu.dot_dimension_numbers<[1], [0], [0], [1], [0, 0, 1, 1], [], []>} : vector<32x50xbf16>, vector<50x128xbf16>, vector<32x128xf32> -> vector<32x128xf32>
    %c0_43 = arith.constant 0 : index
    %c0_44 = arith.constant 0 : index
    %72 = vector.load %arg11[%c0_43, %c0_44] : memref<1x128xf32, #tpu.memory_space<vmem>>, vector<1x128xf32>
    %73 = vector.broadcast %72 : vector<1x128xf32> to vector<32x128xf32>
    %74 = arith.addf %71, %73 : vector<32x128xf32>
    %75 = vector.extract_strided_slice %74 {offsets = [0, 0], sizes = [32, 10], strides = [1, 1]} : vector<32x128xf32> to vector<32x10xf32>
    %cst_45 = arith.constant dense<0xFF800000> : vector<32xf32>
    %76 = vector.multi_reduction <maximumf>, %75, %cst_45 [1] : vector<32x10xf32> to vector<32xf32>
    %77 = vector.shape_cast %76 : vector<32xf32> to vector<32x1xf32>
    %78 = vector.broadcast %77 : vector<32x1xf32> to vector<32x10xf32>
    %79 = arith.subf %75, %78 : vector<32x10xf32>
    %80 = math.exp %79 : vector<32x10xf32>
    %cst_46 = arith.constant dense<0.000000e+00> : vector<32xf32>
    %81 = vector.multi_reduction <add>, %80, %cst_46 [1] : vector<32x10xf32> to vector<32xf32>
    %82 = vector.shape_cast %81 : vector<32xf32> to vector<32x1xf32>
    %83 = math.log %82 : vector<32x1xf32>
    %84 = arith.addf %83, %77 : vector<32x1xf32>
    %85 = vector.broadcast %84 : vector<32x1xf32> to vector<32x128xf32>
    %86 = arith.subf %74, %85 : vector<32x128xf32>
    %c0_47 = arith.constant 0 : index
    %c0_48 = arith.constant 0 : index
    %87 = vector.load %arg14[%c0_47, %c0_48] : memref<32x128xf32, #tpu.memory_space<vmem>>, vector<32x128xf32>
    tpu.vector_store %arg14[%c0_47, %c0_48], %86 {strides = array<i32>} : memref<32x128xf32, #tpu.memory_space<vmem>>, vector<32x128xf32>,
    return
  }
  func.func @transform_0(%arg0: i32) -> (i32, i32, i32) {
    %c0_i32 = arith.constant 0 : i32
    %c0_i32_0 = arith.constant 0 : i32
    %c0_i32_1 = arith.constant 0 : i32
    return %arg0, %c0_i32, %c0_i32_0 : i32, i32, i32
  }
  func.func @transform_1(%arg0: i32) -> (i32, i32) {
    %c0_i32 = arith.constant 0 : i32
    %c0_i32_0 = arith.constant 0 : i32
    %c0_i32_1 = arith.constant 0 : i32
    return %c0_i32, %c0_i32_0 : i32, i32
  }
  func.func @transform_2(%arg0: i32) -> (i32, i32) {
    %c0_i32 = arith.constant 0 : i32
    %c0_i32_0 = arith.constant 0 : i32
    %c0_i32_1 = arith.constant 0 : i32
    return %c0_i32, %c0_i32_0 : i32, i32
  }
  func.func @transform_3(%arg0: i32) -> (i32, i32, i32) {
    %c0_i32 = arith.constant 0 : i32
    %c0_i32_0 = arith.constant 0 : i32
    %c0_i32_1 = arith.constant 0 : i32
    %c0_i32_2 = arith.constant 0 : i32
    return %c0_i32, %c0_i32_0, %c0_i32_1 : i32, i32, i32
  }
  func.func @transform_4(%arg0: i32) -> (i32, i32) {
    %c0_i32 = arith.constant 0 : i32
    %c0_i32_0 = arith.constant 0 : i32
    %c0_i32_1 = arith.constant 0 : i32
    return %c0_i32, %c0_i32_0 : i32, i32
  }
  func.func @transform_5(%arg0: i32) -> (i32, i32) {
    %c0_i32 = arith.constant 0 : i32
    %c0_i32_0 = arith.constant 0 : i32
    %c0_i32_1 = arith.constant 0 : i32
    return %c0_i32, %c0_i32_0 : i32, i32
  }
  func.func @transform_6(%arg0: i32) -> (i32, i32, i32) {
    %c0_i32 = arith.constant 0 : i32
    %c0_i32_0 = arith.constant 0 : i32
    %c0_i32_1 = arith.constant 0 : i32
    %c0_i32_2 = arith.constant 0 : i32
    return %c0_i32, %c0_i32_0, %c0_i32_1 : i32, i32, i32
  }
  func.func @transform_7(%arg0: i32) -> (i32, i32) {
    %c0_i32 = arith.constant 0 : i32
    %c0_i32_0 = arith.constant 0 : i32
    %c0_i32_1 = arith.constant 0 : i32
    return %c0_i32, %c0_i32_0 : i32, i32
  }
  func.func @transform_8(%arg0: i32) -> (i32, i32) {
    %c0_i32 = arith.constant 0 : i32
    %c0_i32_0 = arith.constant 0 : i32
    %c0_i32_1 = arith.constant 0 : i32
    return %c0_i32, %c0_i32_0 : i32, i32
  }
  func.func @transform_9(%arg0: i32) -> (i32, i32) {
    %c0_i32 = arith.constant 0 : i32
    %c0_i32_0 = arith.constant 0 : i32
    %c0_i32_1 = arith.constant 0 : i32
    return %c0_i32, %c0_i32_0 : i32, i32
  }
  func.func @transform_10(%arg0: i32) -> (i32, i32) {
    %c0_i32 = arith.constant 0 : i32
    %c0_i32_0 = arith.constant 0 : i32
    %c0_i32_1 = arith.constant 0 : i32
    return %c0_i32, %c0_i32_0 : i32, i32
  }
  func.func @transform_11(%arg0: i32) -> (i32, i32) {
    %c0_i32 = arith.constant 0 : i32
    %c0_i32_0 = arith.constant 0 : i32
    %c0_i32_1 = arith.constant 0 : i32
    return %c0_i32, %c0_i32_0 : i32, i32
  }
  func.func @transform_12(%arg0: i32) -> (i32, i32) {
    %c0_i32 = arith.constant 0 : i32
    %c0_i32_0 = arith.constant 0 : i32
    %c0_i32_1 = arith.constant 0 : i32
    return %c0_i32, %c0_i32_0 : i32, i32
  }
  func.func @transform_13(%arg0: i32) -> (i32, i32) {
    %c0_i32 = arith.constant 0 : i32
    %c0_i32_0 = arith.constant 0 : i32
    return %arg0, %c0_i32 : i32, i32
  }
}

</mosaic_0001>

<llo_original>
// kernel: mycnn_forward.1
$region0: #{mycnn_forward.1}
  #allocation0 [shape = 'u32[]', space=smem, size = 0x4, offset = 0x4, fixed_abs, tag = 'smem constant byte address 0x4 - core index']
  #allocation1 [shape = 'u32[144,128]{1,0:T(1,128)}', space=vmem, size = 0x12000, scoped, tag = 'internal scratch']
  %s0 = inlined_call_operand.vmem [shape: bf16[64,36,28], index: 0, kind: input, shape index: {}]
  %s1 = inlined_call_operand.vmem [shape: bf16[140,240], index: 1, kind: input, shape index: {}]
  %s2 = inlined_call_operand.vmem [shape: f32[1,240], index: 2, kind: input, shape index: {}]
  %s3 = inlined_call_operand.vmem [shape: bf16[2,240,120], index: 3, kind: input, shape index: {}]
  %s4 = inlined_call_operand.vmem [shape: bf16[600,160], index: 4, kind: input, shape index: {}]
  %s5 = inlined_call_operand.vmem [shape: f32[1,160], index: 5, kind: input, shape index: {}]
  %s6 = inlined_call_operand.vmem [shape: bf16[2,160,80], index: 6, kind: input, shape index: {}]
  %s7 = inlined_call_operand.vmem [shape: bf16[320,50], index: 7, kind: input, shape index: {}]
  %s8 = inlined_call_operand.vmem [shape: f32[1,50], index: 8, kind: input, shape index: {}]
  %s9 = inlined_call_operand.vmem [shape: bf16[50,128], index: 9, kind: input, shape index: {}]
  %s10 = inlined_call_operand.vmem [shape: f32[1,128], index: 10, kind: input, shape index: {}]
  %s11 = inlined_call_operand.vmem [shape: bf16[128,512], index: 11, kind: input, shape index: {}]
  %s12 = inlined_call_operand.vmem [shape: bf16[128,512], index: 12, kind: input, shape index: {}]
  %s13 = inlined_call_operand.vmem [shape: f32[64,128], index: 13, kind: output, shape index: {}]
  %s14 = sld [smem:[#allocation0]]
  $region85: #{mycnn_forward.1} parent=0
    _
  %s16 = ssub.s32 1, %s14
  %s17 = scalar_select 0, %s16, %s14
  loop: start=0, step=1, limit=4
  $region2: #{mycnn_forward.1} parent=0 // loop_pre_header
    _
  $region3: #{mycnn_forward.1} parent=0 // loop_header
    %s19 = sphi 0, %s23
    %p20 = scmp.ge.s32.totalorder %s19, 4
    %s29 = sphi 0, %s31
    %s32 = sphi 0, %s29
    %s33 = sphi 0, %s32
    %s49 = sphi 0, %s33
    %s53 = sphi 0, %s53
    %s55 = sphi 0, %s53
    %s56 = sphi 0, %s55
    %s70 = sphi 0, %s56
    %s74 = sphi 0, %s74
    %s76 = sphi 0, %s74
    %s77 = sphi 0, %s76
    %s91 = sphi 0, %s77
    %s95 = sphi 0, %s95
    %s97 = sphi 0, %s95
    %s98 = sphi 0, %s97
    %s112 = sphi 0, %s98
    %s116 = sphi 0, %s116
    %s118 = sphi 0, %s116
    %s119 = sphi 0, %s118
    %s133 = sphi 0, %s119
    %s137 = sphi 0, %s137
    %s139 = sphi 0, %s137
    %s140 = sphi 0, %s139
    %s154 = sphi 0, %s140
    %s158 = sphi 0, %s158
    %s160 = sphi 0, %s158
    %s161 = sphi 0, %s160
    %s175 = sphi 0, %s161
    %s179 = sphi 0, %s179
    %s181 = sphi 0, %s179
    %s182 = sphi 0, %s181
    %s196 = sphi 0, %s182
    %s200 = sphi 0, %s200
    %s202 = sphi 0, %s200
    %s203 = sphi 0, %s202
    %s217 = sphi 0, %s203
    %s221 = sphi 0, %s221
    %s223 = sphi 0, %s221
    %s224 = sphi 0, %s223
    %s238 = sphi 0, %s224
    %s242 = sphi 0, %s242
    %s244 = sphi 0, %s242
    %s245 = sphi 0, %s244
    %s259 = sphi 0, %s245
    %s263 = sphi 0, %s263
    %s265 = sphi 0, %s263
    %s266 = sphi 0, %s265
    %s280 = sphi 0, %s266
    %s284 = sphi 0, %s284
    %s286 = sphi 0, %s284
    %s287 = sphi 0, %s286
    %s301 = sphi 0, %s287
    %s307 = sphi 0, %s309
    %s310 = sphi 0, %s307
    %s311 = sphi 0, %s310
    %s327 = sphi 0, %s311
  $region4: #{mycnn_forward.1} parent=0 // loop_header_branch
    %22 = sbr.rel (%p20) target = $region8
  $region5: #{mycnn_forward.1} parent=0 // loop_body
    %s24 = ssub.s32 %s19, 1
    %s25 = ssub.s32 %s19, 2
    %s26 = sadd.s32 %s19, 1
    %s27 = ssub.s32 %s19, %s26
    %p28 = scmp.eq.s32.totalorder %s27, 0
    %s30 = sadd.s32 %s29, 1
    %s31 = scalar_select %p28, %s29, %s30
    %p34 = pneg %p28
    %p35 = scmp.eq.s32.totalorder %s19, 1
    %p36 = por %p34, %p35
    %p37 = scmp.ne.s32.totalorder %s29, %s32
    %p38 = scmp.eq.s32.totalorder %s19, 0
    %p39 = por %p37, %p38
    %p40 = scmp.ne.s32.totalorder %s29, %s32
    %p41 = scmp.eq.s32.totalorder %s24, 1
    %p42 = por %p40, %p41
    %p43 = scmp.ne.s32.totalorder %s32, %s33
    %p44 = scmp.eq.s32.totalorder %s24, 0
    %p45 = por %p43, %p44
    %p46 = scmp.ne.s32.totalorder %s32, %s33
    %p47 = scmp.eq.s32.totalorder %s25, 1
    %p48 = por %p46, %p47
    %p50 = scmp.ne.s32.totalorder %s33, %s49
    %p51 = scmp.eq.s32.totalorder %s25, 0
    %p52 = por %p50, %p51
    %s54 = sadd.s32 %s53, 1
    %p57 = scmp.eq.s32.totalorder %s19, 1
    %p58 = scmp.ne.s32.totalorder %s53, %s55
    %p59 = scmp.eq.s32.totalorder %s19, 0
    %p60 = por %p58, %p59
    %p61 = scmp.ne.s32.totalorder %s53, %s55
    %p62 = scmp.eq.s32.totalorder %s24, 1
    %p63 = por %p61, %p62
    %p64 = scmp.ne.s32.totalorder %s55, %s56
    %p65 = scmp.eq.s32.totalorder %s24, 0
    %p66 = por %p64, %p65
    %p67 = scmp.ne.s32.totalorder %s55, %s56
    %p68 = scmp.eq.s32.totalorder %s25, 1
    %p69 = por %p67, %p68
    %p71 = scmp.ne.s32.totalorder %s56, %s70
    %p72 = scmp.eq.s32.totalorder %s25, 0
    %p73 = por %p71, %p72
    %s75 = sadd.s32 %s74, 1
    %p78 = scmp.eq.s32.totalorder %s19, 1
    %p79 = scmp.ne.s32.totalorder %s74, %s76
    %p80 = scmp.eq.s32.totalorder %s19, 0
    %p81 = por %p79, %p80
    %p82 = scmp.ne.s32.totalorder %s74, %s76
    %p83 = scmp.eq.s32.totalorder %s24, 1
    %p84 = por %p82, %p83
    %p85 = scmp.ne.s32.totalorder %s76, %s77
    %p86 = scmp.eq.s32.totalorder %s24, 0
    %p87 = por %p85, %p86
    %p88 = scmp.ne.s32.totalorder %s76, %s77
    %p89 = scmp.eq.s32.totalorder %s25, 1
    %p90 = por %p88, %p89
    %p92 = scmp.ne.s32.totalorder %s77, %s91
    %p93 = scmp.eq.s32.totalorder %s25, 0
    %p94 = por %p92, %p93
    %s96 = sadd.s32 %s95, 1
    %p99 = scmp.eq.s32.totalorder %s19, 1
    %p100 = scmp.ne.s32.totalorder %s95, %s97
    %p101 = scmp.eq.s32.totalorder %s19, 0
    %p102 = por %p100, %p101
    %p103 = scmp.ne.s32.totalorder %s95, %s97
    %p104 = scmp.eq.s32.totalorder %s24, 1
    %p105 = por %p103, %p104
    %p106 = scmp.ne.s32.totalorder %s97, %s98
    %p107 = scmp.eq.s32.totalorder %s24, 0
    %p108 = por %p106, %p107
    %p109 = scmp.ne.s32.totalorder %s97, %s98
    %p110 = scmp.eq.s32.totalorder %s25, 1
    %p111 = por %p109, %p110
    %p113 = scmp.ne.s32.totalorder %s98, %s112
    %p114 = scmp.eq.s32.totalorder %s25, 0
    %p115 = por %p113, %p114
    %s117 = sadd.s32 %s116, 1
    %p120 = scmp.eq.s32.totalorder %s19, 1
    %p121 = scmp.ne.s32.totalorder %s116, %s118
    %p122 = scmp.eq.s32.totalorder %s19, 0
    %p123 = por %p121, %p122
    %p124 = scmp.ne.s32.totalorder %s116, %s118
    %p125 = scmp.eq.s32.totalorder %s24, 1
    %p126 = por %p124, %p125
    %p127 = scmp.ne.s32.totalorder %s118, %s119
    %p128 = scmp.eq.s32.totalorder %s24, 0
    %p129 = por %p127, %p128
    %p130 = scmp.ne.s32.totalorder %s118, %s119
    %p131 = scmp.eq.s32.totalorder %s25, 1
    %p132 = por %p130, %p131
    %p134 = scmp.ne.s32.totalorder %s119, %s133
    %p135 = scmp.eq.s32.totalorder %s25, 0
    %p136 = por %p134, %p135
    %s138 = sadd.s32 %s137, 1
    %p141 = scmp.eq.s32.totalorder %s19, 1
    %p142 = scmp.ne.s32.totalorder %s137, %s139
    %p143 = scmp.eq.s32.totalorder %s19, 0
    %p144 = por %p142, %p143
    %p145 = scmp.ne.s32.totalorder %s137, %s139
    %p146 = scmp.eq.s32.totalorder %s24, 1
    %p147 = por %p145, %p146
    %p148 = scmp.ne.s32.totalorder %s139, %s140
    %p149 = scmp.eq.s32.totalorder %s24, 0
    %p150 = por %p148, %p149
    %p151 = scmp.ne.s32.totalorder %s139, %s140
    %p152 = scmp.eq.s32.totalorder %s25, 1
    %p153 = por %p151, %p152
    %p155 = scmp.ne.s32.totalorder %s140, %s154
    %p156 = scmp.eq.s32.totalorder %s25, 0
    %p157 = por %p155, %p156
    %s159 = sadd.s32 %s158, 1
    %p162 = scmp.eq.s32.totalorder %s19, 1
    %p163 = scmp.ne.s32.totalorder %s158, %s160
    %p164 = scmp.eq.s32.totalorder %s19, 0
    %p165 = por %p163, %p164
    %p166 = scmp.ne.s32.totalorder %s158, %s160
    %p167 = scmp.eq.s32.totalorder %s24, 1
    %p168 = por %p166, %p167
    %p169 = scmp.ne.s32.totalorder %s160, %s161
    %p170 = scmp.eq.s32.totalorder %s24, 0
    %p171 = por %p169, %p170
    %p172 = scmp.ne.s32.totalorder %s160, %s161
    %p173 = scmp.eq.s32.totalorder %s25, 1
    %p174 = por %p172, %p173
    %p176 = scmp.ne.s32.totalorder %s161, %s175
    %p177 = scmp.eq.s32.totalorder %s25, 0
    %p178 = por %p176, %p177
    %s180 = sadd.s32 %s179, 1
    %p183 = scmp.eq.s32.totalorder %s19, 1
    %p184 = scmp.ne.s32.totalorder %s179, %s181
    %p185 = scmp.eq.s32.totalorder %s19, 0
    %p186 = por %p184, %p185
    %p187 = scmp.ne.s32.totalorder %s179, %s181
    %p188 = scmp.eq.s32.totalorder %s24, 1
    %p189 = por %p187, %p188
    %p190 = scmp.ne.s32.totalorder %s181, %s182
    %p191 = scmp.eq.s32.totalorder %s24, 0
    %p192 = por %p190, %p191
    %p193 = scmp.ne.s32.totalorder %s181, %s182
    %p194 = scmp.eq.s32.totalorder %s25, 1
    %p195 = por %p193, %p194
    %p197 = scmp.ne.s32.totalorder %s182, %s196
    %p198 = scmp.eq.s32.totalorder %s25, 0
    %p199 = por %p197, %p198
    %s201 = sadd.s32 %s200, 1
    %p204 = scmp.eq.s32.totalorder %s19, 1
    %p205 = scmp.ne.s32.totalorder %s200, %s202
    %p206 = scmp.eq.s32.totalorder %s19, 0
    %p207 = por %p205, %p206
    %p208 = scmp.ne.s32.totalorder %s200, %s202
    %p209 = scmp.eq.s32.totalorder %s24, 1
    %p210 = por %p208, %p209
    %p211 = scmp.ne.s32.totalorder %s202, %s203
    %p212 = scmp.eq.s32.totalorder %s24, 0
    %p213 = por %p211, %p212
    %p214 = scmp.ne.s32.totalorder %s202, %s203
    %p215 = scmp.eq.s32.totalorder %s25, 1
    %p216 = por %p214, %p215
    %p218 = scmp.ne.s32.totalorder %s203, %s217
    %p219 = scmp.eq.s32.totalorder %s25, 0
    %p220 = por %p218, %p219
    %s222 = sadd.s32 %s221, 1
    %p225 = scmp.eq.s32.totalorder %s19, 1
    %p226 = scmp.ne.s32.totalorder %s221, %s223
    %p227 = scmp.eq.s32.totalorder %s19, 0
    %p228 = por %p226, %p227
    %p229 = scmp.ne.s32.totalorder %s221, %s223
    %p230 = scmp.eq.s32.totalorder %s24, 1
    %p231 = por %p229, %p230
    %p232 = scmp.ne.s32.totalorder %s223, %s224
    %p233 = scmp.eq.s32.totalorder %s24, 0
    %p234 = por %p232, %p233
    %p235 = scmp.ne.s32.totalorder %s223, %s224
    %p236 = scmp.eq.s32.totalorder %s25, 1
    %p237 = por %p235, %p236
    %p239 = scmp.ne.s32.totalorder %s224, %s238
    %p240 = scmp.eq.s32.totalorder %s25, 0
    %p241 = por %p239, %p240
    %s243 = sadd.s32 %s242, 1
    %p246 = scmp.eq.s32.totalorder %s19, 1
    %p247 = scmp.ne.s32.totalorder %s242, %s244
    %p248 = scmp.eq.s32.totalorder %s19, 0
    %p249 = por %p247, %p248
    %p250 = scmp.ne.s32.totalorder %s242, %s244
    %p251 = scmp.eq.s32.totalorder %s24, 1
    %p252 = por %p250, %p251
    %p253 = scmp.ne.s32.totalorder %s244, %s245
    %p254 = scmp.eq.s32.totalorder %s24, 0
    %p255 = por %p253, %p254
    %p256 = scmp.ne.s32.totalorder %s244, %s245
    %p257 = scmp.eq.s32.totalorder %s25, 1
    %p258 = por %p256, %p257
    %p260 = scmp.ne.s32.totalorder %s245, %s259
    %p261 = scmp.eq.s32.totalorder %s25, 0
    %p262 = por %p260, %p261
    %s264 = sadd.s32 %s263, 1
    %p267 = scmp.eq.s32.totalorder %s19, 1
    %p268 = scmp.ne.s32.totalorder %s263, %s265
    %p269 = scmp.eq.s32.totalorder %s19, 0
    %p270 = por %p268, %p269
    %p271 = scmp.ne.s32.totalorder %s263, %s265
    %p272 = scmp.eq.s32.totalorder %s24, 1
    %p273 = por %p271, %p272
    %p274 = scmp.ne.s32.totalorder %s265, %s266
    %p275 = scmp.eq.s32.totalorder %s24, 0
    %p276 = por %p274, %p275
    %p277 = scmp.ne.s32.totalorder %s265, %s266
    %p278 = scmp.eq.s32.totalorder %s25, 1
    %p279 = por %p277, %p278
    %p281 = scmp.ne.s32.totalorder %s266, %s280
    %p282 = scmp.eq.s32.totalorder %s25, 0
    %p283 = por %p281, %p282
    %s285 = sadd.s32 %s284, 1
    %p288 = scmp.eq.s32.totalorder %s19, 1
    %p289 = scmp.ne.s32.totalorder %s284, %s286
    %p290 = scmp.eq.s32.totalorder %s19, 0
    %p291 = por %p289, %p290
    %p292 = scmp.ne.s32.totalorder %s284, %s286
    %p293 = scmp.eq.s32.totalorder %s24, 1
    %p294 = por %p292, %p293
    %p295 = scmp.ne.s32.totalorder %s286, %s287
    %p296 = scmp.eq.s32.totalorder %s24, 0
    %p297 = por %p295, %p296
    %p298 = scmp.ne.s32.totalorder %s286, %s287
    %p299 = scmp.eq.s32.totalorder %s25, 1
    %p300 = por %p298, %p299
    %p302 = scmp.ne.s32.totalorder %s287, %s301
    %p303 = scmp.eq.s32.totalorder %s25, 0
    %p304 = por %p302, %p303
    %s305 = ssub.s32 %s19, %s26
    %p306 = scmp.eq.s32.totalorder %s305, 0
    %s308 = sadd.s32 %s307, 1
    %s309 = scalar_select %p306, %s307, %s308
    %p312 = pneg %p306
    %p313 = scmp.eq.s32.totalorder %s19, 1
    %p314 = por %p312, %p313
    %p315 = scmp.ne.s32.totalorder %s307, %s310
    %p316 = scmp.eq.s32.totalorder %s19, 0
    %p317 = por %p315, %p316
    %p318 = scmp.ne.s32.totalorder %s307, %s310
    %p319 = scmp.eq.s32.totalorder %s24, 1
    %p320 = por %p318, %p319
    %p321 = scmp.ne.s32.totalorder %s310, %s311
    %p322 = scmp.eq.s32.totalorder %s24, 0
    %p323 = por %p321, %p322
    %p324 = scmp.ne.s32.totalorder %s310, %s311
    %p325 = scmp.eq.s32.totalorder %s25, 1
    %p326 = por %p324, %p325
    %p328 = scmp.ne.s32.totalorder %s311, %s327
    %p329 = scmp.eq.s32.totalorder %s25, 0
    %p330 = por %p328, %p329
    %p331 = scmp.le.s32.totalorder 1, %s19
    %p332 = scmp.lt.s32.totalorder %s19, 3
    %p333 = pnand %p331, %p332
    %p334 = pneg %p333
    // Predicated region
    $region9: #{mycnn_forward.1} parent=5 // pred_check
      _
    $region10: #{mycnn_forward.1} parent=5 // pred_check_branch
      %336 = sbr.rel (%p333) target = $region12
    $region11: #{mycnn_forward.1} parent=5 // pred_region
      %s337 = ssub.s32 %s19, 1
      // Predicated region
      $region13: #{mycnn_forward.1} parent=11 // pred_check
        %p338 = pneg %p66
      $region14: #{mycnn_forward.1} parent=11 // pred_check_branch
        %340 = sbr.rel (%p338) target = $region16
      $region15: #{mycnn_forward.1} parent=11 // pred_region
        _
      $region16: #{mycnn_forward.1} parent=11 // pred_fallthru
        _
      // Predicated region
      $region17: #{mycnn_forward.1} parent=11 // pred_check
        %p341 = pneg %p87
      $region18: #{mycnn_forward.1} parent=11 // pred_check_branch
        %343 = sbr.rel (%p341) target = $region20
      $region19: #{mycnn_forward.1} parent=11 // pred_region
        _
      $region20: #{mycnn_forward.1} parent=11 // pred_fallthru
        _
      // Predicated region
      $region21: #{mycnn_forward.1} parent=11 // pred_check
        %p344 = pneg %p108
      $region22: #{mycnn_forward.1} parent=11 // pred_check_branch
        %346 = sbr.rel (%p344) target = $region24
      $region23: #{mycnn_forward.1} parent=11 // pred_region
        _
      $region24: #{mycnn_forward.1} parent=11 // pred_fallthru
        _
      // Predicated region
      $region25: #{mycnn_forward.1} parent=11 // pred_check
        %p347 = pneg %p129
      $region26: #{mycnn_forward.1} parent=11 // pred_check_branch
        %349 = sbr.rel (%p347) target = $region28
      $region27: #{mycnn_forward.1} parent=11 // pred_region
        _
      $region28: #{mycnn_forward.1} parent=11 // pred_fallthru
        _
      // Predicated region
      $region29: #{mycnn_forward.1} parent=11 // pred_check
        %p350 = pneg %p150
      $region30: #{mycnn_forward.1} parent=11 // pred_check_branch
        %352 = sbr.rel (%p350) target = $region32
      $region31: #{mycnn_forward.1} parent=11 // pred_region
        _
      $region32: #{mycnn_forward.1} parent=11 // pred_fallthru
        _
      // Predicated region
      $region33: #{mycnn_forward.1} parent=11 // pred_check
        %p353 = pneg %p171
      $region34: #{mycnn_forward.1} parent=11 // pred_check_branch
        %355 = sbr.rel (%p353) target = $region36
      $region35: #{mycnn_forward.1} parent=11 // pred_region
        _
      $region36: #{mycnn_forward.1} parent=11 // pred_fallthru
        _
      // Predicated region
      $region37: #{mycnn_forward.1} parent=11 // pred_check
        %p356 = pneg %p192
      $region38: #{mycnn_forward.1} parent=11 // pred_check_branch
        %358 = sbr.rel (%p356) target = $region40
      $region39: #{mycnn_forward.1} parent=11 // pred_region
        _
      $region40: #{mycnn_forward.1} parent=11 // pred_fallthru
        _
      // Predicated region
      $region41: #{mycnn_forward.1} parent=11 // pred_check
        %p359 = pneg %p213
      $region42: #{mycnn_forward.1} parent=11 // pred_check_branch
        %361 = sbr.rel (%p359) target = $region44
      $region43: #{mycnn_forward.1} parent=11 // pred_region
        _
      $region44: #{mycnn_forward.1} parent=11 // pred_fallthru
        _
      // Predicated region
      $region45: #{mycnn_forward.1} parent=11 // pred_check
        %p362 = pneg %p234
      $region46: #{mycnn_forward.1} parent=11 // pred_check_branch
        %364 = sbr.rel (%p362) target = $region48
      $region47: #{mycnn_forward.1} parent=11 // pred_region
        _
      $region48: #{mycnn_forward.1} parent=11 // pred_fallthru
        _
      // Predicated region
      $region49: #{mycnn_forward.1} parent=11 // pred_check
        %p365 = pneg %p255
      $region50: #{mycnn_forward.1} parent=11 // pred_check_branch
        %367 = sbr.rel (%p365) target = $region52
      $region51: #{mycnn_forward.1} parent=11 // pred_region
        _
      $region52: #{mycnn_forward.1} parent=11 // pred_fallthru
        _
      // Predicated region
      $region53: #{mycnn_forward.1} parent=11 // pred_check
        %p368 = pneg %p276
      $region54: #{mycnn_forward.1} parent=11 // pred_check_branch
        %370 = sbr.rel (%p368) target = $region56
      $region55: #{mycnn_forward.1} parent=11 // pred_region
        _
      $region56: #{mycnn_forward.1} parent=11 // pred_fallthru
        _
      // Predicated region
      $region57: #{mycnn_forward.1} parent=11 // pred_check
        %p371 = pneg %p297
      $region58: #{mycnn_forward.1} parent=11 // pred_check_branch
        %373 = sbr.rel (%p371) target = $region60
      $region59: #{mycnn_forward.1} parent=11 // pred_region
        _
      $region60: #{mycnn_forward.1} parent=11 // pred_fallthru
        _
    $region12: #{mycnn_forward.1} parent=5 // pred_fallthru
      _
    %p374 = scmp.lt.s32.totalorder %s19, 2
    // Predicated region
    $region61: #{mycnn_forward.1} parent=5 // pred_check
      %p375 = pneg %p374
    $region62: #{mycnn_forward.1} parent=5 // pred_check_branch
      %377 = sbr.rel (%p375) target = $region64
    $region63: #{mycnn_forward.1} parent=5 // pred_region
      // Predicated region
      $region65: #{mycnn_forward.1} parent=63 // pred_check
        %p378 = pneg %p39
      $region66: #{mycnn_forward.1} parent=63 // pred_check_branch
        %380 = sbr.rel (%p378) target = $region68
      $region67: #{mycnn_forward.1} parent=63 // pred_region
        %s381 = smul.u32 32, %s19
        %p382 = scmp.lt.s32.totalorder %s381, 63
        %s383 = scalar_select %p382, %s381, 63
        %s384 = smul.addr %s383, 5
        %s385 = smul.addr %s384, 4
        %s386 = scalar_lea.vmem %s0, %s385
        %s387 = smul.u32 32, %s19
      $region68: #{mycnn_forward.1} parent=63 // pred_fallthru
        _
    $region64: #{mycnn_forward.1} parent=5 // pred_fallthru
      _
    %p388 = scmp.le.s32.totalorder 1, %s19
    %p389 = scmp.lt.s32.totalorder %s19, 3
    %p390 = pnand %p388, %p389
    %p391 = pneg %p390
    // Predicated region
    $region69: #{mycnn_forward.1} parent=5 // pred_check
      _
    $region70: #{mycnn_forward.1} parent=5 // pred_check_branch
      %393 = sbr.rel (%p390) target = $region72
    $region71: #{mycnn_forward.1} parent=5 // pred_region
      %s394 = ssub.s32 %s19, 1
      %s395 = smul.u32 32, %s24
      %p396 = scmp.lt.s32.totalorder %s395, 63
      %s397 = scalar_select %p396, %s395, 63
      %s398 = smul.addr %s397, 5
      %s399 = smul.addr %s398, 4
      %s400 = scalar_lea.vmem %s0, %s399
      %p401 = pneg %p45
      %p402 = pneg %p42
      %p403 = pneg %p66
      %p404 = pneg %p63
      %p405 = pneg %p87
      %p406 = pneg %p84
      %p407 = pneg %p108
      %p408 = pneg %p105
      %p409 = pneg %p129
      %p410 = pneg %p126
      %p411 = pneg %p150
      %p412 = pneg %p147
      %p413 = pneg %p171
      %p414 = pneg %p168
      %p415 = pneg %p192
      %p416 = pneg %p189
      %p417 = pneg %p213
      %p418 = pneg %p210
      %p419 = pneg %p234
      %p420 = pneg %p231
      %p421 = pneg %p255
      %p422 = pneg %p252
      %p423 = pneg %p276
      %p424 = pneg %p273
      %p425 = pneg %p297
      %p426 = pneg %p294
      %p427 = pneg %p323
      %p428 = pneg %p320
      %s429 = smul.u32 4, %s24
      %p430 = scmp.lt.s32.totalorder %s429, 7
      %s431 = scalar_select %p430, %s429, 7
      %s432 = smul.addr %s431, 8
      %s433 = scalar_lea.vmem %s13, %s432
      %s434 = smul.u32 32, %s24
      %p435 = scmp.lt.s32.totalorder %s434, 63
      %s436 = scalar_select %p435, %s434, 63
      %s437 = smul.addr %s436, 5
      %s438 = smul.addr %s437, 4
      %s439 = scalar_lea.vmem %s0, %s438
      %s440 = smul.u32 32, %s24
      %s441 = smul.u32 4, %s24
      %p442 = scmp.lt.s32.totalorder %s441, 7
      %s443 = scalar_select %p442, %s441, 7
      %s444 = smul.addr %s443, 8
      %s445 = scalar_lea.vmem %s13, %s444
      %s446 = smul.u32 4, %s24
      %v448 = vld [vmem:[%s439] sm:$0xf]
      %v449 = vld [vmem:[%s439 + $0x4] sm:$0xf]
      %v450 = vld [vmem:[%s439 + $0x8] sm:$0xf]
      %v451 = vld [vmem:[%s439 + $0xc] sm:$0xf]
      %v452 = vld [vmem:[%s439 + $0x10] sm:$0x3]
      %v453 = vld [vmem:[%s439 + $0x14] sm:$0xf]
      %v454 = vld [vmem:[%s439 + $0x18] sm:$0xf]
      %v455 = vld [vmem:[%s439 + $0x1c] sm:$0xf]
      %v456 = vld [vmem:[%s439 + $0x20] sm:$0xf]
      %v457 = vld [vmem:[%s439 + $0x24] sm:$0x3]
      %v458 = vld [vmem:[%s439 + $0x28] sm:$0xf]
      %v459 = vld [vmem:[%s439 + $0x2c] sm:$0xf]
      %v460 = vld [vmem:[%s439 + $0x30] sm:$0xf]
      %v461 = vld [vmem:[%s439 + $0x34] sm:$0xf]
      %v462 = vld [vmem:[%s439 + $0x38] sm:$0x3]
      %v463 = vld [vmem:[%s439 + $0x3c] sm:$0xf]
      %v464 = vld [vmem:[%s439 + $0x40] sm:$0xf]
      %v465 = vld [vmem:[%s439 + $0x44] sm:$0xf]
      %v466 = vld [vmem:[%s439 + $0x48] sm:$0xf]
      %v467 = vld [vmem:[%s439 + $0x4c] sm:$0x3]
      %v468 = vld [vmem:[%s439 + $0x50] sm:$0xf]
      %v469 = vld [vmem:[%s439 + $0x54] sm:$0xf]
      %v470 = vld [vmem:[%s439 + $0x58] sm:$0xf]
      %v471 = vld [vmem:[%s439 + $0x5c] sm:$0xf]
      %v472 = vld [vmem:[%s439 + $0x60] sm:$0x3]
      %v473 = vld [vmem:[%s439 + $0x64] sm:$0xf]
      %v474 = vld [vmem:[%s439 + $0x68] sm:$0xf]
      %v475 = vld [vmem:[%s439 + $0x6c] sm:$0xf]
      %v476 = vld [vmem:[%s439 + $0x70] sm:$0xf]
      %v477 = vld [vmem:[%s439 + $0x74] sm:$0x3]
      %v478 = vld [vmem:[%s439 + $0x78] sm:$0xf]
      %v479 = vld [vmem:[%s439 + $0x7c] sm:$0xf]
      %v480 = vld [vmem:[%s439 + $0x80] sm:$0xf]
      %v481 = vld [vmem:[%s439 + $0x84] sm:$0xf]
      %v482 = vld [vmem:[%s439 + $0x88] sm:$0x3]
      %v483 = vld [vmem:[%s439 + $0x8c] sm:$0xf]
      %v484 = vld [vmem:[%s439 + $0x90] sm:$0xf]
      %v485 = vld [vmem:[%s439 + $0x94] sm:$0xf]
      %v486 = vld [vmem:[%s439 + $0x98] sm:$0xf]
      %v487 = vld [vmem:[%s439 + $0x9c] sm:$0x3]
      %v488 = vld [vmem:[%s439 + $0xa0] sm:$0xf]
      %v489 = vld [vmem:[%s439 + $0xa4] sm:$0xf]
      %v490 = vld [vmem:[%s439 + $0xa8] sm:$0xf]
      %v491 = vld [vmem:[%s439 + $0xac] sm:$0xf]
      %v492 = vld [vmem:[%s439 + $0xb0] sm:$0x3]
      %v493 = vld [vmem:[%s439 + $0xb4] sm:$0xf]
      %v494 = vld [vmem:[%s439 + $0xb8] sm:$0xf]
      %v495 = vld [vmem:[%s439 + $0xbc] sm:$0xf]
      %v496 = vld [vmem:[%s439 + $0xc0] sm:$0xf]
      %v497 = vld [vmem:[%s439 + $0xc4] sm:$0x3]
      %v498 = vld [vmem:[%s439 + $0xc8] sm:$0xf]
      %v499 = vld [vmem:[%s439 + $0xcc] sm:$0xf]
      %v500 = vld [vmem:[%s439 + $0xd0] sm:$0xf]
      %v501 = vld [vmem:[%s439 + $0xd4] sm:$0xf]
      %v502 = vld [vmem:[%s439 + $0xd8] sm:$0x3]
      %v503 = vld [vmem:[%s439 + $0xdc] sm:$0xf]
      %v504 = vld [vmem:[%s439 + $0xe0] sm:$0xf]
      %v505 = vld [vmem:[%s439 + $0xe4] sm:$0xf]
      %v506 = vld [vmem:[%s439 + $0xe8] sm:$0xf]
      %v507 = vld [vmem:[%s439 + $0xec] sm:$0x3]
      %v508 = vld [vmem:[%s439 + $0xf0] sm:$0xf]
      %v509 = vld [vmem:[%s439 + $0xf4] sm:$0xf]
      %v510 = vld [vmem:[%s439 + $0xf8] sm:$0xf]
      %v511 = vld [vmem:[%s439 + $0xfc] sm:$0xf]
      %v512 = vld [vmem:[%s439 + $0x100] sm:$0x3]
      %v513 = vld [vmem:[%s439 + $0x104] sm:$0xf]
      %v514 = vld [vmem:[%s439 + $0x108] sm:$0xf]
      %v515 = vld [vmem:[%s439 + $0x10c] sm:$0xf]
      %v516 = vld [vmem:[%s439 + $0x110] sm:$0xf]
      %v517 = vld [vmem:[%s439 + $0x114] sm:$0x3]
      %v518 = vld [vmem:[%s439 + $0x118] sm:$0xf]
      %v519 = vld [vmem:[%s439 + $0x11c] sm:$0xf]
      %v520 = vld [vmem:[%s439 + $0x120] sm:$0xf]
      %v521 = vld [vmem:[%s439 + $0x124] sm:$0xf]
      %v522 = vld [vmem:[%s439 + $0x128] sm:$0x3]
      %v523 = vld [vmem:[%s439 + $0x12c] sm:$0xf]
      %v524 = vld [vmem:[%s439 + $0x130] sm:$0xf]
      %v525 = vld [vmem:[%s439 + $0x134] sm:$0xf]
      %v526 = vld [vmem:[%s439 + $0x138] sm:$0xf]
      %v527 = vld [vmem:[%s439 + $0x13c] sm:$0x3]
      %v528 = vld [vmem:[%s439 + $0x140] sm:$0xf]
      %v529 = vld [vmem:[%s439 + $0x144] sm:$0xf]
      %v530 = vld [vmem:[%s439 + $0x148] sm:$0xf]
      %v531 = vld [vmem:[%s439 + $0x14c] sm:$0xf]
      %v532 = vld [vmem:[%s439 + $0x150] sm:$0x3]
      %v533 = vld [vmem:[%s439 + $0x154] sm:$0xf]
      %v534 = vld [vmem:[%s439 + $0x158] sm:$0xf]
      %v535 = vld [vmem:[%s439 + $0x15c] sm:$0xf]
      %v536 = vld [vmem:[%s439 + $0x160] sm:$0xf]
      %v537 = vld [vmem:[%s439 + $0x164] sm:$0x3]
      %v538 = vld [vmem:[%s439 + $0x168] sm:$0xf]
      %v539 = vld [vmem:[%s439 + $0x16c] sm:$0xf]
      %v540 = vld [vmem:[%s439 + $0x170] sm:$0xf]
      %v541 = vld [vmem:[%s439 + $0x174] sm:$0xf]
      %v542 = vld [vmem:[%s439 + $0x178] sm:$0x3]
      %v543 = vld [vmem:[%s439 + $0x17c] sm:$0xf]
      %v544 = vld [vmem:[%s439 + $0x180] sm:$0xf]
      %v545 = vld [vmem:[%s439 + $0x184] sm:$0xf]
      %v546 = vld [vmem:[%s439 + $0x188] sm:$0xf]
      %v547 = vld [vmem:[%s439 + $0x18c] sm:$0x3]
      %v548 = vld [vmem:[%s439 + $0x190] sm:$0xf]
      %v549 = vld [vmem:[%s439 + $0x194] sm:$0xf]
      %v550 = vld [vmem:[%s439 + $0x198] sm:$0xf]
      %v551 = vld [vmem:[%s439 + $0x19c] sm:$0xf]
      %v552 = vld [vmem:[%s439 + $0x1a0] sm:$0x3]
      %v553 = vld [vmem:[%s439 + $0x1a4] sm:$0xf]
      %v554 = vld [vmem:[%s439 + $0x1a8] sm:$0xf]
      %v555 = vld [vmem:[%s439 + $0x1ac] sm:$0xf]
      %v556 = vld [vmem:[%s439 + $0x1b0] sm:$0xf]
      %v557 = vld [vmem:[%s439 + $0x1b4] sm:$0x3]
      %v558 = vld [vmem:[%s439 + $0x1b8] sm:$0xf]
      %v559 = vld [vmem:[%s439 + $0x1bc] sm:$0xf]
      %v560 = vld [vmem:[%s439 + $0x1c0] sm:$0xf]
      %v561 = vld [vmem:[%s439 + $0x1c4] sm:$0xf]
      %v562 = vld [vmem:[%s439 + $0x1c8] sm:$0x3]
      %v563 = vld [vmem:[%s439 + $0x1cc] sm:$0xf]
      %v564 = vld [vmem:[%s439 + $0x1d0] sm:$0xf]
      %v565 = vld [vmem:[%s439 + $0x1d4] sm:$0xf]
      %v566 = vld [vmem:[%s439 + $0x1d8] sm:$0xf]
      %v567 = vld [vmem:[%s439 + $0x1dc] sm:$0x3]
      %v568 = vld [vmem:[%s439 + $0x1e0] sm:$0xf]
      %v569 = vld [vmem:[%s439 + $0x1e4] sm:$0xf]
      %v570 = vld [vmem:[%s439 + $0x1e8] sm:$0xf]
      %v571 = vld [vmem:[%s439 + $0x1ec] sm:$0xf]
      %v572 = vld [vmem:[%s439 + $0x1f0] sm:$0x3]
      %v573 = vld [vmem:[%s439 + $0x1f4] sm:$0xf]
      %v574 = vld [vmem:[%s439 + $0x1f8] sm:$0xf]
      %v575 = vld [vmem:[%s439 + $0x1fc] sm:$0xf]
      %v576 = vld [vmem:[%s439 + $0x200] sm:$0xf]
      %v577 = vld [vmem:[%s439 + $0x204] sm:$0x3]
      %v578 = vld [vmem:[%s439 + $0x208] sm:$0xf]
      %v579 = vld [vmem:[%s439 + $0x20c] sm:$0xf]
      %v580 = vld [vmem:[%s439 + $0x210] sm:$0xf]
      %v581 = vld [vmem:[%s439 + $0x214] sm:$0xf]
      %v582 = vld [vmem:[%s439 + $0x218] sm:$0x3]
      %v583 = vld [vmem:[%s439 + $0x21c] sm:$0xf]
      %v584 = vld [vmem:[%s439 + $0x220] sm:$0xf]
      %v585 = vld [vmem:[%s439 + $0x224] sm:$0xf]
      %v586 = vld [vmem:[%s439 + $0x228] sm:$0xf]
      %v587 = vld [vmem:[%s439 + $0x22c] sm:$0x3]
      %v588 = vld [vmem:[%s439 + $0x230] sm:$0xf]
      %v589 = vld [vmem:[%s439 + $0x234] sm:$0xf]
      %v590 = vld [vmem:[%s439 + $0x238] sm:$0xf]
      %v591 = vld [vmem:[%s439 + $0x23c] sm:$0xf]
      %v592 = vld [vmem:[%s439 + $0x240] sm:$0x3]
      %v593 = vld [vmem:[%s439 + $0x244] sm:$0xf]
      %v594 = vld [vmem:[%s439 + $0x248] sm:$0xf]
      %v595 = vld [vmem:[%s439 + $0x24c] sm:$0xf]
      %v596 = vld [vmem:[%s439 + $0x250] sm:$0xf]
      %v597 = vld [vmem:[%s439 + $0x254] sm:$0x3]
      %v598 = vld [vmem:[%s439 + $0x258] sm:$0xf]
      %v599 = vld [vmem:[%s439 + $0x25c] sm:$0xf]
      %v600 = vld [vmem:[%s439 + $0x260] sm:$0xf]
      %v601 = vld [vmem:[%s439 + $0x264] sm:$0xf]
      %v602 = vld [vmem:[%s439 + $0x268] sm:$0x3]
      %v603 = vld [vmem:[%s439 + $0x26c] sm:$0xf]
      %v604 = vld [vmem:[%s439 + $0x270] sm:$0xf]
      %v605 = vld [vmem:[%s439 + $0x274] sm:$0xf]
      %v606 = vld [vmem:[%s439 + $0x278] sm:$0xf]
      %v607 = vld [vmem:[%s439 + $0x27c] sm:$0x3]
      %v736 = vunpack.c.l.b16 %v448
      %v737 = vunpack.c.l.b16 %v449
      %v738 = vunpack.c.l.b16 %v450
      %v739 = vunpack.c.l.b16 %v451
      %v740 = vunpack.c.l.b16 %v453
      %v741 = vunpack.c.l.b16 %v454
      %v742 = vunpack.c.l.b16 %v455
      %v743 = vunpack.c.l.b16 %v456
      %v744 = vunpack.c.l.b16 %v458
      %v745 = vunpack.c.l.b16 %v459
      %v746 = vunpack.c.l.b16 %v460
      %v747 = vunpack.c.l.b16 %v461
      %v748 = vunpack.c.l.b16 %v463
      %v749 = vunpack.c.l.b16 %v464
      %v750 = vunpack.c.l.b16 %v465
      %v751 = vunpack.c.l.b16 %v466
      %v752 = vunpack.c.l.b16 %v468
      %v753 = vunpack.c.l.b16 %v469
      %v754 = vunpack.c.l.b16 %v470
      %v755 = vunpack.c.l.b16 %v471
      %v756 = vunpack.c.l.b16 %v473
      %v757 = vunpack.c.l.b16 %v474
      %v758 = vunpack.c.l.b16 %v475
      %v759 = vunpack.c.l.b16 %v476
      %v760 = vunpack.c.l.b16 %v478
      %v761 = vunpack.c.l.b16 %v479
      %v762 = vunpack.c.l.b16 %v480
      %v763 = vunpack.c.l.b16 %v481
      %v764 = vunpack.c.l.b16 %v483
      %v765 = vunpack.c.l.b16 %v484
      %v766 = vunpack.c.l.b16 %v485
      %v767 = vunpack.c.l.b16 %v486
      %v768 = vunpack.c.l.b16 %v488
      %v769 = vunpack.c.l.b16 %v489
      %v770 = vunpack.c.l.b16 %v490
      %v771 = vunpack.c.l.b16 %v491
      %v772 = vunpack.c.l.b16 %v493
      %v773 = vunpack.c.l.b16 %v494
      %v774 = vunpack.c.l.b16 %v495
      %v775 = vunpack.c.l.b16 %v496
      %v776 = vunpack.c.l.b16 %v498
      %v777 = vunpack.c.l.b16 %v499
      %v778 = vunpack.c.l.b16 %v500
      %v779 = vunpack.c.l.b16 %v501
      %v780 = vunpack.c.l.b16 %v503
      %v781 = vunpack.c.l.b16 %v504
      %v782 = vunpack.c.l.b16 %v505
      %v783 = vunpack.c.l.b16 %v506
      %v784 = vunpack.c.l.b16 %v508
      %v785 = vunpack.c.l.b16 %v509
      %v786 = vunpack.c.l.b16 %v510
      %v787 = vunpack.c.l.b16 %v511
      %v788 = vunpack.c.l.b16 %v513
      %v789 = vunpack.c.l.b16 %v514
      %v790 = vunpack.c.l.b16 %v515
      %v791 = vunpack.c.l.b16 %v516
      %v792 = vunpack.c.l.b16 %v518
      %v793 = vunpack.c.l.b16 %v519
      %v794 = vunpack.c.l.b16 %v520
      %v795 = vunpack.c.l.b16 %v521
      %v796 = vunpack.c.l.b16 %v523
      %v797 = vunpack.c.l.b16 %v524
      %v798 = vunpack.c.l.b16 %v525
      %v799 = vunpack.c.l.b16 %v526
      %v800 = vunpack.c.l.b16 %v528
      %v801 = vunpack.c.l.b16 %v529
      %v802 = vunpack.c.l.b16 %v530
      %v803 = vunpack.c.l.b16 %v531
      %v804 = vunpack.c.l.b16 %v533
      %v805 = vunpack.c.l.b16 %v534
      %v806 = vunpack.c.l.b16 %v535
      %v807 = vunpack.c.l.b16 %v536
      %v808 = vunpack.c.l.b16 %v538
      %v809 = vunpack.c.l.b16 %v539
      %v810 = vunpack.c.l.b16 %v540
      %v811 = vunpack.c.l.b16 %v541
      %v812 = vunpack.c.l.b16 %v543
      %v813 = vunpack.c.l.b16 %v544
      %v814 = vunpack.c.l.b16 %v545
      %v815 = vunpack.c.l.b16 %v546
      %v816 = vunpack.c.l.b16 %v548
      %v817 = vunpack.c.l.b16 %v549
      %v818 = vunpack.c.l.b16 %v550
      %v819 = vunpack.c.l.b16 %v551
      %v820 = vunpack.c.l.b16 %v553
      %v821 = vunpack.c.l.b16 %v554
      %v822 = vunpack.c.l.b16 %v555
      %v823 = vunpack.c.l.b16 %v556
      %v824 = vunpack.c.l.b16 %v558
      %v825 = vunpack.c.l.b16 %v559
      %v826 = vunpack.c.l.b16 %v560
      %v827 = vunpack.c.l.b16 %v561
      %v828 = vunpack.c.l.b16 %v563
      %v829 = vunpack.c.l.b16 %v564
      %v830 = vunpack.c.l.b16 %v565
      %v831 = vunpack.c.l.b16 %v566
      %v832 = vunpack.c.l.b16 %v568
      %v833 = vunpack.c.l.b16 %v569
      %v834 = vunpack.c.l.b16 %v570
      %v835 = vunpack.c.l.b16 %v571
      %v836 = vunpack.c.l.b16 %v573
      %v837 = vunpack.c.l.b16 %v574
      %v838 = vunpack.c.l.b16 %v575
      %v839 = vunpack.c.l.b16 %v576
      %v840 = vunpack.c.l.b16 %v578
      %v841 = vunpack.c.l.b16 %v579
      %v842 = vunpack.c.l.b16 %v580
      %v843 = vunpack.c.l.b16 %v581
      %v844 = vunpack.c.l.b16 %v583
      %v845 = vunpack.c.l.b16 %v584
      %v846 = vunpack.c.l.b16 %v585
      %v847 = vunpack.c.l.b16 %v586
      %v848 = vunpack.c.l.b16 %v588
      %v849 = vunpack.c.l.b16 %v589
      %v850 = vunpack.c.l.b16 %v590
      %v851 = vunpack.c.l.b16 %v591
      %v852 = vunpack.c.l.b16 %v593
      %v853 = vunpack.c.l.b16 %v594
      %v854 = vunpack.c.l.b16 %v595
      %v855 = vunpack.c.l.b16 %v596
      %v856 = vunpack.c.l.b16 %v598
      %v857 = vunpack.c.l.b16 %v599
      %v858 = vunpack.c.l.b16 %v600
      %v859 = vunpack.c.l.b16 %v601
      %v860 = vunpack.c.l.b16 %v603
      %v861 = vunpack.c.l.b16 %v604
      %v862 = vunpack.c.l.b16 %v605
      %v863 = vunpack.c.l.b16 %v606
      %v864 = vpack.c.b16 %v737, %v736
      %v865 = vpack.c.b16 %v739, %v738
      %v866 = vpack.c.b16 %v741, %v740
      %v867 = vpack.c.b16 %v743, %v742
      %v868 = vpack.c.b16 %v745, %v744
      %v869 = vpack.c.b16 %v747, %v746
      %v870 = vpack.c.b16 %v749, %v748
      %v871 = vpack.c.b16 %v751, %v750
      %v872 = vpack.c.b16 %v753, %v752
      %v873 = vpack.c.b16 %v755, %v754
      %v874 = vpack.c.b16 %v757, %v756
      %v875 = vpack.c.b16 %v759, %v758
      %v876 = vpack.c.b16 %v761, %v760
      %v877 = vpack.c.b16 %v763, %v762
      %v878 = vpack.c.b16 %v765, %v764
      %v879 = vpack.c.b16 %v767, %v766
      %v880 = vpack.c.b16 %v769, %v768
      %v881 = vpack.c.b16 %v771, %v770
      %v882 = vpack.c.b16 %v773, %v772
      %v883 = vpack.c.b16 %v775, %v774
      %v884 = vpack.c.b16 %v777, %v776
      %v885 = vpack.c.b16 %v779, %v778
      %v886 = vpack.c.b16 %v781, %v780
      %v887 = vpack.c.b16 %v783, %v782
      %v888 = vpack.c.b16 %v785, %v784
      %v889 = vpack.c.b16 %v787, %v786
      %v890 = vpack.c.b16 %v789, %v788
      %v891 = vpack.c.b16 %v791, %v790
      %v892 = vpack.c.b16 %v793, %v792
      %v893 = vpack.c.b16 %v795, %v794
      %v894 = vpack.c.b16 %v797, %v796
      %v895 = vpack.c.b16 %v799, %v798
      %v896 = vpack.c.b16 %v801, %v800
      %v897 = vpack.c.b16 %v803, %v802
      %v898 = vpack.c.b16 %v805, %v804
      %v899 = vpack.c.b16 %v807, %v806
      %v900 = vpack.c.b16 %v809, %v808
      %v901 = vpack.c.b16 %v811, %v810
      %v902 = vpack.c.b16 %v813, %v812
      %v903 = vpack.c.b16 %v815, %v814
      %v904 = vpack.c.b16 %v817, %v816
      %v905 = vpack.c.b16 %v819, %v818
      %v906 = vpack.c.b16 %v821, %v820
      %v907 = vpack.c.b16 %v823, %v822
      %v908 = vpack.c.b16 %v825, %v824
      %v909 = vpack.c.b16 %v827, %v826
      %v910 = vpack.c.b16 %v829, %v828
      %v911 = vpack.c.b16 %v831, %v830
      %v912 = vpack.c.b16 %v833, %v832
      %v913 = vpack.c.b16 %v835, %v834
      %v914 = vpack.c.b16 %v837, %v836
      %v915 = vpack.c.b16 %v839, %v838
      %v916 = vpack.c.b16 %v841, %v840
      %v917 = vpack.c.b16 %v843, %v842
      %v918 = vpack.c.b16 %v845, %v844
      %v919 = vpack.c.b16 %v847, %v846
      %v920 = vpack.c.b16 %v849, %v848
      %v921 = vpack.c.b16 %v851, %v850
      %v922 = vpack.c.b16 %v853, %v852
      %v923 = vpack.c.b16 %v855, %v854
      %v924 = vpack.c.b16 %v857, %v856
      %v925 = vpack.c.b16 %v859, %v858
      %v926 = vpack.c.b16 %v861, %v860
      %v927 = vpack.c.b16 %v863, %v862
      %v960 = vunpack.c.l.b16 %v452
      %v961 = vunpack.c.l.b16 %v457
      %v962 = vunpack.c.l.b16 %v462
      %v963 = vunpack.c.l.b16 %v467
      %v964 = vunpack.c.l.b16 %v472
      %v965 = vunpack.c.l.b16 %v477
      %v966 = vunpack.c.l.b16 %v482
      %v967 = vunpack.c.l.b16 %v487
      %v968 = vunpack.c.l.b16 %v492
      %v969 = vunpack.c.l.b16 %v497
      %v970 = vunpack.c.l.b16 %v502
      %v971 = vunpack.c.l.b16 %v507
      %v972 = vunpack.c.l.b16 %v512
      %v973 = vunpack.c.l.b16 %v517
      %v974 = vunpack.c.l.b16 %v522
      %v975 = vunpack.c.l.b16 %v527
      %v976 = vunpack.c.l.b16 %v532
      %v977 = vunpack.c.l.b16 %v537
      %v978 = vunpack.c.l.b16 %v542
      %v979 = vunpack.c.l.b16 %v547
      %v980 = vunpack.c.l.b16 %v552
      %v981 = vunpack.c.l.b16 %v557
      %v982 = vunpack.c.l.b16 %v562
      %v983 = vunpack.c.l.b16 %v567
      %v984 = vunpack.c.l.b16 %v572
      %v985 = vunpack.c.l.b16 %v577
      %v986 = vunpack.c.l.b16 %v582
      %v987 = vunpack.c.l.b16 %v587
      %v988 = vunpack.c.l.b16 %v592
      %v989 = vunpack.c.l.b16 %v597
      %v990 = vunpack.c.l.b16 %v602
      %v991 = vunpack.c.l.b16 %v607
      %v992 = vpack.c.b16 %v960, %v960
      %v993 = vpack.c.b16 %v961, %v961
      %v994 = vpack.c.b16 %v962, %v962
      %v995 = vpack.c.b16 %v963, %v963
      %v996 = vpack.c.b16 %v964, %v964
      %v997 = vpack.c.b16 %v965, %v965
      %v998 = vpack.c.b16 %v966, %v966
      %v999 = vpack.c.b16 %v967, %v967
      %v1000 = vpack.c.b16 %v968, %v968
      %v1001 = vpack.c.b16 %v969, %v969
      %v1002 = vpack.c.b16 %v970, %v970
      %v1003 = vpack.c.b16 %v971, %v971
      %v1004 = vpack.c.b16 %v972, %v972
      %v1005 = vpack.c.b16 %v973, %v973
      %v1006 = vpack.c.b16 %v974, %v974
      %v1007 = vpack.c.b16 %v975, %v975
      %v1008 = vpack.c.b16 %v976, %v976
      %v1009 = vpack.c.b16 %v977, %v977
      %v1010 = vpack.c.b16 %v978, %v978
      %v1011 = vpack.c.b16 %v979, %v979
      %v1012 = vpack.c.b16 %v980, %v980
      %v1013 = vpack.c.b16 %v981, %v981
      %v1014 = vpack.c.b16 %v982, %v982
      %v1015 = vpack.c.b16 %v983, %v983
      %v1016 = vpack.c.b16 %v984, %v984
      %v1017 = vpack.c.b16 %v985, %v985
      %v1018 = vpack.c.b16 %v986, %v986
      %v1019 = vpack.c.b16 %v987, %v987
      %v1020 = vpack.c.b16 %v988, %v988
      %v1021 = vpack.c.b16 %v989, %v989
      %v1022 = vpack.c.b16 %v990, %v990
      %v1023 = vpack.c.b16 %v991, %v991
      %vm1024 = vsmask.f32 7424
      %v1026 = vshrl.u32 %v864, 16
      %v1028 = vshll.u32 %v864, 16
      %v1030 = vrot.slane %v1028, 1
      %v1031 = vor.u32 %v1026, %v1030
      %v1033 = vshll.u32 %v865, 16
      %v1035 = vrot.slane %v1033, 1
      %v1036 = vsel %vm1024, %v1031, %v1035
      %v1037 = vshrl.u32 %v865, 16
      %v1039 = vor.u32 %v1037, %v1035
      %v1041 = vshll.u32 %v992, 16
      %v1043 = vrot.slane %v1041, 1
      %v1044 = vsel %vm1024, %v1039, %v1043
      %v1046 = vshrl.u32 %v866, 16
      %v1048 = vshll.u32 %v866, 16
      %v1050 = vrot.slane %v1048, 1
      %v1051 = vor.u32 %v1046, %v1050
      %v1053 = vshll.u32 %v867, 16
      %v1055 = vrot.slane %v1053, 1
      %v1056 = vsel %vm1024, %v1051, %v1055
      %v1057 = vshrl.u32 %v867, 16
      %v1059 = vor.u32 %v1057, %v1055
      %v1061 = vshll.u32 %v993, 16
      %v1063 = vrot.slane %v1061, 1
      %v1064 = vsel %vm1024, %v1059, %v1063
      %v1066 = vshrl.u32 %v868, 16
      %v1068 = vshll.u32 %v868, 16
      %v1070 = vrot.slane %v1068, 1
      %v1071 = vor.u32 %v1066, %v1070
      %v1073 = vshll.u32 %v869, 16
      %v1075 = vrot.slane %v1073, 1
      %v1076 = vsel %vm1024, %v1071, %v1075
      %v1077 = vshrl.u32 %v869, 16
      %v1079 = vor.u32 %v1077, %v1075
      %v1081 = vshll.u32 %v994, 16
      %v1083 = vrot.slane %v1081, 1
      %v1084 = vsel %vm1024, %v1079, %v1083
      %v1086 = vshrl.u32 %v870, 16
      %v1088 = vshll.u32 %v870, 16
      %v1090 = vrot.slane %v1088, 1
      %v1091 = vor.u32 %v1086, %v1090
      %v1093 = vshll.u32 %v871, 16
      %v1095 = vrot.slane %v1093, 1
      %v1096 = vsel %vm1024, %v1091, %v1095
      %v1097 = vshrl.u32 %v871, 16
      %v1099 = vor.u32 %v1097, %v1095
      %v1101 = vshll.u32 %v995, 16
      %v1103 = vrot.slane %v1101, 1
      %v1104 = vsel %vm1024, %v1099, %v1103
      %v1106 = vshrl.u32 %v872, 16
      %v1108 = vshll.u32 %v872, 16
      %v1110 = vrot.slane %v1108, 1
      %v1111 = vor.u32 %v1106, %v1110
      %v1113 = vshll.u32 %v873, 16
      %v1115 = vrot.slane %v1113, 1
      %v1116 = vsel %vm1024, %v1111, %v1115
      %v1117 = vshrl.u32 %v873, 16
      %v1119 = vor.u32 %v1117, %v1115
      %v1121 = vshll.u32 %v996, 16
      %v1123 = vrot.slane %v1121, 1
      %v1124 = vsel %vm1024, %v1119, %v1123
      %v1126 = vshrl.u32 %v874, 16
      %v1128 = vshll.u32 %v874, 16
      %v1130 = vrot.slane %v1128, 1
      %v1131 = vor.u32 %v1126, %v1130
      %v1133 = vshll.u32 %v875, 16
      %v1135 = vrot.slane %v1133, 1
      %v1136 = vsel %vm1024, %v1131, %v1135
      %v1137 = vshrl.u32 %v875, 16
      %v1139 = vor.u32 %v1137, %v1135
      %v1141 = vshll.u32 %v997, 16
      %v1143 = vrot.slane %v1141, 1
      %v1144 = vsel %vm1024, %v1139, %v1143
      %v1146 = vshrl.u32 %v876, 16
      %v1148 = vshll.u32 %v876, 16
      %v1150 = vrot.slane %v1148, 1
      %v1151 = vor.u32 %v1146, %v1150
      %v1153 = vshll.u32 %v877, 16
      %v1155 = vrot.slane %v1153, 1
      %v1156 = vsel %vm1024, %v1151, %v1155
      %v1157 = vshrl.u32 %v877, 16
      %v1159 = vor.u32 %v1157, %v1155
      %v1161 = vshll.u32 %v998, 16
      %v1163 = vrot.slane %v1161, 1
      %v1164 = vsel %vm1024, %v1159, %v1163
      %v1166 = vshrl.u32 %v878, 16
      %v1168 = vshll.u32 %v878, 16
      %v1170 = vrot.slane %v1168, 1
      %v1171 = vor.u32 %v1166, %v1170
      %v1173 = vshll.u32 %v879, 16
      %v1175 = vrot.slane %v1173, 1
      %v1176 = vsel %vm1024, %v1171, %v1175
      %v1177 = vshrl.u32 %v879, 16
      %v1179 = vor.u32 %v1177, %v1175
      %v1181 = vshll.u32 %v999, 16
      %v1183 = vrot.slane %v1181, 1
      %v1184 = vsel %vm1024, %v1179, %v1183
      %v1186 = vshrl.u32 %v880, 16
      %v1188 = vshll.u32 %v880, 16
      %v1190 = vrot.slane %v1188, 1
      %v1191 = vor.u32 %v1186, %v1190
      %v1193 = vshll.u32 %v881, 16
      %v1195 = vrot.slane %v1193, 1
      %v1196 = vsel %vm1024, %v1191, %v1195
      %v1197 = vshrl.u32 %v881, 16
      %v1199 = vor.u32 %v1197, %v1195
      %v1201 = vshll.u32 %v1000, 16
      %v1203 = vrot.slane %v1201, 1
      %v1204 = vsel %vm1024, %v1199, %v1203
      %v1206 = vshrl.u32 %v882, 16
      %v1208 = vshll.u32 %v882, 16
      %v1210 = vrot.slane %v1208, 1
      %v1211 = vor.u32 %v1206, %v1210
      %v1213 = vshll.u32 %v883, 16
      %v1215 = vrot.slane %v1213, 1
      %v1216 = vsel %vm1024, %v1211, %v1215
      %v1217 = vshrl.u32 %v883, 16
      %v1219 = vor.u32 %v1217, %v1215
      %v1221 = vshll.u32 %v1001, 16
      %v1223 = vrot.slane %v1221, 1
      %v1224 = vsel %vm1024, %v1219, %v1223
      %v1226 = vshrl.u32 %v884, 16
      %v1228 = vshll.u32 %v884, 16
      %v1230 = vrot.slane %v1228, 1
      %v1231 = vor.u32 %v1226, %v1230
      %v1233 = vshll.u32 %v885, 16
      %v1235 = vrot.slane %v1233, 1
      %v1236 = vsel %vm1024, %v1231, %v1235
      %v1237 = vshrl.u32 %v885, 16
      %v1239 = vor.u32 %v1237, %v1235
      %v1241 = vshll.u32 %v1002, 16
      %v1243 = vrot.slane %v1241, 1
      %v1244 = vsel %vm1024, %v1239, %v1243
      %v1246 = vshrl.u32 %v886, 16
      %v1248 = vshll.u32 %v886, 16
      %v1250 = vrot.slane %v1248, 1
      %v1251 = vor.u32 %v1246, %v1250
      %v1253 = vshll.u32 %v887, 16
      %v1255 = vrot.slane %v1253, 1
      %v1256 = vsel %vm1024, %v1251, %v1255
      %v1257 = vshrl.u32 %v887, 16
      %v1259 = vor.u32 %v1257, %v1255
      %v1261 = vshll.u32 %v1003, 16
      %v1263 = vrot.slane %v1261, 1
      %v1264 = vsel %vm1024, %v1259, %v1263
      %v1266 = vshrl.u32 %v888, 16
      %v1268 = vshll.u32 %v888, 16
      %v1270 = vrot.slane %v1268, 1
      %v1271 = vor.u32 %v1266, %v1270
      %v1273 = vshll.u32 %v889, 16
      %v1275 = vrot.slane %v1273, 1
      %v1276 = vsel %vm1024, %v1271, %v1275
      %v1277 = vshrl.u32 %v889, 16
      %v1279 = vor.u32 %v1277, %v1275
      %v1281 = vshll.u32 %v1004, 16
      %v1283 = vrot.slane %v1281, 1
      %v1284 = vsel %vm1024, %v1279, %v1283
      %v1286 = vshrl.u32 %v890, 16
      %v1288 = vshll.u32 %v890, 16
      %v1290 = vrot.slane %v1288, 1
      %v1291 = vor.u32 %v1286, %v1290
      %v1293 = vshll.u32 %v891, 16
      %v1295 = vrot.slane %v1293, 1
      %v1296 = vsel %vm1024, %v1291, %v1295
      %v1297 = vshrl.u32 %v891, 16
      %v1299 = vor.u32 %v1297, %v1295
      %v1301 = vshll.u32 %v1005, 16
      %v1303 = vrot.slane %v1301, 1
      %v1304 = vsel %vm1024, %v1299, %v1303
      %v1306 = vshrl.u32 %v892, 16
      %v1308 = vshll.u32 %v892, 16
      %v1310 = vrot.slane %v1308, 1
      %v1311 = vor.u32 %v1306, %v1310
      %v1313 = vshll.u32 %v893, 16
      %v1315 = vrot.slane %v1313, 1
      %v1316 = vsel %vm1024, %v1311, %v1315
      %v1317 = vshrl.u32 %v893, 16
      %v1319 = vor.u32 %v1317, %v1315
      %v1321 = vshll.u32 %v1006, 16
      %v1323 = vrot.slane %v1321, 1
      %v1324 = vsel %vm1024, %v1319, %v1323
      %v1326 = vshrl.u32 %v894, 16
      %v1328 = vshll.u32 %v894, 16
      %v1330 = vrot.slane %v1328, 1
      %v1331 = vor.u32 %v1326, %v1330
      %v1333 = vshll.u32 %v895, 16
      %v1335 = vrot.slane %v1333, 1
      %v1336 = vsel %vm1024, %v1331, %v1335
      %v1337 = vshrl.u32 %v895, 16
      %v1339 = vor.u32 %v1337, %v1335
      %v1341 = vshll.u32 %v1007, 16
      %v1343 = vrot.slane %v1341, 1
      %v1344 = vsel %vm1024, %v1339, %v1343
      %v1346 = vshrl.u32 %v896, 16
      %v1348 = vshll.u32 %v896, 16
      %v1350 = vrot.slane %v1348, 1
      %v1351 = vor.u32 %v1346, %v1350
      %v1353 = vshll.u32 %v897, 16
      %v1355 = vrot.slane %v1353, 1
      %v1356 = vsel %vm1024, %v1351, %v1355
      %v1357 = vshrl.u32 %v897, 16
      %v1359 = vor.u32 %v1357, %v1355
      %v1361 = vshll.u32 %v1008, 16
      %v1363 = vrot.slane %v1361, 1
      %v1364 = vsel %vm1024, %v1359, %v1363
      %v1366 = vshrl.u32 %v898, 16
      %v1368 = vshll.u32 %v898, 16
      %v1370 = vrot.slane %v1368, 1
      %v1371 = vor.u32 %v1366, %v1370
      %v1373 = vshll.u32 %v899, 16
      %v1375 = vrot.slane %v1373, 1
      %v1376 = vsel %vm1024, %v1371, %v1375
      %v1377 = vshrl.u32 %v899, 16
      %v1379 = vor.u32 %v1377, %v1375
      %v1381 = vshll.u32 %v1009, 16
      %v1383 = vrot.slane %v1381, 1
      %v1384 = vsel %vm1024, %v1379, %v1383
      %v1386 = vshrl.u32 %v900, 16
      %v1388 = vshll.u32 %v900, 16
      %v1390 = vrot.slane %v1388, 1
      %v1391 = vor.u32 %v1386, %v1390
      %v1393 = vshll.u32 %v901, 16
      %v1395 = vrot.slane %v1393, 1
      %v1396 = vsel %vm1024, %v1391, %v1395
      %v1397 = vshrl.u32 %v901, 16
      %v1399 = vor.u32 %v1397, %v1395
      %v1401 = vshll.u32 %v1010, 16
      %v1403 = vrot.slane %v1401, 1
      %v1404 = vsel %vm1024, %v1399, %v1403
      %v1406 = vshrl.u32 %v902, 16
      %v1408 = vshll.u32 %v902, 16
      %v1410 = vrot.slane %v1408, 1
      %v1411 = vor.u32 %v1406, %v1410
      %v1413 = vshll.u32 %v903, 16
      %v1415 = vrot.slane %v1413, 1
      %v1416 = vsel %vm1024, %v1411, %v1415
      %v1417 = vshrl.u32 %v903, 16
      %v1419 = vor.u32 %v1417, %v1415
      %v1421 = vshll.u32 %v1011, 16
      %v1423 = vrot.slane %v1421, 1
      %v1424 = vsel %vm1024, %v1419, %v1423
      %v1426 = vshrl.u32 %v904, 16
      %v1428 = vshll.u32 %v904, 16
      %v1430 = vrot.slane %v1428, 1
      %v1431 = vor.u32 %v1426, %v1430
      %v1433 = vshll.u32 %v905, 16
      %v1435 = vrot.slane %v1433, 1
      %v1436 = vsel %vm1024, %v1431, %v1435
      %v1437 = vshrl.u32 %v905, 16
      %v1439 = vor.u32 %v1437, %v1435
      %v1441 = vshll.u32 %v1012, 16
      %v1443 = vrot.slane %v1441, 1
      %v1444 = vsel %vm1024, %v1439, %v1443
      %v1446 = vshrl.u32 %v906, 16
      %v1448 = vshll.u32 %v906, 16
      %v1450 = vrot.slane %v1448, 1
      %v1451 = vor.u32 %v1446, %v1450
      %v1453 = vshll.u32 %v907, 16
      %v1455 = vrot.slane %v1453, 1
      %v1456 = vsel %vm1024, %v1451, %v1455
      %v1457 = vshrl.u32 %v907, 16
      %v1459 = vor.u32 %v1457, %v1455
      %v1461 = vshll.u32 %v1013, 16
      %v1463 = vrot.slane %v1461, 1
      %v1464 = vsel %vm1024, %v1459, %v1463
      %v1466 = vshrl.u32 %v908, 16
      %v1468 = vshll.u32 %v908, 16
      %v1470 = vrot.slane %v1468, 1
      %v1471 = vor.u32 %v1466, %v1470
      %v1473 = vshll.u32 %v909, 16
      %v1475 = vrot.slane %v1473, 1
      %v1476 = vsel %vm1024, %v1471, %v1475
      %v1477 = vshrl.u32 %v909, 16
      %v1479 = vor.u32 %v1477, %v1475
      %v1481 = vshll.u32 %v1014, 16
      %v1483 = vrot.slane %v1481, 1
      %v1484 = vsel %vm1024, %v1479, %v1483
      %v1486 = vshrl.u32 %v910, 16
      %v1488 = vshll.u32 %v910, 16
      %v1490 = vrot.slane %v1488, 1
      %v1491 = vor.u32 %v1486, %v1490
      %v1493 = vshll.u32 %v911, 16
      %v1495 = vrot.slane %v1493, 1
      %v1496 = vsel %vm1024, %v1491, %v1495
      %v1497 = vshrl.u32 %v911, 16
      %v1499 = vor.u32 %v1497, %v1495
      %v1501 = vshll.u32 %v1015, 16
      %v1503 = vrot.slane %v1501, 1
      %v1504 = vsel %vm1024, %v1499, %v1503
      %v1506 = vshrl.u32 %v912, 16
      %v1508 = vshll.u32 %v912, 16
      %v1510 = vrot.slane %v1508, 1
      %v1511 = vor.u32 %v1506, %v1510
      %v1513 = vshll.u32 %v913, 16
      %v1515 = vrot.slane %v1513, 1
      %v1516 = vsel %vm1024, %v1511, %v1515
      %v1517 = vshrl.u32 %v913, 16
      %v1519 = vor.u32 %v1517, %v1515
      %v1521 = vshll.u32 %v1016, 16
      %v1523 = vrot.slane %v1521, 1
      %v1524 = vsel %vm1024, %v1519, %v1523
      %v1526 = vshrl.u32 %v914, 16
      %v1528 = vshll.u32 %v914, 16
      %v1530 = vrot.slane %v1528, 1
      %v1531 = vor.u32 %v1526, %v1530
      %v1533 = vshll.u32 %v915, 16
      %v1535 = vrot.slane %v1533, 1
      %v1536 = vsel %vm1024, %v1531, %v1535
      %v1537 = vshrl.u32 %v915, 16
      %v1539 = vor.u32 %v1537, %v1535
      %v1541 = vshll.u32 %v1017, 16
      %v1543 = vrot.slane %v1541, 1
      %v1544 = vsel %vm1024, %v1539, %v1543
      %v1546 = vshrl.u32 %v916, 16
      %v1548 = vshll.u32 %v916, 16
      %v1550 = vrot.slane %v1548, 1
      %v1551 = vor.u32 %v1546, %v1550
      %v1553 = vshll.u32 %v917, 16
      %v1555 = vrot.slane %v1553, 1
      %v1556 = vsel %vm1024, %v1551, %v1555
      %v1557 = vshrl.u32 %v917, 16
      %v1559 = vor.u32 %v1557, %v1555
      %v1561 = vshll.u32 %v1018, 16
      %v1563 = vrot.slane %v1561, 1
      %v1564 = vsel %vm1024, %v1559, %v1563
      %v1566 = vshrl.u32 %v918, 16
      %v1568 = vshll.u32 %v918, 16
      %v1570 = vrot.slane %v1568, 1
      %v1571 = vor.u32 %v1566, %v1570
      %v1573 = vshll.u32 %v919, 16
      %v1575 = vrot.slane %v1573, 1
      %v1576 = vsel %vm1024, %v1571, %v1575
      %v1577 = vshrl.u32 %v919, 16
      %v1579 = vor.u32 %v1577, %v1575
      %v1581 = vshll.u32 %v1019, 16
      %v1583 = vrot.slane %v1581, 1
      %v1584 = vsel %vm1024, %v1579, %v1583
      %v1586 = vshrl.u32 %v920, 16
      %v1588 = vshll.u32 %v920, 16
      %v1590 = vrot.slane %v1588, 1
      %v1591 = vor.u32 %v1586, %v1590
      %v1593 = vshll.u32 %v921, 16
      %v1595 = vrot.slane %v1593, 1
      %v1596 = vsel %vm1024, %v1591, %v1595
      %v1597 = vshrl.u32 %v921, 16
      %v1599 = vor.u32 %v1597, %v1595
      %v1601 = vshll.u32 %v1020, 16
      %v1603 = vrot.slane %v1601, 1
      %v1604 = vsel %vm1024, %v1599, %v1603
      %v1606 = vshrl.u32 %v922, 16
      %v1608 = vshll.u32 %v922, 16
      %v1610 = vrot.slane %v1608, 1
      %v1611 = vor.u32 %v1606, %v1610
      %v1613 = vshll.u32 %v923, 16
      %v1615 = vrot.slane %v1613, 1
      %v1616 = vsel %vm1024, %v1611, %v1615
      %v1617 = vshrl.u32 %v923, 16
      %v1619 = vor.u32 %v1617, %v1615
      %v1621 = vshll.u32 %v1021, 16
      %v1623 = vrot.slane %v1621, 1
      %v1624 = vsel %vm1024, %v1619, %v1623
      %v1626 = vshrl.u32 %v924, 16
      %v1628 = vshll.u32 %v924, 16
      %v1630 = vrot.slane %v1628, 1
      %v1631 = vor.u32 %v1626, %v1630
      %v1633 = vshll.u32 %v925, 16
      %v1635 = vrot.slane %v1633, 1
      %v1636 = vsel %vm1024, %v1631, %v1635
      %v1637 = vshrl.u32 %v925, 16
      %v1639 = vor.u32 %v1637, %v1635
      %v1641 = vshll.u32 %v1022, 16
      %v1643 = vrot.slane %v1641, 1
      %v1644 = vsel %vm1024, %v1639, %v1643
      %v1646 = vshrl.u32 %v926, 16
      %v1648 = vshll.u32 %v926, 16
      %v1650 = vrot.slane %v1648, 1
      %v1651 = vor.u32 %v1646, %v1650
      %v1653 = vshll.u32 %v927, 16
      %v1655 = vrot.slane %v1653, 1
      %v1656 = vsel %vm1024, %v1651, %v1655
      %v1657 = vshrl.u32 %v927, 16
      %v1659 = vor.u32 %v1657, %v1655
      %v1661 = vshll.u32 %v1023, 16
      %v1663 = vrot.slane %v1661, 1
      %v1664 = vsel %vm1024, %v1659, %v1663
      %1665 = vrot.lane.b32.xlu0 %v1036, 28
      %v1666 = vpop.permute.xlu0 %1665
      %1667 = vrot.lane.b32.xlu0 %v1044, 28
      %v1668 = vpop.permute.xlu0 %1667
      %1669 = vrot.lane.b32.xlu0 %v1056, 28
      %v1670 = vpop.permute.xlu0 %1669
      %1671 = vrot.lane.b32.xlu0 %v1064, 28
      %v1672 = vpop.permute.xlu0 %1671
      %1673 = vrot.lane.b32.xlu0 %v1076, 28
      %v1674 = vpop.permute.xlu0 %1673
      %1675 = vrot.lane.b32.xlu0 %v1084, 28
      %v1676 = vpop.permute.xlu0 %1675
      %1677 = vrot.lane.b32.xlu0 %v1096, 28
      %v1678 = vpop.permute.xlu0 %1677
      %1679 = vrot.lane.b32.xlu0 %v1104, 28
      %v1680 = vpop.permute.xlu0 %1679
      %1681 = vrot.lane.b32.xlu0 %v1116, 28
      %v1682 = vpop.permute.xlu0 %1681
      %1683 = vrot.lane.b32.xlu0 %v1124, 28
      %v1684 = vpop.permute.xlu0 %1683
      %1685 = vrot.lane.b32.xlu0 %v1136, 28
      %v1686 = vpop.permute.xlu0 %1685
      %1687 = vrot.lane.b32.xlu0 %v1144, 28
      %v1688 = vpop.permute.xlu0 %1687
      %1689 = vrot.lane.b32.xlu0 %v1156, 28
      %v1690 = vpop.permute.xlu0 %1689
      %1691 = vrot.lane.b32.xlu0 %v1164, 28
      %v1692 = vpop.permute.xlu0 %1691
      %1693 = vrot.lane.b32.xlu0 %v1176, 28
      %v1694 = vpop.permute.xlu0 %1693
      %1695 = vrot.lane.b32.xlu0 %v1184, 28
      %v1696 = vpop.permute.xlu0 %1695
      %1697 = vrot.lane.b32.xlu0 %v1196, 28
      %v1698 = vpop.permute.xlu0 %1697
      %1699 = vrot.lane.b32.xlu0 %v1204, 28
      %v1700 = vpop.permute.xlu0 %1699
      %1701 = vrot.lane.b32.xlu0 %v1216, 28
      %v1702 = vpop.permute.xlu0 %1701
      %1703 = vrot.lane.b32.xlu0 %v1224, 28
      %v1704 = vpop.permute.xlu0 %1703
      %1705 = vrot.lane.b32.xlu0 %v1236, 28
      %v1706 = vpop.permute.xlu0 %1705
      %1707 = vrot.lane.b32.xlu0 %v1244, 28
      %v1708 = vpop.permute.xlu0 %1707
      %1709 = vrot.lane.b32.xlu0 %v1256, 28
      %v1710 = vpop.permute.xlu0 %1709
      %1711 = vrot.lane.b32.xlu0 %v1264, 28
      %v1712 = vpop.permute.xlu0 %1711
      %1713 = vrot.lane.b32.xlu0 %v1276, 28
      %v1714 = vpop.permute.xlu0 %1713
      %1715 = vrot.lane.b32.xlu0 %v1284, 28
      %v1716 = vpop.permute.xlu0 %1715
      %1717 = vrot.lane.b32.xlu0 %v1296, 28
      %v1718 = vpop.permute.xlu0 %1717
      %1719 = vrot.lane.b32.xlu0 %v1304, 28
      %v1720 = vpop.permute.xlu0 %1719
      %1721 = vrot.lane.b32.xlu0 %v1316, 28
      %v1722 = vpop.permute.xlu0 %1721
      %1723 = vrot.lane.b32.xlu0 %v1324, 28
      %v1724 = vpop.permute.xlu0 %1723
      %1725 = vrot.lane.b32.xlu0 %v1336, 28
      %v1726 = vpop.permute.xlu0 %1725
      %1727 = vrot.lane.b32.xlu0 %v1344, 28
      %v1728 = vpop.permute.xlu0 %1727
      %1729 = vrot.lane.b32.xlu0 %v1356, 28
      %v1730 = vpop.permute.xlu0 %1729
      %1731 = vrot.lane.b32.xlu0 %v1364, 28
      %v1732 = vpop.permute.xlu0 %1731
      %1733 = vrot.lane.b32.xlu0 %v1376, 28
      %v1734 = vpop.permute.xlu0 %1733
      %1735 = vrot.lane.b32.xlu0 %v1384, 28
      %v1736 = vpop.permute.xlu0 %1735
      %1737 = vrot.lane.b32.xlu0 %v1396, 28
      %v1738 = vpop.permute.xlu0 %1737
      %1739 = vrot.lane.b32.xlu0 %v1404, 28
      %v1740 = vpop.permute.xlu0 %1739
      %1741 = vrot.lane.b32.xlu0 %v1416, 28
      %v1742 = vpop.permute.xlu0 %1741
      %1743 = vrot.lane.b32.xlu0 %v1424, 28
      %v1744 = vpop.permute.xlu0 %1743
      %1745 = vrot.lane.b32.xlu0 %v1436, 28
      %v1746 = vpop.permute.xlu0 %1745
      %1747 = vrot.lane.b32.xlu0 %v1444, 28
      %v1748 = vpop.permute.xlu0 %1747
      %1749 = vrot.lane.b32.xlu0 %v1456, 28
      %v1750 = vpop.permute.xlu0 %1749
      %1751 = vrot.lane.b32.xlu0 %v1464, 28
      %v1752 = vpop.permute.xlu0 %1751
      %1753 = vrot.lane.b32.xlu0 %v1476, 28
      %v1754 = vpop.permute.xlu0 %1753
      %1755 = vrot.lane.b32.xlu0 %v1484, 28
      %v1756 = vpop.permute.xlu0 %1755
      %1757 = vrot.lane.b32.xlu0 %v1496, 28
      %v1758 = vpop.permute.xlu0 %1757
      %1759 = vrot.lane.b32.xlu0 %v1504, 28
      %v1760 = vpop.permute.xlu0 %1759
      %1761 = vrot.lane.b32.xlu0 %v1516, 28
      %v1762 = vpop.permute.xlu0 %1761
      %1763 = vrot.lane.b32.xlu0 %v1524, 28
      %v1764 = vpop.permute.xlu0 %1763
      %1765 = vrot.lane.b32.xlu0 %v1536, 28
      %v1766 = vpop.permute.xlu0 %1765
      %1767 = vrot.lane.b32.xlu0 %v1544, 28
      %v1768 = vpop.permute.xlu0 %1767
      %1769 = vrot.lane.b32.xlu0 %v1556, 28
      %v1770 = vpop.permute.xlu0 %1769
      %1771 = vrot.lane.b32.xlu0 %v1564, 28
      %v1772 = vpop.permute.xlu0 %1771
      %1773 = vrot.lane.b32.xlu0 %v1576, 28
      %v1774 = vpop.permute.xlu0 %1773
      %1775 = vrot.lane.b32.xlu0 %v1584, 28
      %v1776 = vpop.permute.xlu0 %1775
      %1777 = vrot.lane.b32.xlu0 %v1596, 28
      %v1778 = vpop.permute.xlu0 %1777
      %1779 = vrot.lane.b32.xlu0 %v1604, 28
      %v1780 = vpop.permute.xlu0 %1779
      %1781 = vrot.lane.b32.xlu0 %v1616, 28
      %v1782 = vpop.permute.xlu0 %1781
      %1783 = vrot.lane.b32.xlu0 %v1624, 28
      %v1784 = vpop.permute.xlu0 %1783
      %1785 = vrot.lane.b32.xlu0 %v1636, 28
      %v1786 = vpop.permute.xlu0 %1785
      %1787 = vrot.lane.b32.xlu0 %v1644, 28
      %v1788 = vpop.permute.xlu0 %1787
      %1789 = vrot.lane.b32.xlu0 %v1656, 28
      %v1790 = vpop.permute.xlu0 %1789
      %1791 = vrot.lane.b32.xlu0 %v1664, 28
      %v1792 = vpop.permute.xlu0 %1791
      %vm1793 = vcmask 1046528
      %v1794 = vrot.slane %v864, 1
      %v1795 = vrot.slane %v865, 1
      %v1796 = vsel %vm1793, %v1794, %v1795
      %v1797 = vrot.slane %v992, 1
      %v1798 = vsel %vm1793, %v1795, %v1797
      %v1799 = vrot.slane %v866, 1
      %v1800 = vrot.slane %v867, 1
      %v1801 = vsel %vm1793, %v1799, %v1800
      %v1802 = vrot.slane %v993, 1
      %v1803 = vsel %vm1793, %v1800, %v1802
      %v1804 = vrot.slane %v868, 1
      %v1805 = vrot.slane %v869, 1
      %v1806 = vsel %vm1793, %v1804, %v1805
      %v1807 = vrot.slane %v994, 1
      %v1808 = vsel %vm1793, %v1805, %v1807
      %v1809 = vrot.slane %v870, 1
      %v1810 = vrot.slane %v871, 1
      %v1811 = vsel %vm1793, %v1809, %v1810
      %v1812 = vrot.slane %v995, 1
      %v1813 = vsel %vm1793, %v1810, %v1812
      %v1814 = vrot.slane %v872, 1
      %v1815 = vrot.slane %v873, 1
      %v1816 = vsel %vm1793, %v1814, %v1815
      %v1817 = vrot.slane %v996, 1
      %v1818 = vsel %vm1793, %v1815, %v1817
      %v1819 = vrot.slane %v874, 1
      %v1820 = vrot.slane %v875, 1
      %v1821 = vsel %vm1793, %v1819, %v1820
      %v1822 = vrot.slane %v997, 1
      %v1823 = vsel %vm1793, %v1820, %v1822
      %v1824 = vrot.slane %v876, 1
      %v1825 = vrot.slane %v877, 1
      %v1826 = vsel %vm1793, %v1824, %v1825
      %v1827 = vrot.slane %v998, 1
      %v1828 = vsel %vm1793, %v1825, %v1827
      %v1829 = vrot.slane %v878, 1
      %v1830 = vrot.slane %v879, 1
      %v1831 = vsel %vm1793, %v1829, %v1830
      %v1832 = vrot.slane %v999, 1
      %v1833 = vsel %vm1793, %v1830, %v1832
      %v1834 = vrot.slane %v880, 1
      %v1835 = vrot.slane %v881, 1
      %v1836 = vsel %vm1793, %v1834, %v1835
      %v1837 = vrot.slane %v1000, 1
      %v1838 = vsel %vm1793, %v1835, %v1837
      %v1839 = vrot.slane %v882, 1
      %v1840 = vrot.slane %v883, 1
      %v1841 = vsel %vm1793, %v1839, %v1840
      %v1842 = vrot.slane %v1001, 1
      %v1843 = vsel %vm1793, %v1840, %v1842
      %v1844 = vrot.slane %v884, 1
      %v1845 = vrot.slane %v885, 1
      %v1846 = vsel %vm1793, %v1844, %v1845
      %v1847 = vrot.slane %v1002, 1
      %v1848 = vsel %vm1793, %v1845, %v1847
      %v1849 = vrot.slane %v886, 1
      %v1850 = vrot.slane %v887, 1
      %v1851 = vsel %vm1793, %v1849, %v1850
      %v1852 = vrot.slane %v1003, 1
      %v1853 = vsel %vm1793, %v1850, %v1852
      %v1854 = vrot.slane %v888, 1
      %v1855 = vrot.slane %v889, 1
      %v1856 = vsel %vm1793, %v1854, %v1855
      %v1857 = vrot.slane %v1004, 1
      %v1858 = vsel %vm1793, %v1855, %v1857
      %v1859 = vrot.slane %v890, 1
      %v1860 = vrot.slane %v891, 1
      %v1861 = vsel %vm1793, %v1859, %v1860
      %v1862 = vrot.slane %v1005, 1
      %v1863 = vsel %vm1793, %v1860, %v1862
      %v1864 = vrot.slane %v892, 1
      %v1865 = vrot.slane %v893, 1
      %v1866 = vsel %vm1793, %v1864, %v1865
      %v1867 = vrot.slane %v1006, 1
      %v1868 = vsel %vm1793, %v1865, %v1867
      %v1869 = vrot.slane %v894, 1
      %v1870 = vrot.slane %v895, 1
      %v1871 = vsel %vm1793, %v1869, %v1870
      %v1872 = vrot.slane %v1007, 1
      %v1873 = vsel %vm1793, %v1870, %v1872
      %v1874 = vrot.slane %v896, 1
      %v1875 = vrot.slane %v897, 1
      %v1876 = vsel %vm1793, %v1874, %v1875
      %v1877 = vrot.slane %v1008, 1
      %v1878 = vsel %vm1793, %v1875, %v1877
      %v1879 = vrot.slane %v898, 1
      %v1880 = vrot.slane %v899, 1
      %v1881 = vsel %vm1793, %v1879, %v1880
      %v1882 = vrot.slane %v1009, 1
      %v1883 = vsel %vm1793, %v1880, %v1882
      %v1884 = vrot.slane %v900, 1
      %v1885 = vrot.slane %v901, 1
      %v1886 = vsel %vm1793, %v1884, %v1885
      %v1887 = vrot.slane %v1010, 1
      %v1888 = vsel %vm1793, %v1885, %v1887
      %v1889 = vrot.slane %v902, 1
      %v1890 = vrot.slane %v903, 1
      %v1891 = vsel %vm1793, %v1889, %v1890
      %v1892 = vrot.slane %v1011, 1
      %v1893 = vsel %vm1793, %v1890, %v1892
      %v1894 = vrot.slane %v904, 1
      %v1895 = vrot.slane %v905, 1
      %v1896 = vsel %vm1793, %v1894, %v1895
      %v1897 = vrot.slane %v1012, 1
      %v1898 = vsel %vm1793, %v1895, %v1897
      %v1899 = vrot.slane %v906, 1
      %v1900 = vrot.slane %v907, 1
      %v1901 = vsel %vm1793, %v1899, %v1900
      %v1902 = vrot.slane %v1013, 1
      %v1903 = vsel %vm1793, %v1900, %v1902
      %v1904 = vrot.slane %v908, 1
      %v1905 = vrot.slane %v909, 1
      %v1906 = vsel %vm1793, %v1904, %v1905
      %v1907 = vrot.slane %v1014, 1
      %v1908 = vsel %vm1793, %v1905, %v1907
      %v1909 = vrot.slane %v910, 1
      %v1910 = vrot.slane %v911, 1
      %v1911 = vsel %vm1793, %v1909, %v1910
      %v1912 = vrot.slane %v1015, 1
      %v1913 = vsel %vm1793, %v1910, %v1912
      %v1914 = vrot.slane %v912, 1
      %v1915 = vrot.slane %v913, 1
      %v1916 = vsel %vm1793, %v1914, %v1915
      %v1917 = vrot.slane %v1016, 1
      %v1918 = vsel %vm1793, %v1915, %v1917
      %v1919 = vrot.slane %v914, 1
      %v1920 = vrot.slane %v915, 1
      %v1921 = vsel %vm1793, %v1919, %v1920
      %v1922 = vrot.slane %v1017, 1
      %v1923 = vsel %vm1793, %v1920, %v1922
      %v1924 = vrot.slane %v916, 1
      %v1925 = vrot.slane %v917, 1
      %v1926 = vsel %vm1793, %v1924, %v1925
      %v1927 = vrot.slane %v1018, 1
      %v1928 = vsel %vm1793, %v1925, %v1927
      %v1929 = vrot.slane %v918, 1
      %v1930 = vrot.slane %v919, 1
      %v1931 = vsel %vm1793, %v1929, %v1930
      %v1932 = vrot.slane %v1019, 1
      %v1933 = vsel %vm1793, %v1930, %v1932
      %v1934 = vrot.slane %v920, 1
      %v1935 = vrot.slane %v921, 1
      %v1936 = vsel %vm1793, %v1934, %v1935
      %v1937 = vrot.slane %v1020, 1
      %v1938 = vsel %vm1793, %v1935, %v1937
      %v1939 = vrot.slane %v922, 1
      %v1940 = vrot.slane %v923, 1
      %v1941 = vsel %vm1793, %v1939, %v1940
      %v1942 = vrot.slane %v1021, 1
      %v1943 = vsel %vm1793, %v1940, %v1942
      %v1944 = vrot.slane %v924, 1
      %v1945 = vrot.slane %v925, 1
      %v1946 = vsel %vm1793, %v1944, %v1945
      %v1947 = vrot.slane %v1022, 1
      %v1948 = vsel %vm1793, %v1945, %v1947
      %v1949 = vrot.slane %v926, 1
      %v1950 = vrot.slane %v927, 1
      %v1951 = vsel %vm1793, %v1949, %v1950
      %v1952 = vrot.slane %v1023, 1
      %v1953 = vsel %vm1793, %v1950, %v1952
      %1954 = vrot.lane.b32.xlu0 %v1796, 56
      %v1955 = vpop.permute.xlu0 %1954
      %1956 = vrot.lane.b32.xlu0 %v1798, 56
      %v1957 = vpop.permute.xlu0 %1956
      %1958 = vrot.lane.b32.xlu0 %v1801, 56
      %v1959 = vpop.permute.xlu0 %1958
      %1960 = vrot.lane.b32.xlu0 %v1803, 56
      %v1961 = vpop.permute.xlu0 %1960
      %1962 = vrot.lane.b32.xlu0 %v1806, 56
      %v1963 = vpop.permute.xlu0 %1962
      %1964 = vrot.lane.b32.xlu0 %v1808, 56
      %v1965 = vpop.permute.xlu0 %1964
      %1966 = vrot.lane.b32.xlu0 %v1811, 56
      %v1967 = vpop.permute.xlu0 %1966
      %1968 = vrot.lane.b32.xlu0 %v1813, 56
      %v1969 = vpop.permute.xlu0 %1968
      %1970 = vrot.lane.b32.xlu0 %v1816, 56
      %v1971 = vpop.permute.xlu0 %1970
      %1972 = vrot.lane.b32.xlu0 %v1818, 56
      %v1973 = vpop.permute.xlu0 %1972
      %1974 = vrot.lane.b32.xlu0 %v1821, 56
      %v1975 = vpop.permute.xlu0 %1974
      %1976 = vrot.lane.b32.xlu0 %v1823, 56
      %v1977 = vpop.permute.xlu0 %1976
      %1978 = vrot.lane.b32.xlu0 %v1826, 56
      %v1979 = vpop.permute.xlu0 %1978
      %1980 = vrot.lane.b32.xlu0 %v1828, 56
      %v1981 = vpop.permute.xlu0 %1980
      %1982 = vrot.lane.b32.xlu0 %v1831, 56
      %v1983 = vpop.permute.xlu0 %1982
      %1984 = vrot.lane.b32.xlu0 %v1833, 56
      %v1985 = vpop.permute.xlu0 %1984
      %1986 = vrot.lane.b32.xlu0 %v1836, 56
      %v1987 = vpop.permute.xlu0 %1986
      %1988 = vrot.lane.b32.xlu0 %v1838, 56
      %v1989 = vpop.permute.xlu0 %1988
      %1990 = vrot.lane.b32.xlu0 %v1841, 56
      %v1991 = vpop.permute.xlu0 %1990
      %1992 = vrot.lane.b32.xlu0 %v1843, 56
      %v1993 = vpop.permute.xlu0 %1992
      %1994 = vrot.lane.b32.xlu0 %v1846, 56
      %v1995 = vpop.permute.xlu0 %1994
      %1996 = vrot.lane.b32.xlu0 %v1848, 56
      %v1997 = vpop.permute.xlu0 %1996
      %1998 = vrot.lane.b32.xlu0 %v1851, 56
      %v1999 = vpop.permute.xlu0 %1998
      %2000 = vrot.lane.b32.xlu0 %v1853, 56
      %v2001 = vpop.permute.xlu0 %2000
      %2002 = vrot.lane.b32.xlu0 %v1856, 56
      %v2003 = vpop.permute.xlu0 %2002
      %2004 = vrot.lane.b32.xlu0 %v1858, 56
      %v2005 = vpop.permute.xlu0 %2004
      %2006 = vrot.lane.b32.xlu0 %v1861, 56
      %v2007 = vpop.permute.xlu0 %2006
      %2008 = vrot.lane.b32.xlu0 %v1863, 56
      %v2009 = vpop.permute.xlu0 %2008
      %2010 = vrot.lane.b32.xlu0 %v1866, 56
      %v2011 = vpop.permute.xlu0 %2010
      %2012 = vrot.lane.b32.xlu0 %v1868, 56
      %v2013 = vpop.permute.xlu0 %2012
      %2014 = vrot.lane.b32.xlu0 %v1871, 56
      %v2015 = vpop.permute.xlu0 %2014
      %2016 = vrot.lane.b32.xlu0 %v1873, 56
      %v2017 = vpop.permute.xlu0 %2016
      %2018 = vrot.lane.b32.xlu0 %v1876, 56
      %v2019 = vpop.permute.xlu0 %2018
      %2020 = vrot.lane.b32.xlu0 %v1878, 56
      %v2021 = vpop.permute.xlu0 %2020
      %2022 = vrot.lane.b32.xlu0 %v1881, 56
      %v2023 = vpop.permute.xlu0 %2022
      %2024 = vrot.lane.b32.xlu0 %v1883, 56
      %v2025 = vpop.permute.xlu0 %2024
      %2026 = vrot.lane.b32.xlu0 %v1886, 56
      %v2027 = vpop.permute.xlu0 %2026
      %2028 = vrot.lane.b32.xlu0 %v1888, 56
      %v2029 = vpop.permute.xlu0 %2028
      %2030 = vrot.lane.b32.xlu0 %v1891, 56
      %v2031 = vpop.permute.xlu0 %2030
      %2032 = vrot.lane.b32.xlu0 %v1893, 56
      %v2033 = vpop.permute.xlu0 %2032
      %2034 = vrot.lane.b32.xlu0 %v1896, 56
      %v2035 = vpop.permute.xlu0 %2034
      %2036 = vrot.lane.b32.xlu0 %v1898, 56
      %v2037 = vpop.permute.xlu0 %2036
      %2038 = vrot.lane.b32.xlu0 %v1901, 56
      %v2039 = vpop.permute.xlu0 %2038
      %2040 = vrot.lane.b32.xlu0 %v1903, 56
      %v2041 = vpop.permute.xlu0 %2040
      %2042 = vrot.lane.b32.xlu0 %v1906, 56
      %v2043 = vpop.permute.xlu0 %2042
      %2044 = vrot.lane.b32.xlu0 %v1908, 56
      %v2045 = vpop.permute.xlu0 %2044
      %2046 = vrot.lane.b32.xlu0 %v1911, 56
      %v2047 = vpop.permute.xlu0 %2046
      %2048 = vrot.lane.b32.xlu0 %v1913, 56
      %v2049 = vpop.permute.xlu0 %2048
      %2050 = vrot.lane.b32.xlu0 %v1916, 56
      %v2051 = vpop.permute.xlu0 %2050
      %2052 = vrot.lane.b32.xlu0 %v1918, 56
      %v2053 = vpop.permute.xlu0 %2052
      %2054 = vrot.lane.b32.xlu0 %v1921, 56
      %v2055 = vpop.permute.xlu0 %2054
      %2056 = vrot.lane.b32.xlu0 %v1923, 56
      %v2057 = vpop.permute.xlu0 %2056
      %2058 = vrot.lane.b32.xlu0 %v1926, 56
      %v2059 = vpop.permute.xlu0 %2058
      %2060 = vrot.lane.b32.xlu0 %v1928, 56
      %v2061 = vpop.permute.xlu0 %2060
      %2062 = vrot.lane.b32.xlu0 %v1931, 56
      %v2063 = vpop.permute.xlu0 %2062
      %2064 = vrot.lane.b32.xlu0 %v1933, 56
      %v2065 = vpop.permute.xlu0 %2064
      %2066 = vrot.lane.b32.xlu0 %v1936, 56
      %v2067 = vpop.permute.xlu0 %2066
      %2068 = vrot.lane.b32.xlu0 %v1938, 56
      %v2069 = vpop.permute.xlu0 %2068
      %2070 = vrot.lane.b32.xlu0 %v1941, 56
      %v2071 = vpop.permute.xlu0 %2070
      %2072 = vrot.lane.b32.xlu0 %v1943, 56
      %v2073 = vpop.permute.xlu0 %2072
      %2074 = vrot.lane.b32.xlu0 %v1946, 56
      %v2075 = vpop.permute.xlu0 %2074
      %2076 = vrot.lane.b32.xlu0 %v1948, 56
      %v2077 = vpop.permute.xlu0 %2076
      %2078 = vrot.lane.b32.xlu0 %v1951, 56
      %v2079 = vpop.permute.xlu0 %2078
      %2080 = vrot.lane.b32.xlu0 %v1953, 56
      %v2081 = vpop.permute.xlu0 %2080
      %vm2082 = vsmask.f32 6400
      %v2083 = vrot.slane %v1026, 1
      %v2084 = vrot.slane %v1028, 2
      %v2085 = vor.u32 %v2083, %v2084
      %v2086 = vrot.slane %v1037, 1
      %v2087 = vrot.slane %v1033, 2
      %v2088 = vor.u32 %v2086, %v2087
      %v2089 = vsel %vm2082, %v2085, %v2088
      %v2090 = vshrl.u32 %v992, 16
      %v2092 = vrot.slane %v2090, 1
      %v2093 = vrot.slane %v1041, 2
      %v2094 = vor.u32 %v2092, %v2093
      %v2095 = vsel %vm2082, %v2088, %v2094
      %v2096 = vrot.slane %v1046, 1
      %v2097 = vrot.slane %v1048, 2
      %v2098 = vor.u32 %v2096, %v2097
      %v2099 = vrot.slane %v1057, 1
      %v2100 = vrot.slane %v1053, 2
      %v2101 = vor.u32 %v2099, %v2100
      %v2102 = vsel %vm2082, %v2098, %v2101
      %v2103 = vshrl.u32 %v993, 16
      %v2105 = vrot.slane %v2103, 1
      %v2106 = vrot.slane %v1061, 2
      %v2107 = vor.u32 %v2105, %v2106
      %v2108 = vsel %vm2082, %v2101, %v2107
      %v2109 = vrot.slane %v1066, 1
      %v2110 = vrot.slane %v1068, 2
      %v2111 = vor.u32 %v2109, %v2110
      %v2112 = vrot.slane %v1077, 1
      %v2113 = vrot.slane %v1073, 2
      %v2114 = vor.u32 %v2112, %v2113
      %v2115 = vsel %vm2082, %v2111, %v2114
      %v2116 = vshrl.u32 %v994, 16
      %v2118 = vrot.slane %v2116, 1
      %v2119 = vrot.slane %v1081, 2
      %v2120 = vor.u32 %v2118, %v2119
      %v2121 = vsel %vm2082, %v2114, %v2120
      %v2122 = vrot.slane %v1086, 1
      %v2123 = vrot.slane %v1088, 2
      %v2124 = vor.u32 %v2122, %v2123
      %v2125 = vrot.slane %v1097, 1
      %v2126 = vrot.slane %v1093, 2
      %v2127 = vor.u32 %v2125, %v2126
      %v2128 = vsel %vm2082, %v2124, %v2127
      %v2129 = vshrl.u32 %v995, 16
      %v2131 = vrot.slane %v2129, 1
      %v2132 = vrot.slane %v1101, 2
      %v2133 = vor.u32 %v2131, %v2132
      %v2134 = vsel %vm2082, %v2127, %v2133
      %v2135 = vrot.slane %v1106, 1
      %v2136 = vrot.slane %v1108, 2
      %v2137 = vor.u32 %v2135, %v2136
      %v2138 = vrot.slane %v1117, 1
      %v2139 = vrot.slane %v1113, 2
      %v2140 = vor.u32 %v2138, %v2139
      %v2141 = vsel %vm2082, %v2137, %v2140
      %v2142 = vshrl.u32 %v996, 16
      %v2144 = vrot.slane %v2142, 1
      %v2145 = vrot.slane %v1121, 2
      %v2146 = vor.u32 %v2144, %v2145
      %v2147 = vsel %vm2082, %v2140, %v2146
      %v2148 = vrot.slane %v1126, 1
      %v2149 = vrot.slane %v1128, 2
      %v2150 = vor.u32 %v2148, %v2149
      %v2151 = vrot.slane %v1137, 1
      %v2152 = vrot.slane %v1133, 2
      %v2153 = vor.u32 %v2151, %v2152
      %v2154 = vsel %vm2082, %v2150, %v2153
      %v2155 = vshrl.u32 %v997, 16
      %v2157 = vrot.slane %v2155, 1
      %v2158 = vrot.slane %v1141, 2
      %v2159 = vor.u32 %v2157, %v2158
      %v2160 = vsel %vm2082, %v2153, %v2159
      %v2161 = vrot.slane %v1146, 1
      %v2162 = vrot.slane %v1148, 2
      %v2163 = vor.u32 %v2161, %v2162
      %v2164 = vrot.slane %v1157, 1
      %v2165 = vrot.slane %v1153, 2
      %v2166 = vor.u32 %v2164, %v2165
      %v2167 = vsel %vm2082, %v2163, %v2166
      %v2168 = vshrl.u32 %v998, 16
      %v2170 = vrot.slane %v2168, 1
      %v2171 = vrot.slane %v1161, 2
      %v2172 = vor.u32 %v2170, %v2171
      %v2173 = vsel %vm2082, %v2166, %v2172
      %v2174 = vrot.slane %v1166, 1
      %v2175 = vrot.slane %v1168, 2
      %v2176 = vor.u32 %v2174, %v2175
      %v2177 = vrot.slane %v1177, 1
      %v2178 = vrot.slane %v1173, 2
      %v2179 = vor.u32 %v2177, %v2178
      %v2180 = vsel %vm2082, %v2176, %v2179
      %v2181 = vshrl.u32 %v999, 16
      %v2183 = vrot.slane %v2181, 1
      %v2184 = vrot.slane %v1181, 2
      %v2185 = vor.u32 %v2183, %v2184
      %v2186 = vsel %vm2082, %v2179, %v2185
      %v2187 = vrot.slane %v1186, 1
      %v2188 = vrot.slane %v1188, 2
      %v2189 = vor.u32 %v2187, %v2188
      %v2190 = vrot.slane %v1197, 1
      %v2191 = vrot.slane %v1193, 2
      %v2192 = vor.u32 %v2190, %v2191
      %v2193 = vsel %vm2082, %v2189, %v2192
      %v2194 = vshrl.u32 %v1000, 16
      %v2196 = vrot.slane %v2194, 1
      %v2197 = vrot.slane %v1201, 2
      %v2198 = vor.u32 %v2196, %v2197
      %v2199 = vsel %vm2082, %v2192, %v2198
      %v2200 = vrot.slane %v1206, 1
      %v2201 = vrot.slane %v1208, 2
      %v2202 = vor.u32 %v2200, %v2201
      %v2203 = vrot.slane %v1217, 1
      %v2204 = vrot.slane %v1213, 2
      %v2205 = vor.u32 %v2203, %v2204
      %v2206 = vsel %vm2082, %v2202, %v2205
      %v2207 = vshrl.u32 %v1001, 16
      %v2209 = vrot.slane %v2207, 1
      %v2210 = vrot.slane %v1221, 2
      %v2211 = vor.u32 %v2209, %v2210
      %v2212 = vsel %vm2082, %v2205, %v2211
      %v2213 = vrot.slane %v1226, 1
      %v2214 = vrot.slane %v1228, 2
      %v2215 = vor.u32 %v2213, %v2214
      %v2216 = vrot.slane %v1237, 1
      %v2217 = vrot.slane %v1233, 2
      %v2218 = vor.u32 %v2216, %v2217
      %v2219 = vsel %vm2082, %v2215, %v2218
      %v2220 = vshrl.u32 %v1002, 16
      %v2222 = vrot.slane %v2220, 1
      %v2223 = vrot.slane %v1241, 2
      %v2224 = vor.u32 %v2222, %v2223
      %v2225 = vsel %vm2082, %v2218, %v2224
      %v2226 = vrot.slane %v1246, 1
      %v2227 = vrot.slane %v1248, 2
      %v2228 = vor.u32 %v2226, %v2227
      %v2229 = vrot.slane %v1257, 1
      %v2230 = vrot.slane %v1253, 2
      %v2231 = vor.u32 %v2229, %v2230
      %v2232 = vsel %vm2082, %v2228, %v2231
      %v2233 = vshrl.u32 %v1003, 16
      %v2235 = vrot.slane %v2233, 1
      %v2236 = vrot.slane %v1261, 2
      %v2237 = vor.u32 %v2235, %v2236
      %v2238 = vsel %vm2082, %v2231, %v2237
      %v2239 = vrot.slane %v1266, 1
      %v2240 = vrot.slane %v1268, 2
      %v2241 = vor.u32 %v2239, %v2240
      %v2242 = vrot.slane %v1277, 1
      %v2243 = vrot.slane %v1273, 2
      %v2244 = vor.u32 %v2242, %v2243
      %v2245 = vsel %vm2082, %v2241, %v2244
      %v2246 = vshrl.u32 %v1004, 16
      %v2248 = vrot.slane %v2246, 1
      %v2249 = vrot.slane %v1281, 2
      %v2250 = vor.u32 %v2248, %v2249
      %v2251 = vsel %vm2082, %v2244, %v2250
      %v2252 = vrot.slane %v1286, 1
      %v2253 = vrot.slane %v1288, 2
      %v2254 = vor.u32 %v2252, %v2253
      %v2255 = vrot.slane %v1297, 1
      %v2256 = vrot.slane %v1293, 2
      %v2257 = vor.u32 %v2255, %v2256
      %v2258 = vsel %vm2082, %v2254, %v2257
      %v2259 = vshrl.u32 %v1005, 16
      %v2261 = vrot.slane %v2259, 1
      %v2262 = vrot.slane %v1301, 2
      %v2263 = vor.u32 %v2261, %v2262
      %v2264 = vsel %vm2082, %v2257, %v2263
      %v2265 = vrot.slane %v1306, 1
      %v2266 = vrot.slane %v1308, 2
      %v2267 = vor.u32 %v2265, %v2266
      %v2268 = vrot.slane %v1317, 1
      %v2269 = vrot.slane %v1313, 2
      %v2270 = vor.u32 %v2268, %v2269
      %v2271 = vsel %vm2082, %v2267, %v2270
      %v2272 = vshrl.u32 %v1006, 16
      %v2274 = vrot.slane %v2272, 1
      %v2275 = vrot.slane %v1321, 2
      %v2276 = vor.u32 %v2274, %v2275
      %v2277 = vsel %vm2082, %v2270, %v2276
      %v2278 = vrot.slane %v1326, 1
      %v2279 = vrot.slane %v1328, 2
      %v2280 = vor.u32 %v2278, %v2279
      %v2281 = vrot.slane %v1337, 1
      %v2282 = vrot.slane %v1333, 2
      %v2283 = vor.u32 %v2281, %v2282
      %v2284 = vsel %vm2082, %v2280, %v2283
      %v2285 = vshrl.u32 %v1007, 16
      %v2287 = vrot.slane %v2285, 1
      %v2288 = vrot.slane %v1341, 2
      %v2289 = vor.u32 %v2287, %v2288
      %v2290 = vsel %vm2082, %v2283, %v2289
      %v2291 = vrot.slane %v1346, 1
      %v2292 = vrot.slane %v1348, 2
      %v2293 = vor.u32 %v2291, %v2292
      %v2294 = vrot.slane %v1357, 1
      %v2295 = vrot.slane %v1353, 2
      %v2296 = vor.u32 %v2294, %v2295
      %v2297 = vsel %vm2082, %v2293, %v2296
      %v2298 = vshrl.u32 %v1008, 16
      %v2300 = vrot.slane %v2298, 1
      %v2301 = vrot.slane %v1361, 2
      %v2302 = vor.u32 %v2300, %v2301
      %v2303 = vsel %vm2082, %v2296, %v2302
      %v2304 = vrot.slane %v1366, 1
      %v2305 = vrot.slane %v1368, 2
      %v2306 = vor.u32 %v2304, %v2305
      %v2307 = vrot.slane %v1377, 1
      %v2308 = vrot.slane %v1373, 2
      %v2309 = vor.u32 %v2307, %v2308
      %v2310 = vsel %vm2082, %v2306, %v2309
      %v2311 = vshrl.u32 %v1009, 16
      %v2313 = vrot.slane %v2311, 1
      %v2314 = vrot.slane %v1381, 2
      %v2315 = vor.u32 %v2313, %v2314
      %v2316 = vsel %vm2082, %v2309, %v2315
      %v2317 = vrot.slane %v1386, 1
      %v2318 = vrot.slane %v1388, 2
      %v2319 = vor.u32 %v2317, %v2318
      %v2320 = vrot.slane %v1397, 1
      %v2321 = vrot.slane %v1393, 2
      %v2322 = vor.u32 %v2320, %v2321
      %v2323 = vsel %vm2082, %v2319, %v2322
      %v2324 = vshrl.u32 %v1010, 16
      %v2326 = vrot.slane %v2324, 1
      %v2327 = vrot.slane %v1401, 2
      %v2328 = vor.u32 %v2326, %v2327
      %v2329 = vsel %vm2082, %v2322, %v2328
      %v2330 = vrot.slane %v1406, 1
      %v2331 = vrot.slane %v1408, 2
      %v2332 = vor.u32 %v2330, %v2331
      %v2333 = vrot.slane %v1417, 1
      %v2334 = vrot.slane %v1413, 2
      %v2335 = vor.u32 %v2333, %v2334
      %v2336 = vsel %vm2082, %v2332, %v2335
      %v2337 = vshrl.u32 %v1011, 16
      %v2339 = vrot.slane %v2337, 1
      %v2340 = vrot.slane %v1421, 2
      %v2341 = vor.u32 %v2339, %v2340
      %v2342 = vsel %vm2082, %v2335, %v2341
      %v2343 = vrot.slane %v1426, 1
      %v2344 = vrot.slane %v1428, 2
      %v2345 = vor.u32 %v2343, %v2344
      %v2346 = vrot.slane %v1437, 1
      %v2347 = vrot.slane %v1433, 2
      %v2348 = vor.u32 %v2346, %v2347
      %v2349 = vsel %vm2082, %v2345, %v2348
      %v2350 = vshrl.u32 %v1012, 16
      %v2352 = vrot.slane %v2350, 1
      %v2353 = vrot.slane %v1441, 2
      %v2354 = vor.u32 %v2352, %v2353
      %v2355 = vsel %vm2082, %v2348, %v2354
      %v2356 = vrot.slane %v1446, 1
      %v2357 = vrot.slane %v1448, 2
      %v2358 = vor.u32 %v2356, %v2357
      %v2359 = vrot.slane %v1457, 1
      %v2360 = vrot.slane %v1453, 2
      %v2361 = vor.u32 %v2359, %v2360
      %v2362 = vsel %vm2082, %v2358, %v2361
      %v2363 = vshrl.u32 %v1013, 16
      %v2365 = vrot.slane %v2363, 1
      %v2366 = vrot.slane %v1461, 2
      %v2367 = vor.u32 %v2365, %v2366
      %v2368 = vsel %vm2082, %v2361, %v2367
      %v2369 = vrot.slane %v1466, 1
      %v2370 = vrot.slane %v1468, 2
      %v2371 = vor.u32 %v2369, %v2370
      %v2372 = vrot.slane %v1477, 1
      %v2373 = vrot.slane %v1473, 2
      %v2374 = vor.u32 %v2372, %v2373
      %v2375 = vsel %vm2082, %v2371, %v2374
      %v2376 = vshrl.u32 %v1014, 16
      %v2378 = vrot.slane %v2376, 1
      %v2379 = vrot.slane %v1481, 2
      %v2380 = vor.u32 %v2378, %v2379
      %v2381 = vsel %vm2082, %v2374, %v2380
      %v2382 = vrot.slane %v1486, 1
      %v2383 = vrot.slane %v1488, 2
      %v2384 = vor.u32 %v2382, %v2383
      %v2385 = vrot.slane %v1497, 1
      %v2386 = vrot.slane %v1493, 2
      %v2387 = vor.u32 %v2385, %v2386
      %v2388 = vsel %vm2082, %v2384, %v2387
      %v2389 = vshrl.u32 %v1015, 16
      %v2391 = vrot.slane %v2389, 1
      %v2392 = vrot.slane %v1501, 2
      %v2393 = vor.u32 %v2391, %v2392
      %v2394 = vsel %vm2082, %v2387, %v2393
      %v2395 = vrot.slane %v1506, 1
      %v2396 = vrot.slane %v1508, 2
      %v2397 = vor.u32 %v2395, %v2396
      %v2398 = vrot.slane %v1517, 1
      %v2399 = vrot.slane %v1513, 2
      %v2400 = vor.u32 %v2398, %v2399
      %v2401 = vsel %vm2082, %v2397, %v2400
      %v2402 = vshrl.u32 %v1016, 16
      %v2404 = vrot.slane %v2402, 1
      %v2405 = vrot.slane %v1521, 2
      %v2406 = vor.u32 %v2404, %v2405
      %v2407 = vsel %vm2082, %v2400, %v2406
      %v2408 = vrot.slane %v1526, 1
      %v2409 = vrot.slane %v1528, 2
      %v2410 = vor.u32 %v2408, %v2409
      %v2411 = vrot.slane %v1537, 1
      %v2412 = vrot.slane %v1533, 2
      %v2413 = vor.u32 %v2411, %v2412
      %v2414 = vsel %vm2082, %v2410, %v2413
      %v2415 = vshrl.u32 %v1017, 16
      %v2417 = vrot.slane %v2415, 1
      %v2418 = vrot.slane %v1541, 2
      %v2419 = vor.u32 %v2417, %v2418
      %v2420 = vsel %vm2082, %v2413, %v2419
      %v2421 = vrot.slane %v1546, 1
      %v2422 = vrot.slane %v1548, 2
      %v2423 = vor.u32 %v2421, %v2422
      %v2424 = vrot.slane %v1557, 1
      %v2425 = vrot.slane %v1553, 2
      %v2426 = vor.u32 %v2424, %v2425
      %v2427 = vsel %vm2082, %v2423, %v2426
      %v2428 = vshrl.u32 %v1018, 16
      %v2430 = vrot.slane %v2428, 1
      %v2431 = vrot.slane %v1561, 2
      %v2432 = vor.u32 %v2430, %v2431
      %v2433 = vsel %vm2082, %v2426, %v2432
      %v2434 = vrot.slane %v1566, 1
      %v2435 = vrot.slane %v1568, 2
      %v2436 = vor.u32 %v2434, %v2435
      %v2437 = vrot.slane %v1577, 1
      %v2438 = vrot.slane %v1573, 2
      %v2439 = vor.u32 %v2437, %v2438
      %v2440 = vsel %vm2082, %v2436, %v2439
      %v2441 = vshrl.u32 %v1019, 16
      %v2443 = vrot.slane %v2441, 1
      %v2444 = vrot.slane %v1581, 2
      %v2445 = vor.u32 %v2443, %v2444
      %v2446 = vsel %vm2082, %v2439, %v2445
      %v2447 = vrot.slane %v1586, 1
      %v2448 = vrot.slane %v1588, 2
      %v2449 = vor.u32 %v2447, %v2448
      %v2450 = vrot.slane %v1597, 1
      %v2451 = vrot.slane %v1593, 2
      %v2452 = vor.u32 %v2450, %v2451
      %v2453 = vsel %vm2082, %v2449, %v2452
      %v2454 = vshrl.u32 %v1020, 16
      %v2456 = vrot.slane %v2454, 1
      %v2457 = vrot.slane %v1601, 2
      %v2458 = vor.u32 %v2456, %v2457
      %v2459 = vsel %vm2082, %v2452, %v2458
      %v2460 = vrot.slane %v1606, 1
      %v2461 = vrot.slane %v1608, 2
      %v2462 = vor.u32 %v2460, %v2461
      %v2463 = vrot.slane %v1617, 1
      %v2464 = vrot.slane %v1613, 2
      %v2465 = vor.u32 %v2463, %v2464
      %v2466 = vsel %vm2082, %v2462, %v2465
      %v2467 = vshrl.u32 %v1021, 16
      %v2469 = vrot.slane %v2467, 1
      %v2470 = vrot.slane %v1621, 2
      %v2471 = vor.u32 %v2469, %v2470
      %v2472 = vsel %vm2082, %v2465, %v2471
      %v2473 = vrot.slane %v1626, 1
      %v2474 = vrot.slane %v1628, 2
      %v2475 = vor.u32 %v2473, %v2474
      %v2476 = vrot.slane %v1637, 1
      %v2477 = vrot.slane %v1633, 2
      %v2478 = vor.u32 %v2476, %v2477
      %v2479 = vsel %vm2082, %v2475, %v2478
      %v2480 = vshrl.u32 %v1022, 16
      %v2482 = vrot.slane %v2480, 1
      %v2483 = vrot.slane %v1641, 2
      %v2484 = vor.u32 %v2482, %v2483
      %v2485 = vsel %vm2082, %v2478, %v2484
      %v2486 = vrot.slane %v1646, 1
      %v2487 = vrot.slane %v1648, 2
      %v2488 = vor.u32 %v2486, %v2487
      %v2489 = vrot.slane %v1657, 1
      %v2490 = vrot.slane %v1653, 2
      %v2491 = vor.u32 %v2489, %v2490
      %v2492 = vsel %vm2082, %v2488, %v2491
      %v2493 = vshrl.u32 %v1023, 16
      %v2495 = vrot.slane %v2493, 1
      %v2496 = vrot.slane %v1661, 2
      %v2497 = vor.u32 %v2495, %v2496
      %v2498 = vsel %vm2082, %v2491, %v2497
      %2499 = vrot.lane.b32.xlu0 %v2089, 84
      %v2500 = vpop.permute.xlu0 %2499
      %2501 = vrot.lane.b32.xlu0 %v2095, 84
      %v2502 = vpop.permute.xlu0 %2501
      %2503 = vrot.lane.b32.xlu0 %v2102, 84
      %v2504 = vpop.permute.xlu0 %2503
      %2505 = vrot.lane.b32.xlu0 %v2108, 84
      %v2506 = vpop.permute.xlu0 %2505
      %2507 = vrot.lane.b32.xlu0 %v2115, 84
      %v2508 = vpop.permute.xlu0 %2507
      %2509 = vrot.lane.b32.xlu0 %v2121, 84
      %v2510 = vpop.permute.xlu0 %2509
      %2511 = vrot.lane.b32.xlu0 %v2128, 84
      %v2512 = vpop.permute.xlu0 %2511
      %2513 = vrot.lane.b32.xlu0 %v2134, 84
      %v2514 = vpop.permute.xlu0 %2513
      %2515 = vrot.lane.b32.xlu0 %v2141, 84
      %v2516 = vpop.permute.xlu0 %2515
      %2517 = vrot.lane.b32.xlu0 %v2147, 84
      %v2518 = vpop.permute.xlu0 %2517
      %2519 = vrot.lane.b32.xlu0 %v2154, 84
      %v2520 = vpop.permute.xlu0 %2519
      %2521 = vrot.lane.b32.xlu0 %v2160, 84
      %v2522 = vpop.permute.xlu0 %2521
      %2523 = vrot.lane.b32.xlu0 %v2167, 84
      %v2524 = vpop.permute.xlu0 %2523
      %2525 = vrot.lane.b32.xlu0 %v2173, 84
      %v2526 = vpop.permute.xlu0 %2525
      %2527 = vrot.lane.b32.xlu0 %v2180, 84
      %v2528 = vpop.permute.xlu0 %2527
      %2529 = vrot.lane.b32.xlu0 %v2186, 84
      %v2530 = vpop.permute.xlu0 %2529
      %2531 = vrot.lane.b32.xlu0 %v2193, 84
      %v2532 = vpop.permute.xlu0 %2531
      %2533 = vrot.lane.b32.xlu0 %v2199, 84
      %v2534 = vpop.permute.xlu0 %2533
      %2535 = vrot.lane.b32.xlu0 %v2206, 84
      %v2536 = vpop.permute.xlu0 %2535
      %2537 = vrot.lane.b32.xlu0 %v2212, 84
      %v2538 = vpop.permute.xlu0 %2537
      %2539 = vrot.lane.b32.xlu0 %v2219, 84
      %v2540 = vpop.permute.xlu0 %2539
      %2541 = vrot.lane.b32.xlu0 %v2225, 84
      %v2542 = vpop.permute.xlu0 %2541
      %2543 = vrot.lane.b32.xlu0 %v2232, 84
      %v2544 = vpop.permute.xlu0 %2543
      %2545 = vrot.lane.b32.xlu0 %v2238, 84
      %v2546 = vpop.permute.xlu0 %2545
      %2547 = vrot.lane.b32.xlu0 %v2245, 84
      %v2548 = vpop.permute.xlu0 %2547
      %2549 = vrot.lane.b32.xlu0 %v2251, 84
      %v2550 = vpop.permute.xlu0 %2549
      %2551 = vrot.lane.b32.xlu0 %v2258, 84
      %v2552 = vpop.permute.xlu0 %2551
      %2553 = vrot.lane.b32.xlu0 %v2264, 84
      %v2554 = vpop.permute.xlu0 %2553
      %2555 = vrot.lane.b32.xlu0 %v2271, 84
      %v2556 = vpop.permute.xlu0 %2555
      %2557 = vrot.lane.b32.xlu0 %v2277, 84
      %v2558 = vpop.permute.xlu0 %2557
      %2559 = vrot.lane.b32.xlu0 %v2284, 84
      %v2560 = vpop.permute.xlu0 %2559
      %2561 = vrot.lane.b32.xlu0 %v2290, 84
      %v2562 = vpop.permute.xlu0 %2561
      %2563 = vrot.lane.b32.xlu0 %v2297, 84
      %v2564 = vpop.permute.xlu0 %2563
      %2565 = vrot.lane.b32.xlu0 %v2303, 84
      %v2566 = vpop.permute.xlu0 %2565
      %2567 = vrot.lane.b32.xlu0 %v2310, 84
      %v2568 = vpop.permute.xlu0 %2567
      %2569 = vrot.lane.b32.xlu0 %v2316, 84
      %v2570 = vpop.permute.xlu0 %2569
      %2571 = vrot.lane.b32.xlu0 %v2323, 84
      %v2572 = vpop.permute.xlu0 %2571
      %2573 = vrot.lane.b32.xlu0 %v2329, 84
      %v2574 = vpop.permute.xlu0 %2573
      %2575 = vrot.lane.b32.xlu0 %v2336, 84
      %v2576 = vpop.permute.xlu0 %2575
      %2577 = vrot.lane.b32.xlu0 %v2342, 84
      %v2578 = vpop.permute.xlu0 %2577
      %2579 = vrot.lane.b32.xlu0 %v2349, 84
      %v2580 = vpop.permute.xlu0 %2579
      %2581 = vrot.lane.b32.xlu0 %v2355, 84
      %v2582 = vpop.permute.xlu0 %2581
      %2583 = vrot.lane.b32.xlu0 %v2362, 84
      %v2584 = vpop.permute.xlu0 %2583
      %2585 = vrot.lane.b32.xlu0 %v2368, 84
      %v2586 = vpop.permute.xlu0 %2585
      %2587 = vrot.lane.b32.xlu0 %v2375, 84
      %v2588 = vpop.permute.xlu0 %2587
      %2589 = vrot.lane.b32.xlu0 %v2381, 84
      %v2590 = vpop.permute.xlu0 %2589
      %2591 = vrot.lane.b32.xlu0 %v2388, 84
      %v2592 = vpop.permute.xlu0 %2591
      %2593 = vrot.lane.b32.xlu0 %v2394, 84
      %v2594 = vpop.permute.xlu0 %2593
      %2595 = vrot.lane.b32.xlu0 %v2401, 84
      %v2596 = vpop.permute.xlu0 %2595
      %2597 = vrot.lane.b32.xlu0 %v2407, 84
      %v2598 = vpop.permute.xlu0 %2597
      %2599 = vrot.lane.b32.xlu0 %v2414, 84
      %v2600 = vpop.permute.xlu0 %2599
      %2601 = vrot.lane.b32.xlu0 %v2420, 84
      %v2602 = vpop.permute.xlu0 %2601
      %2603 = vrot.lane.b32.xlu0 %v2427, 84
      %v2604 = vpop.permute.xlu0 %2603
      %2605 = vrot.lane.b32.xlu0 %v2433, 84
      %v2606 = vpop.permute.xlu0 %2605
      %2607 = vrot.lane.b32.xlu0 %v2440, 84
      %v2608 = vpop.permute.xlu0 %2607
      %2609 = vrot.lane.b32.xlu0 %v2446, 84
      %v2610 = vpop.permute.xlu0 %2609
      %2611 = vrot.lane.b32.xlu0 %v2453, 84
      %v2612 = vpop.permute.xlu0 %2611
      %2613 = vrot.lane.b32.xlu0 %v2459, 84
      %v2614 = vpop.permute.xlu0 %2613
      %2615 = vrot.lane.b32.xlu0 %v2466, 84
      %v2616 = vpop.permute.xlu0 %2615
      %2617 = vrot.lane.b32.xlu0 %v2472, 84
      %v2618 = vpop.permute.xlu0 %2617
      %2619 = vrot.lane.b32.xlu0 %v2479, 84
      %v2620 = vpop.permute.xlu0 %2619
      %2621 = vrot.lane.b32.xlu0 %v2485, 84
      %v2622 = vpop.permute.xlu0 %2621
      %2623 = vrot.lane.b32.xlu0 %v2492, 84
      %v2624 = vpop.permute.xlu0 %2623
      %2625 = vrot.lane.b32.xlu0 %v2498, 84
      %v2626 = vpop.permute.xlu0 %2625
      %vm2627 = vcmask 1045504
      %v2628 = vrot.slane %v864, 2
      %v2629 = vrot.slane %v865, 2
      %v2630 = vsel %vm2627, %v2628, %v2629
      %v2631 = vrot.slane %v992, 2
      %v2632 = vsel %vm2627, %v2629, %v2631
      %v2633 = vrot.slane %v866, 2
      %v2634 = vrot.slane %v867, 2
      %v2635 = vsel %vm2627, %v2633, %v2634
      %v2636 = vrot.slane %v993, 2
      %v2637 = vsel %vm2627, %v2634, %v2636
      %v2638 = vrot.slane %v868, 2
      %v2639 = vrot.slane %v869, 2
      %v2640 = vsel %vm2627, %v2638, %v2639
      %v2641 = vrot.slane %v994, 2
      %v2642 = vsel %vm2627, %v2639, %v2641
      %v2643 = vrot.slane %v870, 2
      %v2644 = vrot.slane %v871, 2
      %v2645 = vsel %vm2627, %v2643, %v2644
      %v2646 = vrot.slane %v995, 2
      %v2647 = vsel %vm2627, %v2644, %v2646
      %v2648 = vrot.slane %v872, 2
      %v2649 = vrot.slane %v873, 2
      %v2650 = vsel %vm2627, %v2648, %v2649
      %v2651 = vrot.slane %v996, 2
      %v2652 = vsel %vm2627, %v2649, %v2651
      %v2653 = vrot.slane %v874, 2
      %v2654 = vrot.slane %v875, 2
      %v2655 = vsel %vm2627, %v2653, %v2654
      %v2656 = vrot.slane %v997, 2
      %v2657 = vsel %vm2627, %v2654, %v2656
      %v2658 = vrot.slane %v876, 2
      %v2659 = vrot.slane %v877, 2
      %v2660 = vsel %vm2627, %v2658, %v2659
      %v2661 = vrot.slane %v998, 2
      %v2662 = vsel %vm2627, %v2659, %v2661
      %v2663 = vrot.slane %v878, 2
      %v2664 = vrot.slane %v879, 2
      %v2665 = vsel %vm2627, %v2663, %v2664
      %v2666 = vrot.slane %v999, 2
      %v2667 = vsel %vm2627, %v2664, %v2666
      %v2668 = vrot.slane %v880, 2
      %v2669 = vrot.slane %v881, 2
      %v2670 = vsel %vm2627, %v2668, %v2669
      %v2671 = vrot.slane %v1000, 2
      %v2672 = vsel %vm2627, %v2669, %v2671
      %v2673 = vrot.slane %v882, 2
      %v2674 = vrot.slane %v883, 2
      %v2675 = vsel %vm2627, %v2673, %v2674
      %v2676 = vrot.slane %v1001, 2
      %v2677 = vsel %vm2627, %v2674, %v2676
      %v2678 = vrot.slane %v884, 2
      %v2679 = vrot.slane %v885, 2
      %v2680 = vsel %vm2627, %v2678, %v2679
      %v2681 = vrot.slane %v1002, 2
      %v2682 = vsel %vm2627, %v2679, %v2681
      %v2683 = vrot.slane %v886, 2
      %v2684 = vrot.slane %v887, 2
      %v2685 = vsel %vm2627, %v2683, %v2684
      %v2686 = vrot.slane %v1003, 2
      %v2687 = vsel %vm2627, %v2684, %v2686
      %v2688 = vrot.slane %v888, 2
      %v2689 = vrot.slane %v889, 2
      %v2690 = vsel %vm2627, %v2688, %v2689
      %v2691 = vrot.slane %v1004, 2
      %v2692 = vsel %vm2627, %v2689, %v2691
      %v2693 = vrot.slane %v890, 2
      %v2694 = vrot.slane %v891, 2
      %v2695 = vsel %vm2627, %v2693, %v2694
      %v2696 = vrot.slane %v1005, 2
      %v2697 = vsel %vm2627, %v2694, %v2696
      %v2698 = vrot.slane %v892, 2
      %v2699 = vrot.slane %v893, 2
      %v2700 = vsel %vm2627, %v2698, %v2699
      %v2701 = vrot.slane %v1006, 2
      %v2702 = vsel %vm2627, %v2699, %v2701
      %v2703 = vrot.slane %v894, 2
      %v2704 = vrot.slane %v895, 2
      %v2705 = vsel %vm2627, %v2703, %v2704
      %v2706 = vrot.slane %v1007, 2
      %v2707 = vsel %vm2627, %v2704, %v2706
      %v2708 = vrot.slane %v896, 2
      %v2709 = vrot.slane %v897, 2
      %v2710 = vsel %vm2627, %v2708, %v2709
      %v2711 = vrot.slane %v1008, 2
      %v2712 = vsel %vm2627, %v2709, %v2711
      %v2713 = vrot.slane %v898, 2
      %v2714 = vrot.slane %v899, 2
      %v2715 = vsel %vm2627, %v2713, %v2714
      %v2716 = vrot.slane %v1009, 2
      %v2717 = vsel %vm2627, %v2714, %v2716
      %v2718 = vrot.slane %v900, 2
      %v2719 = vrot.slane %v901, 2
      %v2720 = vsel %vm2627, %v2718, %v2719
      %v2721 = vrot.slane %v1010, 2
      %v2722 = vsel %vm2627, %v2719, %v2721
      %v2723 = vrot.slane %v902, 2
      %v2724 = vrot.slane %v903, 2
      %v2725 = vsel %vm2627, %v2723, %v2724
      %v2726 = vrot.slane %v1011, 2
      %v2727 = vsel %vm2627, %v2724, %v2726
      %v2728 = vrot.slane %v904, 2
      %v2729 = vrot.slane %v905, 2
      %v2730 = vsel %vm2627, %v2728, %v2729
      %v2731 = vrot.slane %v1012, 2
      %v2732 = vsel %vm2627, %v2729, %v2731
      %v2733 = vrot.slane %v906, 2
      %v2734 = vrot.slane %v907, 2
      %v2735 = vsel %vm2627, %v2733, %v2734
      %v2736 = vrot.slane %v1013, 2
      %v2737 = vsel %vm2627, %v2734, %v2736
      %v2738 = vrot.slane %v908, 2
      %v2739 = vrot.slane %v909, 2
      %v2740 = vsel %vm2627, %v2738, %v2739
      %v2741 = vrot.slane %v1014, 2
      %v2742 = vsel %vm2627, %v2739, %v2741
      %v2743 = vrot.slane %v910, 2
      %v2744 = vrot.slane %v911, 2
      %v2745 = vsel %vm2627, %v2743, %v2744
      %v2746 = vrot.slane %v1015, 2
      %v2747 = vsel %vm2627, %v2744, %v2746
      %v2748 = vrot.slane %v912, 2
      %v2749 = vrot.slane %v913, 2
      %v2750 = vsel %vm2627, %v2748, %v2749
      %v2751 = vrot.slane %v1016, 2
      %v2752 = vsel %vm2627, %v2749, %v2751
      %v2753 = vrot.slane %v914, 2
      %v2754 = vrot.slane %v915, 2
      %v2755 = vsel %vm2627, %v2753, %v2754
      %v2756 = vrot.slane %v1017, 2
      %v2757 = vsel %vm2627, %v2754, %v2756
      %v2758 = vrot.slane %v916, 2
      %v2759 = vrot.slane %v917, 2
      %v2760 = vsel %vm2627, %v2758, %v2759
      %v2761 = vrot.slane %v1018, 2
      %v2762 = vsel %vm2627, %v2759, %v2761
      %v2763 = vrot.slane %v918, 2
      %v2764 = vrot.slane %v919, 2
      %v2765 = vsel %vm2627, %v2763, %v2764
      %v2766 = vrot.slane %v1019, 2
      %v2767 = vsel %vm2627, %v2764, %v2766
      %v2768 = vrot.slane %v920, 2
      %v2769 = vrot.slane %v921, 2
      %v2770 = vsel %vm2627, %v2768, %v2769
      %v2771 = vrot.slane %v1020, 2
      %v2772 = vsel %vm2627, %v2769, %v2771
      %v2773 = vrot.slane %v922, 2
      %v2774 = vrot.slane %v923, 2
      %v2775 = vsel %vm2627, %v2773, %v2774
      %v2776 = vrot.slane %v1021, 2
      %v2777 = vsel %vm2627, %v2774, %v2776
      %v2778 = vrot.slane %v924, 2
      %v2779 = vrot.slane %v925, 2
      %v2780 = vsel %vm2627, %v2778, %v2779
      %v2781 = vrot.slane %v1022, 2
      %v2782 = vsel %vm2627, %v2779, %v2781
      %v2783 = vrot.slane %v926, 2
      %v2784 = vrot.slane %v927, 2
      %v2785 = vsel %vm2627, %v2783, %v2784
      %v2786 = vrot.slane %v1023, 2
      %v2787 = vsel %vm2627, %v2784, %v2786
      %2788 = vrot.lane.b32.xlu0 %v2630, 112
      %v2789 = vpop.permute.xlu0 %2788
      %2790 = vrot.lane.b32.xlu0 %v2632, 112
      %v2791 = vpop.permute.xlu0 %2790
      %2792 = vrot.lane.b32.xlu0 %v2635, 112
      %v2793 = vpop.permute.xlu0 %2792
      %2794 = vrot.lane.b32.xlu0 %v2637, 112
      %v2795 = vpop.permute.xlu0 %2794
      %2796 = vrot.lane.b32.xlu0 %v2640, 112
      %v2797 = vpop.permute.xlu0 %2796
      %2798 = vrot.lane.b32.xlu0 %v2642, 112
      %v2799 = vpop.permute.xlu0 %2798
      %2800 = vrot.lane.b32.xlu0 %v2645, 112
      %v2801 = vpop.permute.xlu0 %2800
      %2802 = vrot.lane.b32.xlu0 %v2647, 112
      %v2803 = vpop.permute.xlu0 %2802
      %2804 = vrot.lane.b32.xlu0 %v2650, 112
      %v2805 = vpop.permute.xlu0 %2804
      %2806 = vrot.lane.b32.xlu0 %v2652, 112
      %v2807 = vpop.permute.xlu0 %2806
      %2808 = vrot.lane.b32.xlu0 %v2655, 112
      %v2809 = vpop.permute.xlu0 %2808
      %2810 = vrot.lane.b32.xlu0 %v2657, 112
      %v2811 = vpop.permute.xlu0 %2810
      %2812 = vrot.lane.b32.xlu0 %v2660, 112
      %v2813 = vpop.permute.xlu0 %2812
      %2814 = vrot.lane.b32.xlu0 %v2662, 112
      %v2815 = vpop.permute.xlu0 %2814
      %2816 = vrot.lane.b32.xlu0 %v2665, 112
      %v2817 = vpop.permute.xlu0 %2816
      %2818 = vrot.lane.b32.xlu0 %v2667, 112
      %v2819 = vpop.permute.xlu0 %2818
      %2820 = vrot.lane.b32.xlu0 %v2670, 112
      %v2821 = vpop.permute.xlu0 %2820
      %2822 = vrot.lane.b32.xlu0 %v2672, 112
      %v2823 = vpop.permute.xlu0 %2822
      %2824 = vrot.lane.b32.xlu0 %v2675, 112
      %v2825 = vpop.permute.xlu0 %2824
      %2826 = vrot.lane.b32.xlu0 %v2677, 112
      %v2827 = vpop.permute.xlu0 %2826
      %2828 = vrot.lane.b32.xlu0 %v2680, 112
      %v2829 = vpop.permute.xlu0 %2828
      %2830 = vrot.lane.b32.xlu0 %v2682, 112
      %v2831 = vpop.permute.xlu0 %2830
      %2832 = vrot.lane.b32.xlu0 %v2685, 112
      %v2833 = vpop.permute.xlu0 %2832
      %2834 = vrot.lane.b32.xlu0 %v2687, 112
      %v2835 = vpop.permute.xlu0 %2834
      %2836 = vrot.lane.b32.xlu0 %v2690, 112
      %v2837 = vpop.permute.xlu0 %2836
      %2838 = vrot.lane.b32.xlu0 %v2692, 112
      %v2839 = vpop.permute.xlu0 %2838
      %2840 = vrot.lane.b32.xlu0 %v2695, 112
      %v2841 = vpop.permute.xlu0 %2840
      %2842 = vrot.lane.b32.xlu0 %v2697, 112
      %v2843 = vpop.permute.xlu0 %2842
      %2844 = vrot.lane.b32.xlu0 %v2700, 112
      %v2845 = vpop.permute.xlu0 %2844
      %2846 = vrot.lane.b32.xlu0 %v2702, 112
      %v2847 = vpop.permute.xlu0 %2846
      %2848 = vrot.lane.b32.xlu0 %v2705, 112
      %v2849 = vpop.permute.xlu0 %2848
      %2850 = vrot.lane.b32.xlu0 %v2707, 112
      %v2851 = vpop.permute.xlu0 %2850
      %2852 = vrot.lane.b32.xlu0 %v2710, 112
      %v2853 = vpop.permute.xlu0 %2852
      %2854 = vrot.lane.b32.xlu0 %v2712, 112
      %v2855 = vpop.permute.xlu0 %2854
      %2856 = vrot.lane.b32.xlu0 %v2715, 112
      %v2857 = vpop.permute.xlu0 %2856
      %2858 = vrot.lane.b32.xlu0 %v2717, 112
      %v2859 = vpop.permute.xlu0 %2858
      %2860 = vrot.lane.b32.xlu0 %v2720, 112
      %v2861 = vpop.permute.xlu0 %2860
      %2862 = vrot.lane.b32.xlu0 %v2722, 112
      %v2863 = vpop.permute.xlu0 %2862
      %2864 = vrot.lane.b32.xlu0 %v2725, 112
      %v2865 = vpop.permute.xlu0 %2864
      %2866 = vrot.lane.b32.xlu0 %v2727, 112
      %v2867 = vpop.permute.xlu0 %2866
      %2868 = vrot.lane.b32.xlu0 %v2730, 112
      %v2869 = vpop.permute.xlu0 %2868
      %2870 = vrot.lane.b32.xlu0 %v2732, 112
      %v2871 = vpop.permute.xlu0 %2870
      %2872 = vrot.lane.b32.xlu0 %v2735, 112
      %v2873 = vpop.permute.xlu0 %2872
      %2874 = vrot.lane.b32.xlu0 %v2737, 112
      %v2875 = vpop.permute.xlu0 %2874
      %2876 = vrot.lane.b32.xlu0 %v2740, 112
      %v2877 = vpop.permute.xlu0 %2876
      %2878 = vrot.lane.b32.xlu0 %v2742, 112
      %v2879 = vpop.permute.xlu0 %2878
      %2880 = vrot.lane.b32.xlu0 %v2745, 112
      %v2881 = vpop.permute.xlu0 %2880
      %2882 = vrot.lane.b32.xlu0 %v2747, 112
      %v2883 = vpop.permute.xlu0 %2882
      %2884 = vrot.lane.b32.xlu0 %v2750, 112
      %v2885 = vpop.permute.xlu0 %2884
      %2886 = vrot.lane.b32.xlu0 %v2752, 112
      %v2887 = vpop.permute.xlu0 %2886
      %2888 = vrot.lane.b32.xlu0 %v2755, 112
      %v2889 = vpop.permute.xlu0 %2888
      %2890 = vrot.lane.b32.xlu0 %v2757, 112
      %v2891 = vpop.permute.xlu0 %2890
      %2892 = vrot.lane.b32.xlu0 %v2760, 112
      %v2893 = vpop.permute.xlu0 %2892
      %2894 = vrot.lane.b32.xlu0 %v2762, 112
      %v2895 = vpop.permute.xlu0 %2894
      %2896 = vrot.lane.b32.xlu0 %v2765, 112
      %v2897 = vpop.permute.xlu0 %2896
      %2898 = vrot.lane.b32.xlu0 %v2767, 112
      %v2899 = vpop.permute.xlu0 %2898
      %2900 = vrot.lane.b32.xlu0 %v2770, 112
      %v2901 = vpop.permute.xlu0 %2900
      %2902 = vrot.lane.b32.xlu0 %v2772, 112
      %v2903 = vpop.permute.xlu0 %2902
      %2904 = vrot.lane.b32.xlu0 %v2775, 112
      %v2905 = vpop.permute.xlu0 %2904
      %2906 = vrot.lane.b32.xlu0 %v2777, 112
      %v2907 = vpop.permute.xlu0 %2906
      %2908 = vrot.lane.b32.xlu0 %v2780, 112
      %v2909 = vpop.permute.xlu0 %2908
      %2910 = vrot.lane.b32.xlu0 %v2782, 112
      %v2911 = vpop.permute.xlu0 %2910
      %2912 = vrot.lane.b32.xlu0 %v2785, 112
      %v2913 = vpop.permute.xlu0 %2912
      %2914 = vrot.lane.b32.xlu0 %v2787, 112
      %v2915 = vpop.permute.xlu0 %2914
      %vm2916 = vcmask 228352
      %v2918 = vsel %vm2916, %v864, %v1666
      %v2920 = vsel %vm2916, %v865, %v1668
      %v2922 = vsel %vm2916, %v866, %v1670
      %v2924 = vsel %vm2916, %v867, %v1672
      %v2926 = vsel %vm2916, %v868, %v1674
      %v2928 = vsel %vm2916, %v869, %v1676
      %v2930 = vsel %vm2916, %v870, %v1678
      %v2932 = vsel %vm2916, %v871, %v1680
      %v2934 = vsel %vm2916, %v872, %v1682
      %v2936 = vsel %vm2916, %v873, %v1684
      %v2938 = vsel %vm2916, %v874, %v1686
      %v2940 = vsel %vm2916, %v875, %v1688
      %v2942 = vsel %vm2916, %v876, %v1690
      %v2944 = vsel %vm2916, %v877, %v1692
      %v2946 = vsel %vm2916, %v878, %v1694
      %v2948 = vsel %vm2916, %v879, %v1696
      %v2950 = vsel %vm2916, %v880, %v1698
      %v2952 = vsel %vm2916, %v881, %v1700
      %v2954 = vsel %vm2916, %v882, %v1702
      %v2956 = vsel %vm2916, %v883, %v1704
      %v2958 = vsel %vm2916, %v884, %v1706
      %v2960 = vsel %vm2916, %v885, %v1708
      %v2962 = vsel %vm2916, %v886, %v1710
      %v2964 = vsel %vm2916, %v887, %v1712
      %v2966 = vsel %vm2916, %v888, %v1714
      %v2968 = vsel %vm2916, %v889, %v1716
      %v2970 = vsel %vm2916, %v890, %v1718
      %v2972 = vsel %vm2916, %v891, %v1720
      %v2974 = vsel %vm2916, %v892, %v1722
      %v2976 = vsel %vm2916, %v893, %v1724
      %v2978 = vsel %vm2916, %v894, %v1726
      %v2980 = vsel %vm2916, %v895, %v1728
      %v2982 = vsel %vm2916, %v896, %v1730
      %v2984 = vsel %vm2916, %v897, %v1732
      %v2986 = vsel %vm2916, %v898, %v1734
      %v2988 = vsel %vm2916, %v899, %v1736
      %v2990 = vsel %vm2916, %v900, %v1738
      %v2992 = vsel %vm2916, %v901, %v1740
      %v2994 = vsel %vm2916, %v902, %v1742
      %v2996 = vsel %vm2916, %v903, %v1744
      %v2998 = vsel %vm2916, %v904, %v1746
      %v3000 = vsel %vm2916, %v905, %v1748
      %v3002 = vsel %vm2916, %v906, %v1750
      %v3004 = vsel %vm2916, %v907, %v1752
      %v3006 = vsel %vm2916, %v908, %v1754
      %v3008 = vsel %vm2916, %v909, %v1756
      %v3010 = vsel %vm2916, %v910, %v1758
      %v3012 = vsel %vm2916, %v911, %v1760
      %v3014 = vsel %vm2916, %v912, %v1762
      %v3016 = vsel %vm2916, %v913, %v1764
      %v3018 = vsel %vm2916, %v914, %v1766
      %v3020 = vsel %vm2916, %v915, %v1768
      %v3022 = vsel %vm2916, %v916, %v1770
      %v3024 = vsel %vm2916, %v917, %v1772
      %v3026 = vsel %vm2916, %v918, %v1774
      %v3028 = vsel %vm2916, %v919, %v1776
      %v3030 = vsel %vm2916, %v920, %v1778
      %v3032 = vsel %vm2916, %v921, %v1780
      %v3034 = vsel %vm2916, %v922, %v1782
      %v3036 = vsel %vm2916, %v923, %v1784
      %v3038 = vsel %vm2916, %v924, %v1786
      %v3040 = vsel %vm2916, %v925, %v1788
      %v3042 = vsel %vm2916, %v926, %v1790
      %v3044 = vsel %vm2916, %v927, %v1792
      %vm3045 = vcmask 457728
      %v3047 = vsel %vm3045, %v2918, %v1955
      %v3049 = vsel %vm3045, %v2920, %v1957
      %v3051 = vsel %vm3045, %v2922, %v1959
      %v3053 = vsel %vm3045, %v2924, %v1961
      %v3055 = vsel %vm3045, %v2926, %v1963
      %v3057 = vsel %vm3045, %v2928, %v1965
      %v3059 = vsel %vm3045, %v2930, %v1967
      %v3061 = vsel %vm3045, %v2932, %v1969
      %v3063 = vsel %vm3045, %v2934, %v1971
      %v3065 = vsel %vm3045, %v2936, %v1973
      %v3067 = vsel %vm3045, %v2938, %v1975
      %v3069 = vsel %vm3045, %v2940, %v1977
      %v3071 = vsel %vm3045, %v2942, %v1979
      %v3073 = vsel %vm3045, %v2944, %v1981
      %v3075 = vsel %vm3045, %v2946, %v1983
      %v3077 = vsel %vm3045, %v2948, %v1985
      %v3079 = vsel %vm3045, %v2950, %v1987
      %v3081 = vsel %vm3045, %v2952, %v1989
      %v3083 = vsel %vm3045, %v2954, %v1991
      %v3085 = vsel %vm3045, %v2956, %v1993
      %v3087 = vsel %vm3045, %v2958, %v1995
      %v3089 = vsel %vm3045, %v2960, %v1997
      %v3091 = vsel %vm3045, %v2962, %v1999
      %v3093 = vsel %vm3045, %v2964, %v2001
      %v3095 = vsel %vm3045, %v2966, %v2003
      %v3097 = vsel %vm3045, %v2968, %v2005
      %v3099 = vsel %vm3045, %v2970, %v2007
      %v3101 = vsel %vm3045, %v2972, %v2009
      %v3103 = vsel %vm3045, %v2974, %v2011
      %v3105 = vsel %vm3045, %v2976, %v2013
      %v3107 = vsel %vm3045, %v2978, %v2015
      %v3109 = vsel %vm3045, %v2980, %v2017
      %v3111 = vsel %vm3045, %v2982, %v2019
      %v3113 = vsel %vm3045, %v2984, %v2021
      %v3115 = vsel %vm3045, %v2986, %v2023
      %v3117 = vsel %vm3045, %v2988, %v2025
      %v3119 = vsel %vm3045, %v2990, %v2027
      %v3121 = vsel %vm3045, %v2992, %v2029
      %v3123 = vsel %vm3045, %v2994, %v2031
      %v3125 = vsel %vm3045, %v2996, %v2033
      %v3127 = vsel %vm3045, %v2998, %v2035
      %v3129 = vsel %vm3045, %v3000, %v2037
      %v3131 = vsel %vm3045, %v3002, %v2039
      %v3133 = vsel %vm3045, %v3004, %v2041
      %v3135 = vsel %vm3045, %v3006, %v2043
      %v3137 = vsel %vm3045, %v3008, %v2045
      %v3139 = vsel %vm3045, %v3010, %v2047
      %v3141 = vsel %vm3045, %v3012, %v2049
      %v3143 = vsel %vm3045, %v3014, %v2051
      %v3145 = vsel %vm3045, %v3016, %v2053
      %v3147 = vsel %vm3045, %v3018, %v2055
      %v3149 = vsel %vm3045, %v3020, %v2057
      %v3151 = vsel %vm3045, %v3022, %v2059
      %v3153 = vsel %vm3045, %v3024, %v2061
      %v3155 = vsel %vm3045, %v3026, %v2063
      %v3157 = vsel %vm3045, %v3028, %v2065
      %v3159 = vsel %vm3045, %v3030, %v2067
      %v3161 = vsel %vm3045, %v3032, %v2069
      %v3163 = vsel %vm3045, %v3034, %v2071
      %v3165 = vsel %vm3045, %v3036, %v2073
      %v3167 = vsel %vm3045, %v3038, %v2075
      %v3169 = vsel %vm3045, %v3040, %v2077
      %v3171 = vsel %vm3045, %v3042, %v2079
      %v3173 = vsel %vm3045, %v3044, %v2081
      %vm3174 = vcmask 687104
      %v3176 = vsel %vm3174, %v3047, %v2500
      %v3178 = vsel %vm3174, %v3049, %v2502
      %v3180 = vsel %vm3174, %v3051, %v2504
      %v3182 = vsel %vm3174, %v3053, %v2506
      %v3184 = vsel %vm3174, %v3055, %v2508
      %v3186 = vsel %vm3174, %v3057, %v2510
      %v3188 = vsel %vm3174, %v3059, %v2512
      %v3190 = vsel %vm3174, %v3061, %v2514
      %v3192 = vsel %vm3174, %v3063, %v2516
      %v3194 = vsel %vm3174, %v3065, %v2518
      %v3196 = vsel %vm3174, %v3067, %v2520
      %v3198 = vsel %vm3174, %v3069, %v2522
      %v3200 = vsel %vm3174, %v3071, %v2524
      %v3202 = vsel %vm3174, %v3073, %v2526
      %v3204 = vsel %vm3174, %v3075, %v2528
      %v3206 = vsel %vm3174, %v3077, %v2530
      %v3208 = vsel %vm3174, %v3079, %v2532
      %v3210 = vsel %vm3174, %v3081, %v2534
      %v3212 = vsel %vm3174, %v3083, %v2536
      %v3214 = vsel %vm3174, %v3085, %v2538
      %v3216 = vsel %vm3174, %v3087, %v2540
      %v3218 = vsel %vm3174, %v3089, %v2542
      %v3220 = vsel %vm3174, %v3091, %v2544
      %v3222 = vsel %vm3174, %v3093, %v2546
      %v3224 = vsel %vm3174, %v3095, %v2548
      %v3226 = vsel %vm3174, %v3097, %v2550
      %v3228 = vsel %vm3174, %v3099, %v2552
      %v3230 = vsel %vm3174, %v3101, %v2554
      %v3232 = vsel %vm3174, %v3103, %v2556
      %v3234 = vsel %vm3174, %v3105, %v2558
      %v3236 = vsel %vm3174, %v3107, %v2560
      %v3238 = vsel %vm3174, %v3109, %v2562
      %v3240 = vsel %vm3174, %v3111, %v2564
      %v3242 = vsel %vm3174, %v3113, %v2566
      %v3244 = vsel %vm3174, %v3115, %v2568
      %v3246 = vsel %vm3174, %v3117, %v2570
      %v3248 = vsel %vm3174, %v3119, %v2572
      %v3250 = vsel %vm3174, %v3121, %v2574
      %v3252 = vsel %vm3174, %v3123, %v2576
      %v3254 = vsel %vm3174, %v3125, %v2578
      %v3256 = vsel %vm3174, %v3127, %v2580
      %v3258 = vsel %vm3174, %v3129, %v2582
      %v3260 = vsel %vm3174, %v3131, %v2584
      %v3262 = vsel %vm3174, %v3133, %v2586
      %v3264 = vsel %vm3174, %v3135, %v2588
      %v3266 = vsel %vm3174, %v3137, %v2590
      %v3268 = vsel %vm3174, %v3139, %v2592
      %v3270 = vsel %vm3174, %v3141, %v2594
      %v3272 = vsel %vm3174, %v3143, %v2596
      %v3274 = vsel %vm3174, %v3145, %v2598
      %v3276 = vsel %vm3174, %v3147, %v2600
      %v3278 = vsel %vm3174, %v3149, %v2602
      %v3280 = vsel %vm3174, %v3151, %v2604
      %v3282 = vsel %vm3174, %v3153, %v2606
      %v3284 = vsel %vm3174, %v3155, %v2608
      %v3286 = vsel %vm3174, %v3157, %v2610
      %v3288 = vsel %vm3174, %v3159, %v2612
      %v3290 = vsel %vm3174, %v3161, %v2614
      %v3292 = vsel %vm3174, %v3163, %v2616
      %v3294 = vsel %vm3174, %v3165, %v2618
      %v3296 = vsel %vm3174, %v3167, %v2620
      %v3298 = vsel %vm3174, %v3169, %v2622
      %v3300 = vsel %vm3174, %v3171, %v2624
      %v3302 = vsel %vm3174, %v3173, %v2626
      %vm3303 = vcmask 916480
      %v3305 = vsel %vm3303, %v3176, %v2789
      %v3308 = vsel %vm3303, %v3178, %v2791
      %v3311 = vsel %vm3303, %v3180, %v2793
      %v3314 = vsel %vm3303, %v3182, %v2795
      %v3317 = vsel %vm3303, %v3184, %v2797
      %v3320 = vsel %vm3303, %v3186, %v2799
      %v3323 = vsel %vm3303, %v3188, %v2801
      %v3326 = vsel %vm3303, %v3190, %v2803
      %v3329 = vsel %vm3303, %v3192, %v2805
      %v3332 = vsel %vm3303, %v3194, %v2807
      %v3335 = vsel %vm3303, %v3196, %v2809
      %v3338 = vsel %vm3303, %v3198, %v2811
      %v3341 = vsel %vm3303, %v3200, %v2813
      %v3344 = vsel %vm3303, %v3202, %v2815
      %v3347 = vsel %vm3303, %v3204, %v2817
      %v3350 = vsel %vm3303, %v3206, %v2819
      %v3353 = vsel %vm3303, %v3208, %v2821
      %v3356 = vsel %vm3303, %v3210, %v2823
      %v3359 = vsel %vm3303, %v3212, %v2825
      %v3362 = vsel %vm3303, %v3214, %v2827
      %v3365 = vsel %vm3303, %v3216, %v2829
      %v3368 = vsel %vm3303, %v3218, %v2831
      %v3371 = vsel %vm3303, %v3220, %v2833
      %v3374 = vsel %vm3303, %v3222, %v2835
      %v3377 = vsel %vm3303, %v3224, %v2837
      %v3380 = vsel %vm3303, %v3226, %v2839
      %v3383 = vsel %vm3303, %v3228, %v2841
      %v3386 = vsel %vm3303, %v3230, %v2843
      %v3389 = vsel %vm3303, %v3232, %v2845
      %v3392 = vsel %vm3303, %v3234, %v2847
      %v3395 = vsel %vm3303, %v3236, %v2849
      %v3398 = vsel %vm3303, %v3238, %v2851
      %v3401 = vsel %vm3303, %v3240, %v2853
      %v3404 = vsel %vm3303, %v3242, %v2855
      %v3407 = vsel %vm3303, %v3244, %v2857
      %v3410 = vsel %vm3303, %v3246, %v2859
      %v3413 = vsel %vm3303, %v3248, %v2861
      %v3416 = vsel %vm3303, %v3250, %v2863
      %v3419 = vsel %vm3303, %v3252, %v2865
      %v3422 = vsel %vm3303, %v3254, %v2867
      %v3425 = vsel %vm3303, %v3256, %v2869
      %v3428 = vsel %vm3303, %v3258, %v2871
      %v3431 = vsel %vm3303, %v3260, %v2873
      %v3434 = vsel %vm3303, %v3262, %v2875
      %v3437 = vsel %vm3303, %v3264, %v2877
      %v3440 = vsel %vm3303, %v3266, %v2879
      %v3443 = vsel %vm3303, %v3268, %v2881
      %v3446 = vsel %vm3303, %v3270, %v2883
      %v3449 = vsel %vm3303, %v3272, %v2885
      %v3452 = vsel %vm3303, %v3274, %v2887
      %v3455 = vsel %vm3303, %v3276, %v2889
      %v3458 = vsel %vm3303, %v3278, %v2891
      %v3461 = vsel %vm3303, %v3280, %v2893
      %v3464 = vsel %vm3303, %v3282, %v2895
      %v3467 = vsel %vm3303, %v3284, %v2897
      %v3470 = vsel %vm3303, %v3286, %v2899
      %v3473 = vsel %vm3303, %v3288, %v2901
      %v3476 = vsel %vm3303, %v3290, %v2903
      %v3479 = vsel %vm3303, %v3292, %v2905
      %v3482 = vsel %vm3303, %v3294, %v2907
      %v3485 = vsel %vm3303, %v3296, %v2909
      %v3488 = vsel %vm3303, %v3298, %v2911
      %v3491 = vsel %vm3303, %v3300, %v2913
      %v3494 = vsel %vm3303, %v3302, %v2915
      %v3496 = vld [vmem:[%s1] sm:$0xff]
      %v3497 = vld [vmem:[%s1 + $0x8] sm:$0xff]
      %v3498 = vld [vmem:[%s1 + $0x10] sm:$0xff]
      %v3499 = vld [vmem:[%s1 + $0x18] sm:$0xff]
      %v3500 = vld [vmem:[%s1 + $0x20] sm:$0xff]
      %v3501 = vld [vmem:[%s1 + $0x28] sm:$0xff]
      %v3502 = vld [vmem:[%s1 + $0x30] sm:$0xff]
      %v3503 = vld [vmem:[%s1 + $0x38] sm:$0xff]
      %v3504 = vld [vmem:[%s1 + $0x40] sm:$0xff]
      %v3505 = vld [vmem:[%s1 + $0x48] sm:$0xff]
      %v3506 = vld [vmem:[%s1 + $0x50] sm:$0xff]
      %v3507 = vld [vmem:[%s1 + $0x58] sm:$0xff]
      %v3508 = vld [vmem:[%s1 + $0x60] sm:$0xff]
      %v3509 = vld [vmem:[%s1 + $0x68] sm:$0xff]
      %v3510 = vld [vmem:[%s1 + $0x70] sm:$0xff]
      %v3511 = vld [vmem:[%s1 + $0x78] sm:$0xff]
      %v3512 = vld [vmem:[%s1 + $0x80] sm:$0xff]
      %v3513 = vld [vmem:[%s1 + $0x88] sm:$0x33]
      %v3514 = vld [vmem:[%s2] sm:$0x3]
      %v3516 = vlaneseq
      %v3517 = vshrl.u32 %v3516, 7
      %v3518 = vsub.s32 0, %v3517
      %v3519 = vrot.slane %v3514, %v3518
      %v3520 = vlaneseq
      %v3521 = vshrl.u32 %v3520, 7
      %v3522 = vsub.s32 1, %v3521
      %v3523 = vrot.slane %v3514, %v3522
      %v3544 = vunpack.c.l.b16 %v3496
      %v3545 = vunpack.c.h.b16 %v3496
      %v3546 = vunpack.c.l.b16 %v3497
      %v3547 = vunpack.c.h.b16 %v3497
      %v3548 = vunpack.c.l.b16 %v3498
      %v3549 = vunpack.c.h.b16 %v3498
      %v3550 = vunpack.c.l.b16 %v3499
      %v3551 = vunpack.c.h.b16 %v3499
      %v3552 = vunpack.c.l.b16 %v3500
      %v3553 = vunpack.c.h.b16 %v3500
      %v3554 = vunpack.c.l.b16 %v3501
      %v3555 = vunpack.c.h.b16 %v3501
      %v3556 = vunpack.c.l.b16 %v3502
      %v3557 = vunpack.c.h.b16 %v3502
      %v3558 = vunpack.c.l.b16 %v3503
      %v3559 = vunpack.c.h.b16 %v3503
      %v3560 = vunpack.c.l.b16 %v3504
      %v3561 = vunpack.c.h.b16 %v3504
      %v3562 = vunpack.c.l.b16 %v3505
      %v3563 = vunpack.c.h.b16 %v3505
      %v3564 = vunpack.c.l.b16 %v3506
      %v3565 = vunpack.c.h.b16 %v3506
      %v3566 = vunpack.c.l.b16 %v3507
      %v3567 = vunpack.c.h.b16 %v3507
      %v3568 = vunpack.c.l.b16 %v3508
      %v3569 = vunpack.c.h.b16 %v3508
      %v3570 = vunpack.c.l.b16 %v3509
      %v3571 = vunpack.c.h.b16 %v3509
      %v3572 = vunpack.c.l.b16 %v3510
      %v3573 = vunpack.c.h.b16 %v3510
      %v3574 = vunpack.c.l.b16 %v3511
      %v3575 = vunpack.c.h.b16 %v3511
      %v3576 = vunpack.c.l.b16 %v3512
      %v3577 = vunpack.c.h.b16 %v3512
      %v3578 = vunpack.c.l.b16 %v3513
      %v3579 = vunpack.c.h.b16 %v3513
      %v3580 = vpack.c.b16 %v3546, %v3544
      %v3581 = vpack.c.b16 %v3547, %v3545
      %v3582 = vpack.c.b16 %v3550, %v3548
      %v3583 = vpack.c.b16 %v3551, %v3549
      %v3584 = vpack.c.b16 %v3554, %v3552
      %v3585 = vpack.c.b16 %v3555, %v3553
      %v3586 = vpack.c.b16 %v3558, %v3556
      %v3587 = vpack.c.b16 %v3559, %v3557
      %v3588 = vpack.c.b16 %v3562, %v3560
      %v3589 = vpack.c.b16 %v3563, %v3561
      %v3590 = vpack.c.b16 %v3566, %v3564
      %v3591 = vpack.c.b16 %v3567, %v3565
      %v3592 = vpack.c.b16 %v3570, %v3568
      %v3593 = vpack.c.b16 %v3571, %v3569
      %v3594 = vpack.c.b16 %v3574, %v3572
      %v3595 = vpack.c.b16 %v3575, %v3573
      %v3596 = vpack.c.b16 %v3578, %v3576
      %v3597 = vpack.c.b16 %v3579, %v3577
      %vm3614 = vcmask 97280
      %v3615 = vsel %vm3614, %v2789, 0
      %v3617 = vsel %vm3614, %v2791, 0
      %v3619 = vsel %vm3614, %v2793, 0
      %v3621 = vsel %vm3614, %v2795, 0
      %v3623 = vsel %vm3614, %v2797, 0
      %v3625 = vsel %vm3614, %v2799, 0
      %v3627 = vsel %vm3614, %v2801, 0
      %v3629 = vsel %vm3614, %v2803, 0
      %v3631 = vsel %vm3614, %v2805, 0
      %v3633 = vsel %vm3614, %v2807, 0
      %v3635 = vsel %vm3614, %v2809, 0
      %v3637 = vsel %vm3614, %v2811, 0
      %v3639 = vsel %vm3614, %v2813, 0
      %v3641 = vsel %vm3614, %v2815, 0
      %v3643 = vsel %vm3614, %v2817, 0
      %v3645 = vsel %vm3614, %v2819, 0
      %v3647 = vsel %vm3614, %v2821, 0
      %v3649 = vsel %vm3614, %v2823, 0
      %v3651 = vsel %vm3614, %v2825, 0
      %v3653 = vsel %vm3614, %v2827, 0
      %v3655 = vsel %vm3614, %v2829, 0
      %v3657 = vsel %vm3614, %v2831, 0
      %v3659 = vsel %vm3614, %v2833, 0
      %v3661 = vsel %vm3614, %v2835, 0
      %v3663 = vsel %vm3614, %v2837, 0
      %v3665 = vsel %vm3614, %v2839, 0
      %v3667 = vsel %vm3614, %v2841, 0
      %v3669 = vsel %vm3614, %v2843, 0
      %v3671 = vsel %vm3614, %v2845, 0
      %v3673 = vsel %vm3614, %v2847, 0
      %v3675 = vsel %vm3614, %v2849, 0
      %v3677 = vsel %vm3614, %v2851, 0
      %v3679 = vsel %vm3614, %v2853, 0
      %v3681 = vsel %vm3614, %v2855, 0
      %v3683 = vsel %vm3614, %v2857, 0
      %v3685 = vsel %vm3614, %v2859, 0
      %v3687 = vsel %vm3614, %v2861, 0
      %v3689 = vsel %vm3614, %v2863, 0
      %v3691 = vsel %vm3614, %v2865, 0
      %v3693 = vsel %vm3614, %v2867, 0
      %v3695 = vsel %vm3614, %v2869, 0
      %v3697 = vsel %vm3614, %v2871, 0
      %v3699 = vsel %vm3614, %v2873, 0
      %v3701 = vsel %vm3614, %v2875, 0
      %v3703 = vsel %vm3614, %v2877, 0
      %v3705 = vsel %vm3614, %v2879, 0
      %v3707 = vsel %vm3614, %v2881, 0
      %v3709 = vsel %vm3614, %v2883, 0
      %v3711 = vsel %vm3614, %v2885, 0
      %v3713 = vsel %vm3614, %v2887, 0
      %v3715 = vsel %vm3614, %v2889, 0
      %v3717 = vsel %vm3614, %v2891, 0
      %v3719 = vsel %vm3614, %v2893, 0
      %v3721 = vsel %vm3614, %v2895, 0
      %v3723 = vsel %vm3614, %v2897, 0
      %v3725 = vsel %vm3614, %v2899, 0
      %v3727 = vsel %vm3614, %v2901, 0
      %v3729 = vsel %vm3614, %v2903, 0
      %v3731 = vsel %vm3614, %v2905, 0
      %v3733 = vsel %vm3614, %v2907, 0
      %v3735 = vsel %vm3614, %v2909, 0
      %v3737 = vsel %vm3614, %v2911, 0
      %v3739 = vsel %vm3614, %v2913, 0
      %v3741 = vsel %vm3614, %v2915, 0
      %vm3743 = vcmask 1045504
      %v3745 = vsel %vm3743, %v3596, 0
      %v3748 = vsel %vm3743, %v3597, 0
      %3750 = vmatprep.subr.bf16.mxu0 %v3581
      %3751 = vmatpush1.bf16.msra.mxu0 %v3580
      %3752 = vmatprep.subr.bf16.mxu0 %v3583
      %3753 = vmatpush1.bf16.msra.mxu0 %v3582
      %3754 = vmatprep.subr.bf16.mxu0 %v3585
      %3755 = vmatpush1.bf16.msra.mxu0 %v3584
      %3756 = vmatprep.subr.bf16.mxu0 %v3587
      %3757 = vmatpush1.bf16.msra.mxu0 %v3586
      %3758 = vmatprep.subr.bf16.mxu0 %v3589
      %3759 = vmatpush1.bf16.msra.mxu0 %v3588
      %3760 = vmatprep.subr.bf16.mxu0 %v3591
      %3761 = vmatpush1.bf16.msra.mxu0 %v3590
      %3762 = vmatprep.subr.bf16.mxu0 %v3593
      %3763 = vmatpush1.bf16.msra.mxu0 %v3592
      %3764 = vmatprep.subr.bf16.mxu0 %v3595
      %3765 = vmatpush1.bf16.msra.mxu0 %v3594
      %3766 = vmatprep.subr.bf16.mxu0 %v3748
      %3767 = vmatpush1.bf16.msra.mxu0 %v3745
      %3768 = vmatprep.subr.bf16.mxu0 0
      %3769 = vmatpush1.bf16.msra.mxu0 0
      %3770 = vmatprep.subr.bf16.mxu0 0
      %3771 = vmatpush1.bf16.msra.mxu0 0
      %3772 = vmatprep.subr.bf16.mxu0 0
      %3773 = vmatpush1.bf16.msra.mxu0 0
      %3774 = vmatprep.subr.bf16.mxu0 0
      %3775 = vmatpush1.bf16.msra.mxu0 0
      %3776 = vmatprep.subr.bf16.mxu0 0
      %3777 = vmatpush1.bf16.msra.mxu0 0
      %3778 = vmatprep.subr.bf16.mxu0 0
      %3779 = vmatpush1.bf16.msra.mxu0 0
      %3780 = vmatprep.subr.bf16.mxu0 0
      %3781 = vmatpush1.bf16.msra.mxu0 0
      %3782 = vmatprep.mubr.bf16.mxu0 %v3615
      %3783 = vmatmul.mubr.bf16.gmra.mrb[0].mxu0 %v3305
      %v3784 = vpop.f32.mrb[0].mxu0
      %v3785 = vadd.f32 %v3519, %v3784
      %v3786 = vpop.f32.mrb[0].mxu0
      %v3787 = vadd.f32 %v3523, %v3786
      %v3788 = vpop.f32.mrb[0].mxu0
      %v3789 = vadd.f32 %v3519, %v3788
      %v3790 = vpop.f32.mrb[0].mxu0
      %v3791 = vadd.f32 %v3523, %v3790
      %3792 = vmatprep.mubr.bf16.mxu0 %v3617
      %3793 = vmatmul.mubr.bf16.gmra.mrb[0].mxu0 %v3308
      %v3794 = vpop.f32.mrb[0].mxu0
      %v3795 = vadd.f32 %v3519, %v3794
      %v3796 = vpop.f32.mrb[0].mxu0
      %v3797 = vadd.f32 %v3523, %v3796
      %v3798 = vpop.f32.mrb[0].mxu0
      %v3799 = vadd.f32 %v3519, %v3798
      %v3800 = vpop.f32.mrb[0].mxu0
      %v3801 = vadd.f32 %v3523, %v3800
      %3802 = vmatprep.mubr.bf16.mxu0 %v3619
      %3803 = vmatmul.mubr.bf16.gmra.mrb[0].mxu0 %v3311
      %v3804 = vpop.f32.mrb[0].mxu0
      %v3805 = vadd.f32 %v3519, %v3804
      %v3806 = vpop.f32.mrb[0].mxu0
      %v3807 = vadd.f32 %v3523, %v3806
      %v3808 = vpop.f32.mrb[0].mxu0
      %v3809 = vadd.f32 %v3519, %v3808
      %v3810 = vpop.f32.mrb[0].mxu0
      %v3811 = vadd.f32 %v3523, %v3810
      %3812 = vmatprep.mubr.bf16.mxu0 %v3621
      %3813 = vmatmul.mubr.bf16.gmra.mrb[0].mxu0 %v3314
      %v3814 = vpop.f32.mrb[0].mxu0
      %v3815 = vadd.f32 %v3519, %v3814
      %v3816 = vpop.f32.mrb[0].mxu0
      %v3817 = vadd.f32 %v3523, %v3816
      %v3818 = vpop.f32.mrb[0].mxu0
      %v3819 = vadd.f32 %v3519, %v3818
      %v3820 = vpop.f32.mrb[0].mxu0
      %v3821 = vadd.f32 %v3523, %v3820
      %3822 = vmatprep.mubr.bf16.mxu0 %v3623
      %3823 = vmatmul.mubr.bf16.gmra.mrb[0].mxu0 %v3317
      %v3824 = vpop.f32.mrb[0].mxu0
      %v3825 = vadd.f32 %v3519, %v3824
      %v3826 = vpop.f32.mrb[0].mxu0
      %v3827 = vadd.f32 %v3523, %v3826
      %v3828 = vpop.f32.mrb[0].mxu0
      %v3829 = vadd.f32 %v3519, %v3828
      %v3830 = vpop.f32.mrb[0].mxu0
      %v3831 = vadd.f32 %v3523, %v3830
      %3832 = vmatprep.mubr.bf16.mxu0 %v3625
      %3833 = vmatmul.mubr.bf16.gmra.mrb[0].mxu0 %v3320
      %v3834 = vpop.f32.mrb[0].mxu0
      %v3835 = vadd.f32 %v3519, %v3834
      %v3836 = vpop.f32.mrb[0].mxu0
      %v3837 = vadd.f32 %v3523, %v3836
      %v3838 = vpop.f32.mrb[0].mxu0
      %v3839 = vadd.f32 %v3519, %v3838
      %v3840 = vpop.f32.mrb[0].mxu0
      %v3841 = vadd.f32 %v3523, %v3840
      %3842 = vmatprep.mubr.bf16.mxu0 %v3627
      %3843 = vmatmul.mubr.bf16.gmra.mrb[0].mxu0 %v3323
      %v3844 = vpop.f32.mrb[0].mxu0
      %v3845 = vadd.f32 %v3519, %v3844
      %v3846 = vpop.f32.mrb[0].mxu0
      %v3847 = vadd.f32 %v3523, %v3846
      %v3848 = vpop.f32.mrb[0].mxu0
      %v3849 = vadd.f32 %v3519, %v3848
      %v3850 = vpop.f32.mrb[0].mxu0
      %v3851 = vadd.f32 %v3523, %v3850
      %3852 = vmatprep.mubr.bf16.mxu0 %v3629
      %3853 = vmatmul.mubr.bf16.gmra.mrb[0].mxu0 %v3326
      %v3854 = vpop.f32.mrb[0].mxu0
      %v3855 = vadd.f32 %v3519, %v3854
      %v3856 = vpop.f32.mrb[0].mxu0
      %v3857 = vadd.f32 %v3523, %v3856
      %v3858 = vpop.f32.mrb[0].mxu0
      %v3859 = vadd.f32 %v3519, %v3858
      %v3860 = vpop.f32.mrb[0].mxu0
      %v3861 = vadd.f32 %v3523, %v3860
      %3862 = vmatprep.mubr.bf16.mxu0 %v3631
      %3863 = vmatmul.mubr.bf16.gmra.mrb[0].mxu0 %v3329
      %v3864 = vpop.f32.mrb[0].mxu0
      %v3865 = vadd.f32 %v3519, %v3864
      %v3866 = vpop.f32.mrb[0].mxu0
      %v3867 = vadd.f32 %v3523, %v3866
      %v3868 = vpop.f32.mrb[0].mxu0
      %v3869 = vadd.f32 %v3519, %v3868
      %v3870 = vpop.f32.mrb[0].mxu0
      %v3871 = vadd.f32 %v3523, %v3870
      %3872 = vmatprep.mubr.bf16.mxu0 %v3633
      %3873 = vmatmul.mubr.bf16.gmra.mrb[0].mxu0 %v3332
      %v3874 = vpop.f32.mrb[0].mxu0
      %v3875 = vadd.f32 %v3519, %v3874
      %v3876 = vpop.f32.mrb[0].mxu0
      %v3877 = vadd.f32 %v3523, %v3876
      %v3878 = vpop.f32.mrb[0].mxu0
      %v3879 = vadd.f32 %v3519, %v3878
      %v3880 = vpop.f32.mrb[0].mxu0
      %v3881 = vadd.f32 %v3523, %v3880
      %3882 = vmatprep.mubr.bf16.mxu0 %v3635
      %3883 = vmatmul.mubr.bf16.gmra.mrb[0].mxu0 %v3335
      %v3884 = vpop.f32.mrb[0].mxu0
      %v3885 = vadd.f32 %v3519, %v3884
      %v3886 = vpop.f32.mrb[0].mxu0
      %v3887 = vadd.f32 %v3523, %v3886
      %v3888 = vpop.f32.mrb[0].mxu0
      %v3889 = vadd.f32 %v3519, %v3888
      %v3890 = vpop.f32.mrb[0].mxu0
      %v3891 = vadd.f32 %v3523, %v3890
      %3892 = vmatprep.mubr.bf16.mxu0 %v3637
      %3893 = vmatmul.mubr.bf16.gmra.mrb[0].mxu0 %v3338
      %v3894 = vpop.f32.mrb[0].mxu0
      %v3895 = vadd.f32 %v3519, %v3894
      %v3896 = vpop.f32.mrb[0].mxu0
      %v3897 = vadd.f32 %v3523, %v3896
      %v3898 = vpop.f32.mrb[0].mxu0
      %v3899 = vadd.f32 %v3519, %v3898
      %v3900 = vpop.f32.mrb[0].mxu0
      %v3901 = vadd.f32 %v3523, %v3900
      %3902 = vmatprep.mubr.bf16.mxu0 %v3639
      %3903 = vmatmul.mubr.bf16.gmra.mrb[0].mxu0 %v3341
      %v3904 = vpop.f32.mrb[0].mxu0
      %v3905 = vadd.f32 %v3519, %v3904
      %v3906 = vpop.f32.mrb[0].mxu0
      %v3907 = vadd.f32 %v3523, %v3906
      %v3908 = vpop.f32.mrb[0].mxu0
      %v3909 = vadd.f32 %v3519, %v3908
      %v3910 = vpop.f32.mrb[0].mxu0
      %v3911 = vadd.f32 %v3523, %v3910
      %3912 = vmatprep.mubr.bf16.mxu0 %v3641
      %3913 = vmatmul.mubr.bf16.gmra.mrb[0].mxu0 %v3344
      %v3914 = vpop.f32.mrb[0].mxu0
      %v3915 = vadd.f32 %v3519, %v3914
      %v3916 = vpop.f32.mrb[0].mxu0
      %v3917 = vadd.f32 %v3523, %v3916
      %v3918 = vpop.f32.mrb[0].mxu0
      %v3919 = vadd.f32 %v3519, %v3918
      %v3920 = vpop.f32.mrb[0].mxu0
      %v3921 = vadd.f32 %v3523, %v3920
      %3922 = vmatprep.mubr.bf16.mxu0 %v3643
      %3923 = vmatmul.mubr.bf16.gmra.mrb[0].mxu0 %v3347
      %v3924 = vpop.f32.mrb[0].mxu0
      %v3925 = vadd.f32 %v3519, %v3924
      %v3926 = vpop.f32.mrb[0].mxu0
      %v3927 = vadd.f32 %v3523, %v3926
      %v3928 = vpop.f32.mrb[0].mxu0
      %v3929 = vadd.f32 %v3519, %v3928
      %v3930 = vpop.f32.mrb[0].mxu0
      %v3931 = vadd.f32 %v3523, %v3930
      %3932 = vmatprep.mubr.bf16.mxu0 %v3645
      %3933 = vmatmul.mubr.bf16.gmra.mrb[0].mxu0 %v3350
      %v3934 = vpop.f32.mrb[0].mxu0
      %v3935 = vadd.f32 %v3519, %v3934
      %v3936 = vpop.f32.mrb[0].mxu0
      %v3937 = vadd.f32 %v3523, %v3936
      %v3938 = vpop.f32.mrb[0].mxu0
      %v3939 = vadd.f32 %v3519, %v3938
      %v3940 = vpop.f32.mrb[0].mxu0
      %v3941 = vadd.f32 %v3523, %v3940
      %3942 = vmatprep.mubr.bf16.mxu0 %v3647
      %3943 = vmatmul.mubr.bf16.gmra.mrb[0].mxu0 %v3353
      %v3944 = vpop.f32.mrb[0].mxu0
      %v3945 = vadd.f32 %v3519, %v3944
      %v3946 = vpop.f32.mrb[0].mxu0
      %v3947 = vadd.f32 %v3523, %v3946
      %v3948 = vpop.f32.mrb[0].mxu0
      %v3949 = vadd.f32 %v3519, %v3948
      %v3950 = vpop.f32.mrb[0].mxu0
      %v3951 = vadd.f32 %v3523, %v3950
      %3952 = vmatprep.mubr.bf16.mxu0 %v3649
      %3953 = vmatmul.mubr.bf16.gmra.mrb[0].mxu0 %v3356
      %v3954 = vpop.f32.mrb[0].mxu0
      %v3955 = vadd.f32 %v3519, %v3954
      %v3956 = vpop.f32.mrb[0].mxu0
      %v3957 = vadd.f32 %v3523, %v3956
      %v3958 = vpop.f32.mrb[0].mxu0
      %v3959 = vadd.f32 %v3519, %v3958
      %v3960 = vpop.f32.mrb[0].mxu0
      %v3961 = vadd.f32 %v3523, %v3960
      %3962 = vmatprep.mubr.bf16.mxu0 %v3651
      %3963 = vmatmul.mubr.bf16.gmra.mrb[0].mxu0 %v3359
      %v3964 = vpop.f32.mrb[0].mxu0
      %v3965 = vadd.f32 %v3519, %v3964
      %v3966 = vpop.f32.mrb[0].mxu0
      %v3967 = vadd.f32 %v3523, %v3966
      %v3968 = vpop.f32.mrb[0].mxu0
      %v3969 = vadd.f32 %v3519, %v3968
      %v3970 = vpop.f32.mrb[0].mxu0
      %v3971 = vadd.f32 %v3523, %v3970
      %3972 = vmatprep.mubr.bf16.mxu0 %v3653
      %3973 = vmatmul.mubr.bf16.gmra.mrb[0].mxu0 %v3362
      %v3974 = vpop.f32.mrb[0].mxu0
      %v3975 = vadd.f32 %v3519, %v3974
      %v3976 = vpop.f32.mrb[0].mxu0
      %v3977 = vadd.f32 %v3523, %v3976
      %v3978 = vpop.f32.mrb[0].mxu0
      %v3979 = vadd.f32 %v3519, %v3978
      %v3980 = vpop.f32.mrb[0].mxu0
      %v3981 = vadd.f32 %v3523, %v3980
      %3982 = vmatprep.mubr.bf16.mxu0 %v3655
      %3983 = vmatmul.mubr.bf16.gmra.mrb[0].mxu0 %v3365
      %v3984 = vpop.f32.mrb[0].mxu0
      %v3985 = vadd.f32 %v3519, %v3984
      %v3986 = vpop.f32.mrb[0].mxu0
      %v3987 = vadd.f32 %v3523, %v3986
      %v3988 = vpop.f32.mrb[0].mxu0
      %v3989 = vadd.f32 %v3519, %v3988
      %v3990 = vpop.f32.mrb[0].mxu0
      %v3991 = vadd.f32 %v3523, %v3990
      %3992 = vmatprep.mubr.bf16.mxu0 %v3657
      %3993 = vmatmul.mubr.bf16.gmra.mrb[0].mxu0 %v3368
      %v3994 = vpop.f32.mrb[0].mxu0
      %v3995 = vadd.f32 %v3519, %v3994
      %v3996 = vpop.f32.mrb[0].mxu0
      %v3997 = vadd.f32 %v3523, %v3996
      %v3998 = vpop.f32.mrb[0].mxu0
      %v3999 = vadd.f32 %v3519, %v3998
      %v4000 = vpop.f32.mrb[0].mxu0
      %v4001 = vadd.f32 %v3523, %v4000
      %4002 = vmatprep.mubr.bf16.mxu0 %v3659
      %4003 = vmatmul.mubr.bf16.gmra.mrb[0].mxu0 %v3371
      %v4004 = vpop.f32.mrb[0].mxu0
      %v4005 = vadd.f32 %v3519, %v4004
      %v4006 = vpop.f32.mrb[0].mxu0
      %v4007 = vadd.f32 %v3523, %v4006
      %v4008 = vpop.f32.mrb[0].mxu0
      %v4009 = vadd.f32 %v3519, %v4008
      %v4010 = vpop.f32.mrb[0].mxu0
      %v4011 = vadd.f32 %v3523, %v4010
      %4012 = vmatprep.mubr.bf16.mxu0 %v3661
      %4013 = vmatmul.mubr.bf16.gmra.mrb[0].mxu0 %v3374
      %v4014 = vpop.f32.mrb[0].mxu0
      %v4015 = vadd.f32 %v3519, %v4014
      %v4016 = vpop.f32.mrb[0].mxu0
      %v4017 = vadd.f32 %v3523, %v4016
      %v4018 = vpop.f32.mrb[0].mxu0
      %v4019 = vadd.f32 %v3519, %v4018
      %v4020 = vpop.f32.mrb[0].mxu0
      %v4021 = vadd.f32 %v3523, %v4020
      %4022 = vmatprep.mubr.bf16.mxu0 %v3663
      %4023 = vmatmul.mubr.bf16.gmra.mrb[0].mxu0 %v3377
      %v4024 = vpop.f32.mrb[0].mxu0
      %v4025 = vadd.f32 %v3519, %v4024
      %v4026 = vpop.f32.mrb[0].mxu0
      %v4027 = vadd.f32 %v3523, %v4026
      %v4028 = vpop.f32.mrb[0].mxu0
      %v4029 = vadd.f32 %v3519, %v4028
      %v4030 = vpop.f32.mrb[0].mxu0
      %v4031 = vadd.f32 %v3523, %v4030
      %4032 = vmatprep.mubr.bf16.mxu0 %v3665
      %4033 = vmatmul.mubr.bf16.gmra.mrb[0].mxu0 %v3380
      %v4034 = vpop.f32.mrb[0].mxu0
      %v4035 = vadd.f32 %v3519, %v4034
      %v4036 = vpop.f32.mrb[0].mxu0
      %v4037 = vadd.f32 %v3523, %v4036
      %v4038 = vpop.f32.mrb[0].mxu0
      %v4039 = vadd.f32 %v3519, %v4038
      %v4040 = vpop.f32.mrb[0].mxu0
      %v4041 = vadd.f32 %v3523, %v4040
      %4042 = vmatprep.mubr.bf16.mxu0 %v3667
      %4043 = vmatmul.mubr.bf16.gmra.mrb[0].mxu0 %v3383
      %v4044 = vpop.f32.mrb[0].mxu0
      %v4045 = vadd.f32 %v3519, %v4044
      %v4046 = vpop.f32.mrb[0].mxu0
      %v4047 = vadd.f32 %v3523, %v4046
      %v4048 = vpop.f32.mrb[0].mxu0
      %v4049 = vadd.f32 %v3519, %v4048
      %v4050 = vpop.f32.mrb[0].mxu0
      %v4051 = vadd.f32 %v3523, %v4050
      %4052 = vmatprep.mubr.bf16.mxu0 %v3669
      %4053 = vmatmul.mubr.bf16.gmra.mrb[0].mxu0 %v3386
      %v4054 = vpop.f32.mrb[0].mxu0
      %v4055 = vadd.f32 %v3519, %v4054
      %v4056 = vpop.f32.mrb[0].mxu0
      %v4057 = vadd.f32 %v3523, %v4056
      %v4058 = vpop.f32.mrb[0].mxu0
      %v4059 = vadd.f32 %v3519, %v4058
      %v4060 = vpop.f32.mrb[0].mxu0
      %v4061 = vadd.f32 %v3523, %v4060
      %4062 = vmatprep.mubr.bf16.mxu0 %v3671
      %4063 = vmatmul.mubr.bf16.gmra.mrb[0].mxu0 %v3389
      %v4064 = vpop.f32.mrb[0].mxu0
      %v4065 = vadd.f32 %v3519, %v4064
      %v4066 = vpop.f32.mrb[0].mxu0
      %v4067 = vadd.f32 %v3523, %v4066
      %v4068 = vpop.f32.mrb[0].mxu0
      %v4069 = vadd.f32 %v3519, %v4068
      %v4070 = vpop.f32.mrb[0].mxu0
      %v4071 = vadd.f32 %v3523, %v4070
      %4072 = vmatprep.mubr.bf16.mxu0 %v3673
      %4073 = vmatmul.mubr.bf16.gmra.mrb[0].mxu0 %v3392
      %v4074 = vpop.f32.mrb[0].mxu0
      %v4075 = vadd.f32 %v3519, %v4074
      %v4076 = vpop.f32.mrb[0].mxu0
      %v4077 = vadd.f32 %v3523, %v4076
      %v4078 = vpop.f32.mrb[0].mxu0
      %v4079 = vadd.f32 %v3519, %v4078
      %v4080 = vpop.f32.mrb[0].mxu0
      %v4081 = vadd.f32 %v3523, %v4080
      %4082 = vmatprep.mubr.bf16.mxu0 %v3675
      %4083 = vmatmul.mubr.bf16.gmra.mrb[0].mxu0 %v3395
      %v4084 = vpop.f32.mrb[0].mxu0
      %v4085 = vadd.f32 %v3519, %v4084
      %v4086 = vpop.f32.mrb[0].mxu0
      %v4087 = vadd.f32 %v3523, %v4086
      %v4088 = vpop.f32.mrb[0].mxu0
      %v4089 = vadd.f32 %v3519, %v4088
      %v4090 = vpop.f32.mrb[0].mxu0
      %v4091 = vadd.f32 %v3523, %v4090
      %4092 = vmatprep.mubr.bf16.mxu0 %v3677
      %4093 = vmatmul.mubr.bf16.gmra.mrb[0].mxu0 %v3398
      %v4094 = vpop.f32.mrb[0].mxu0
      %v4095 = vadd.f32 %v3519, %v4094
      %v4096 = vpop.f32.mrb[0].mxu0
      %v4097 = vadd.f32 %v3523, %v4096
      %v4098 = vpop.f32.mrb[0].mxu0
      %v4099 = vadd.f32 %v3519, %v4098
      %v4100 = vpop.f32.mrb[0].mxu0
      %v4101 = vadd.f32 %v3523, %v4100
      %4102 = vmatprep.mubr.bf16.mxu0 %v3679
      %4103 = vmatmul.mubr.bf16.gmra.mrb[0].mxu0 %v3401
      %v4104 = vpop.f32.mrb[0].mxu0
      %v4105 = vadd.f32 %v3519, %v4104
      %v4106 = vpop.f32.mrb[0].mxu0
      %v4107 = vadd.f32 %v3523, %v4106
      %v4108 = vpop.f32.mrb[0].mxu0
      %v4109 = vadd.f32 %v3519, %v4108
      %v4110 = vpop.f32.mrb[0].mxu0
      %v4111 = vadd.f32 %v3523, %v4110
      %4112 = vmatprep.mubr.bf16.mxu0 %v3681
      %4113 = vmatmul.mubr.bf16.gmra.mrb[0].mxu0 %v3404
      %v4114 = vpop.f32.mrb[0].mxu0
      %v4115 = vadd.f32 %v3519, %v4114
      %v4116 = vpop.f32.mrb[0].mxu0
      %v4117 = vadd.f32 %v3523, %v4116
      %v4118 = vpop.f32.mrb[0].mxu0
      %v4119 = vadd.f32 %v3519, %v4118
      %v4120 = vpop.f32.mrb[0].mxu0
      %v4121 = vadd.f32 %v3523, %v4120
      %4122 = vmatprep.mubr.bf16.mxu0 %v3683
      %4123 = vmatmul.mubr.bf16.gmra.mrb[0].mxu0 %v3407
      %v4124 = vpop.f32.mrb[0].mxu0
      %v4125 = vadd.f32 %v3519, %v4124
      %v4126 = vpop.f32.mrb[0].mxu0
      %v4127 = vadd.f32 %v3523, %v4126
      %v4128 = vpop.f32.mrb[0].mxu0
      %v4129 = vadd.f32 %v3519, %v4128
      %v4130 = vpop.f32.mrb[0].mxu0
      %v4131 = vadd.f32 %v3523, %v4130
      %4132 = vmatprep.mubr.bf16.mxu0 %v3685
      %4133 = vmatmul.mubr.bf16.gmra.mrb[0].mxu0 %v3410
      %v4134 = vpop.f32.mrb[0].mxu0
      %v4135 = vadd.f32 %v3519, %v4134
      %v4136 = vpop.f32.mrb[0].mxu0
      %v4137 = vadd.f32 %v3523, %v4136
      %v4138 = vpop.f32.mrb[0].mxu0
      %v4139 = vadd.f32 %v3519, %v4138
      %v4140 = vpop.f32.mrb[0].mxu0
      %v4141 = vadd.f32 %v3523, %v4140
      %4142 = vmatprep.mubr.bf16.mxu0 %v3687
      %4143 = vmatmul.mubr.bf16.gmra.mrb[0].mxu0 %v3413
      %v4144 = vpop.f32.mrb[0].mxu0
      %v4145 = vadd.f32 %v3519, %v4144
      %v4146 = vpop.f32.mrb[0].mxu0
      %v4147 = vadd.f32 %v3523, %v4146
      %v4148 = vpop.f32.mrb[0].mxu0
      %v4149 = vadd.f32 %v3519, %v4148
      %v4150 = vpop.f32.mrb[0].mxu0
      %v4151 = vadd.f32 %v3523, %v4150
      %4152 = vmatprep.mubr.bf16.mxu0 %v3689
      %4153 = vmatmul.mubr.bf16.gmra.mrb[0].mxu0 %v3416
      %v4154 = vpop.f32.mrb[0].mxu0
      %v4155 = vadd.f32 %v3519, %v4154
      %v4156 = vpop.f32.mrb[0].mxu0
      %v4157 = vadd.f32 %v3523, %v4156
      %v4158 = vpop.f32.mrb[0].mxu0
      %v4159 = vadd.f32 %v3519, %v4158
      %v4160 = vpop.f32.mrb[0].mxu0
      %v4161 = vadd.f32 %v3523, %v4160
      %4162 = vmatprep.mubr.bf16.mxu0 %v3691
      %4163 = vmatmul.mubr.bf16.gmra.mrb[0].mxu0 %v3419
      %v4164 = vpop.f32.mrb[0].mxu0
      %v4165 = vadd.f32 %v3519, %v4164
      %v4166 = vpop.f32.mrb[0].mxu0
      %v4167 = vadd.f32 %v3523, %v4166
      %v4168 = vpop.f32.mrb[0].mxu0
      %v4169 = vadd.f32 %v3519, %v4168
      %v4170 = vpop.f32.mrb[0].mxu0
      %v4171 = vadd.f32 %v3523, %v4170
      %4172 = vmatprep.mubr.bf16.mxu0 %v3693
      %4173 = vmatmul.mubr.bf16.gmra.mrb[0].mxu0 %v3422
      %v4174 = vpop.f32.mrb[0].mxu0
      %v4175 = vadd.f32 %v3519, %v4174
      %v4176 = vpop.f32.mrb[0].mxu0
      %v4177 = vadd.f32 %v3523, %v4176
      %v4178 = vpop.f32.mrb[0].mxu0
      %v4179 = vadd.f32 %v3519, %v4178
      %v4180 = vpop.f32.mrb[0].mxu0
      %v4181 = vadd.f32 %v3523, %v4180
      %4182 = vmatprep.mubr.bf16.mxu0 %v3695
      %4183 = vmatmul.mubr.bf16.gmra.mrb[0].mxu0 %v3425
      %v4184 = vpop.f32.mrb[0].mxu0
      %v4185 = vadd.f32 %v3519, %v4184
      %v4186 = vpop.f32.mrb[0].mxu0
      %v4187 = vadd.f32 %v3523, %v4186
      %v4188 = vpop.f32.mrb[0].mxu0
      %v4189 = vadd.f32 %v3519, %v4188
      %v4190 = vpop.f32.mrb[0].mxu0
      %v4191 = vadd.f32 %v3523, %v4190
      %4192 = vmatprep.mubr.bf16.mxu0 %v3697
      %4193 = vmatmul.mubr.bf16.gmra.mrb[0].mxu0 %v3428
      %v4194 = vpop.f32.mrb[0].mxu0
      %v4195 = vadd.f32 %v3519, %v4194
      %v4196 = vpop.f32.mrb[0].mxu0
      %v4197 = vadd.f32 %v3523, %v4196
      %v4198 = vpop.f32.mrb[0].mxu0
      %v4199 = vadd.f32 %v3519, %v4198
      %v4200 = vpop.f32.mrb[0].mxu0
      %v4201 = vadd.f32 %v3523, %v4200
      %4202 = vmatprep.mubr.bf16.mxu0 %v3699
      %4203 = vmatmul.mubr.bf16.gmra.mrb[0].mxu0 %v3431
      %v4204 = vpop.f32.mrb[0].mxu0
      %v4205 = vadd.f32 %v3519, %v4204
      %v4206 = vpop.f32.mrb[0].mxu0
      %v4207 = vadd.f32 %v3523, %v4206
      %v4208 = vpop.f32.mrb[0].mxu0
      %v4209 = vadd.f32 %v3519, %v4208
      %v4210 = vpop.f32.mrb[0].mxu0
      %v4211 = vadd.f32 %v3523, %v4210
      %4212 = vmatprep.mubr.bf16.mxu0 %v3701
      %4213 = vmatmul.mubr.bf16.gmra.mrb[0].mxu0 %v3434
      %v4214 = vpop.f32.mrb[0].mxu0
      %v4215 = vadd.f32 %v3519, %v4214
      %v4216 = vpop.f32.mrb[0].mxu0
      %v4217 = vadd.f32 %v3523, %v4216
      %v4218 = vpop.f32.mrb[0].mxu0
      %v4219 = vadd.f32 %v3519, %v4218
      %v4220 = vpop.f32.mrb[0].mxu0
      %v4221 = vadd.f32 %v3523, %v4220
      %4222 = vmatprep.mubr.bf16.mxu0 %v3703
      %4223 = vmatmul.mubr.bf16.gmra.mrb[0].mxu0 %v3437
      %v4224 = vpop.f32.mrb[0].mxu0
      %v4225 = vadd.f32 %v3519, %v4224
      %v4226 = vpop.f32.mrb[0].mxu0
      %v4227 = vadd.f32 %v3523, %v4226
      %v4228 = vpop.f32.mrb[0].mxu0
      %v4229 = vadd.f32 %v3519, %v4228
      %v4230 = vpop.f32.mrb[0].mxu0
      %v4231 = vadd.f32 %v3523, %v4230
      %4232 = vmatprep.mubr.bf16.mxu0 %v3705
      %4233 = vmatmul.mubr.bf16.gmra.mrb[0].mxu0 %v3440
      %v4234 = vpop.f32.mrb[0].mxu0
      %v4235 = vadd.f32 %v3519, %v4234
      %v4236 = vpop.f32.mrb[0].mxu0
      %v4237 = vadd.f32 %v3523, %v4236
      %v4238 = vpop.f32.mrb[0].mxu0
      %v4239 = vadd.f32 %v3519, %v4238
      %v4240 = vpop.f32.mrb[0].mxu0
      %v4241 = vadd.f32 %v3523, %v4240
      %4242 = vmatprep.mubr.bf16.mxu0 %v3707
      %4243 = vmatmul.mubr.bf16.gmra.mrb[0].mxu0 %v3443
      %v4244 = vpop.f32.mrb[0].mxu0
      %v4245 = vadd.f32 %v3519, %v4244
      %v4246 = vpop.f32.mrb[0].mxu0
      %v4247 = vadd.f32 %v3523, %v4246
      %v4248 = vpop.f32.mrb[0].mxu0
      %v4249 = vadd.f32 %v3519, %v4248
      %v4250 = vpop.f32.mrb[0].mxu0
      %v4251 = vadd.f32 %v3523, %v4250
      %4252 = vmatprep.mubr.bf16.mxu0 %v3709
      %4253 = vmatmul.mubr.bf16.gmra.mrb[0].mxu0 %v3446
      %v4254 = vpop.f32.mrb[0].mxu0
      %v4255 = vadd.f32 %v3519, %v4254
      %v4256 = vpop.f32.mrb[0].mxu0
      %v4257 = vadd.f32 %v3523, %v4256
      %v4258 = vpop.f32.mrb[0].mxu0
      %v4259 = vadd.f32 %v3519, %v4258
      %v4260 = vpop.f32.mrb[0].mxu0
      %v4261 = vadd.f32 %v3523, %v4260
      %4262 = vmatprep.mubr.bf16.mxu0 %v3711
      %4263 = vmatmul.mubr.bf16.gmra.mrb[0].mxu0 %v3449
      %v4264 = vpop.f32.mrb[0].mxu0
      %v4265 = vadd.f32 %v3519, %v4264
      %v4266 = vpop.f32.mrb[0].mxu0
      %v4267 = vadd.f32 %v3523, %v4266
      %v4268 = vpop.f32.mrb[0].mxu0
      %v4269 = vadd.f32 %v3519, %v4268
      %v4270 = vpop.f32.mrb[0].mxu0
      %v4271 = vadd.f32 %v3523, %v4270
      %4272 = vmatprep.mubr.bf16.mxu0 %v3713
      %4273 = vmatmul.mubr.bf16.gmra.mrb[0].mxu0 %v3452
      %v4274 = vpop.f32.mrb[0].mxu0
      %v4275 = vadd.f32 %v3519, %v4274
      %v4276 = vpop.f32.mrb[0].mxu0
      %v4277 = vadd.f32 %v3523, %v4276
      %v4278 = vpop.f32.mrb[0].mxu0
      %v4279 = vadd.f32 %v3519, %v4278
      %v4280 = vpop.f32.mrb[0].mxu0
      %v4281 = vadd.f32 %v3523, %v4280
      %4282 = vmatprep.mubr.bf16.mxu0 %v3715
      %4283 = vmatmul.mubr.bf16.gmra.mrb[0].mxu0 %v3455
      %v4284 = vpop.f32.mrb[0].mxu0
      %v4285 = vadd.f32 %v3519, %v4284
      %v4286 = vpop.f32.mrb[0].mxu0
      %v4287 = vadd.f32 %v3523, %v4286
      %v4288 = vpop.f32.mrb[0].mxu0
      %v4289 = vadd.f32 %v3519, %v4288
      %v4290 = vpop.f32.mrb[0].mxu0
      %v4291 = vadd.f32 %v3523, %v4290
      %4292 = vmatprep.mubr.bf16.mxu0 %v3717
      %4293 = vmatmul.mubr.bf16.gmra.mrb[0].mxu0 %v3458
      %v4294 = vpop.f32.mrb[0].mxu0
      %v4295 = vadd.f32 %v3519, %v4294
      %v4296 = vpop.f32.mrb[0].mxu0
      %v4297 = vadd.f32 %v3523, %v4296
      %v4298 = vpop.f32.mrb[0].mxu0
      %v4299 = vadd.f32 %v3519, %v4298
      %v4300 = vpop.f32.mrb[0].mxu0
      %v4301 = vadd.f32 %v3523, %v4300
      %4302 = vmatprep.mubr.bf16.mxu0 %v3719
      %4303 = vmatmul.mubr.bf16.gmra.mrb[0].mxu0 %v3461
      %v4304 = vpop.f32.mrb[0].mxu0
      %v4305 = vadd.f32 %v3519, %v4304
      %v4306 = vpop.f32.mrb[0].mxu0
      %v4307 = vadd.f32 %v3523, %v4306
      %v4308 = vpop.f32.mrb[0].mxu0
      %v4309 = vadd.f32 %v3519, %v4308
      %v4310 = vpop.f32.mrb[0].mxu0
      %v4311 = vadd.f32 %v3523, %v4310
      %4312 = vmatprep.mubr.bf16.mxu0 %v3721
      %4313 = vmatmul.mubr.bf16.gmra.mrb[0].mxu0 %v3464
      %v4314 = vpop.f32.mrb[0].mxu0
      %v4315 = vadd.f32 %v3519, %v4314
      %v4316 = vpop.f32.mrb[0].mxu0
      %v4317 = vadd.f32 %v3523, %v4316
      %v4318 = vpop.f32.mrb[0].mxu0
      %v4319 = vadd.f32 %v3519, %v4318
      %v4320 = vpop.f32.mrb[0].mxu0
      %v4321 = vadd.f32 %v3523, %v4320
      %4322 = vmatprep.mubr.bf16.mxu0 %v3723
      %4323 = vmatmul.mubr.bf16.gmra.mrb[0].mxu0 %v3467
      %v4324 = vpop.f32.mrb[0].mxu0
      %v4325 = vadd.f32 %v3519, %v4324
      %v4326 = vpop.f32.mrb[0].mxu0
      %v4327 = vadd.f32 %v3523, %v4326
      %v4328 = vpop.f32.mrb[0].mxu0
      %v4329 = vadd.f32 %v3519, %v4328
      %v4330 = vpop.f32.mrb[0].mxu0
      %v4331 = vadd.f32 %v3523, %v4330
      %4332 = vmatprep.mubr.bf16.mxu0 %v3725
      %4333 = vmatmul.mubr.bf16.gmra.mrb[0].mxu0 %v3470
      %v4334 = vpop.f32.mrb[0].mxu0
      %v4335 = vadd.f32 %v3519, %v4334
      %v4336 = vpop.f32.mrb[0].mxu0
      %v4337 = vadd.f32 %v3523, %v4336
      %v4338 = vpop.f32.mrb[0].mxu0
      %v4339 = vadd.f32 %v3519, %v4338
      %v4340 = vpop.f32.mrb[0].mxu0
      %v4341 = vadd.f32 %v3523, %v4340
      %4342 = vmatprep.mubr.bf16.mxu0 %v3727
      %4343 = vmatmul.mubr.bf16.gmra.mrb[0].mxu0 %v3473
      %v4344 = vpop.f32.mrb[0].mxu0
      %v4345 = vadd.f32 %v3519, %v4344
      %v4346 = vpop.f32.mrb[0].mxu0
      %v4347 = vadd.f32 %v3523, %v4346
      %v4348 = vpop.f32.mrb[0].mxu0
      %v4349 = vadd.f32 %v3519, %v4348
      %v4350 = vpop.f32.mrb[0].mxu0
      %v4351 = vadd.f32 %v3523, %v4350
      %4352 = vmatprep.mubr.bf16.mxu0 %v3729
      %4353 = vmatmul.mubr.bf16.gmra.mrb[0].mxu0 %v3476
      %v4354 = vpop.f32.mrb[0].mxu0
      %v4355 = vadd.f32 %v3519, %v4354
      %v4356 = vpop.f32.mrb[0].mxu0
      %v4357 = vadd.f32 %v3523, %v4356
      %v4358 = vpop.f32.mrb[0].mxu0
      %v4359 = vadd.f32 %v3519, %v4358
      %v4360 = vpop.f32.mrb[0].mxu0
      %v4361 = vadd.f32 %v3523, %v4360
      %4362 = vmatprep.mubr.bf16.mxu0 %v3731
      %4363 = vmatmul.mubr.bf16.gmra.mrb[0].mxu0 %v3479
      %v4364 = vpop.f32.mrb[0].mxu0
      %v4365 = vadd.f32 %v3519, %v4364
      %v4366 = vpop.f32.mrb[0].mxu0
      %v4367 = vadd.f32 %v3523, %v4366
      %v4368 = vpop.f32.mrb[0].mxu0
      %v4369 = vadd.f32 %v3519, %v4368
      %v4370 = vpop.f32.mrb[0].mxu0
      %v4371 = vadd.f32 %v3523, %v4370
      %4372 = vmatprep.mubr.bf16.mxu0 %v3733
      %4373 = vmatmul.mubr.bf16.gmra.mrb[0].mxu0 %v3482
      %v4374 = vpop.f32.mrb[0].mxu0
      %v4375 = vadd.f32 %v3519, %v4374
      %v4376 = vpop.f32.mrb[0].mxu0
      %v4377 = vadd.f32 %v3523, %v4376
      %v4378 = vpop.f32.mrb[0].mxu0
      %v4379 = vadd.f32 %v3519, %v4378
      %v4380 = vpop.f32.mrb[0].mxu0
      %v4381 = vadd.f32 %v3523, %v4380
      %4382 = vmatprep.mubr.bf16.mxu0 %v3735
      %4383 = vmatmul.mubr.bf16.gmra.mrb[0].mxu0 %v3485
      %v4384 = vpop.f32.mrb[0].mxu0
      %v4385 = vadd.f32 %v3519, %v4384
      %v4386 = vpop.f32.mrb[0].mxu0
      %v4387 = vadd.f32 %v3523, %v4386
      %v4388 = vpop.f32.mrb[0].mxu0
      %v4389 = vadd.f32 %v3519, %v4388
      %v4390 = vpop.f32.mrb[0].mxu0
      %v4391 = vadd.f32 %v3523, %v4390
      %4392 = vmatprep.mubr.bf16.mxu0 %v3737
      %4393 = vmatmul.mubr.bf16.gmra.mrb[0].mxu0 %v3488
      %v4394 = vpop.f32.mrb[0].mxu0
      %v4395 = vadd.f32 %v3519, %v4394
      %v4396 = vpop.f32.mrb[0].mxu0
      %v4397 = vadd.f32 %v3523, %v4396
      %v4398 = vpop.f32.mrb[0].mxu0
      %v4399 = vadd.f32 %v3519, %v4398
      %v4400 = vpop.f32.mrb[0].mxu0
      %v4401 = vadd.f32 %v3523, %v4400
      %4402 = vmatprep.mubr.bf16.mxu0 %v3739
      %4403 = vmatmul.mubr.bf16.gmra.mrb[0].mxu0 %v3491
      %v4404 = vpop.f32.mrb[0].mxu0
      %v4405 = vadd.f32 %v3519, %v4404
      %v4406 = vpop.f32.mrb[0].mxu0
      %v4407 = vadd.f32 %v3523, %v4406
      %v4408 = vpop.f32.mrb[0].mxu0
      %v4409 = vadd.f32 %v3519, %v4408
      %v4410 = vpop.f32.mrb[0].mxu0
      %v4411 = vadd.f32 %v3523, %v4410
      %4412 = vmatprep.mubr.bf16.mxu0 %v3741
      %4413 = vmatmul.mubr.bf16.gmra.mrb[0].mxu0 %v3494
      %v4414 = vpop.f32.mrb[0].mxu0
      %v4415 = vadd.f32 %v3519, %v4414
      %v4416 = vpop.f32.mrb[0].mxu0
      %v4417 = vadd.f32 %v3523, %v4416
      %v4418 = vpop.f32.mrb[0].mxu0
      %v4419 = vadd.f32 %v3519, %v4418
      %v4420 = vpop.f32.mrb[0].mxu0
      %v4421 = vadd.f32 %v3523, %v4420
      %4422 = vdwg.mxu0
      %v4423 = vpack.c.bf16 %v3789, %v3785
      %v4424 = vpack.c.bf16 %v3791, %v3787
      %v4425 = vpack.c.bf16 %v3799, %v3795
      %v4426 = vpack.c.bf16 %v3801, %v3797
      %v4427 = vpack.c.bf16 %v3809, %v3805
      %v4428 = vpack.c.bf16 %v3811, %v3807
      %v4429 = vpack.c.bf16 %v3819, %v3815
      %v4430 = vpack.c.bf16 %v3821, %v3817
      %v4431 = vpack.c.bf16 %v3829, %v3825
      %v4432 = vpack.c.bf16 %v3831, %v3827
      %v4433 = vpack.c.bf16 %v3839, %v3835
      %v4434 = vpack.c.bf16 %v3841, %v3837
      %v4435 = vpack.c.bf16 %v3849, %v3845
      %v4436 = vpack.c.bf16 %v3851, %v3847
      %v4437 = vpack.c.bf16 %v3859, %v3855
      %v4438 = vpack.c.bf16 %v3861, %v3857
      %v4439 = vpack.c.bf16 %v3869, %v3865
      %v4440 = vpack.c.bf16 %v3871, %v3867
      %v4441 = vpack.c.bf16 %v3879, %v3875
      %v4442 = vpack.c.bf16 %v3881, %v3877
      %v4443 = vpack.c.bf16 %v3889, %v3885
      %v4444 = vpack.c.bf16 %v3891, %v3887
      %v4445 = vpack.c.bf16 %v3899, %v3895
      %v4446 = vpack.c.bf16 %v3901, %v3897
      %v4447 = vpack.c.bf16 %v3909, %v3905
      %v4448 = vpack.c.bf16 %v3911, %v3907
      %v4449 = vpack.c.bf16 %v3919, %v3915
      %v4450 = vpack.c.bf16 %v3921, %v3917
      %v4451 = vpack.c.bf16 %v3929, %v3925
      %v4452 = vpack.c.bf16 %v3931, %v3927
      %v4453 = vpack.c.bf16 %v3939, %v3935
      %v4454 = vpack.c.bf16 %v3941, %v3937
      %v4455 = vpack.c.bf16 %v3949, %v3945
      %v4456 = vpack.c.bf16 %v3951, %v3947
      %v4457 = vpack.c.bf16 %v3959, %v3955
      %v4458 = vpack.c.bf16 %v3961, %v3957
      %v4459 = vpack.c.bf16 %v3969, %v3965
      %v4460 = vpack.c.bf16 %v3971, %v3967
      %v4461 = vpack.c.bf16 %v3979, %v3975
      %v4462 = vpack.c.bf16 %v3981, %v3977
      %v4463 = vpack.c.bf16 %v3989, %v3985
      %v4464 = vpack.c.bf16 %v3991, %v3987
      %v4465 = vpack.c.bf16 %v3999, %v3995
      %v4466 = vpack.c.bf16 %v4001, %v3997
      %v4467 = vpack.c.bf16 %v4009, %v4005
      %v4468 = vpack.c.bf16 %v4011, %v4007
      %v4469 = vpack.c.bf16 %v4019, %v4015
      %v4470 = vpack.c.bf16 %v4021, %v4017
      %v4471 = vpack.c.bf16 %v4029, %v4025
      %v4472 = vpack.c.bf16 %v4031, %v4027
      %v4473 = vpack.c.bf16 %v4039, %v4035
      %v4474 = vpack.c.bf16 %v4041, %v4037
      %v4475 = vpack.c.bf16 %v4049, %v4045
      %v4476 = vpack.c.bf16 %v4051, %v4047
      %v4477 = vpack.c.bf16 %v4059, %v4055
      %v4478 = vpack.c.bf16 %v4061, %v4057
      %v4479 = vpack.c.bf16 %v4069, %v4065
      %v4480 = vpack.c.bf16 %v4071, %v4067
      %v4481 = vpack.c.bf16 %v4079, %v4075
      %v4482 = vpack.c.bf16 %v4081, %v4077
      %v4483 = vpack.c.bf16 %v4089, %v4085
      %v4484 = vpack.c.bf16 %v4091, %v4087
      %v4485 = vpack.c.bf16 %v4099, %v4095
      %v4486 = vpack.c.bf16 %v4101, %v4097
      %v4487 = vpack.c.bf16 %v4109, %v4105
      %v4488 = vpack.c.bf16 %v4111, %v4107
      %v4489 = vpack.c.bf16 %v4119, %v4115
      %v4490 = vpack.c.bf16 %v4121, %v4117
      %v4491 = vpack.c.bf16 %v4129, %v4125
      %v4492 = vpack.c.bf16 %v4131, %v4127
      %v4493 = vpack.c.bf16 %v4139, %v4135
      %v4494 = vpack.c.bf16 %v4141, %v4137
      %v4495 = vpack.c.bf16 %v4149, %v4145
      %v4496 = vpack.c.bf16 %v4151, %v4147
      %v4497 = vpack.c.bf16 %v4159, %v4155
      %v4498 = vpack.c.bf16 %v4161, %v4157
      %v4499 = vpack.c.bf16 %v4169, %v4165
      %v4500 = vpack.c.bf16 %v4171, %v4167
      %v4501 = vpack.c.bf16 %v4179, %v4175
      %v4502 = vpack.c.bf16 %v4181, %v4177
      %v4503 = vpack.c.bf16 %v4189, %v4185
      %v4504 = vpack.c.bf16 %v4191, %v4187
      %v4505 = vpack.c.bf16 %v4199, %v4195
      %v4506 = vpack.c.bf16 %v4201, %v4197
      %v4507 = vpack.c.bf16 %v4209, %v4205
      %v4508 = vpack.c.bf16 %v4211, %v4207
      %v4509 = vpack.c.bf16 %v4219, %v4215
      %v4510 = vpack.c.bf16 %v4221, %v4217
      %v4511 = vpack.c.bf16 %v4229, %v4225
      %v4512 = vpack.c.bf16 %v4231, %v4227
      %v4513 = vpack.c.bf16 %v4239, %v4235
      %v4514 = vpack.c.bf16 %v4241, %v4237
      %v4515 = vpack.c.bf16 %v4249, %v4245
      %v4516 = vpack.c.bf16 %v4251, %v4247
      %v4517 = vpack.c.bf16 %v4259, %v4255
      %v4518 = vpack.c.bf16 %v4261, %v4257
      %v4519 = vpack.c.bf16 %v4269, %v4265
      %v4520 = vpack.c.bf16 %v4271, %v4267
      %v4521 = vpack.c.bf16 %v4279, %v4275
      %v4522 = vpack.c.bf16 %v4281, %v4277
      %v4523 = vpack.c.bf16 %v4289, %v4285
      %v4524 = vpack.c.bf16 %v4291, %v4287
      %v4525 = vpack.c.bf16 %v4299, %v4295
      %v4526 = vpack.c.bf16 %v4301, %v4297
      %v4527 = vpack.c.bf16 %v4309, %v4305
      %v4528 = vpack.c.bf16 %v4311, %v4307
      %v4529 = vpack.c.bf16 %v4319, %v4315
      %v4530 = vpack.c.bf16 %v4321, %v4317
      %v4531 = vpack.c.bf16 %v4329, %v4325
      %v4532 = vpack.c.bf16 %v4331, %v4327
      %v4533 = vpack.c.bf16 %v4339, %v4335
      %v4534 = vpack.c.bf16 %v4341, %v4337
      %v4535 = vpack.c.bf16 %v4349, %v4345
      %v4536 = vpack.c.bf16 %v4351, %v4347
      %v4537 = vpack.c.bf16 %v4359, %v4355
      %v4538 = vpack.c.bf16 %v4361, %v4357
      %v4539 = vpack.c.bf16 %v4369, %v4365
      %v4540 = vpack.c.bf16 %v4371, %v4367
      %v4541 = vpack.c.bf16 %v4379, %v4375
      %v4542 = vpack.c.bf16 %v4381, %v4377
      %v4543 = vpack.c.bf16 %v4389, %v4385
      %v4544 = vpack.c.bf16 %v4391, %v4387
      %v4545 = vpack.c.bf16 %v4399, %v4395
      %v4546 = vpack.c.bf16 %v4401, %v4397
      %v4547 = vpack.c.bf16 %v4409, %v4405
      %v4548 = vpack.c.bf16 %v4411, %v4407
      %v4549 = vpack.c.bf16 %v4419, %v4415
      %v4550 = vpack.c.bf16 %v4421, %v4417
      %v4551 = vld [vmem:[%s3] sm:$0xf]
      %v4552 = vld [vmem:[%s3 + $0x4] sm:$0xf]
      %v4553 = vld [vmem:[%s3 + $0x8] sm:$0xf]
      %v4554 = vld [vmem:[%s3 + $0xc] sm:$0xf]
      %v4555 = vld [vmem:[%s3 + $0x10] sm:$0xf]
      %v4556 = vld [vmem:[%s3 + $0x14] sm:$0xf]
      %v4557 = vld [vmem:[%s3 + $0x18] sm:$0xf]
      %v4558 = vld [vmem:[%s3 + $0x1c] sm:$0xf]
      %v4559 = vld [vmem:[%s3 + $0x20] sm:$0xf]
      %v4560 = vld [vmem:[%s3 + $0x24] sm:$0xf]
      %v4561 = vld [vmem:[%s3 + $0x28] sm:$0xf]
      %v4562 = vld [vmem:[%s3 + $0x2c] sm:$0xf]
      %v4563 = vld [vmem:[%s3 + $0x30] sm:$0xf]
      %v4564 = vld [vmem:[%s3 + $0x34] sm:$0xf]
      %v4565 = vld [vmem:[%s3 + $0x38] sm:$0xf]
      %v4566 = vld [vmem:[%s3 + $0x3c] sm:$0xf]
      %v4567 = vld [vmem:[%s3 + $0x40] sm:$0xf]
      %v4568 = vld [vmem:[%s3 + $0x44] sm:$0xf]
      %v4569 = vld [vmem:[%s3 + $0x48] sm:$0xf]
      %v4570 = vld [vmem:[%s3 + $0x4c] sm:$0xf]
      %v4571 = vld [vmem:[%s3 + $0x50] sm:$0xf]
      %v4572 = vld [vmem:[%s3 + $0x54] sm:$0xf]
      %v4573 = vld [vmem:[%s3 + $0x58] sm:$0xf]
      %v4574 = vld [vmem:[%s3 + $0x5c] sm:$0xf]
      %v4575 = vld [vmem:[%s3 + $0x60] sm:$0xf]
      %v4576 = vld [vmem:[%s3 + $0x64] sm:$0xf]
      %v4577 = vld [vmem:[%s3 + $0x68] sm:$0xf]
      %v4578 = vld [vmem:[%s3 + $0x6c] sm:$0xf]
      %v4579 = vld [vmem:[%s3 + $0x70] sm:$0xf]
      %v4580 = vld [vmem:[%s3 + $0x74] sm:$0xf]
      %v4611 = vunpack.c.l.b16 %v4551
      %v4612 = vunpack.c.l.b16 %v4552
      %v4613 = vunpack.c.l.b16 %v4553
      %v4614 = vunpack.c.l.b16 %v4554
      %v4615 = vunpack.c.l.b16 %v4555
      %v4616 = vunpack.c.l.b16 %v4556
      %v4617 = vunpack.c.l.b16 %v4557
      %v4618 = vunpack.c.l.b16 %v4558
      %v4619 = vunpack.c.l.b16 %v4559
      %v4620 = vunpack.c.l.b16 %v4560
      %v4621 = vunpack.c.l.b16 %v4561
      %v4622 = vunpack.c.l.b16 %v4562
      %v4623 = vunpack.c.l.b16 %v4563
      %v4624 = vunpack.c.l.b16 %v4564
      %v4625 = vunpack.c.l.b16 %v4565
      %v4626 = vunpack.c.l.b16 %v4566
      %v4627 = vunpack.c.l.b16 %v4567
      %v4628 = vunpack.c.l.b16 %v4568
      %v4629 = vunpack.c.l.b16 %v4569
      %v4630 = vunpack.c.l.b16 %v4570
      %v4631 = vunpack.c.l.b16 %v4571
      %v4632 = vunpack.c.l.b16 %v4572
      %v4633 = vunpack.c.l.b16 %v4573
      %v4634 = vunpack.c.l.b16 %v4574
      %v4635 = vunpack.c.l.b16 %v4575
      %v4636 = vunpack.c.l.b16 %v4576
      %v4637 = vunpack.c.l.b16 %v4577
      %v4638 = vunpack.c.l.b16 %v4578
      %v4639 = vunpack.c.l.b16 %v4579
      %v4640 = vunpack.c.l.b16 %v4580
      %v4641 = vpack.c.b16 %v4612, %v4611
      %v4642 = vpack.c.b16 %v4614, %v4613
      %v4643 = vpack.c.b16 %v4616, %v4615
      %v4644 = vpack.c.b16 %v4618, %v4617
      %v4645 = vpack.c.b16 %v4620, %v4619
      %v4646 = vpack.c.b16 %v4622, %v4621
      %v4647 = vpack.c.b16 %v4624, %v4623
      %v4648 = vpack.c.b16 %v4626, %v4625
      %v4649 = vpack.c.b16 %v4628, %v4627
      %v4650 = vpack.c.b16 %v4630, %v4629
      %v4651 = vpack.c.b16 %v4632, %v4631
      %v4652 = vpack.c.b16 %v4634, %v4633
      %v4653 = vpack.c.b16 %v4636, %v4635
      %v4654 = vpack.c.b16 %v4638, %v4637
      %v4655 = vpack.c.b16 %v4640, %v4639
      %v4672 = vsel %vm3303, %v4424, 0
      %v4675 = vsel %vm3303, %v4426, 0
      %v4678 = vsel %vm3303, %v4428, 0
      %v4681 = vsel %vm3303, %v4430, 0
      %v4684 = vsel %vm3303, %v4432, 0
      %v4687 = vsel %vm3303, %v4434, 0
      %v4690 = vsel %vm3303, %v4436, 0
      %v4693 = vsel %vm3303, %v4438, 0
      %v4696 = vsel %vm3303, %v4440, 0
      %v4699 = vsel %vm3303, %v4442, 0
      %v4702 = vsel %vm3303, %v4444, 0
      %v4705 = vsel %vm3303, %v4446, 0
      %v4708 = vsel %vm3303, %v4448, 0
      %v4711 = vsel %vm3303, %v4450, 0
      %v4714 = vsel %vm3303, %v4452, 0
      %v4717 = vsel %vm3303, %v4454, 0
      %v4720 = vsel %vm3303, %v4456, 0
      %v4723 = vsel %vm3303, %v4458, 0
      %v4726 = vsel %vm3303, %v4460, 0
      %v4729 = vsel %vm3303, %v4462, 0
      %v4732 = vsel %vm3303, %v4464, 0
      %v4735 = vsel %vm3303, %v4466, 0
      %v4738 = vsel %vm3303, %v4468, 0
      %v4741 = vsel %vm3303, %v4470, 0
      %v4744 = vsel %vm3303, %v4472, 0
      %v4747 = vsel %vm3303, %v4474, 0
      %v4750 = vsel %vm3303, %v4476, 0
      %v4753 = vsel %vm3303, %v4478, 0
      %v4756 = vsel %vm3303, %v4480, 0
      %v4759 = vsel %vm3303, %v4482, 0
      %v4762 = vsel %vm3303, %v4484, 0
      %v4765 = vsel %vm3303, %v4486, 0
      %v4768 = vsel %vm3303, %v4488, 0
      %v4771 = vsel %vm3303, %v4490, 0
      %v4774 = vsel %vm3303, %v4492, 0
      %v4777 = vsel %vm3303, %v4494, 0
      %v4780 = vsel %vm3303, %v4496, 0
      %v4783 = vsel %vm3303, %v4498, 0
      %v4786 = vsel %vm3303, %v4500, 0
      %v4789 = vsel %vm3303, %v4502, 0
      %v4792 = vsel %vm3303, %v4504, 0
      %v4795 = vsel %vm3303, %v4506, 0
      %v4798 = vsel %vm3303, %v4508, 0
      %v4801 = vsel %vm3303, %v4510, 0
      %v4804 = vsel %vm3303, %v4512, 0
      %v4807 = vsel %vm3303, %v4514, 0
      %v4810 = vsel %vm3303, %v4516, 0
      %v4813 = vsel %vm3303, %v4518, 0
      %v4816 = vsel %vm3303, %v4520, 0
      %v4819 = vsel %vm3303, %v4522, 0
      %v4822 = vsel %vm3303, %v4524, 0
      %v4825 = vsel %vm3303, %v4526, 0
      %v4828 = vsel %vm3303, %v4528, 0
      %v4831 = vsel %vm3303, %v4530, 0
      %v4834 = vsel %vm3303, %v4532, 0
      %v4837 = vsel %vm3303, %v4534, 0
      %v4840 = vsel %vm3303, %v4536, 0
      %v4843 = vsel %vm3303, %v4538, 0
      %v4846 = vsel %vm3303, %v4540, 0
      %v4849 = vsel %vm3303, %v4542, 0
      %v4852 = vsel %vm3303, %v4544, 0
      %v4855 = vsel %vm3303, %v4546, 0
      %v4858 = vsel %vm3303, %v4548, 0
      %v4861 = vsel %vm3303, %v4550, 0
      %4863 = vmatprep.subr.bf16.mxu0 0
      %4864 = vmatpush1.bf16.msra.mxu0 %v4641
      %4865 = vmatprep.subr.bf16.mxu0 0
      %4866 = vmatpush1.bf16.msra.mxu0 %v4642
      %4867 = vmatprep.subr.bf16.mxu0 0
      %4868 = vmatpush1.bf16.msra.mxu0 %v4643
      %4869 = vmatprep.subr.bf16.mxu0 0
      %4870 = vmatpush1.bf16.msra.mxu0 %v4644
      %4871 = vmatprep.subr.bf16.mxu0 0
      %4872 = vmatpush1.bf16.msra.mxu0 %v4645
      %4873 = vmatprep.subr.bf16.mxu0 0
      %4874 = vmatpush1.bf16.msra.mxu0 %v4646
      %4875 = vmatprep.subr.bf16.mxu0 0
      %4876 = vmatpush1.bf16.msra.mxu0 %v4647
      %4877 = vmatprep.subr.bf16.mxu0 0
      %4878 = vmatpush1.bf16.msra.mxu0 %v4648
      %4879 = vmatprep.subr.bf16.mxu0 0
      %4880 = vmatpush1.bf16.msra.mxu0 %v4649
      %4881 = vmatprep.subr.bf16.mxu0 0
      %4882 = vmatpush1.bf16.msra.mxu0 %v4650
      %4883 = vmatprep.subr.bf16.mxu0 0
      %4884 = vmatpush1.bf16.msra.mxu0 %v4651
      %4885 = vmatprep.subr.bf16.mxu0 0
      %4886 = vmatpush1.bf16.msra.mxu0 %v4652
      %4887 = vmatprep.subr.bf16.mxu0 0
      %4888 = vmatpush1.bf16.msra.mxu0 %v4653
      %4889 = vmatprep.subr.bf16.mxu0 0
      %4890 = vmatpush1.bf16.msra.mxu0 %v4654
      %4891 = vmatprep.subr.bf16.mxu0 0
      %4892 = vmatpush1.bf16.msra.mxu0 %v4655
      %4893 = vmatprep.subr.bf16.mxu0 0
      %4894 = vmatpush1.bf16.msra.mxu0 0
      %4895 = vmatprep.mubr.bf16.mxu0 %v4672
      %4896 = vmatmul.mubr.bf16.gmra.mrb[0].mxu0 %v4423
      %v4897 = vpop.f32.mrb[0].mxu0
      %v4898 = vadd.f32 0.0, %v4897
      %v4899 = vpop.f32.mrb[0].mxu0
      %v4900 = vpop.f32.mrb[0].mxu0
      %v4901 = vadd.f32 0.0, %v4900
      %v4902 = vpop.f32.mrb[0].mxu0
      %4903 = vmatprep.mubr.bf16.mxu0 %v4675
      %4904 = vmatmul.mubr.bf16.gmra.mrb[0].mxu0 %v4425
      %v4905 = vpop.f32.mrb[0].mxu0
      %v4906 = vadd.f32 0.0, %v4905
      %v4907 = vpop.f32.mrb[0].mxu0
      %v4908 = vpop.f32.mrb[0].mxu0
      %v4909 = vadd.f32 0.0, %v4908
      %v4910 = vpop.f32.mrb[0].mxu0
      %4911 = vmatprep.mubr.bf16.mxu0 %v4678
      %4912 = vmatmul.mubr.bf16.gmra.mrb[0].mxu0 %v4427
      %v4913 = vpop.f32.mrb[0].mxu0
      %v4914 = vadd.f32 0.0, %v4913
      %v4915 = vpop.f32.mrb[0].mxu0
      %v4916 = vpop.f32.mrb[0].mxu0
      %v4917 = vadd.f32 0.0, %v4916
      %v4918 = vpop.f32.mrb[0].mxu0
      %4919 = vmatprep.mubr.bf16.mxu0 %v4681
      %4920 = vmatmul.mubr.bf16.gmra.mrb[0].mxu0 %v4429
      %v4921 = vpop.f32.mrb[0].mxu0
      %v4922 = vadd.f32 0.0, %v4921
      %v4923 = vpop.f32.mrb[0].mxu0
      %v4924 = vpop.f32.mrb[0].mxu0
      %v4925 = vadd.f32 0.0, %v4924
      %v4926 = vpop.f32.mrb[0].mxu0
      %4927 = vmatprep.mubr.bf16.mxu0 %v4684
      %4928 = vmatmul.mubr.bf16.gmra.mrb[0].mxu0 %v4431
      %v4929 = vpop.f32.mrb[0].mxu0
      %v4930 = vadd.f32 0.0, %v4929
      %v4931 = vpop.f32.mrb[0].mxu0
      %v4932 = vpop.f32.mrb[0].mxu0
      %v4933 = vadd.f32 0.0, %v4932
      %v4934 = vpop.f32.mrb[0].mxu0
      %4935 = vmatprep.mubr.bf16.mxu0 %v4687
      %4936 = vmatmul.mubr.bf16.gmra.mrb[0].mxu0 %v4433
      %v4937 = vpop.f32.mrb[0].mxu0
      %v4938 = vadd.f32 0.0, %v4937
      %v4939 = vpop.f32.mrb[0].mxu0
      %v4940 = vpop.f32.mrb[0].mxu0
      %v4941 = vadd.f32 0.0, %v4940
      %v4942 = vpop.f32.mrb[0].mxu0
      %4943 = vmatprep.mubr.bf16.mxu0 %v4690
      %4944 = vmatmul.mubr.bf16.gmra.mrb[0].mxu0 %v4435
      %v4945 = vpop.f32.mrb[0].mxu0
      %v4946 = vadd.f32 0.0, %v4945
      %v4947 = vpop.f32.mrb[0].mxu0
      %v4948 = vpop.f32.mrb[0].mxu0
      %v4949 = vadd.f32 0.0, %v4948
      %v4950 = vpop.f32.mrb[0].mxu0
      %4951 = vmatprep.mubr.bf16.mxu0 %v4693
      %4952 = vmatmul.mubr.bf16.gmra.mrb[0].mxu0 %v4437
      %v4953 = vpop.f32.mrb[0].mxu0
      %v4954 = vadd.f32 0.0, %v4953
      %v4955 = vpop.f32.mrb[0].mxu0
      %v4956 = vpop.f32.mrb[0].mxu0
      %v4957 = vadd.f32 0.0, %v4956
      %v4958 = vpop.f32.mrb[0].mxu0
      %4959 = vmatprep.mubr.bf16.mxu0 %v4696
      %4960 = vmatmul.mubr.bf16.gmra.mrb[0].mxu0 %v4439
      %v4961 = vpop.f32.mrb[0].mxu0
      %v4962 = vadd.f32 0.0, %v4961
      %v4963 = vpop.f32.mrb[0].mxu0
      %v4964 = vpop.f32.mrb[0].mxu0
      %v4965 = vadd.f32 0.0, %v4964
      %v4966 = vpop.f32.mrb[0].mxu0
      %4967 = vmatprep.mubr.bf16.mxu0 %v4699
      %4968 = vmatmul.mubr.bf16.gmra.mrb[0].mxu0 %v4441
      %v4969 = vpop.f32.mrb[0].mxu0
      %v4970 = vadd.f32 0.0, %v4969
      %v4971 = vpop.f32.mrb[0].mxu0
      %v4972 = vpop.f32.mrb[0].mxu0
      %v4973 = vadd.f32 0.0, %v4972
      %v4974 = vpop.f32.mrb[0].mxu0
      %4975 = vmatprep.mubr.bf16.mxu0 %v4702
      %4976 = vmatmul.mubr.bf16.gmra.mrb[0].mxu0 %v4443
      %v4977 = vpop.f32.mrb[0].mxu0
      %v4978 = vadd.f32 0.0, %v4977
      %v4979 = vpop.f32.mrb[0].mxu0
      %v4980 = vpop.f32.mrb[0].mxu0
      %v4981 = vadd.f32 0.0, %v4980
      %v4982 = vpop.f32.mrb[0].mxu0
      %4983 = vmatprep.mubr.bf16.mxu0 %v4705
      %4984 = vmatmul.mubr.bf16.gmra.mrb[0].mxu0 %v4445
      %v4985 = vpop.f32.mrb[0].mxu0
      %v4986 = vadd.f32 0.0, %v4985
      %v4987 = vpop.f32.mrb[0].mxu0
      %v4988 = vpop.f32.mrb[0].mxu0
      %v4989 = vadd.f32 0.0, %v4988
      %v4990 = vpop.f32.mrb[0].mxu0
      %4991 = vmatprep.mubr.bf16.mxu0 %v4708
      %4992 = vmatmul.mubr.bf16.gmra.mrb[0].mxu0 %v4447
      %v4993 = vpop.f32.mrb[0].mxu0
      %v4994 = vadd.f32 0.0, %v4993
      %v4995 = vpop.f32.mrb[0].mxu0
      %v4996 = vpop.f32.mrb[0].mxu0
      %v4997 = vadd.f32 0.0, %v4996
      %v4998 = vpop.f32.mrb[0].mxu0
      %4999 = vmatprep.mubr.bf16.mxu0 %v4711
      %5000 = vmatmul.mubr.bf16.gmra.mrb[0].mxu0 %v4449
      %v5001 = vpop.f32.mrb[0].mxu0
      %v5002 = vadd.f32 0.0, %v5001
      %v5003 = vpop.f32.mrb[0].mxu0
      %v5004 = vpop.f32.mrb[0].mxu0
      %v5005 = vadd.f32 0.0, %v5004
      %v5006 = vpop.f32.mrb[0].mxu0
      %5007 = vmatprep.mubr.bf16.mxu0 %v4714
      %5008 = vmatmul.mubr.bf16.gmra.mrb[0].mxu0 %v4451
      %v5009 = vpop.f32.mrb[0].mxu0
      %v5010 = vadd.f32 0.0, %v5009
      %v5011 = vpop.f32.mrb[0].mxu0
      %v5012 = vpop.f32.mrb[0].mxu0
      %v5013 = vadd.f32 0.0, %v5012
      %v5014 = vpop.f32.mrb[0].mxu0
      %5015 = vmatprep.mubr.bf16.mxu0 %v4717
      %5016 = vmatmul.mubr.bf16.gmra.mrb[0].mxu0 %v4453
      %v5017 = vpop.f32.mrb[0].mxu0
      %v5018 = vadd.f32 0.0, %v5017
      %v5019 = vpop.f32.mrb[0].mxu0
      %v5020 = vpop.f32.mrb[0].mxu0
      %v5021 = vadd.f32 0.0, %v5020
      %v5022 = vpop.f32.mrb[0].mxu0
      %5023 = vmatprep.mubr.bf16.mxu0 %v4720
      %5024 = vmatmul.mubr.bf16.gmra.mrb[0].mxu0 %v4455
      %v5025 = vpop.f32.mrb[0].mxu0
      %v5026 = vadd.f32 0.0, %v5025
      %v5027 = vpop.f32.mrb[0].mxu0
      %v5028 = vpop.f32.mrb[0].mxu0
      %v5029 = vadd.f32 0.0, %v5028
      %v5030 = vpop.f32.mrb[0].mxu0
      %5031 = vmatprep.mubr.bf16.mxu0 %v4723
      %5032 = vmatmul.mubr.bf16.gmra.mrb[0].mxu0 %v4457
      %v5033 = vpop.f32.mrb[0].mxu0
      %v5034 = vadd.f32 0.0, %v5033
      %v5035 = vpop.f32.mrb[0].mxu0
      %v5036 = vpop.f32.mrb[0].mxu0
      %v5037 = vadd.f32 0.0, %v5036
      %v5038 = vpop.f32.mrb[0].mxu0
      %5039 = vmatprep.mubr.bf16.mxu0 %v4726
      %5040 = vmatmul.mubr.bf16.gmra.mrb[0].mxu0 %v4459
      %v5041 = vpop.f32.mrb[0].mxu0
      %v5042 = vadd.f32 0.0, %v5041
      %v5043 = vpop.f32.mrb[0].mxu0
      %v5044 = vpop.f32.mrb[0].mxu0
      %v5045 = vadd.f32 0.0, %v5044
      %v5046 = vpop.f32.mrb[0].mxu0
      %5047 = vmatprep.mubr.bf16.mxu0 %v4729
      %5048 = vmatmul.mubr.bf16.gmra.mrb[0].mxu0 %v4461
      %v5049 = vpop.f32.mrb[0].mxu0
      %v5050 = vadd.f32 0.0, %v5049
      %v5051 = vpop.f32.mrb[0].mxu0
      %v5052 = vpop.f32.mrb[0].mxu0
      %v5053 = vadd.f32 0.0, %v5052
      %v5054 = vpop.f32.mrb[0].mxu0
      %5055 = vmatprep.mubr.bf16.mxu0 %v4732
      %5056 = vmatmul.mubr.bf16.gmra.mrb[0].mxu0 %v4463
      %v5057 = vpop.f32.mrb[0].mxu0
      %v5058 = vadd.f32 0.0, %v5057
      %v5059 = vpop.f32.mrb[0].mxu0
      %v5060 = vpop.f32.mrb[0].mxu0
      %v5061 = vadd.f32 0.0, %v5060
      %v5062 = vpop.f32.mrb[0].mxu0
      %5063 = vmatprep.mubr.bf16.mxu0 %v4735
      %5064 = vmatmul.mubr.bf16.gmra.mrb[0].mxu0 %v4465
      %v5065 = vpop.f32.mrb[0].mxu0
      %v5066 = vadd.f32 0.0, %v5065
      %v5067 = vpop.f32.mrb[0].mxu0
      %v5068 = vpop.f32.mrb[0].mxu0
      %v5069 = vadd.f32 0.0, %v5068
      %v5070 = vpop.f32.mrb[0].mxu0
      %5071 = vmatprep.mubr.bf16.mxu0 %v4738
      %5072 = vmatmul.mubr.bf16.gmra.mrb[0].mxu0 %v4467
      %v5073 = vpop.f32.mrb[0].mxu0
      %v5074 = vadd.f32 0.0, %v5073
      %v5075 = vpop.f32.mrb[0].mxu0
      %v5076 = vpop.f32.mrb[0].mxu0
      %v5077 = vadd.f32 0.0, %v5076
      %v5078 = vpop.f32.mrb[0].mxu0
      %5079 = vmatprep.mubr.bf16.mxu0 %v4741
      %5080 = vmatmul.mubr.bf16.gmra.mrb[0].mxu0 %v4469
      %v5081 = vpop.f32.mrb[0].mxu0
      %v5082 = vadd.f32 0.0, %v5081
      %v5083 = vpop.f32.mrb[0].mxu0
      %v5084 = vpop.f32.mrb[0].mxu0
      %v5085 = vadd.f32 0.0, %v5084
      %v5086 = vpop.f32.mrb[0].mxu0
      %5087 = vmatprep.mubr.bf16.mxu0 %v4744
      %5088 = vmatmul.mubr.bf16.gmra.mrb[0].mxu0 %v4471
      %v5089 = vpop.f32.mrb[0].mxu0
      %v5090 = vadd.f32 0.0, %v5089
      %v5091 = vpop.f32.mrb[0].mxu0
      %v5092 = vpop.f32.mrb[0].mxu0
      %v5093 = vadd.f32 0.0, %v5092
      %v5094 = vpop.f32.mrb[0].mxu0
      %5095 = vmatprep.mubr.bf16.mxu0 %v4747
      %5096 = vmatmul.mubr.bf16.gmra.mrb[0].mxu0 %v4473
      %v5097 = vpop.f32.mrb[0].mxu0
      %v5098 = vadd.f32 0.0, %v5097
      %v5099 = vpop.f32.mrb[0].mxu0
      %v5100 = vpop.f32.mrb[0].mxu0
      %v5101 = vadd.f32 0.0, %v5100
      %v5102 = vpop.f32.mrb[0].mxu0
      %5103 = vmatprep.mubr.bf16.mxu0 %v4750
      %5104 = vmatmul.mubr.bf16.gmra.mrb[0].mxu0 %v4475
      %v5105 = vpop.f32.mrb[0].mxu0
      %v5106 = vadd.f32 0.0, %v5105
      %v5107 = vpop.f32.mrb[0].mxu0
      %v5108 = vpop.f32.mrb[0].mxu0
      %v5109 = vadd.f32 0.0, %v5108
      %v5110 = vpop.f32.mrb[0].mxu0
      %5111 = vmatprep.mubr.bf16.mxu0 %v4753
      %5112 = vmatmul.mubr.bf16.gmra.mrb[0].mxu0 %v4477
      %v5113 = vpop.f32.mrb[0].mxu0
      %v5114 = vadd.f32 0.0, %v5113
      %v5115 = vpop.f32.mrb[0].mxu0
      %v5116 = vpop.f32.mrb[0].mxu0
      %v5117 = vadd.f32 0.0, %v5116
      %v5118 = vpop.f32.mrb[0].mxu0
      %5119 = vmatprep.mubr.bf16.mxu0 %v4756
      %5120 = vmatmul.mubr.bf16.gmra.mrb[0].mxu0 %v4479
      %v5121 = vpop.f32.mrb[0].mxu0
      %v5122 = vadd.f32 0.0, %v5121
      %v5123 = vpop.f32.mrb[0].mxu0
      %v5124 = vpop.f32.mrb[0].mxu0
      %v5125 = vadd.f32 0.0, %v5124
      %v5126 = vpop.f32.mrb[0].mxu0
      %5127 = vmatprep.mubr.bf16.mxu0 %v4759
      %5128 = vmatmul.mubr.bf16.gmra.mrb[0].mxu0 %v4481
      %v5129 = vpop.f32.mrb[0].mxu0
      %v5130 = vadd.f32 0.0, %v5129
      %v5131 = vpop.f32.mrb[0].mxu0
      %v5132 = vpop.f32.mrb[0].mxu0
      %v5133 = vadd.f32 0.0, %v5132
      %v5134 = vpop.f32.mrb[0].mxu0
      %5135 = vmatprep.mubr.bf16.mxu0 %v4762
      %5136 = vmatmul.mubr.bf16.gmra.mrb[0].mxu0 %v4483
      %v5137 = vpop.f32.mrb[0].mxu0
      %v5138 = vadd.f32 0.0, %v5137
      %v5139 = vpop.f32.mrb[0].mxu0
      %v5140 = vpop.f32.mrb[0].mxu0
      %v5141 = vadd.f32 0.0, %v5140
      %v5142 = vpop.f32.mrb[0].mxu0
      %5143 = vmatprep.mubr.bf16.mxu0 %v4765
      %5144 = vmatmul.mubr.bf16.gmra.mrb[0].mxu0 %v4485
      %v5145 = vpop.f32.mrb[0].mxu0
      %v5146 = vadd.f32 0.0, %v5145
      %v5147 = vpop.f32.mrb[0].mxu0
      %v5148 = vpop.f32.mrb[0].mxu0
      %v5149 = vadd.f32 0.0, %v5148
      %v5150 = vpop.f32.mrb[0].mxu0
      %5151 = vmatprep.mubr.bf16.mxu0 %v4768
      %5152 = vmatmul.mubr.bf16.gmra.mrb[0].mxu0 %v4487
      %v5153 = vpop.f32.mrb[0].mxu0
      %v5154 = vadd.f32 0.0, %v5153
      %v5155 = vpop.f32.mrb[0].mxu0
      %v5156 = vpop.f32.mrb[0].mxu0
      %v5157 = vadd.f32 0.0, %v5156
      %v5158 = vpop.f32.mrb[0].mxu0
      %5159 = vmatprep.mubr.bf16.mxu0 %v4771
      %5160 = vmatmul.mubr.bf16.gmra.mrb[0].mxu0 %v4489
      %v5161 = vpop.f32.mrb[0].mxu0
      %v5162 = vadd.f32 0.0, %v5161
      %v5163 = vpop.f32.mrb[0].mxu0
      %v5164 = vpop.f32.mrb[0].mxu0
      %v5165 = vadd.f32 0.0, %v5164
      %v5166 = vpop.f32.mrb[0].mxu0
      %5167 = vmatprep.mubr.bf16.mxu0 %v4774
      %5168 = vmatmul.mubr.bf16.gmra.mrb[0].mxu0 %v4491
      %v5169 = vpop.f32.mrb[0].mxu0
      %v5170 = vadd.f32 0.0, %v5169
      %v5171 = vpop.f32.mrb[0].mxu0
      %v5172 = vpop.f32.mrb[0].mxu0
      %v5173 = vadd.f32 0.0, %v5172
      %v5174 = vpop.f32.mrb[0].mxu0
      %5175 = vmatprep.mubr.bf16.mxu0 %v4777
      %5176 = vmatmul.mubr.bf16.gmra.mrb[0].mxu0 %v4493
      %v5177 = vpop.f32.mrb[0].mxu0
      %v5178 = vadd.f32 0.0, %v5177
      %v5179 = vpop.f32.mrb[0].mxu0
      %v5180 = vpop.f32.mrb[0].mxu0
      %v5181 = vadd.f32 0.0, %v5180
      %v5182 = vpop.f32.mrb[0].mxu0
      %5183 = vmatprep.mubr.bf16.mxu0 %v4780
      %5184 = vmatmul.mubr.bf16.gmra.mrb[0].mxu0 %v4495
      %v5185 = vpop.f32.mrb[0].mxu0
      %v5186 = vadd.f32 0.0, %v5185
      %v5187 = vpop.f32.mrb[0].mxu0
      %v5188 = vpop.f32.mrb[0].mxu0
      %v5189 = vadd.f32 0.0, %v5188
      %v5190 = vpop.f32.mrb[0].mxu0
      %5191 = vmatprep.mubr.bf16.mxu0 %v4783
      %5192 = vmatmul.mubr.bf16.gmra.mrb[0].mxu0 %v4497
      %v5193 = vpop.f32.mrb[0].mxu0
      %v5194 = vadd.f32 0.0, %v5193
      %v5195 = vpop.f32.mrb[0].mxu0
      %v5196 = vpop.f32.mrb[0].mxu0
      %v5197 = vadd.f32 0.0, %v5196
      %v5198 = vpop.f32.mrb[0].mxu0
      %5199 = vmatprep.mubr.bf16.mxu0 %v4786
      %5200 = vmatmul.mubr.bf16.gmra.mrb[0].mxu0 %v4499
      %v5201 = vpop.f32.mrb[0].mxu0
      %v5202 = vadd.f32 0.0, %v5201
      %v5203 = vpop.f32.mrb[0].mxu0
      %v5204 = vpop.f32.mrb[0].mxu0
      %v5205 = vadd.f32 0.0, %v5204
      %v5206 = vpop.f32.mrb[0].mxu0
      %5207 = vmatprep.mubr.bf16.mxu0 %v4789
      %5208 = vmatmul.mubr.bf16.gmra.mrb[0].mxu0 %v4501
      %v5209 = vpop.f32.mrb[0].mxu0
      %v5210 = vadd.f32 0.0, %v5209
      %v5211 = vpop.f32.mrb[0].mxu0
      %v5212 = vpop.f32.mrb[0].mxu0
      %v5213 = vadd.f32 0.0, %v5212
      %v5214 = vpop.f32.mrb[0].mxu0
      %5215 = vmatprep.mubr.bf16.mxu0 %v4792
      %5216 = vmatmul.mubr.bf16.gmra.mrb[0].mxu0 %v4503
      %v5217 = vpop.f32.mrb[0].mxu0
      %v5218 = vadd.f32 0.0, %v5217
      %v5219 = vpop.f32.mrb[0].mxu0
      %v5220 = vpop.f32.mrb[0].mxu0
      %v5221 = vadd.f32 0.0, %v5220
      %v5222 = vpop.f32.mrb[0].mxu0
      %5223 = vmatprep.mubr.bf16.mxu0 %v4795
      %5224 = vmatmul.mubr.bf16.gmra.mrb[0].mxu0 %v4505
      %v5225 = vpop.f32.mrb[0].mxu0
      %v5226 = vadd.f32 0.0, %v5225
      %v5227 = vpop.f32.mrb[0].mxu0
      %v5228 = vpop.f32.mrb[0].mxu0
      %v5229 = vadd.f32 0.0, %v5228
      %v5230 = vpop.f32.mrb[0].mxu0
      %5231 = vmatprep.mubr.bf16.mxu0 %v4798
      %5232 = vmatmul.mubr.bf16.gmra.mrb[0].mxu0 %v4507
      %v5233 = vpop.f32.mrb[0].mxu0
      %v5234 = vadd.f32 0.0, %v5233
      %v5235 = vpop.f32.mrb[0].mxu0
      %v5236 = vpop.f32.mrb[0].mxu0
      %v5237 = vadd.f32 0.0, %v5236
      %v5238 = vpop.f32.mrb[0].mxu0
      %5239 = vmatprep.mubr.bf16.mxu0 %v4801
      %5240 = vmatmul.mubr.bf16.gmra.mrb[0].mxu0 %v4509
      %v5241 = vpop.f32.mrb[0].mxu0
      %v5242 = vadd.f32 0.0, %v5241
      %v5243 = vpop.f32.mrb[0].mxu0
      %v5244 = vpop.f32.mrb[0].mxu0
      %v5245 = vadd.f32 0.0, %v5244
      %v5246 = vpop.f32.mrb[0].mxu0
      %5247 = vmatprep.mubr.bf16.mxu0 %v4804
      %5248 = vmatmul.mubr.bf16.gmra.mrb[0].mxu0 %v4511
      %v5249 = vpop.f32.mrb[0].mxu0
      %v5250 = vadd.f32 0.0, %v5249
      %v5251 = vpop.f32.mrb[0].mxu0
      %v5252 = vpop.f32.mrb[0].mxu0
      %v5253 = vadd.f32 0.0, %v5252
      %v5254 = vpop.f32.mrb[0].mxu0
      %5255 = vmatprep.mubr.bf16.mxu0 %v4807
      %5256 = vmatmul.mubr.bf16.gmra.mrb[0].mxu0 %v4513
      %v5257 = vpop.f32.mrb[0].mxu0
      %v5258 = vadd.f32 0.0, %v5257
      %v5259 = vpop.f32.mrb[0].mxu0
      %v5260 = vpop.f32.mrb[0].mxu0
      %v5261 = vadd.f32 0.0, %v5260
      %v5262 = vpop.f32.mrb[0].mxu0
      %5263 = vmatprep.mubr.bf16.mxu0 %v4810
      %5264 = vmatmul.mubr.bf16.gmra.mrb[0].mxu0 %v4515
      %v5265 = vpop.f32.mrb[0].mxu0
      %v5266 = vadd.f32 0.0, %v5265
      %v5267 = vpop.f32.mrb[0].mxu0
      %v5268 = vpop.f32.mrb[0].mxu0
      %v5269 = vadd.f32 0.0, %v5268
      %v5270 = vpop.f32.mrb[0].mxu0
      %5271 = vmatprep.mubr.bf16.mxu0 %v4813
      %5272 = vmatmul.mubr.bf16.gmra.mrb[0].mxu0 %v4517
      %v5273 = vpop.f32.mrb[0].mxu0
      %v5274 = vadd.f32 0.0, %v5273
      %v5275 = vpop.f32.mrb[0].mxu0
      %v5276 = vpop.f32.mrb[0].mxu0
      %v5277 = vadd.f32 0.0, %v5276
      %v5278 = vpop.f32.mrb[0].mxu0
      %5279 = vmatprep.mubr.bf16.mxu0 %v4816
      %5280 = vmatmul.mubr.bf16.gmra.mrb[0].mxu0 %v4519
      %v5281 = vpop.f32.mrb[0].mxu0
      %v5282 = vadd.f32 0.0, %v5281
      %v5283 = vpop.f32.mrb[0].mxu0
      %v5284 = vpop.f32.mrb[0].mxu0
      %v5285 = vadd.f32 0.0, %v5284
      %v5286 = vpop.f32.mrb[0].mxu0
      %5287 = vmatprep.mubr.bf16.mxu0 %v4819
      %5288 = vmatmul.mubr.bf16.gmra.mrb[0].mxu0 %v4521
      %v5289 = vpop.f32.mrb[0].mxu0
      %v5290 = vadd.f32 0.0, %v5289
      %v5291 = vpop.f32.mrb[0].mxu0
      %v5292 = vpop.f32.mrb[0].mxu0
      %v5293 = vadd.f32 0.0, %v5292
      %v5294 = vpop.f32.mrb[0].mxu0
      %5295 = vmatprep.mubr.bf16.mxu0 %v4822
      %5296 = vmatmul.mubr.bf16.gmra.mrb[0].mxu0 %v4523
      %v5297 = vpop.f32.mrb[0].mxu0
      %v5298 = vadd.f32 0.0, %v5297
      %v5299 = vpop.f32.mrb[0].mxu0
      %v5300 = vpop.f32.mrb[0].mxu0
      %v5301 = vadd.f32 0.0, %v5300
      %v5302 = vpop.f32.mrb[0].mxu0
      %5303 = vmatprep.mubr.bf16.mxu0 %v4825
      %5304 = vmatmul.mubr.bf16.gmra.mrb[0].mxu0 %v4525
      %v5305 = vpop.f32.mrb[0].mxu0
      %v5306 = vadd.f32 0.0, %v5305
      %v5307 = vpop.f32.mrb[0].mxu0
      %v5308 = vpop.f32.mrb[0].mxu0
      %v5309 = vadd.f32 0.0, %v5308
      %v5310 = vpop.f32.mrb[0].mxu0
      %5311 = vmatprep.mubr.bf16.mxu0 %v4828
      %5312 = vmatmul.mubr.bf16.gmra.mrb[0].mxu0 %v4527
      %v5313 = vpop.f32.mrb[0].mxu0
      %v5314 = vadd.f32 0.0, %v5313
      %v5315 = vpop.f32.mrb[0].mxu0
      %v5316 = vpop.f32.mrb[0].mxu0
      %v5317 = vadd.f32 0.0, %v5316
      %v5318 = vpop.f32.mrb[0].mxu0
      %5319 = vmatprep.mubr.bf16.mxu0 %v4831
      %5320 = vmatmul.mubr.bf16.gmra.mrb[0].mxu0 %v4529
      %v5321 = vpop.f32.mrb[0].mxu0
      %v5322 = vadd.f32 0.0, %v5321
      %v5323 = vpop.f32.mrb[0].mxu0
      %v5324 = vpop.f32.mrb[0].mxu0
      %v5325 = vadd.f32 0.0, %v5324
      %v5326 = vpop.f32.mrb[0].mxu0
      %5327 = vmatprep.mubr.bf16.mxu0 %v4834
      %5328 = vmatmul.mubr.bf16.gmra.mrb[0].mxu0 %v4531
      %v5329 = vpop.f32.mrb[0].mxu0
      %v5330 = vadd.f32 0.0, %v5329
      %v5331 = vpop.f32.mrb[0].mxu0
      %v5332 = vpop.f32.mrb[0].mxu0
      %v5333 = vadd.f32 0.0, %v5332
      %v5334 = vpop.f32.mrb[0].mxu0
      %5335 = vmatprep.mubr.bf16.mxu0 %v4837
      %5336 = vmatmul.mubr.bf16.gmra.mrb[0].mxu0 %v4533
      %v5337 = vpop.f32.mrb[0].mxu0
      %v5338 = vadd.f32 0.0, %v5337
      %v5339 = vpop.f32.mrb[0].mxu0
      %v5340 = vpop.f32.mrb[0].mxu0
      %v5341 = vadd.f32 0.0, %v5340
      %v5342 = vpop.f32.mrb[0].mxu0
      %5343 = vmatprep.mubr.bf16.mxu0 %v4840
      %5344 = vmatmul.mubr.bf16.gmra.mrb[0].mxu0 %v4535
      %v5345 = vpop.f32.mrb[0].mxu0
      %v5346 = vadd.f32 0.0, %v5345
      %v5347 = vpop.f32.mrb[0].mxu0
      %v5348 = vpop.f32.mrb[0].mxu0
      %v5349 = vadd.f32 0.0, %v5348
      %v5350 = vpop.f32.mrb[0].mxu0
      %5351 = vmatprep.mubr.bf16.mxu0 %v4843
      %5352 = vmatmul.mubr.bf16.gmra.mrb[0].mxu0 %v4537
      %v5353 = vpop.f32.mrb[0].mxu0
      %v5354 = vadd.f32 0.0, %v5353
      %v5355 = vpop.f32.mrb[0].mxu0
      %v5356 = vpop.f32.mrb[0].mxu0
      %v5357 = vadd.f32 0.0, %v5356
      %v5358 = vpop.f32.mrb[0].mxu0
      %5359 = vmatprep.mubr.bf16.mxu0 %v4846
      %5360 = vmatmul.mubr.bf16.gmra.mrb[0].mxu0 %v4539
      %v5361 = vpop.f32.mrb[0].mxu0
      %v5362 = vadd.f32 0.0, %v5361
      %v5363 = vpop.f32.mrb[0].mxu0
      %v5364 = vpop.f32.mrb[0].mxu0
      %v5365 = vadd.f32 0.0, %v5364
      %v5366 = vpop.f32.mrb[0].mxu0
      %5367 = vmatprep.mubr.bf16.mxu0 %v4849
      %5368 = vmatmul.mubr.bf16.gmra.mrb[0].mxu0 %v4541
      %v5369 = vpop.f32.mrb[0].mxu0
      %v5370 = vadd.f32 0.0, %v5369
      %v5371 = vpop.f32.mrb[0].mxu0
      %v5372 = vpop.f32.mrb[0].mxu0
      %v5373 = vadd.f32 0.0, %v5372
      %v5374 = vpop.f32.mrb[0].mxu0
      %5375 = vmatprep.mubr.bf16.mxu0 %v4852
      %5376 = vmatmul.mubr.bf16.gmra.mrb[0].mxu0 %v4543
      %v5377 = vpop.f32.mrb[0].mxu0
      %v5378 = vadd.f32 0.0, %v5377
      %v5379 = vpop.f32.mrb[0].mxu0
      %v5380 = vpop.f32.mrb[0].mxu0
      %v5381 = vadd.f32 0.0, %v5380
      %v5382 = vpop.f32.mrb[0].mxu0
      %5383 = vmatprep.mubr.bf16.mxu0 %v4855
      %5384 = vmatmul.mubr.bf16.gmra.mrb[0].mxu0 %v4545
      %v5385 = vpop.f32.mrb[0].mxu0
      %v5386 = vadd.f32 0.0, %v5385
      %v5387 = vpop.f32.mrb[0].mxu0
      %v5388 = vpop.f32.mrb[0].mxu0
      %v5389 = vadd.f32 0.0, %v5388
      %v5390 = vpop.f32.mrb[0].mxu0
      %5391 = vmatprep.mubr.bf16.mxu0 %v4858
      %5392 = vmatmul.mubr.bf16.gmra.mrb[0].mxu0 %v4547
      %v5393 = vpop.f32.mrb[0].mxu0
      %v5394 = vadd.f32 0.0, %v5393
      %v5395 = vpop.f32.mrb[0].mxu0
      %v5396 = vpop.f32.mrb[0].mxu0
      %v5397 = vadd.f32 0.0, %v5396
      %v5398 = vpop.f32.mrb[0].mxu0
      %5399 = vmatprep.mubr.bf16.mxu0 %v4861
      %5400 = vmatmul.mubr.bf16.gmra.mrb[0].mxu0 %v4549
      %v5401 = vpop.f32.mrb[0].mxu0
      %v5402 = vadd.f32 0.0, %v5401
      %v5403 = vpop.f32.mrb[0].mxu0
      %v5404 = vpop.f32.mrb[0].mxu0
      %v5405 = vadd.f32 0.0, %v5404
      %v5406 = vpop.f32.mrb[0].mxu0
      %5407 = vdwg.mxu0
      %s5408 = scalar_lea.vmem %s3, 120
      %v5409 = vld [vmem:[%s5408] sm:$0xf]
      %v5410 = vld [vmem:[%s5408 + $0x4] sm:$0xf]
      %v5411 = vld [vmem:[%s5408 + $0x8] sm:$0xf]
      %v5412 = vld [vmem:[%s5408 + $0xc] sm:$0xf]
      %v5413 = vld [vmem:[%s5408 + $0x10] sm:$0xf]
      %v5414 = vld [vmem:[%s5408 + $0x14] sm:$0xf]
      %v5415 = vld [vmem:[%s5408 + $0x18] sm:$0xf]
      %v5416 = vld [vmem:[%s5408 + $0x1c] sm:$0xf]
      %v5417 = vld [vmem:[%s5408 + $0x20] sm:$0xf]
      %v5418 = vld [vmem:[%s5408 + $0x24] sm:$0xf]
      %v5419 = vld [vmem:[%s5408 + $0x28] sm:$0xf]
      %v5420 = vld [vmem:[%s5408 + $0x2c] sm:$0xf]
      %v5421 = vld [vmem:[%s5408 + $0x30] sm:$0xf]
      %v5422 = vld [vmem:[%s5408 + $0x34] sm:$0xf]
      %v5423 = vld [vmem:[%s5408 + $0x38] sm:$0xf]
      %v5424 = vld [vmem:[%s5408 + $0x3c] sm:$0xf]
      %v5425 = vld [vmem:[%s5408 + $0x40] sm:$0xf]
      %v5426 = vld [vmem:[%s5408 + $0x44] sm:$0xf]
      %v5427 = vld [vmem:[%s5408 + $0x48] sm:$0xf]
      %v5428 = vld [vmem:[%s5408 + $0x4c] sm:$0xf]
      %v5429 = vld [vmem:[%s5408 + $0x50] sm:$0xf]
      %v5430 = vld [vmem:[%s5408 + $0x54] sm:$0xf]
      %v5431 = vld [vmem:[%s5408 + $0x58] sm:$0xf]
      %v5432 = vld [vmem:[%s5408 + $0x5c] sm:$0xf]
      %v5433 = vld [vmem:[%s5408 + $0x60] sm:$0xf]
      %v5434 = vld [vmem:[%s5408 + $0x64] sm:$0xf]
      %v5435 = vld [vmem:[%s5408 + $0x68] sm:$0xf]
      %v5436 = vld [vmem:[%s5408 + $0x6c] sm:$0xf]
      %v5437 = vld [vmem:[%s5408 + $0x70] sm:$0xf]
      %v5438 = vld [vmem:[%s5408 + $0x74] sm:$0xf]
      %v5469 = vunpack.c.l.b16 %v5409
      %v5470 = vunpack.c.l.b16 %v5410
      %v5471 = vunpack.c.l.b16 %v5411
      %v5472 = vunpack.c.l.b16 %v5412
      %v5473 = vunpack.c.l.b16 %v5413
      %v5474 = vunpack.c.l.b16 %v5414
      %v5475 = vunpack.c.l.b16 %v5415
      %v5476 = vunpack.c.l.b16 %v5416
      %v5477 = vunpack.c.l.b16 %v5417
      %v5478 = vunpack.c.l.b16 %v5418
      %v5479 = vunpack.c.l.b16 %v5419
      %v5480 = vunpack.c.l.b16 %v5420
      %v5481 = vunpack.c.l.b16 %v5421
      %v5482 = vunpack.c.l.b16 %v5422
      %v5483 = vunpack.c.l.b16 %v5423
      %v5484 = vunpack.c.l.b16 %v5424
      %v5485 = vunpack.c.l.b16 %v5425
      %v5486 = vunpack.c.l.b16 %v5426
      %v5487 = vunpack.c.l.b16 %v5427
      %v5488 = vunpack.c.l.b16 %v5428
      %v5489 = vunpack.c.l.b16 %v5429
      %v5490 = vunpack.c.l.b16 %v5430
      %v5491 = vunpack.c.l.b16 %v5431
      %v5492 = vunpack.c.l.b16 %v5432
      %v5493 = vunpack.c.l.b16 %v5433
      %v5494 = vunpack.c.l.b16 %v5434
      %v5495 = vunpack.c.l.b16 %v5435
      %v5496 = vunpack.c.l.b16 %v5436
      %v5497 = vunpack.c.l.b16 %v5437
      %v5498 = vunpack.c.l.b16 %v5438
      %v5499 = vpack.c.b16 %v5470, %v5469
      %v5500 = vpack.c.b16 %v5472, %v5471
      %v5501 = vpack.c.b16 %v5474, %v5473
      %v5502 = vpack.c.b16 %v5476, %v5475
      %v5503 = vpack.c.b16 %v5478, %v5477
      %v5504 = vpack.c.b16 %v5480, %v5479
      %v5505 = vpack.c.b16 %v5482, %v5481
      %v5506 = vpack.c.b16 %v5484, %v5483
      %v5507 = vpack.c.b16 %v5486, %v5485
      %v5508 = vpack.c.b16 %v5488, %v5487
      %v5509 = vpack.c.b16 %v5490, %v5489
      %v5510 = vpack.c.b16 %v5492, %v5491
      %v5511 = vpack.c.b16 %v5494, %v5493
      %v5512 = vpack.c.b16 %v5496, %v5495
      %v5513 = vpack.c.b16 %v5498, %v5497
      %5529 = vmatprep.subr.bf16.mxu0 0
      %5530 = vmatpush1.bf16.msra.mxu0 %v5499
      %5531 = vmatprep.subr.bf16.mxu0 0
      %5532 = vmatpush1.bf16.msra.mxu0 %v5500
      %5533 = vmatprep.subr.bf16.mxu0 0
      %5534 = vmatpush1.bf16.msra.mxu0 %v5501
      %5535 = vmatprep.subr.bf16.mxu0 0
      %5536 = vmatpush1.bf16.msra.mxu0 %v5502
      %5537 = vmatprep.subr.bf16.mxu0 0
      %5538 = vmatpush1.bf16.msra.mxu0 %v5503
      %5539 = vmatprep.subr.bf16.mxu0 0
      %5540 = vmatpush1.bf16.msra.mxu0 %v5504
      %5541 = vmatprep.subr.bf16.mxu0 0
      %5542 = vmatpush1.bf16.msra.mxu0 %v5505
      %5543 = vmatprep.subr.bf16.mxu0 0
      %5544 = vmatpush1.bf16.msra.mxu0 %v5506
      %5545 = vmatprep.subr.bf16.mxu0 0
      %5546 = vmatpush1.bf16.msra.mxu0 %v5507
      %5547 = vmatprep.subr.bf16.mxu0 0
      %5548 = vmatpush1.bf16.msra.mxu0 %v5508
      %5549 = vmatprep.subr.bf16.mxu0 0
      %5550 = vmatpush1.bf16.msra.mxu0 %v5509
      %5551 = vmatprep.subr.bf16.mxu0 0
      %5552 = vmatpush1.bf16.msra.mxu0 %v5510
      %5553 = vmatprep.subr.bf16.mxu0 0
      %5554 = vmatpush1.bf16.msra.mxu0 %v5511
      %5555 = vmatprep.subr.bf16.mxu0 0
      %5556 = vmatpush1.bf16.msra.mxu0 %v5512
      %5557 = vmatprep.subr.bf16.mxu0 0
      %5558 = vmatpush1.bf16.msra.mxu0 %v5513
      %5559 = vmatprep.subr.bf16.mxu0 0
      %5560 = vmatpush1.bf16.msra.mxu0 0
      %5561 = vmatprep.mubr.bf16.mxu0 %v4672
      %5562 = vmatmul.mubr.bf16.gmra.mrb[0].mxu0 %v4423
      %v5563 = vpop.f32.mrb[0].mxu0
      %v5564 = vadd.f32 0.0, %v5563
      %v5565 = vpop.f32.mrb[0].mxu0
      %v5566 = vpop.f32.mrb[0].mxu0
      %v5567 = vadd.f32 0.0, %v5566
      %v5568 = vpop.f32.mrb[0].mxu0
      %5569 = vmatprep.mubr.bf16.mxu0 %v4675
      %5570 = vmatmul.mubr.bf16.gmra.mrb[0].mxu0 %v4425
      %v5571 = vpop.f32.mrb[0].mxu0
      %v5572 = vadd.f32 0.0, %v5571
      %v5573 = vpop.f32.mrb[0].mxu0
      %v5574 = vpop.f32.mrb[0].mxu0
      %v5575 = vadd.f32 0.0, %v5574
      %v5576 = vpop.f32.mrb[0].mxu0
      %5577 = vmatprep.mubr.bf16.mxu0 %v4678
      %5578 = vmatmul.mubr.bf16.gmra.mrb[0].mxu0 %v4427
      %v5579 = vpop.f32.mrb[0].mxu0
      %v5580 = vadd.f32 0.0, %v5579
      %v5581 = vpop.f32.mrb[0].mxu0
      %v5582 = vpop.f32.mrb[0].mxu0
      %v5583 = vadd.f32 0.0, %v5582
      %v5584 = vpop.f32.mrb[0].mxu0
      %5585 = vmatprep.mubr.bf16.mxu0 %v4681
      %5586 = vmatmul.mubr.bf16.gmra.mrb[0].mxu0 %v4429
      %v5587 = vpop.f32.mrb[0].mxu0
      %v5588 = vadd.f32 0.0, %v5587
      %v5589 = vpop.f32.mrb[0].mxu0
      %v5590 = vpop.f32.mrb[0].mxu0
      %v5591 = vadd.f32 0.0, %v5590
      %v5592 = vpop.f32.mrb[0].mxu0
      %5593 = vmatprep.mubr.bf16.mxu0 %v4684
      %5594 = vmatmul.mubr.bf16.gmra.mrb[0].mxu0 %v4431
      %v5595 = vpop.f32.mrb[0].mxu0
      %v5596 = vadd.f32 0.0, %v5595
      %v5597 = vpop.f32.mrb[0].mxu0
      %v5598 = vpop.f32.mrb[0].mxu0
      %v5599 = vadd.f32 0.0, %v5598
      %v5600 = vpop.f32.mrb[0].mxu0
      %5601 = vmatprep.mubr.bf16.mxu0 %v4687
      %5602 = vmatmul.mubr.bf16.gmra.mrb[0].mxu0 %v4433
      %v5603 = vpop.f32.mrb[0].mxu0
      %v5604 = vadd.f32 0.0, %v5603
      %v5605 = vpop.f32.mrb[0].mxu0
      %v5606 = vpop.f32.mrb[0].mxu0
      %v5607 = vadd.f32 0.0, %v5606
      %v5608 = vpop.f32.mrb[0].mxu0
      %5609 = vmatprep.mubr.bf16.mxu0 %v4690
      %5610 = vmatmul.mubr.bf16.gmra.mrb[0].mxu0 %v4435
      %v5611 = vpop.f32.mrb[0].mxu0
      %v5612 = vadd.f32 0.0, %v5611
      %v5613 = vpop.f32.mrb[0].mxu0
      %v5614 = vpop.f32.mrb[0].mxu0
      %v5615 = vadd.f32 0.0, %v5614
      %v5616 = vpop.f32.mrb[0].mxu0
      %5617 = vmatprep.mubr.bf16.mxu0 %v4693
      %5618 = vmatmul.mubr.bf16.gmra.mrb[0].mxu0 %v4437
      %v5619 = vpop.f32.mrb[0].mxu0
      %v5620 = vadd.f32 0.0, %v5619
      %v5621 = vpop.f32.mrb[0].mxu0
      %v5622 = vpop.f32.mrb[0].mxu0
      %v5623 = vadd.f32 0.0, %v5622
      %v5624 = vpop.f32.mrb[0].mxu0
      %5625 = vmatprep.mubr.bf16.mxu0 %v4696
      %5626 = vmatmul.mubr.bf16.gmra.mrb[0].mxu0 %v4439
      %v5627 = vpop.f32.mrb[0].mxu0
      %v5628 = vadd.f32 0.0, %v5627
      %v5629 = vpop.f32.mrb[0].mxu0
      %v5630 = vpop.f32.mrb[0].mxu0
      %v5631 = vadd.f32 0.0, %v5630
      %v5632 = vpop.f32.mrb[0].mxu0
      %5633 = vmatprep.mubr.bf16.mxu0 %v4699
      %5634 = vmatmul.mubr.bf16.gmra.mrb[0].mxu0 %v4441
      %v5635 = vpop.f32.mrb[0].mxu0
      %v5636 = vadd.f32 0.0, %v5635
      %v5637 = vpop.f32.mrb[0].mxu0
      %v5638 = vpop.f32.mrb[0].mxu0
      %v5639 = vadd.f32 0.0, %v5638
      %v5640 = vpop.f32.mrb[0].mxu0
      %5641 = vmatprep.mubr.bf16.mxu0 %v4702
      %5642 = vmatmul.mubr.bf16.gmra.mrb[0].mxu0 %v4443
      %v5643 = vpop.f32.mrb[0].mxu0
      %v5644 = vadd.f32 0.0, %v5643
      %v5645 = vpop.f32.mrb[0].mxu0
      %v5646 = vpop.f32.mrb[0].mxu0
      %v5647 = vadd.f32 0.0, %v5646
      %v5648 = vpop.f32.mrb[0].mxu0
      %5649 = vmatprep.mubr.bf16.mxu0 %v4705
      %5650 = vmatmul.mubr.bf16.gmra.mrb[0].mxu0 %v4445
      %v5651 = vpop.f32.mrb[0].mxu0
      %v5652 = vadd.f32 0.0, %v5651
      %v5653 = vpop.f32.mrb[0].mxu0
      %v5654 = vpop.f32.mrb[0].mxu0
      %v5655 = vadd.f32 0.0, %v5654
      %v5656 = vpop.f32.mrb[0].mxu0
      %5657 = vmatprep.mubr.bf16.mxu0 %v4708
      %5658 = vmatmul.mubr.bf16.gmra.mrb[0].mxu0 %v4447
      %v5659 = vpop.f32.mrb[0].mxu0
      %v5660 = vadd.f32 0.0, %v5659
      %v5661 = vpop.f32.mrb[0].mxu0
      %v5662 = vpop.f32.mrb[0].mxu0
      %v5663 = vadd.f32 0.0, %v5662
      %v5664 = vpop.f32.mrb[0].mxu0
      %5665 = vmatprep.mubr.bf16.mxu0 %v4711
      %5666 = vmatmul.mubr.bf16.gmra.mrb[0].mxu0 %v4449
      %v5667 = vpop.f32.mrb[0].mxu0
      %v5668 = vadd.f32 0.0, %v5667
      %v5669 = vpop.f32.mrb[0].mxu0
      %v5670 = vpop.f32.mrb[0].mxu0
      %v5671 = vadd.f32 0.0, %v5670
      %v5672 = vpop.f32.mrb[0].mxu0
      %5673 = vmatprep.mubr.bf16.mxu0 %v4714
      %5674 = vmatmul.mubr.bf16.gmra.mrb[0].mxu0 %v4451
      %v5675 = vpop.f32.mrb[0].mxu0
      %v5676 = vadd.f32 0.0, %v5675
      %v5677 = vpop.f32.mrb[0].mxu0
      %v5678 = vpop.f32.mrb[0].mxu0
      %v5679 = vadd.f32 0.0, %v5678
      %v5680 = vpop.f32.mrb[0].mxu0
      %5681 = vmatprep.mubr.bf16.mxu0 %v4717
      %5682 = vmatmul.mubr.bf16.gmra.mrb[0].mxu0 %v4453
      %v5683 = vpop.f32.mrb[0].mxu0
      %v5684 = vadd.f32 0.0, %v5683
      %v5685 = vpop.f32.mrb[0].mxu0
      %v5686 = vpop.f32.mrb[0].mxu0
      %v5687 = vadd.f32 0.0, %v5686
      %v5688 = vpop.f32.mrb[0].mxu0
      %5689 = vmatprep.mubr.bf16.mxu0 %v4720
      %5690 = vmatmul.mubr.bf16.gmra.mrb[0].mxu0 %v4455
      %v5691 = vpop.f32.mrb[0].mxu0
      %v5692 = vadd.f32 0.0, %v5691
      %v5693 = vpop.f32.mrb[0].mxu0
      %v5694 = vpop.f32.mrb[0].mxu0
      %v5695 = vadd.f32 0.0, %v5694
      %v5696 = vpop.f32.mrb[0].mxu0
      %5697 = vmatprep.mubr.bf16.mxu0 %v4723
      %5698 = vmatmul.mubr.bf16.gmra.mrb[0].mxu0 %v4457
      %v5699 = vpop.f32.mrb[0].mxu0
      %v5700 = vadd.f32 0.0, %v5699
      %v5701 = vpop.f32.mrb[0].mxu0
      %v5702 = vpop.f32.mrb[0].mxu0
      %v5703 = vadd.f32 0.0, %v5702
      %v5704 = vpop.f32.mrb[0].mxu0
      %5705 = vmatprep.mubr.bf16.mxu0 %v4726
      %5706 = vmatmul.mubr.bf16.gmra.mrb[0].mxu0 %v4459
      %v5707 = vpop.f32.mrb[0].mxu0
      %v5708 = vadd.f32 0.0, %v5707
      %v5709 = vpop.f32.mrb[0].mxu0
      %v5710 = vpop.f32.mrb[0].mxu0
      %v5711 = vadd.f32 0.0, %v5710
      %v5712 = vpop.f32.mrb[0].mxu0
      %5713 = vmatprep.mubr.bf16.mxu0 %v4729
      %5714 = vmatmul.mubr.bf16.gmra.mrb[0].mxu0 %v4461
      %v5715 = vpop.f32.mrb[0].mxu0
      %v5716 = vadd.f32 0.0, %v5715
      %v5717 = vpop.f32.mrb[0].mxu0
      %v5718 = vpop.f32.mrb[0].mxu0
      %v5719 = vadd.f32 0.0, %v5718
      %v5720 = vpop.f32.mrb[0].mxu0
      %5721 = vmatprep.mubr.bf16.mxu0 %v4732
      %5722 = vmatmul.mubr.bf16.gmra.mrb[0].mxu0 %v4463
      %v5723 = vpop.f32.mrb[0].mxu0
      %v5724 = vadd.f32 0.0, %v5723
      %v5725 = vpop.f32.mrb[0].mxu0
      %v5726 = vpop.f32.mrb[0].mxu0
      %v5727 = vadd.f32 0.0, %v5726
      %v5728 = vpop.f32.mrb[0].mxu0
      %5729 = vmatprep.mubr.bf16.mxu0 %v4735
      %5730 = vmatmul.mubr.bf16.gmra.mrb[0].mxu0 %v4465
      %v5731 = vpop.f32.mrb[0].mxu0
      %v5732 = vadd.f32 0.0, %v5731
      %v5733 = vpop.f32.mrb[0].mxu0
      %v5734 = vpop.f32.mrb[0].mxu0
      %v5735 = vadd.f32 0.0, %v5734
      %v5736 = vpop.f32.mrb[0].mxu0
      %5737 = vmatprep.mubr.bf16.mxu0 %v4738
      %5738 = vmatmul.mubr.bf16.gmra.mrb[0].mxu0 %v4467
      %v5739 = vpop.f32.mrb[0].mxu0
      %v5740 = vadd.f32 0.0, %v5739
      %v5741 = vpop.f32.mrb[0].mxu0
      %v5742 = vpop.f32.mrb[0].mxu0
      %v5743 = vadd.f32 0.0, %v5742
      %v5744 = vpop.f32.mrb[0].mxu0
      %5745 = vmatprep.mubr.bf16.mxu0 %v4741
      %5746 = vmatmul.mubr.bf16.gmra.mrb[0].mxu0 %v4469
      %v5747 = vpop.f32.mrb[0].mxu0
      %v5748 = vadd.f32 0.0, %v5747
      %v5749 = vpop.f32.mrb[0].mxu0
      %v5750 = vpop.f32.mrb[0].mxu0
      %v5751 = vadd.f32 0.0, %v5750
      %v5752 = vpop.f32.mrb[0].mxu0
      %5753 = vmatprep.mubr.bf16.mxu0 %v4744
      %5754 = vmatmul.mubr.bf16.gmra.mrb[0].mxu0 %v4471
      %v5755 = vpop.f32.mrb[0].mxu0
      %v5756 = vadd.f32 0.0, %v5755
      %v5757 = vpop.f32.mrb[0].mxu0
      %v5758 = vpop.f32.mrb[0].mxu0
      %v5759 = vadd.f32 0.0, %v5758
      %v5760 = vpop.f32.mrb[0].mxu0
      %5761 = vmatprep.mubr.bf16.mxu0 %v4747
      %5762 = vmatmul.mubr.bf16.gmra.mrb[0].mxu0 %v4473
      %v5763 = vpop.f32.mrb[0].mxu0
      %v5764 = vadd.f32 0.0, %v5763
      %v5765 = vpop.f32.mrb[0].mxu0
      %v5766 = vpop.f32.mrb[0].mxu0
      %v5767 = vadd.f32 0.0, %v5766
      %v5768 = vpop.f32.mrb[0].mxu0
      %5769 = vmatprep.mubr.bf16.mxu0 %v4750
      %5770 = vmatmul.mubr.bf16.gmra.mrb[0].mxu0 %v4475
      %v5771 = vpop.f32.mrb[0].mxu0
      %v5772 = vadd.f32 0.0, %v5771
      %v5773 = vpop.f32.mrb[0].mxu0
      %v5774 = vpop.f32.mrb[0].mxu0
      %v5775 = vadd.f32 0.0, %v5774
      %v5776 = vpop.f32.mrb[0].mxu0
      %5777 = vmatprep.mubr.bf16.mxu0 %v4753
      %5778 = vmatmul.mubr.bf16.gmra.mrb[0].mxu0 %v4477
      %v5779 = vpop.f32.mrb[0].mxu0
      %v5780 = vadd.f32 0.0, %v5779
      %v5781 = vpop.f32.mrb[0].mxu0
      %v5782 = vpop.f32.mrb[0].mxu0
      %v5783 = vadd.f32 0.0, %v5782
      %v5784 = vpop.f32.mrb[0].mxu0
      %5785 = vmatprep.mubr.bf16.mxu0 %v4756
      %5786 = vmatmul.mubr.bf16.gmra.mrb[0].mxu0 %v4479
      %v5787 = vpop.f32.mrb[0].mxu0
      %v5788 = vadd.f32 0.0, %v5787
      %v5789 = vpop.f32.mrb[0].mxu0
      %v5790 = vpop.f32.mrb[0].mxu0
      %v5791 = vadd.f32 0.0, %v5790
      %v5792 = vpop.f32.mrb[0].mxu0
      %5793 = vmatprep.mubr.bf16.mxu0 %v4759
      %5794 = vmatmul.mubr.bf16.gmra.mrb[0].mxu0 %v4481
      %v5795 = vpop.f32.mrb[0].mxu0
      %v5796 = vadd.f32 0.0, %v5795
      %v5797 = vpop.f32.mrb[0].mxu0
      %v5798 = vpop.f32.mrb[0].mxu0
      %v5799 = vadd.f32 0.0, %v5798
      %v5800 = vpop.f32.mrb[0].mxu0
      %5801 = vmatprep.mubr.bf16.mxu0 %v4762
      %5802 = vmatmul.mubr.bf16.gmra.mrb[0].mxu0 %v4483
      %v5803 = vpop.f32.mrb[0].mxu0
      %v5804 = vadd.f32 0.0, %v5803
      %v5805 = vpop.f32.mrb[0].mxu0
      %v5806 = vpop.f32.mrb[0].mxu0
      %v5807 = vadd.f32 0.0, %v5806
      %v5808 = vpop.f32.mrb[0].mxu0
      %5809 = vmatprep.mubr.bf16.mxu0 %v4765
      %5810 = vmatmul.mubr.bf16.gmra.mrb[0].mxu0 %v4485
      %v5811 = vpop.f32.mrb[0].mxu0
      %v5812 = vadd.f32 0.0, %v5811
      %v5813 = vpop.f32.mrb[0].mxu0
      %v5814 = vpop.f32.mrb[0].mxu0
      %v5815 = vadd.f32 0.0, %v5814
      %v5816 = vpop.f32.mrb[0].mxu0
      %5817 = vmatprep.mubr.bf16.mxu0 %v4768
      %5818 = vmatmul.mubr.bf16.gmra.mrb[0].mxu0 %v4487
      %v5819 = vpop.f32.mrb[0].mxu0
      %v5820 = vadd.f32 0.0, %v5819
      %v5821 = vpop.f32.mrb[0].mxu0
      %v5822 = vpop.f32.mrb[0].mxu0
      %v5823 = vadd.f32 0.0, %v5822
      %v5824 = vpop.f32.mrb[0].mxu0
      %5825 = vmatprep.mubr.bf16.mxu0 %v4771
      %5826 = vmatmul.mubr.bf16.gmra.mrb[0].mxu0 %v4489
      %v5827 = vpop.f32.mrb[0].mxu0
      %v5828 = vadd.f32 0.0, %v5827
      %v5829 = vpop.f32.mrb[0].mxu0
      %v5830 = vpop.f32.mrb[0].mxu0
      %v5831 = vadd.f32 0.0, %v5830
      %v5832 = vpop.f32.mrb[0].mxu0
      %5833 = vmatprep.mubr.bf16.mxu0 %v4774
      %5834 = vmatmul.mubr.bf16.gmra.mrb[0].mxu0 %v4491
      %v5835 = vpop.f32.mrb[0].mxu0
      %v5836 = vadd.f32 0.0, %v5835
      %v5837 = vpop.f32.mrb[0].mxu0
      %v5838 = vpop.f32.mrb[0].mxu0
      %v5839 = vadd.f32 0.0, %v5838
      %v5840 = vpop.f32.mrb[0].mxu0
      %5841 = vmatprep.mubr.bf16.mxu0 %v4777
      %5842 = vmatmul.mubr.bf16.gmra.mrb[0].mxu0 %v4493
      %v5843 = vpop.f32.mrb[0].mxu0
      %v5844 = vadd.f32 0.0, %v5843
      %v5845 = vpop.f32.mrb[0].mxu0
      %v5846 = vpop.f32.mrb[0].mxu0
      %v5847 = vadd.f32 0.0, %v5846
      %v5848 = vpop.f32.mrb[0].mxu0
      %5849 = vmatprep.mubr.bf16.mxu0 %v4780
      %5850 = vmatmul.mubr.bf16.gmra.mrb[0].mxu0 %v4495
      %v5851 = vpop.f32.mrb[0].mxu0
      %v5852 = vadd.f32 0.0, %v5851
      %v5853 = vpop.f32.mrb[0].mxu0
      %v5854 = vpop.f32.mrb[0].mxu0
      %v5855 = vadd.f32 0.0, %v5854
      %v5856 = vpop.f32.mrb[0].mxu0
      %5857 = vmatprep.mubr.bf16.mxu0 %v4783
      %5858 = vmatmul.mubr.bf16.gmra.mrb[0].mxu0 %v4497
      %v5859 = vpop.f32.mrb[0].mxu0
      %v5860 = vadd.f32 0.0, %v5859
      %v5861 = vpop.f32.mrb[0].mxu0
      %v5862 = vpop.f32.mrb[0].mxu0
      %v5863 = vadd.f32 0.0, %v5862
      %v5864 = vpop.f32.mrb[0].mxu0
      %5865 = vmatprep.mubr.bf16.mxu0 %v4786
      %5866 = vmatmul.mubr.bf16.gmra.mrb[0].mxu0 %v4499
      %v5867 = vpop.f32.mrb[0].mxu0
      %v5868 = vadd.f32 0.0, %v5867
      %v5869 = vpop.f32.mrb[0].mxu0
      %v5870 = vpop.f32.mrb[0].mxu0
      %v5871 = vadd.f32 0.0, %v5870
      %v5872 = vpop.f32.mrb[0].mxu0
      %5873 = vmatprep.mubr.bf16.mxu0 %v4789
      %5874 = vmatmul.mubr.bf16.gmra.mrb[0].mxu0 %v4501
      %v5875 = vpop.f32.mrb[0].mxu0
      %v5876 = vadd.f32 0.0, %v5875
      %v5877 = vpop.f32.mrb[0].mxu0
      %v5878 = vpop.f32.mrb[0].mxu0
      %v5879 = vadd.f32 0.0, %v5878
      %v5880 = vpop.f32.mrb[0].mxu0
      %5881 = vmatprep.mubr.bf16.mxu0 %v4792
      %5882 = vmatmul.mubr.bf16.gmra.mrb[0].mxu0 %v4503
      %v5883 = vpop.f32.mrb[0].mxu0
      %v5884 = vadd.f32 0.0, %v5883
      %v5885 = vpop.f32.mrb[0].mxu0
      %v5886 = vpop.f32.mrb[0].mxu0
      %v5887 = vadd.f32 0.0, %v5886
      %v5888 = vpop.f32.mrb[0].mxu0
      %5889 = vmatprep.mubr.bf16.mxu0 %v4795
      %5890 = vmatmul.mubr.bf16.gmra.mrb[0].mxu0 %v4505
      %v5891 = vpop.f32.mrb[0].mxu0
      %v5892 = vadd.f32 0.0, %v5891
      %v5893 = vpop.f32.mrb[0].mxu0
      %v5894 = vpop.f32.mrb[0].mxu0
      %v5895 = vadd.f32 0.0, %v5894
      %v5896 = vpop.f32.mrb[0].mxu0
      %5897 = vmatprep.mubr.bf16.mxu0 %v4798
      %5898 = vmatmul.mubr.bf16.gmra.mrb[0].mxu0 %v4507
      %v5899 = vpop.f32.mrb[0].mxu0
      %v5900 = vadd.f32 0.0, %v5899
      %v5901 = vpop.f32.mrb[0].mxu0
      %v5902 = vpop.f32.mrb[0].mxu0
      %v5903 = vadd.f32 0.0, %v5902
      %v5904 = vpop.f32.mrb[0].mxu0
      %5905 = vmatprep.mubr.bf16.mxu0 %v4801
      %5906 = vmatmul.mubr.bf16.gmra.mrb[0].mxu0 %v4509
      %v5907 = vpop.f32.mrb[0].mxu0
      %v5908 = vadd.f32 0.0, %v5907
      %v5909 = vpop.f32.mrb[0].mxu0
      %v5910 = vpop.f32.mrb[0].mxu0
      %v5911 = vadd.f32 0.0, %v5910
      %v5912 = vpop.f32.mrb[0].mxu0
      %5913 = vmatprep.mubr.bf16.mxu0 %v4804
      %5914 = vmatmul.mubr.bf16.gmra.mrb[0].mxu0 %v4511
      %v5915 = vpop.f32.mrb[0].mxu0
      %v5916 = vadd.f32 0.0, %v5915
      %v5917 = vpop.f32.mrb[0].mxu0
      %v5918 = vpop.f32.mrb[0].mxu0
      %v5919 = vadd.f32 0.0, %v5918
      %v5920 = vpop.f32.mrb[0].mxu0
      %5921 = vmatprep.mubr.bf16.mxu0 %v4807
      %5922 = vmatmul.mubr.bf16.gmra.mrb[0].mxu0 %v4513
      %v5923 = vpop.f32.mrb[0].mxu0
      %v5924 = vadd.f32 0.0, %v5923
      %v5925 = vpop.f32.mrb[0].mxu0
      %v5926 = vpop.f32.mrb[0].mxu0
      %v5927 = vadd.f32 0.0, %v5926
      %v5928 = vpop.f32.mrb[0].mxu0
      %5929 = vmatprep.mubr.bf16.mxu0 %v4810
      %5930 = vmatmul.mubr.bf16.gmra.mrb[0].mxu0 %v4515
      %v5931 = vpop.f32.mrb[0].mxu0
      %v5932 = vadd.f32 0.0, %v5931
      %v5933 = vpop.f32.mrb[0].mxu0
      %v5934 = vpop.f32.mrb[0].mxu0
      %v5935 = vadd.f32 0.0, %v5934
      %v5936 = vpop.f32.mrb[0].mxu0
      %5937 = vmatprep.mubr.bf16.mxu0 %v4813
      %5938 = vmatmul.mubr.bf16.gmra.mrb[0].mxu0 %v4517
      %v5939 = vpop.f32.mrb[0].mxu0
      %v5940 = vadd.f32 0.0, %v5939
      %v5941 = vpop.f32.mrb[0].mxu0
      %v5942 = vpop.f32.mrb[0].mxu0
      %v5943 = vadd.f32 0.0, %v5942
      %v5944 = vpop.f32.mrb[0].mxu0
      %5945 = vmatprep.mubr.bf16.mxu0 %v4816
      %5946 = vmatmul.mubr.bf16.gmra.mrb[0].mxu0 %v4519
      %v5947 = vpop.f32.mrb[0].mxu0
      %v5948 = vadd.f32 0.0, %v5947
      %v5949 = vpop.f32.mrb[0].mxu0
      %v5950 = vpop.f32.mrb[0].mxu0
      %v5951 = vadd.f32 0.0, %v5950
      %v5952 = vpop.f32.mrb[0].mxu0
      %5953 = vmatprep.mubr.bf16.mxu0 %v4819
      %5954 = vmatmul.mubr.bf16.gmra.mrb[0].mxu0 %v4521
      %v5955 = vpop.f32.mrb[0].mxu0
      %v5956 = vadd.f32 0.0, %v5955
      %v5957 = vpop.f32.mrb[0].mxu0
      %v5958 = vpop.f32.mrb[0].mxu0
      %v5959 = vadd.f32 0.0, %v5958
      %v5960 = vpop.f32.mrb[0].mxu0
      %5961 = vmatprep.mubr.bf16.mxu0 %v4822
      %5962 = vmatmul.mubr.bf16.gmra.mrb[0].mxu0 %v4523
      %v5963 = vpop.f32.mrb[0].mxu0
      %v5964 = vadd.f32 0.0, %v5963
      %v5965 = vpop.f32.mrb[0].mxu0
      %v5966 = vpop.f32.mrb[0].mxu0
      %v5967 = vadd.f32 0.0, %v5966
      %v5968 = vpop.f32.mrb[0].mxu0
      %5969 = vmatprep.mubr.bf16.mxu0 %v4825
      %5970 = vmatmul.mubr.bf16.gmra.mrb[0].mxu0 %v4525
      %v5971 = vpop.f32.mrb[0].mxu0
      %v5972 = vadd.f32 0.0, %v5971
      %v5973 = vpop.f32.mrb[0].mxu0
      %v5974 = vpop.f32.mrb[0].mxu0
      %v5975 = vadd.f32 0.0, %v5974
      %v5976 = vpop.f32.mrb[0].mxu0
      %5977 = vmatprep.mubr.bf16.mxu0 %v4828
      %5978 = vmatmul.mubr.bf16.gmra.mrb[0].mxu0 %v4527
      %v5979 = vpop.f32.mrb[0].mxu0
      %v5980 = vadd.f32 0.0, %v5979
      %v5981 = vpop.f32.mrb[0].mxu0
      %v5982 = vpop.f32.mrb[0].mxu0
      %v5983 = vadd.f32 0.0, %v5982
      %v5984 = vpop.f32.mrb[0].mxu0
      %5985 = vmatprep.mubr.bf16.mxu0 %v4831
      %5986 = vmatmul.mubr.bf16.gmra.mrb[0].mxu0 %v4529
      %v5987 = vpop.f32.mrb[0].mxu0
      %v5988 = vadd.f32 0.0, %v5987
      %v5989 = vpop.f32.mrb[0].mxu0
      %v5990 = vpop.f32.mrb[0].mxu0
      %v5991 = vadd.f32 0.0, %v5990
      %v5992 = vpop.f32.mrb[0].mxu0
      %5993 = vmatprep.mubr.bf16.mxu0 %v4834
      %5994 = vmatmul.mubr.bf16.gmra.mrb[0].mxu0 %v4531
      %v5995 = vpop.f32.mrb[0].mxu0
      %v5996 = vadd.f32 0.0, %v5995
      %v5997 = vpop.f32.mrb[0].mxu0
      %v5998 = vpop.f32.mrb[0].mxu0
      %v5999 = vadd.f32 0.0, %v5998
      %v6000 = vpop.f32.mrb[0].mxu0
      %6001 = vmatprep.mubr.bf16.mxu0 %v4837
      %6002 = vmatmul.mubr.bf16.gmra.mrb[0].mxu0 %v4533
      %v6003 = vpop.f32.mrb[0].mxu0
      %v6004 = vadd.f32 0.0, %v6003
      %v6005 = vpop.f32.mrb[0].mxu0
      %v6006 = vpop.f32.mrb[0].mxu0
      %v6007 = vadd.f32 0.0, %v6006
      %v6008 = vpop.f32.mrb[0].mxu0
      %6009 = vmatprep.mubr.bf16.mxu0 %v4840
      %6010 = vmatmul.mubr.bf16.gmra.mrb[0].mxu0 %v4535
      %v6011 = vpop.f32.mrb[0].mxu0
      %v6012 = vadd.f32 0.0, %v6011
      %v6013 = vpop.f32.mrb[0].mxu0
      %v6014 = vpop.f32.mrb[0].mxu0
      %v6015 = vadd.f32 0.0, %v6014
      %v6016 = vpop.f32.mrb[0].mxu0
      %6017 = vmatprep.mubr.bf16.mxu0 %v4843
      %6018 = vmatmul.mubr.bf16.gmra.mrb[0].mxu0 %v4537
      %v6019 = vpop.f32.mrb[0].mxu0
      %v6020 = vadd.f32 0.0, %v6019
      %v6021 = vpop.f32.mrb[0].mxu0
      %v6022 = vpop.f32.mrb[0].mxu0
      %v6023 = vadd.f32 0.0, %v6022
      %v6024 = vpop.f32.mrb[0].mxu0
      %6025 = vmatprep.mubr.bf16.mxu0 %v4846
      %6026 = vmatmul.mubr.bf16.gmra.mrb[0].mxu0 %v4539
      %v6027 = vpop.f32.mrb[0].mxu0
      %v6028 = vadd.f32 0.0, %v6027
      %v6029 = vpop.f32.mrb[0].mxu0
      %v6030 = vpop.f32.mrb[0].mxu0
      %v6031 = vadd.f32 0.0, %v6030
      %v6032 = vpop.f32.mrb[0].mxu0
      %6033 = vmatprep.mubr.bf16.mxu0 %v4849
      %6034 = vmatmul.mubr.bf16.gmra.mrb[0].mxu0 %v4541
      %v6035 = vpop.f32.mrb[0].mxu0
      %v6036 = vadd.f32 0.0, %v6035
      %v6037 = vpop.f32.mrb[0].mxu0
      %v6038 = vpop.f32.mrb[0].mxu0
      %v6039 = vadd.f32 0.0, %v6038
      %v6040 = vpop.f32.mrb[0].mxu0
      %6041 = vmatprep.mubr.bf16.mxu0 %v4852
      %6042 = vmatmul.mubr.bf16.gmra.mrb[0].mxu0 %v4543
      %v6043 = vpop.f32.mrb[0].mxu0
      %v6044 = vadd.f32 0.0, %v6043
      %v6045 = vpop.f32.mrb[0].mxu0
      %v6046 = vpop.f32.mrb[0].mxu0
      %v6047 = vadd.f32 0.0, %v6046
      %v6048 = vpop.f32.mrb[0].mxu0
      %6049 = vmatprep.mubr.bf16.mxu0 %v4855
      %6050 = vmatmul.mubr.bf16.gmra.mrb[0].mxu0 %v4545
      %v6051 = vpop.f32.mrb[0].mxu0
      %v6052 = vadd.f32 0.0, %v6051
      %v6053 = vpop.f32.mrb[0].mxu0
      %v6054 = vpop.f32.mrb[0].mxu0
      %v6055 = vadd.f32 0.0, %v6054
      %v6056 = vpop.f32.mrb[0].mxu0
      %6057 = vmatprep.mubr.bf16.mxu0 %v4858
      %6058 = vmatmul.mubr.bf16.gmra.mrb[0].mxu0 %v4547
      %v6059 = vpop.f32.mrb[0].mxu0
      %v6060 = vadd.f32 0.0, %v6059
      %v6061 = vpop.f32.mrb[0].mxu0
      %v6062 = vpop.f32.mrb[0].mxu0
      %v6063 = vadd.f32 0.0, %v6062
      %v6064 = vpop.f32.mrb[0].mxu0
      %6065 = vmatprep.mubr.bf16.mxu0 %v4861
      %6066 = vmatmul.mubr.bf16.gmra.mrb[0].mxu0 %v4549
      %v6067 = vpop.f32.mrb[0].mxu0
      %v6068 = vadd.f32 0.0, %v6067
      %v6069 = vpop.f32.mrb[0].mxu0
      %v6070 = vpop.f32.mrb[0].mxu0
      %v6071 = vadd.f32 0.0, %v6070
      %v6072 = vpop.f32.mrb[0].mxu0
      %6073 = vdwg.mxu0
      %v6074 = vmax.f32 %v4898, %v5564
      %v6075 = vmax.f32 %v4901, %v5567
      %v6076 = vmax.f32 %v4906, %v5572
      %v6077 = vmax.f32 %v4909, %v5575
      %v6078 = vmax.f32 %v4914, %v5580
      %v6079 = vmax.f32 %v4917, %v5583
      %v6080 = vmax.f32 %v4922, %v5588
      %v6081 = vmax.f32 %v4925, %v5591
      %v6082 = vmax.f32 %v4930, %v5596
      %v6083 = vmax.f32 %v4933, %v5599
      %v6084 = vmax.f32 %v4938, %v5604
      %v6085 = vmax.f32 %v4941, %v5607
      %v6086 = vmax.f32 %v4946, %v5612
      %v6087 = vmax.f32 %v4949, %v5615
      %v6088 = vmax.f32 %v4954, %v5620
      %v6089 = vmax.f32 %v4957, %v5623
      %v6090 = vmax.f32 %v4962, %v5628
      %v6091 = vmax.f32 %v4965, %v5631
      %v6092 = vmax.f32 %v4970, %v5636
      %v6093 = vmax.f32 %v4973, %v5639
      %v6094 = vmax.f32 %v4978, %v5644
      %v6095 = vmax.f32 %v4981, %v5647
      %v6096 = vmax.f32 %v4986, %v5652
      %v6097 = vmax.f32 %v4989, %v5655
      %v6098 = vmax.f32 %v4994, %v5660
      %v6099 = vmax.f32 %v4997, %v5663
      %v6100 = vmax.f32 %v5002, %v5668
      %v6101 = vmax.f32 %v5005, %v5671
      %v6102 = vmax.f32 %v5010, %v5676
      %v6103 = vmax.f32 %v5013, %v5679
      %v6104 = vmax.f32 %v5018, %v5684
      %v6105 = vmax.f32 %v5021, %v5687
      %v6106 = vmax.f32 %v5026, %v5692
      %v6107 = vmax.f32 %v5029, %v5695
      %v6108 = vmax.f32 %v5034, %v5700
      %v6109 = vmax.f32 %v5037, %v5703
      %v6110 = vmax.f32 %v5042, %v5708
      %v6111 = vmax.f32 %v5045, %v5711
      %v6112 = vmax.f32 %v5050, %v5716
      %v6113 = vmax.f32 %v5053, %v5719
      %v6114 = vmax.f32 %v5058, %v5724
      %v6115 = vmax.f32 %v5061, %v5727
      %v6116 = vmax.f32 %v5066, %v5732
      %v6117 = vmax.f32 %v5069, %v5735
      %v6118 = vmax.f32 %v5074, %v5740
      %v6119 = vmax.f32 %v5077, %v5743
      %v6120 = vmax.f32 %v5082, %v5748
      %v6121 = vmax.f32 %v5085, %v5751
      %v6122 = vmax.f32 %v5090, %v5756
      %v6123 = vmax.f32 %v5093, %v5759
      %v6124 = vmax.f32 %v5098, %v5764
      %v6125 = vmax.f32 %v5101, %v5767
      %v6126 = vmax.f32 %v5106, %v5772
      %v6127 = vmax.f32 %v5109, %v5775
      %v6128 = vmax.f32 %v5114, %v5780
      %v6129 = vmax.f32 %v5117, %v5783
      %v6130 = vmax.f32 %v5122, %v5788
      %v6131 = vmax.f32 %v5125, %v5791
      %v6132 = vmax.f32 %v5130, %v5796
      %v6133 = vmax.f32 %v5133, %v5799
      %v6134 = vmax.f32 %v5138, %v5804
      %v6135 = vmax.f32 %v5141, %v5807
      %v6136 = vmax.f32 %v5146, %v5812
      %v6137 = vmax.f32 %v5149, %v5815
      %v6138 = vmax.f32 %v5154, %v5820
      %v6139 = vmax.f32 %v5157, %v5823
      %v6140 = vmax.f32 %v5162, %v5828
      %v6141 = vmax.f32 %v5165, %v5831
      %v6142 = vmax.f32 %v5170, %v5836
      %v6143 = vmax.f32 %v5173, %v5839
      %v6144 = vmax.f32 %v5178, %v5844
      %v6145 = vmax.f32 %v5181, %v5847
      %v6146 = vmax.f32 %v5186, %v5852
      %v6147 = vmax.f32 %v5189, %v5855
      %v6148 = vmax.f32 %v5194, %v5860
      %v6149 = vmax.f32 %v5197, %v5863
      %v6150 = vmax.f32 %v5202, %v5868
      %v6151 = vmax.f32 %v5205, %v5871
      %v6152 = vmax.f32 %v5210, %v5876
      %v6153 = vmax.f32 %v5213, %v5879
      %v6154 = vmax.f32 %v5218, %v5884
      %v6155 = vmax.f32 %v5221, %v5887
      %v6156 = vmax.f32 %v5226, %v5892
      %v6157 = vmax.f32 %v5229, %v5895
      %v6158 = vmax.f32 %v5234, %v5900
      %v6159 = vmax.f32 %v5237, %v5903
      %v6160 = vmax.f32 %v5242, %v5908
      %v6161 = vmax.f32 %v5245, %v5911
      %v6162 = vmax.f32 %v5250, %v5916
      %v6163 = vmax.f32 %v5253, %v5919
      %v6164 = vmax.f32 %v5258, %v5924
      %v6165 = vmax.f32 %v5261, %v5927
      %v6166 = vmax.f32 %v5266, %v5932
      %v6167 = vmax.f32 %v5269, %v5935
      %v6168 = vmax.f32 %v5274, %v5940
      %v6169 = vmax.f32 %v5277, %v5943
      %v6170 = vmax.f32 %v5282, %v5948
      %v6171 = vmax.f32 %v5285, %v5951
      %v6172 = vmax.f32 %v5290, %v5956
      %v6173 = vmax.f32 %v5293, %v5959
      %v6174 = vmax.f32 %v5298, %v5964
      %v6175 = vmax.f32 %v5301, %v5967
      %v6176 = vmax.f32 %v5306, %v5972
      %v6177 = vmax.f32 %v5309, %v5975
      %v6178 = vmax.f32 %v5314, %v5980
      %v6179 = vmax.f32 %v5317, %v5983
      %v6180 = vmax.f32 %v5322, %v5988
      %v6181 = vmax.f32 %v5325, %v5991
      %v6182 = vmax.f32 %v5330, %v5996
      %v6183 = vmax.f32 %v5333, %v5999
      %v6184 = vmax.f32 %v5338, %v6004
      %v6185 = vmax.f32 %v5341, %v6007
      %v6186 = vmax.f32 %v5346, %v6012
      %v6187 = vmax.f32 %v5349, %v6015
      %v6188 = vmax.f32 %v5354, %v6020
      %v6189 = vmax.f32 %v5357, %v6023
      %v6190 = vmax.f32 %v5362, %v6028
      %v6191 = vmax.f32 %v5365, %v6031
      %v6192 = vmax.f32 %v5370, %v6036
      %v6193 = vmax.f32 %v5373, %v6039
      %v6194 = vmax.f32 %v5378, %v6044
      %v6195 = vmax.f32 %v5381, %v6047
      %v6196 = vmax.f32 %v5386, %v6052
      %v6197 = vmax.f32 %v5389, %v6055
      %v6198 = vmax.f32 %v5394, %v6060
      %v6199 = vmax.f32 %v5397, %v6063
      %v6200 = vmax.f32 %v5402, %v6068
      %v6201 = vmax.f32 %v5405, %v6071
      %vm6330 = vcmask 1046528
      %v6331 = vrot.slane %v6074, 1
      %v6332 = vrot.slane %v6075, 1
      %v6333 = vsel %vm6330, %v6331, %v6332
      %v6334 = vrot.slane %v6076, 1
      %v6335 = vsel %vm6330, %v6332, %v6334
      %v6336 = vrot.slane %v6077, 1
      %v6337 = vsel %vm6330, %v6334, %v6336
      %v6338 = vrot.slane %v6078, 1
      %v6339 = vrot.slane %v6079, 1
      %v6340 = vsel %vm6330, %v6338, %v6339
      %v6341 = vrot.slane %v6080, 1
      %v6342 = vsel %vm6330, %v6339, %v6341
      %v6343 = vrot.slane %v6081, 1
      %v6344 = vsel %vm6330, %v6341, %v6343
      %v6345 = vrot.slane %v6082, 1
      %v6346 = vrot.slane %v6083, 1
      %v6347 = vsel %vm6330, %v6345, %v6346
      %v6348 = vrot.slane %v6084, 1
      %v6349 = vsel %vm6330, %v6346, %v6348
      %v6350 = vrot.slane %v6085, 1
      %v6351 = vsel %vm6330, %v6348, %v6350
      %v6352 = vrot.slane %v6086, 1
      %v6353 = vrot.slane %v6087, 1
      %v6354 = vsel %vm6330, %v6352, %v6353
      %v6355 = vrot.slane %v6088, 1
      %v6356 = vsel %vm6330, %v6353, %v6355
      %v6357 = vrot.slane %v6089, 1
      %v6358 = vsel %vm6330, %v6355, %v6357
      %v6359 = vrot.slane %v6090, 1
      %v6360 = vrot.slane %v6091, 1
      %v6361 = vsel %vm6330, %v6359, %v6360
      %v6362 = vrot.slane %v6092, 1
      %v6363 = vsel %vm6330, %v6360, %v6362
      %v6364 = vrot.slane %v6093, 1
      %v6365 = vsel %vm6330, %v6362, %v6364
      %v6366 = vrot.slane %v6094, 1
      %v6367 = vrot.slane %v6095, 1
      %v6368 = vsel %vm6330, %v6366, %v6367
      %v6369 = vrot.slane %v6096, 1
      %v6370 = vsel %vm6330, %v6367, %v6369
      %v6371 = vrot.slane %v6097, 1
      %v6372 = vsel %vm6330, %v6369, %v6371
      %v6373 = vrot.slane %v6098, 1
      %v6374 = vrot.slane %v6099, 1
      %v6375 = vsel %vm6330, %v6373, %v6374
      %v6376 = vrot.slane %v6100, 1
      %v6377 = vsel %vm6330, %v6374, %v6376
      %v6378 = vrot.slane %v6101, 1
      %v6379 = vsel %vm6330, %v6376, %v6378
      %v6380 = vrot.slane %v6102, 1
      %v6381 = vrot.slane %v6103, 1
      %v6382 = vsel %vm6330, %v6380, %v6381
      %v6383 = vrot.slane %v6104, 1
      %v6384 = vsel %vm6330, %v6381, %v6383
      %v6385 = vrot.slane %v6105, 1
      %v6386 = vsel %vm6330, %v6383, %v6385
      %v6387 = vrot.slane %v6106, 1
      %v6388 = vrot.slane %v6107, 1
      %v6389 = vsel %vm6330, %v6387, %v6388
      %v6390 = vrot.slane %v6108, 1
      %v6391 = vsel %vm6330, %v6388, %v6390
      %v6392 = vrot.slane %v6109, 1
      %v6393 = vsel %vm6330, %v6390, %v6392
      %v6394 = vrot.slane %v6110, 1
      %v6395 = vrot.slane %v6111, 1
      %v6396 = vsel %vm6330, %v6394, %v6395
      %v6397 = vrot.slane %v6112, 1
      %v6398 = vsel %vm6330, %v6395, %v6397
      %v6399 = vrot.slane %v6113, 1
      %v6400 = vsel %vm6330, %v6397, %v6399
      %v6401 = vrot.slane %v6114, 1
      %v6402 = vrot.slane %v6115, 1
      %v6403 = vsel %vm6330, %v6401, %v6402
      %v6404 = vrot.slane %v6116, 1
      %v6405 = vsel %vm6330, %v6402, %v6404
      %v6406 = vrot.slane %v6117, 1
      %v6407 = vsel %vm6330, %v6404, %v6406
      %v6408 = vrot.slane %v6118, 1
      %v6409 = vrot.slane %v6119, 1
      %v6410 = vsel %vm6330, %v6408, %v6409
      %v6411 = vrot.slane %v6120, 1
      %v6412 = vsel %vm6330, %v6409, %v6411
      %v6413 = vrot.slane %v6121, 1
      %v6414 = vsel %vm6330, %v6411, %v6413
      %v6415 = vrot.slane %v6122, 1
      %v6416 = vrot.slane %v6123, 1
      %v6417 = vsel %vm6330, %v6415, %v6416
      %v6418 = vrot.slane %v6124, 1
      %v6419 = vsel %vm6330, %v6416, %v6418
      %v6420 = vrot.slane %v6125, 1
      %v6421 = vsel %vm6330, %v6418, %v6420
      %v6422 = vrot.slane %v6126, 1
      %v6423 = vrot.slane %v6127, 1
      %v6424 = vsel %vm6330, %v6422, %v6423
      %v6425 = vrot.slane %v6128, 1
      %v6426 = vsel %vm6330, %v6423, %v6425
      %v6427 = vrot.slane %v6129, 1
      %v6428 = vsel %vm6330, %v6425, %v6427
      %v6429 = vrot.slane %v6130, 1
      %v6430 = vrot.slane %v6131, 1
      %v6431 = vsel %vm6330, %v6429, %v6430
      %v6432 = vrot.slane %v6132, 1
      %v6433 = vsel %vm6330, %v6430, %v6432
      %v6434 = vrot.slane %v6133, 1
      %v6435 = vsel %vm6330, %v6432, %v6434
      %v6436 = vrot.slane %v6134, 1
      %v6437 = vrot.slane %v6135, 1
      %v6438 = vsel %vm6330, %v6436, %v6437
      %v6439 = vrot.slane %v6136, 1
      %v6440 = vsel %vm6330, %v6437, %v6439
      %v6441 = vrot.slane %v6137, 1
      %v6442 = vsel %vm6330, %v6439, %v6441
      %v6443 = vrot.slane %v6138, 1
      %v6444 = vrot.slane %v6139, 1
      %v6445 = vsel %vm6330, %v6443, %v6444
      %v6446 = vrot.slane %v6140, 1
      %v6447 = vsel %vm6330, %v6444, %v6446
      %v6448 = vrot.slane %v6141, 1
      %v6449 = vsel %vm6330, %v6446, %v6448
      %v6450 = vrot.slane %v6142, 1
      %v6451 = vrot.slane %v6143, 1
      %v6452 = vsel %vm6330, %v6450, %v6451
      %v6453 = vrot.slane %v6144, 1
      %v6454 = vsel %vm6330, %v6451, %v6453
      %v6455 = vrot.slane %v6145, 1
      %v6456 = vsel %vm6330, %v6453, %v6455
      %v6457 = vrot.slane %v6146, 1
      %v6458 = vrot.slane %v6147, 1
      %v6459 = vsel %vm6330, %v6457, %v6458
      %v6460 = vrot.slane %v6148, 1
      %v6461 = vsel %vm6330, %v6458, %v6460
      %v6462 = vrot.slane %v6149, 1
      %v6463 = vsel %vm6330, %v6460, %v6462
      %v6464 = vrot.slane %v6150, 1
      %v6465 = vrot.slane %v6151, 1
      %v6466 = vsel %vm6330, %v6464, %v6465
      %v6467 = vrot.slane %v6152, 1
      %v6468 = vsel %vm6330, %v6465, %v6467
      %v6469 = vrot.slane %v6153, 1
      %v6470 = vsel %vm6330, %v6467, %v6469
      %v6471 = vrot.slane %v6154, 1
      %v6472 = vrot.slane %v6155, 1
      %v6473 = vsel %vm6330, %v6471, %v6472
      %v6474 = vrot.slane %v6156, 1
      %v6475 = vsel %vm6330, %v6472, %v6474
      %v6476 = vrot.slane %v6157, 1
      %v6477 = vsel %vm6330, %v6474, %v6476
      %v6478 = vrot.slane %v6158, 1
      %v6479 = vrot.slane %v6159, 1
      %v6480 = vsel %vm6330, %v6478, %v6479
      %v6481 = vrot.slane %v6160, 1
      %v6482 = vsel %vm6330, %v6479, %v6481
      %v6483 = vrot.slane %v6161, 1
      %v6484 = vsel %vm6330, %v6481, %v6483
      %v6485 = vrot.slane %v6162, 1
      %v6486 = vrot.slane %v6163, 1
      %v6487 = vsel %vm6330, %v6485, %v6486
      %v6488 = vrot.slane %v6164, 1
      %v6489 = vsel %vm6330, %v6486, %v6488
      %v6490 = vrot.slane %v6165, 1
      %v6491 = vsel %vm6330, %v6488, %v6490
      %v6492 = vrot.slane %v6166, 1
      %v6493 = vrot.slane %v6167, 1
      %v6494 = vsel %vm6330, %v6492, %v6493
      %v6495 = vrot.slane %v6168, 1
      %v6496 = vsel %vm6330, %v6493, %v6495
      %v6497 = vrot.slane %v6169, 1
      %v6498 = vsel %vm6330, %v6495, %v6497
      %v6499 = vrot.slane %v6170, 1
      %v6500 = vrot.slane %v6171, 1
      %v6501 = vsel %vm6330, %v6499, %v6500
      %v6502 = vrot.slane %v6172, 1
      %v6503 = vsel %vm6330, %v6500, %v6502
      %v6504 = vrot.slane %v6173, 1
      %v6505 = vsel %vm6330, %v6502, %v6504
      %v6506 = vrot.slane %v6174, 1
      %v6507 = vrot.slane %v6175, 1
      %v6508 = vsel %vm6330, %v6506, %v6507
      %v6509 = vrot.slane %v6176, 1
      %v6510 = vsel %vm6330, %v6507, %v6509
      %v6511 = vrot.slane %v6177, 1
      %v6512 = vsel %vm6330, %v6509, %v6511
      %v6513 = vrot.slane %v6178, 1
      %v6514 = vrot.slane %v6179, 1
      %v6515 = vsel %vm6330, %v6513, %v6514
      %v6516 = vrot.slane %v6180, 1
      %v6517 = vsel %vm6330, %v6514, %v6516
      %v6518 = vrot.slane %v6181, 1
      %v6519 = vsel %vm6330, %v6516, %v6518
      %v6520 = vrot.slane %v6182, 1
      %v6521 = vrot.slane %v6183, 1
      %v6522 = vsel %vm6330, %v6520, %v6521
      %v6523 = vrot.slane %v6184, 1
      %v6524 = vsel %vm6330, %v6521, %v6523
      %v6525 = vrot.slane %v6185, 1
      %v6526 = vsel %vm6330, %v6523, %v6525
      %v6527 = vrot.slane %v6186, 1
      %v6528 = vrot.slane %v6187, 1
      %v6529 = vsel %vm6330, %v6527, %v6528
      %v6530 = vrot.slane %v6188, 1
      %v6531 = vsel %vm6330, %v6528, %v6530
      %v6532 = vrot.slane %v6189, 1
      %v6533 = vsel %vm6330, %v6530, %v6532
      %v6534 = vrot.slane %v6190, 1
      %v6535 = vrot.slane %v6191, 1
      %v6536 = vsel %vm6330, %v6534, %v6535
      %v6537 = vrot.slane %v6192, 1
      %v6538 = vsel %vm6330, %v6535, %v6537
      %v6539 = vrot.slane %v6193, 1
      %v6540 = vsel %vm6330, %v6537, %v6539
      %v6541 = vrot.slane %v6194, 1
      %v6542 = vrot.slane %v6195, 1
      %v6543 = vsel %vm6330, %v6541, %v6542
      %v6544 = vrot.slane %v6196, 1
      %v6545 = vsel %vm6330, %v6542, %v6544
      %v6546 = vrot.slane %v6197, 1
      %v6547 = vsel %vm6330, %v6544, %v6546
      %v6548 = vrot.slane %v6198, 1
      %v6549 = vrot.slane %v6199, 1
      %v6550 = vsel %vm6330, %v6548, %v6549
      %v6551 = vrot.slane %v6200, 1
      %v6552 = vsel %vm6330, %v6549, %v6551
      %v6553 = vrot.slane %v6201, 1
      %v6554 = vsel %vm6330, %v6551, %v6553
      %v6651 = vmax.f32 %v6074, %v6333
      %v6652 = vmax.f32 %v6075, %v6335
      %v6653 = vmax.f32 %v6076, %v6337
      %v6654 = vmax.f32 %v6078, %v6340
      %v6655 = vmax.f32 %v6079, %v6342
      %v6656 = vmax.f32 %v6080, %v6344
      %v6657 = vmax.f32 %v6082, %v6347
      %v6658 = vmax.f32 %v6083, %v6349
      %v6659 = vmax.f32 %v6084, %v6351
      %v6660 = vmax.f32 %v6086, %v6354
      %v6661 = vmax.f32 %v6087, %v6356
      %v6662 = vmax.f32 %v6088, %v6358
      %v6663 = vmax.f32 %v6090, %v6361
      %v6664 = vmax.f32 %v6091, %v6363
      %v6665 = vmax.f32 %v6092, %v6365
      %v6666 = vmax.f32 %v6094, %v6368
      %v6667 = vmax.f32 %v6095, %v6370
      %v6668 = vmax.f32 %v6096, %v6372
      %v6669 = vmax.f32 %v6098, %v6375
      %v6670 = vmax.f32 %v6099, %v6377
      %v6671 = vmax.f32 %v6100, %v6379
      %v6672 = vmax.f32 %v6102, %v6382
      %v6673 = vmax.f32 %v6103, %v6384
      %v6674 = vmax.f32 %v6104, %v6386
      %v6675 = vmax.f32 %v6106, %v6389
      %v6676 = vmax.f32 %v6107, %v6391
      %v6677 = vmax.f32 %v6108, %v6393
      %v6678 = vmax.f32 %v6110, %v6396
      %v6679 = vmax.f32 %v6111, %v6398
      %v6680 = vmax.f32 %v6112, %v6400
      %v6681 = vmax.f32 %v6114, %v6403
      %v6682 = vmax.f32 %v6115, %v6405
      %v6683 = vmax.f32 %v6116, %v6407
      %v6684 = vmax.f32 %v6118, %v6410
      %v6685 = vmax.f32 %v6119, %v6412
      %v6686 = vmax.f32 %v6120, %v6414
      %v6687 = vmax.f32 %v6122, %v6417
      %v6688 = vmax.f32 %v6123, %v6419
      %v6689 = vmax.f32 %v6124, %v6421
      %v6690 = vmax.f32 %v6126, %v6424
      %v6691 = vmax.f32 %v6127, %v6426
      %v6692 = vmax.f32 %v6128, %v6428
      %v6693 = vmax.f32 %v6130, %v6431
      %v6694 = vmax.f32 %v6131, %v6433
      %v6695 = vmax.f32 %v6132, %v6435
      %v6696 = vmax.f32 %v6134, %v6438
      %v6697 = vmax.f32 %v6135, %v6440
      %v6698 = vmax.f32 %v6136, %v6442
      %v6699 = vmax.f32 %v6138, %v6445
      %v6700 = vmax.f32 %v6139, %v6447
      %v6701 = vmax.f32 %v6140, %v6449
      %v6702 = vmax.f32 %v6142, %v6452
      %v6703 = vmax.f32 %v6143, %v6454
      %v6704 = vmax.f32 %v6144, %v6456
      %v6705 = vmax.f32 %v6146, %v6459
      %v6706 = vmax.f32 %v6147, %v6461
      %v6707 = vmax.f32 %v6148, %v6463
      %v6708 = vmax.f32 %v6150, %v6466
      %v6709 = vmax.f32 %v6151, %v6468
      %v6710 = vmax.f32 %v6152, %v6470
      %v6711 = vmax.f32 %v6154, %v6473
      %v6712 = vmax.f32 %v6155, %v6475
      %v6713 = vmax.f32 %v6156, %v6477
      %v6714 = vmax.f32 %v6158, %v6480
      %v6715 = vmax.f32 %v6159, %v6482
      %v6716 = vmax.f32 %v6160, %v6484
      %v6717 = vmax.f32 %v6162, %v6487
      %v6718 = vmax.f32 %v6163, %v6489
      %v6719 = vmax.f32 %v6164, %v6491
      %v6720 = vmax.f32 %v6166, %v6494
      %v6721 = vmax.f32 %v6167, %v6496
      %v6722 = vmax.f32 %v6168, %v6498
      %v6723 = vmax.f32 %v6170, %v6501
      %v6724 = vmax.f32 %v6171, %v6503
      %v6725 = vmax.f32 %v6172, %v6505
      %v6726 = vmax.f32 %v6174, %v6508
      %v6727 = vmax.f32 %v6175, %v6510
      %v6728 = vmax.f32 %v6176, %v6512
      %v6729 = vmax.f32 %v6178, %v6515
      %v6730 = vmax.f32 %v6179, %v6517
      %v6731 = vmax.f32 %v6180, %v6519
      %v6732 = vmax.f32 %v6182, %v6522
      %v6733 = vmax.f32 %v6183, %v6524
      %v6734 = vmax.f32 %v6184, %v6526
      %v6735 = vmax.f32 %v6186, %v6529
      %v6736 = vmax.f32 %v6187, %v6531
      %v6737 = vmax.f32 %v6188, %v6533
      %v6738 = vmax.f32 %v6190, %v6536
      %v6739 = vmax.f32 %v6191, %v6538
      %v6740 = vmax.f32 %v6192, %v6540
      %v6741 = vmax.f32 %v6194, %v6543
      %v6742 = vmax.f32 %v6195, %v6545
      %v6743 = vmax.f32 %v6196, %v6547
      %v6744 = vmax.f32 %v6198, %v6550
      %v6745 = vmax.f32 %v6199, %v6552
      %v6746 = vmax.f32 %v6200, %v6554
      %v6747 = vmax.f32 %v6651, 0.0
      %v6748 = vmax.f32 %v6652, 0.0
      %v6749 = vmax.f32 %v6653, 0.0
      %v6750 = vmax.f32 %v6654, 0.0
      %v6751 = vmax.f32 %v6655, 0.0
      %v6752 = vmax.f32 %v6656, 0.0
      %v6753 = vmax.f32 %v6657, 0.0
      %v6754 = vmax.f32 %v6658, 0.0
      %v6755 = vmax.f32 %v6659, 0.0
      %v6756 = vmax.f32 %v6660, 0.0
      %v6757 = vmax.f32 %v6661, 0.0
      %v6758 = vmax.f32 %v6662, 0.0
      %v6759 = vmax.f32 %v6663, 0.0
      %v6760 = vmax.f32 %v6664, 0.0
      %v6761 = vmax.f32 %v6665, 0.0
      %v6762 = vmax.f32 %v6666, 0.0
      %v6763 = vmax.f32 %v6667, 0.0
      %v6764 = vmax.f32 %v6668, 0.0
      %v6765 = vmax.f32 %v6669, 0.0
      %v6766 = vmax.f32 %v6670, 0.0
      %v6767 = vmax.f32 %v6671, 0.0
      %v6768 = vmax.f32 %v6672, 0.0
      %v6769 = vmax.f32 %v6673, 0.0
      %v6770 = vmax.f32 %v6674, 0.0
      %v6771 = vmax.f32 %v6675, 0.0
      %v6772 = vmax.f32 %v6676, 0.0
      %v6773 = vmax.f32 %v6677, 0.0
      %v6774 = vmax.f32 %v6678, 0.0
      %v6775 = vmax.f32 %v6679, 0.0
      %v6776 = vmax.f32 %v6680, 0.0
      %v6777 = vmax.f32 %v6681, 0.0
      %v6778 = vmax.f32 %v6682, 0.0
      %v6779 = vmax.f32 %v6683, 0.0
      %v6780 = vmax.f32 %v6684, 0.0
      %v6781 = vmax.f32 %v6685, 0.0
      %v6782 = vmax.f32 %v6686, 0.0
      %v6783 = vmax.f32 %v6687, 0.0
      %v6784 = vmax.f32 %v6688, 0.0
      %v6785 = vmax.f32 %v6689, 0.0
      %v6786 = vmax.f32 %v6690, 0.0
      %v6787 = vmax.f32 %v6691, 0.0
      %v6788 = vmax.f32 %v6692, 0.0
      %v6789 = vmax.f32 %v6693, 0.0
      %v6790 = vmax.f32 %v6694, 0.0
      %v6791 = vmax.f32 %v6695, 0.0
      %v6792 = vmax.f32 %v6696, 0.0
      %v6793 = vmax.f32 %v6697, 0.0
      %v6794 = vmax.f32 %v6698, 0.0
      %v6795 = vmax.f32 %v6699, 0.0
      %v6796 = vmax.f32 %v6700, 0.0
      %v6797 = vmax.f32 %v6701, 0.0
      %v6798 = vmax.f32 %v6702, 0.0
      %v6799 = vmax.f32 %v6703, 0.0
      %v6800 = vmax.f32 %v6704, 0.0
      %v6801 = vmax.f32 %v6705, 0.0
      %v6802 = vmax.f32 %v6706, 0.0
      %v6803 = vmax.f32 %v6707, 0.0
      %v6804 = vmax.f32 %v6708, 0.0
      %v6805 = vmax.f32 %v6709, 0.0
      %v6806 = vmax.f32 %v6710, 0.0
      %v6807 = vmax.f32 %v6711, 0.0
      %v6808 = vmax.f32 %v6712, 0.0
      %v6809 = vmax.f32 %v6713, 0.0
      %v6810 = vmax.f32 %v6714, 0.0
      %v6811 = vmax.f32 %v6715, 0.0
      %v6812 = vmax.f32 %v6716, 0.0
      %v6813 = vmax.f32 %v6717, 0.0
      %v6814 = vmax.f32 %v6718, 0.0
      %v6815 = vmax.f32 %v6719, 0.0
      %v6816 = vmax.f32 %v6720, 0.0
      %v6817 = vmax.f32 %v6721, 0.0
      %v6818 = vmax.f32 %v6722, 0.0
      %v6819 = vmax.f32 %v6723, 0.0
      %v6820 = vmax.f32 %v6724, 0.0
      %v6821 = vmax.f32 %v6725, 0.0
      %v6822 = vmax.f32 %v6726, 0.0
      %v6823 = vmax.f32 %v6727, 0.0
      %v6824 = vmax.f32 %v6728, 0.0
      %v6825 = vmax.f32 %v6729, 0.0
      %v6826 = vmax.f32 %v6730, 0.0
      %v6827 = vmax.f32 %v6731, 0.0
      %v6828 = vmax.f32 %v6732, 0.0
      %v6829 = vmax.f32 %v6733, 0.0
      %v6830 = vmax.f32 %v6734, 0.0
      %v6831 = vmax.f32 %v6735, 0.0
      %v6832 = vmax.f32 %v6736, 0.0
      %v6833 = vmax.f32 %v6737, 0.0
      %v6834 = vmax.f32 %v6738, 0.0
      %v6835 = vmax.f32 %v6739, 0.0
      %v6836 = vmax.f32 %v6740, 0.0
      %v6837 = vmax.f32 %v6741, 0.0
      %v6838 = vmax.f32 %v6742, 0.0
      %v6839 = vmax.f32 %v6743, 0.0
      %v6840 = vmax.f32 %v6744, 0.0
      %v6841 = vmax.f32 %v6745, 0.0
      %v6842 = vmax.f32 %v6746, 0.0
      %v6843 = vpack.c.bf16 %v6748, %v6747
      %v6844 = vpack.c.bf16 %v6749, %v6749
      %v6845 = vpack.c.bf16 %v6751, %v6750
      %v6846 = vpack.c.bf16 %v6752, %v6752
      %v6847 = vpack.c.bf16 %v6754, %v6753
      %v6848 = vpack.c.bf16 %v6755, %v6755
      %v6849 = vpack.c.bf16 %v6757, %v6756
      %v6850 = vpack.c.bf16 %v6758, %v6758
      %v6851 = vpack.c.bf16 %v6760, %v6759
      %v6852 = vpack.c.bf16 %v6761, %v6761
      %v6853 = vpack.c.bf16 %v6763, %v6762
      %v6854 = vpack.c.bf16 %v6764, %v6764
      %v6855 = vpack.c.bf16 %v6766, %v6765
      %v6856 = vpack.c.bf16 %v6767, %v6767
      %v6857 = vpack.c.bf16 %v6769, %v6768
      %v6858 = vpack.c.bf16 %v6770, %v6770
      %v6859 = vpack.c.bf16 %v6772, %v6771
      %v6860 = vpack.c.bf16 %v6773, %v6773
      %v6861 = vpack.c.bf16 %v6775, %v6774
      %v6862 = vpack.c.bf16 %v6776, %v6776
      %v6863 = vpack.c.bf16 %v6778, %v6777
      %v6864 = vpack.c.bf16 %v6779, %v6779
      %v6865 = vpack.c.bf16 %v6781, %v6780
      %v6866 = vpack.c.bf16 %v6782, %v6782
      %v6867 = vpack.c.bf16 %v6784, %v6783
      %v6868 = vpack.c.bf16 %v6785, %v6785
      %v6869 = vpack.c.bf16 %v6787, %v6786
      %v6870 = vpack.c.bf16 %v6788, %v6788
      %v6871 = vpack.c.bf16 %v6790, %v6789
      %v6872 = vpack.c.bf16 %v6791, %v6791
      %v6873 = vpack.c.bf16 %v6793, %v6792
      %v6874 = vpack.c.bf16 %v6794, %v6794
      %v6875 = vpack.c.bf16 %v6796, %v6795
      %v6876 = vpack.c.bf16 %v6797, %v6797
      %v6877 = vpack.c.bf16 %v6799, %v6798
      %v6878 = vpack.c.bf16 %v6800, %v6800
      %v6879 = vpack.c.bf16 %v6802, %v6801
      %v6880 = vpack.c.bf16 %v6803, %v6803
      %v6881 = vpack.c.bf16 %v6805, %v6804
      %v6882 = vpack.c.bf16 %v6806, %v6806
      %v6883 = vpack.c.bf16 %v6808, %v6807
      %v6884 = vpack.c.bf16 %v6809, %v6809
      %v6885 = vpack.c.bf16 %v6811, %v6810
      %v6886 = vpack.c.bf16 %v6812, %v6812
      %v6887 = vpack.c.bf16 %v6814, %v6813
      %v6888 = vpack.c.bf16 %v6815, %v6815
      %v6889 = vpack.c.bf16 %v6817, %v6816
      %v6890 = vpack.c.bf16 %v6818, %v6818
      %v6891 = vpack.c.bf16 %v6820, %v6819
      %v6892 = vpack.c.bf16 %v6821, %v6821
      %v6893 = vpack.c.bf16 %v6823, %v6822
      %v6894 = vpack.c.bf16 %v6824, %v6824
      %v6895 = vpack.c.bf16 %v6826, %v6825
      %v6896 = vpack.c.bf16 %v6827, %v6827
      %v6897 = vpack.c.bf16 %v6829, %v6828
      %v6898 = vpack.c.bf16 %v6830, %v6830
      %v6899 = vpack.c.bf16 %v6832, %v6831
      %v6900 = vpack.c.bf16 %v6833, %v6833
      %v6901 = vpack.c.bf16 %v6835, %v6834
      %v6902 = vpack.c.bf16 %v6836, %v6836
      %v6903 = vpack.c.bf16 %v6838, %v6837
      %v6904 = vpack.c.bf16 %v6839, %v6839
      %v6905 = vpack.c.bf16 %v6841, %v6840
      %v6906 = vpack.c.bf16 %v6842, %v6842
      %v6971 = vrot.slane %v6843, 1
      %v6972 = vrot.slane %v6844, 1
      %v6973 = vsel %vm1793, %v6971, %v6972
      %v6974 = vrot.slane %v6845, 1
      %v6975 = vrot.slane %v6846, 1
      %v6976 = vsel %vm1793, %v6974, %v6975
      %v6977 = vrot.slane %v6847, 1
      %v6978 = vrot.slane %v6848, 1
      %v6979 = vsel %vm1793, %v6977, %v6978
      %v6980 = vrot.slane %v6849, 1
      %v6981 = vrot.slane %v6850, 1
      %v6982 = vsel %vm1793, %v6980, %v6981
      %v6983 = vrot.slane %v6851, 1
      %v6984 = vrot.slane %v6852, 1
      %v6985 = vsel %vm1793, %v6983, %v6984
      %v6986 = vrot.slane %v6853, 1
      %v6987 = vrot.slane %v6854, 1
      %v6988 = vsel %vm1793, %v6986, %v6987
      %v6989 = vrot.slane %v6855, 1
      %v6990 = vrot.slane %v6856, 1
      %v6991 = vsel %vm1793, %v6989, %v6990
      %v6992 = vrot.slane %v6857, 1
      %v6993 = vrot.slane %v6858, 1
      %v6994 = vsel %vm1793, %v6992, %v6993
      %v6995 = vrot.slane %v6859, 1
      %v6996 = vrot.slane %v6860, 1
      %v6997 = vsel %vm1793, %v6995, %v6996
      %v6998 = vrot.slane %v6861, 1
      %v6999 = vrot.slane %v6862, 1
      %v7000 = vsel %vm1793, %v6998, %v6999
      %v7001 = vrot.slane %v6863, 1
      %v7002 = vrot.slane %v6864, 1
      %v7003 = vsel %vm1793, %v7001, %v7002
      %v7004 = vrot.slane %v6865, 1
      %v7005 = vrot.slane %v6866, 1
      %v7006 = vsel %vm1793, %v7004, %v7005
      %v7007 = vrot.slane %v6867, 1
      %v7008 = vrot.slane %v6868, 1
      %v7009 = vsel %vm1793, %v7007, %v7008
      %v7010 = vrot.slane %v6869, 1
      %v7011 = vrot.slane %v6870, 1
      %v7012 = vsel %vm1793, %v7010, %v7011
      %v7013 = vrot.slane %v6871, 1
      %v7014 = vrot.slane %v6872, 1
      %v7015 = vsel %vm1793, %v7013, %v7014
      %v7016 = vrot.slane %v6873, 1
      %v7017 = vrot.slane %v6874, 1
      %v7018 = vsel %vm1793, %v7016, %v7017
      %v7019 = vrot.slane %v6875, 1
      %v7020 = vrot.slane %v6876, 1
      %v7021 = vsel %vm1793, %v7019, %v7020
      %v7022 = vrot.slane %v6877, 1
      %v7023 = vrot.slane %v6878, 1
      %v7024 = vsel %vm1793, %v7022, %v7023
      %v7025 = vrot.slane %v6879, 1
      %v7026 = vrot.slane %v6880, 1
      %v7027 = vsel %vm1793, %v7025, %v7026
      %v7028 = vrot.slane %v6881, 1
      %v7029 = vrot.slane %v6882, 1
      %v7030 = vsel %vm1793, %v7028, %v7029
      %v7031 = vrot.slane %v6883, 1
      %v7032 = vrot.slane %v6884, 1
      %v7033 = vsel %vm1793, %v7031, %v7032
      %v7034 = vrot.slane %v6885, 1
      %v7035 = vrot.slane %v6886, 1
      %v7036 = vsel %vm1793, %v7034, %v7035
      %v7037 = vrot.slane %v6887, 1
      %v7038 = vrot.slane %v6888, 1
      %v7039 = vsel %vm1793, %v7037, %v7038
      %v7040 = vrot.slane %v6889, 1
      %v7041 = vrot.slane %v6890, 1
      %v7042 = vsel %vm1793, %v7040, %v7041
      %v7043 = vrot.slane %v6891, 1
      %v7044 = vrot.slane %v6892, 1
      %v7045 = vsel %vm1793, %v7043, %v7044
      %v7046 = vrot.slane %v6893, 1
      %v7047 = vrot.slane %v6894, 1
      %v7048 = vsel %vm1793, %v7046, %v7047
      %v7049 = vrot.slane %v6895, 1
      %v7050 = vrot.slane %v6896, 1
      %v7051 = vsel %vm1793, %v7049, %v7050
      %v7052 = vrot.slane %v6897, 1
      %v7053 = vrot.slane %v6898, 1
      %v7054 = vsel %vm1793, %v7052, %v7053
      %v7055 = vrot.slane %v6899, 1
      %v7056 = vrot.slane %v6900, 1
      %v7057 = vsel %vm1793, %v7055, %v7056
      %v7058 = vrot.slane %v6901, 1
      %v7059 = vrot.slane %v6902, 1
      %v7060 = vsel %vm1793, %v7058, %v7059
      %v7061 = vrot.slane %v6903, 1
      %v7062 = vrot.slane %v6904, 1
      %v7063 = vsel %vm1793, %v7061, %v7062
      %v7064 = vrot.slane %v6905, 1
      %v7065 = vrot.slane %v6906, 1
      %v7066 = vsel %vm1793, %v7064, %v7065
      %7067 = vrot.lane.b32.xlu0 %v6973, 120
      %v7068 = vpop.permute.xlu0 %7067
      %7069 = vrot.lane.b32.xlu0 %v6976, 120
      %v7070 = vpop.permute.xlu0 %7069
      %7071 = vrot.lane.b32.xlu0 %v6979, 120
      %v7072 = vpop.permute.xlu0 %7071
      %7073 = vrot.lane.b32.xlu0 %v6982, 120
      %v7074 = vpop.permute.xlu0 %7073
      %7075 = vrot.lane.b32.xlu0 %v6985, 120
      %v7076 = vpop.permute.xlu0 %7075
      %7077 = vrot.lane.b32.xlu0 %v6988, 120
      %v7078 = vpop.permute.xlu0 %7077
      %7079 = vrot.lane.b32.xlu0 %v6991, 120
      %v7080 = vpop.permute.xlu0 %7079
      %7081 = vrot.lane.b32.xlu0 %v6994, 120
      %v7082 = vpop.permute.xlu0 %7081
      %7083 = vrot.lane.b32.xlu0 %v6997, 120
      %v7084 = vpop.permute.xlu0 %7083
      %7085 = vrot.lane.b32.xlu0 %v7000, 120
      %v7086 = vpop.permute.xlu0 %7085
      %7087 = vrot.lane.b32.xlu0 %v7003, 120
      %v7088 = vpop.permute.xlu0 %7087
      %7089 = vrot.lane.b32.xlu0 %v7006, 120
      %v7090 = vpop.permute.xlu0 %7089
      %7091 = vrot.lane.b32.xlu0 %v7009, 120
      %v7092 = vpop.permute.xlu0 %7091
      %7093 = vrot.lane.b32.xlu0 %v7012, 120
      %v7094 = vpop.permute.xlu0 %7093
      %7095 = vrot.lane.b32.xlu0 %v7015, 120
      %v7096 = vpop.permute.xlu0 %7095
      %7097 = vrot.lane.b32.xlu0 %v7018, 120
      %v7098 = vpop.permute.xlu0 %7097
      %7099 = vrot.lane.b32.xlu0 %v7021, 120
      %v7100 = vpop.permute.xlu0 %7099
      %7101 = vrot.lane.b32.xlu0 %v7024, 120
      %v7102 = vpop.permute.xlu0 %7101
      %7103 = vrot.lane.b32.xlu0 %v7027, 120
      %v7104 = vpop.permute.xlu0 %7103
      %7105 = vrot.lane.b32.xlu0 %v7030, 120
      %v7106 = vpop.permute.xlu0 %7105
      %7107 = vrot.lane.b32.xlu0 %v7033, 120
      %v7108 = vpop.permute.xlu0 %7107
      %7109 = vrot.lane.b32.xlu0 %v7036, 120
      %v7110 = vpop.permute.xlu0 %7109
      %7111 = vrot.lane.b32.xlu0 %v7039, 120
      %v7112 = vpop.permute.xlu0 %7111
      %7113 = vrot.lane.b32.xlu0 %v7042, 120
      %v7114 = vpop.permute.xlu0 %7113
      %7115 = vrot.lane.b32.xlu0 %v7045, 120
      %v7116 = vpop.permute.xlu0 %7115
      %7117 = vrot.lane.b32.xlu0 %v7048, 120
      %v7118 = vpop.permute.xlu0 %7117
      %7119 = vrot.lane.b32.xlu0 %v7051, 120
      %v7120 = vpop.permute.xlu0 %7119
      %7121 = vrot.lane.b32.xlu0 %v7054, 120
      %v7122 = vpop.permute.xlu0 %7121
      %7123 = vrot.lane.b32.xlu0 %v7057, 120
      %v7124 = vpop.permute.xlu0 %7123
      %7125 = vrot.lane.b32.xlu0 %v7060, 120
      %v7126 = vpop.permute.xlu0 %7125
      %7127 = vrot.lane.b32.xlu0 %v7063, 120
      %v7128 = vpop.permute.xlu0 %7127
      %7129 = vrot.lane.b32.xlu0 %v7066, 120
      %v7130 = vpop.permute.xlu0 %7129
      %v7131 = vrot.slane %v6843, 2
      %v7132 = vrot.slane %v6844, 2
      %v7133 = vsel %vm2627, %v7131, %v7132
      %v7134 = vrot.slane %v6845, 2
      %v7135 = vrot.slane %v6846, 2
      %v7136 = vsel %vm2627, %v7134, %v7135
      %v7137 = vrot.slane %v6847, 2
      %v7138 = vrot.slane %v6848, 2
      %v7139 = vsel %vm2627, %v7137, %v7138
      %v7140 = vrot.slane %v6849, 2
      %v7141 = vrot.slane %v6850, 2
      %v7142 = vsel %vm2627, %v7140, %v7141
      %v7143 = vrot.slane %v6851, 2
      %v7144 = vrot.slane %v6852, 2
      %v7145 = vsel %vm2627, %v7143, %v7144
      %v7146 = vrot.slane %v6853, 2
      %v7147 = vrot.slane %v6854, 2
      %v7148 = vsel %vm2627, %v7146, %v7147
      %v7149 = vrot.slane %v6855, 2
      %v7150 = vrot.slane %v6856, 2
      %v7151 = vsel %vm2627, %v7149, %v7150
      %v7152 = vrot.slane %v6857, 2
      %v7153 = vrot.slane %v6858, 2
      %v7154 = vsel %vm2627, %v7152, %v7153
      %v7155 = vrot.slane %v6859, 2
      %v7156 = vrot.slane %v6860, 2
      %v7157 = vsel %vm2627, %v7155, %v7156
      %v7158 = vrot.slane %v6861, 2
      %v7159 = vrot.slane %v6862, 2
      %v7160 = vsel %vm2627, %v7158, %v7159
      %v7161 = vrot.slane %v6863, 2
      %v7162 = vrot.slane %v6864, 2
      %v7163 = vsel %vm2627, %v7161, %v7162
      %v7164 = vrot.slane %v6865, 2
      %v7165 = vrot.slane %v6866, 2
      %v7166 = vsel %vm2627, %v7164, %v7165
      %v7167 = vrot.slane %v6867, 2
      %v7168 = vrot.slane %v6868, 2
      %v7169 = vsel %vm2627, %v7167, %v7168
      %v7170 = vrot.slane %v6869, 2
      %v7171 = vrot.slane %v6870, 2
      %v7172 = vsel %vm2627, %v7170, %v7171
      %v7173 = vrot.slane %v6871, 2
      %v7174 = vrot.slane %v6872, 2
      %v7175 = vsel %vm2627, %v7173, %v7174
      %v7176 = vrot.slane %v6873, 2
      %v7177 = vrot.slane %v6874, 2
      %v7178 = vsel %vm2627, %v7176, %v7177
      %v7179 = vrot.slane %v6875, 2
      %v7180 = vrot.slane %v6876, 2
      %v7181 = vsel %vm2627, %v7179, %v7180
      %v7182 = vrot.slane %v6877, 2
      %v7183 = vrot.slane %v6878, 2
      %v7184 = vsel %vm2627, %v7182, %v7183
      %v7185 = vrot.slane %v6879, 2
      %v7186 = vrot.slane %v6880, 2
      %v7187 = vsel %vm2627, %v7185, %v7186
      %v7188 = vrot.slane %v6881, 2
      %v7189 = vrot.slane %v6882, 2
      %v7190 = vsel %vm2627, %v7188, %v7189
      %v7191 = vrot.slane %v6883, 2
      %v7192 = vrot.slane %v6884, 2
      %v7193 = vsel %vm2627, %v7191, %v7192
      %v7194 = vrot.slane %v6885, 2
      %v7195 = vrot.slane %v6886, 2
      %v7196 = vsel %vm2627, %v7194, %v7195
      %v7197 = vrot.slane %v6887, 2
      %v7198 = vrot.slane %v6888, 2
      %v7199 = vsel %vm2627, %v7197, %v7198
      %v7200 = vrot.slane %v6889, 2
      %v7201 = vrot.slane %v6890, 2
      %v7202 = vsel %vm2627, %v7200, %v7201
      %v7203 = vrot.slane %v6891, 2
      %v7204 = vrot.slane %v6892, 2
      %v7205 = vsel %vm2627, %v7203, %v7204
      %v7206 = vrot.slane %v6893, 2
      %v7207 = vrot.slane %v6894, 2
      %v7208 = vsel %vm2627, %v7206, %v7207
      %v7209 = vrot.slane %v6895, 2
      %v7210 = vrot.slane %v6896, 2
      %v7211 = vsel %vm2627, %v7209, %v7210
      %v7212 = vrot.slane %v6897, 2
      %v7213 = vrot.slane %v6898, 2
      %v7214 = vsel %vm2627, %v7212, %v7213
      %v7215 = vrot.slane %v6899, 2
      %v7216 = vrot.slane %v6900, 2
      %v7217 = vsel %vm2627, %v7215, %v7216
      %v7218 = vrot.slane %v6901, 2
      %v7219 = vrot.slane %v6902, 2
      %v7220 = vsel %vm2627, %v7218, %v7219
      %v7221 = vrot.slane %v6903, 2
      %v7222 = vrot.slane %v6904, 2
      %v7223 = vsel %vm2627, %v7221, %v7222
      %v7224 = vrot.slane %v6905, 2
      %v7225 = vrot.slane %v6906, 2
      %v7226 = vsel %vm2627, %v7224, %v7225
      %7227 = vrot.lane.b32.xlu0 %v7133, 112
      %v7228 = vpop.permute.xlu0 %7227
      %7229 = vrot.lane.b32.xlu0 %v7136, 112
      %v7230 = vpop.permute.xlu0 %7229
      %7231 = vrot.lane.b32.xlu0 %v7139, 112
      %v7232 = vpop.permute.xlu0 %7231
      %7233 = vrot.lane.b32.xlu0 %v7142, 112
      %v7234 = vpop.permute.xlu0 %7233
      %7235 = vrot.lane.b32.xlu0 %v7145, 112
      %v7236 = vpop.permute.xlu0 %7235
      %7237 = vrot.lane.b32.xlu0 %v7148, 112
      %v7238 = vpop.permute.xlu0 %7237
      %7239 = vrot.lane.b32.xlu0 %v7151, 112
      %v7240 = vpop.permute.xlu0 %7239
      %7241 = vrot.lane.b32.xlu0 %v7154, 112
      %v7242 = vpop.permute.xlu0 %7241
      %7243 = vrot.lane.b32.xlu0 %v7157, 112
      %v7244 = vpop.permute.xlu0 %7243
      %7245 = vrot.lane.b32.xlu0 %v7160, 112
      %v7246 = vpop.permute.xlu0 %7245
      %7247 = vrot.lane.b32.xlu0 %v7163, 112
      %v7248 = vpop.permute.xlu0 %7247
      %7249 = vrot.lane.b32.xlu0 %v7166, 112
      %v7250 = vpop.permute.xlu0 %7249
      %7251 = vrot.lane.b32.xlu0 %v7169, 112
      %v7252 = vpop.permute.xlu0 %7251
      %7253 = vrot.lane.b32.xlu0 %v7172, 112
      %v7254 = vpop.permute.xlu0 %7253
      %7255 = vrot.lane.b32.xlu0 %v7175, 112
      %v7256 = vpop.permute.xlu0 %7255
      %7257 = vrot.lane.b32.xlu0 %v7178, 112
      %v7258 = vpop.permute.xlu0 %7257
      %7259 = vrot.lane.b32.xlu0 %v7181, 112
      %v7260 = vpop.permute.xlu0 %7259
      %7261 = vrot.lane.b32.xlu0 %v7184, 112
      %v7262 = vpop.permute.xlu0 %7261
      %7263 = vrot.lane.b32.xlu0 %v7187, 112
      %v7264 = vpop.permute.xlu0 %7263
      %7265 = vrot.lane.b32.xlu0 %v7190, 112
      %v7266 = vpop.permute.xlu0 %7265
      %7267 = vrot.lane.b32.xlu0 %v7193, 112
      %v7268 = vpop.permute.xlu0 %7267
      %7269 = vrot.lane.b32.xlu0 %v7196, 112
      %v7270 = vpop.permute.xlu0 %7269
      %7271 = vrot.lane.b32.xlu0 %v7199, 112
      %v7272 = vpop.permute.xlu0 %7271
      %7273 = vrot.lane.b32.xlu0 %v7202, 112
      %v7274 = vpop.permute.xlu0 %7273
      %7275 = vrot.lane.b32.xlu0 %v7205, 112
      %v7276 = vpop.permute.xlu0 %7275
      %7277 = vrot.lane.b32.xlu0 %v7208, 112
      %v7278 = vpop.permute.xlu0 %7277
      %7279 = vrot.lane.b32.xlu0 %v7211, 112
      %v7280 = vpop.permute.xlu0 %7279
      %7281 = vrot.lane.b32.xlu0 %v7214, 112
      %v7282 = vpop.permute.xlu0 %7281
      %7283 = vrot.lane.b32.xlu0 %v7217, 112
      %v7284 = vpop.permute.xlu0 %7283
      %7285 = vrot.lane.b32.xlu0 %v7220, 112
      %v7286 = vpop.permute.xlu0 %7285
      %7287 = vrot.lane.b32.xlu0 %v7223, 112
      %v7288 = vpop.permute.xlu0 %7287
      %7289 = vrot.lane.b32.xlu0 %v7226, 112
      %v7290 = vpop.permute.xlu0 %7289
      %vm7291 = vcmask 1044480
      %v7292 = vrot.slane %v6843, 3
      %v7293 = vrot.slane %v6844, 3
      %v7294 = vsel %vm7291, %v7292, %v7293
      %v7295 = vrot.slane %v6845, 3
      %v7296 = vrot.slane %v6846, 3
      %v7297 = vsel %vm7291, %v7295, %v7296
      %v7298 = vrot.slane %v6847, 3
      %v7299 = vrot.slane %v6848, 3
      %v7300 = vsel %vm7291, %v7298, %v7299
      %v7301 = vrot.slane %v6849, 3
      %v7302 = vrot.slane %v6850, 3
      %v7303 = vsel %vm7291, %v7301, %v7302
      %v7304 = vrot.slane %v6851, 3
      %v7305 = vrot.slane %v6852, 3
      %v7306 = vsel %vm7291, %v7304, %v7305
      %v7307 = vrot.slane %v6853, 3
      %v7308 = vrot.slane %v6854, 3
      %v7309 = vsel %vm7291, %v7307, %v7308
      %v7310 = vrot.slane %v6855, 3
      %v7311 = vrot.slane %v6856, 3
      %v7312 = vsel %vm7291, %v7310, %v7311
      %v7313 = vrot.slane %v6857, 3
      %v7314 = vrot.slane %v6858, 3
      %v7315 = vsel %vm7291, %v7313, %v7314
      %v7316 = vrot.slane %v6859, 3
      %v7317 = vrot.slane %v6860, 3
      %v7318 = vsel %vm7291, %v7316, %v7317
      %v7319 = vrot.slane %v6861, 3
      %v7320 = vrot.slane %v6862, 3
      %v7321 = vsel %vm7291, %v7319, %v7320
      %v7322 = vrot.slane %v6863, 3
      %v7323 = vrot.slane %v6864, 3
      %v7324 = vsel %vm7291, %v7322, %v7323
      %v7325 = vrot.slane %v6865, 3
      %v7326 = vrot.slane %v6866, 3
      %v7327 = vsel %vm7291, %v7325, %v7326
      %v7328 = vrot.slane %v6867, 3
      %v7329 = vrot.slane %v6868, 3
      %v7330 = vsel %vm7291, %v7328, %v7329
      %v7331 = vrot.slane %v6869, 3
      %v7332 = vrot.slane %v6870, 3
      %v7333 = vsel %vm7291, %v7331, %v7332
      %v7334 = vrot.slane %v6871, 3
      %v7335 = vrot.slane %v6872, 3
      %v7336 = vsel %vm7291, %v7334, %v7335
      %v7337 = vrot.slane %v6873, 3
      %v7338 = vrot.slane %v6874, 3
      %v7339 = vsel %vm7291, %v7337, %v7338
      %v7340 = vrot.slane %v6875, 3
      %v7341 = vrot.slane %v6876, 3
      %v7342 = vsel %vm7291, %v7340, %v7341
      %v7343 = vrot.slane %v6877, 3
      %v7344 = vrot.slane %v6878, 3
      %v7345 = vsel %vm7291, %v7343, %v7344
      %v7346 = vrot.slane %v6879, 3
      %v7347 = vrot.slane %v6880, 3
      %v7348 = vsel %vm7291, %v7346, %v7347
      %v7349 = vrot.slane %v6881, 3
      %v7350 = vrot.slane %v6882, 3
      %v7351 = vsel %vm7291, %v7349, %v7350
      %v7352 = vrot.slane %v6883, 3
      %v7353 = vrot.slane %v6884, 3
      %v7354 = vsel %vm7291, %v7352, %v7353
      %v7355 = vrot.slane %v6885, 3
      %v7356 = vrot.slane %v6886, 3
      %v7357 = vsel %vm7291, %v7355, %v7356
      %v7358 = vrot.slane %v6887, 3
      %v7359 = vrot.slane %v6888, 3
      %v7360 = vsel %vm7291, %v7358, %v7359
      %v7361 = vrot.slane %v6889, 3
      %v7362 = vrot.slane %v6890, 3
      %v7363 = vsel %vm7291, %v7361, %v7362
      %v7364 = vrot.slane %v6891, 3
      %v7365 = vrot.slane %v6892, 3
      %v7366 = vsel %vm7291, %v7364, %v7365
      %v7367 = vrot.slane %v6893, 3
      %v7368 = vrot.slane %v6894, 3
      %v7369 = vsel %vm7291, %v7367, %v7368
      %v7370 = vrot.slane %v6895, 3
      %v7371 = vrot.slane %v6896, 3
      %v7372 = vsel %vm7291, %v7370, %v7371
      %v7373 = vrot.slane %v6897, 3
      %v7374 = vrot.slane %v6898, 3
      %v7375 = vsel %vm7291, %v7373, %v7374
      %v7376 = vrot.slane %v6899, 3
      %v7377 = vrot.slane %v6900, 3
      %v7378 = vsel %vm7291, %v7376, %v7377
      %v7379 = vrot.slane %v6901, 3
      %v7380 = vrot.slane %v6902, 3
      %v7381 = vsel %vm7291, %v7379, %v7380
      %v7382 = vrot.slane %v6903, 3
      %v7383 = vrot.slane %v6904, 3
      %v7384 = vsel %vm7291, %v7382, %v7383
      %v7385 = vrot.slane %v6905, 3
      %v7386 = vrot.slane %v6906, 3
      %v7387 = vsel %vm7291, %v7385, %v7386
      %7388 = vrot.lane.b32.xlu0 %v7294, 104
      %v7389 = vpop.permute.xlu0 %7388
      %7390 = vrot.lane.b32.xlu0 %v7297, 104
      %v7391 = vpop.permute.xlu0 %7390
      %7392 = vrot.lane.b32.xlu0 %v7300, 104
      %v7393 = vpop.permute.xlu0 %7392
      %7394 = vrot.lane.b32.xlu0 %v7303, 104
      %v7395 = vpop.permute.xlu0 %7394
      %7396 = vrot.lane.b32.xlu0 %v7306, 104
      %v7397 = vpop.permute.xlu0 %7396
      %7398 = vrot.lane.b32.xlu0 %v7309, 104
      %v7399 = vpop.permute.xlu0 %7398
      %7400 = vrot.lane.b32.xlu0 %v7312, 104
      %v7401 = vpop.permute.xlu0 %7400
      %7402 = vrot.lane.b32.xlu0 %v7315, 104
      %v7403 = vpop.permute.xlu0 %7402
      %7404 = vrot.lane.b32.xlu0 %v7318, 104
      %v7405 = vpop.permute.xlu0 %7404
      %7406 = vrot.lane.b32.xlu0 %v7321, 104
      %v7407 = vpop.permute.xlu0 %7406
      %7408 = vrot.lane.b32.xlu0 %v7324, 104
      %v7409 = vpop.permute.xlu0 %7408
      %7410 = vrot.lane.b32.xlu0 %v7327, 104
      %v7411 = vpop.permute.xlu0 %7410
      %7412 = vrot.lane.b32.xlu0 %v7330, 104
      %v7413 = vpop.permute.xlu0 %7412
      %7414 = vrot.lane.b32.xlu0 %v7333, 104
      %v7415 = vpop.permute.xlu0 %7414
      %7416 = vrot.lane.b32.xlu0 %v7336, 104
      %v7417 = vpop.permute.xlu0 %7416
      %7418 = vrot.lane.b32.xlu0 %v7339, 104
      %v7419 = vpop.permute.xlu0 %7418
      %7420 = vrot.lane.b32.xlu0 %v7342, 104
      %v7421 = vpop.permute.xlu0 %7420
      %7422 = vrot.lane.b32.xlu0 %v7345, 104
      %v7423 = vpop.permute.xlu0 %7422
      %7424 = vrot.lane.b32.xlu0 %v7348, 104
      %v7425 = vpop.permute.xlu0 %7424
      %7426 = vrot.lane.b32.xlu0 %v7351, 104
      %v7427 = vpop.permute.xlu0 %7426
      %7428 = vrot.lane.b32.xlu0 %v7354, 104
      %v7429 = vpop.permute.xlu0 %7428
      %7430 = vrot.lane.b32.xlu0 %v7357, 104
      %v7431 = vpop.permute.xlu0 %7430
      %7432 = vrot.lane.b32.xlu0 %v7360, 104
      %v7433 = vpop.permute.xlu0 %7432
      %7434 = vrot.lane.b32.xlu0 %v7363, 104
      %v7435 = vpop.permute.xlu0 %7434
      %7436 = vrot.lane.b32.xlu0 %v7366, 104
      %v7437 = vpop.permute.xlu0 %7436
      %7438 = vrot.lane.b32.xlu0 %v7369, 104
      %v7439 = vpop.permute.xlu0 %7438
      %7440 = vrot.lane.b32.xlu0 %v7372, 104
      %v7441 = vpop.permute.xlu0 %7440
      %7442 = vrot.lane.b32.xlu0 %v7375, 104
      %v7443 = vpop.permute.xlu0 %7442
      %7444 = vrot.lane.b32.xlu0 %v7378, 104
      %v7445 = vpop.permute.xlu0 %7444
      %7446 = vrot.lane.b32.xlu0 %v7381, 104
      %v7447 = vpop.permute.xlu0 %7446
      %7448 = vrot.lane.b32.xlu0 %v7384, 104
      %v7449 = vpop.permute.xlu0 %7448
      %7450 = vrot.lane.b32.xlu0 %v7387, 104
      %v7451 = vpop.permute.xlu0 %7450
      %vm7452 = vcmask 1043456
      %v7453 = vrot.slane %v6843, 4
      %v7454 = vrot.slane %v6844, 4
      %v7455 = vsel %vm7452, %v7453, %v7454
      %v7456 = vrot.slane %v6845, 4
      %v7457 = vrot.slane %v6846, 4
      %v7458 = vsel %vm7452, %v7456, %v7457
      %v7459 = vrot.slane %v6847, 4
      %v7460 = vrot.slane %v6848, 4
      %v7461 = vsel %vm7452, %v7459, %v7460
      %v7462 = vrot.slane %v6849, 4
      %v7463 = vrot.slane %v6850, 4
      %v7464 = vsel %vm7452, %v7462, %v7463
      %v7465 = vrot.slane %v6851, 4
      %v7466 = vrot.slane %v6852, 4
      %v7467 = vsel %vm7452, %v7465, %v7466
      %v7468 = vrot.slane %v6853, 4
      %v7469 = vrot.slane %v6854, 4
      %v7470 = vsel %vm7452, %v7468, %v7469
      %v7471 = vrot.slane %v6855, 4
      %v7472 = vrot.slane %v6856, 4
      %v7473 = vsel %vm7452, %v7471, %v7472
      %v7474 = vrot.slane %v6857, 4
      %v7475 = vrot.slane %v6858, 4
      %v7476 = vsel %vm7452, %v7474, %v7475
      %v7477 = vrot.slane %v6859, 4
      %v7478 = vrot.slane %v6860, 4
      %v7479 = vsel %vm7452, %v7477, %v7478
      %v7480 = vrot.slane %v6861, 4
      %v7481 = vrot.slane %v6862, 4
      %v7482 = vsel %vm7452, %v7480, %v7481
      %v7483 = vrot.slane %v6863, 4
      %v7484 = vrot.slane %v6864, 4
      %v7485 = vsel %vm7452, %v7483, %v7484
      %v7486 = vrot.slane %v6865, 4
      %v7487 = vrot.slane %v6866, 4
      %v7488 = vsel %vm7452, %v7486, %v7487
      %v7489 = vrot.slane %v6867, 4
      %v7490 = vrot.slane %v6868, 4
      %v7491 = vsel %vm7452, %v7489, %v7490
      %v7492 = vrot.slane %v6869, 4
      %v7493 = vrot.slane %v6870, 4
      %v7494 = vsel %vm7452, %v7492, %v7493
      %v7495 = vrot.slane %v6871, 4
      %v7496 = vrot.slane %v6872, 4
      %v7497 = vsel %vm7452, %v7495, %v7496
      %v7498 = vrot.slane %v6873, 4
      %v7499 = vrot.slane %v6874, 4
      %v7500 = vsel %vm7452, %v7498, %v7499
      %v7501 = vrot.slane %v6875, 4
      %v7502 = vrot.slane %v6876, 4
      %v7503 = vsel %vm7452, %v7501, %v7502
      %v7504 = vrot.slane %v6877, 4
      %v7505 = vrot.slane %v6878, 4
      %v7506 = vsel %vm7452, %v7504, %v7505
      %v7507 = vrot.slane %v6879, 4
      %v7508 = vrot.slane %v6880, 4
      %v7509 = vsel %vm7452, %v7507, %v7508
      %v7510 = vrot.slane %v6881, 4
      %v7511 = vrot.slane %v6882, 4
      %v7512 = vsel %vm7452, %v7510, %v7511
      %v7513 = vrot.slane %v6883, 4
      %v7514 = vrot.slane %v6884, 4
      %v7515 = vsel %vm7452, %v7513, %v7514
      %v7516 = vrot.slane %v6885, 4
      %v7517 = vrot.slane %v6886, 4
      %v7518 = vsel %vm7452, %v7516, %v7517
      %v7519 = vrot.slane %v6887, 4
      %v7520 = vrot.slane %v6888, 4
      %v7521 = vsel %vm7452, %v7519, %v7520
      %v7522 = vrot.slane %v6889, 4
      %v7523 = vrot.slane %v6890, 4
      %v7524 = vsel %vm7452, %v7522, %v7523
      %v7525 = vrot.slane %v6891, 4
      %v7526 = vrot.slane %v6892, 4
      %v7527 = vsel %vm7452, %v7525, %v7526
      %v7528 = vrot.slane %v6893, 4
      %v7529 = vrot.slane %v6894, 4
      %v7530 = vsel %vm7452, %v7528, %v7529
      %v7531 = vrot.slane %v6895, 4
      %v7532 = vrot.slane %v6896, 4
      %v7533 = vsel %vm7452, %v7531, %v7532
      %v7534 = vrot.slane %v6897, 4
      %v7535 = vrot.slane %v6898, 4
      %v7536 = vsel %vm7452, %v7534, %v7535
      %v7537 = vrot.slane %v6899, 4
      %v7538 = vrot.slane %v6900, 4
      %v7539 = vsel %vm7452, %v7537, %v7538
      %v7540 = vrot.slane %v6901, 4
      %v7541 = vrot.slane %v6902, 4
      %v7542 = vsel %vm7452, %v7540, %v7541
      %v7543 = vrot.slane %v6903, 4
      %v7544 = vrot.slane %v6904, 4
      %v7545 = vsel %vm7452, %v7543, %v7544
      %v7546 = vrot.slane %v6905, 4
      %v7547 = vrot.slane %v6906, 4
      %v7548 = vsel %vm7452, %v7546, %v7547
      %7549 = vrot.lane.b32.xlu0 %v7455, 96
      %v7550 = vpop.permute.xlu0 %7549
      %7551 = vrot.lane.b32.xlu0 %v7458, 96
      %v7552 = vpop.permute.xlu0 %7551
      %7553 = vrot.lane.b32.xlu0 %v7461, 96
      %v7554 = vpop.permute.xlu0 %7553
      %7555 = vrot.lane.b32.xlu0 %v7464, 96
      %v7556 = vpop.permute.xlu0 %7555
      %7557 = vrot.lane.b32.xlu0 %v7467, 96
      %v7558 = vpop.permute.xlu0 %7557
      %7559 = vrot.lane.b32.xlu0 %v7470, 96
      %v7560 = vpop.permute.xlu0 %7559
      %7561 = vrot.lane.b32.xlu0 %v7473, 96
      %v7562 = vpop.permute.xlu0 %7561
      %7563 = vrot.lane.b32.xlu0 %v7476, 96
      %v7564 = vpop.permute.xlu0 %7563
      %7565 = vrot.lane.b32.xlu0 %v7479, 96
      %v7566 = vpop.permute.xlu0 %7565
      %7567 = vrot.lane.b32.xlu0 %v7482, 96
      %v7568 = vpop.permute.xlu0 %7567
      %7569 = vrot.lane.b32.xlu0 %v7485, 96
      %v7570 = vpop.permute.xlu0 %7569
      %7571 = vrot.lane.b32.xlu0 %v7488, 96
      %v7572 = vpop.permute.xlu0 %7571
      %7573 = vrot.lane.b32.xlu0 %v7491, 96
      %v7574 = vpop.permute.xlu0 %7573
      %7575 = vrot.lane.b32.xlu0 %v7494, 96
      %v7576 = vpop.permute.xlu0 %7575
      %7577 = vrot.lane.b32.xlu0 %v7497, 96
      %v7578 = vpop.permute.xlu0 %7577
      %7579 = vrot.lane.b32.xlu0 %v7500, 96
      %v7580 = vpop.permute.xlu0 %7579
      %7581 = vrot.lane.b32.xlu0 %v7503, 96
      %v7582 = vpop.permute.xlu0 %7581
      %7583 = vrot.lane.b32.xlu0 %v7506, 96
      %v7584 = vpop.permute.xlu0 %7583
      %7585 = vrot.lane.b32.xlu0 %v7509, 96
      %v7586 = vpop.permute.xlu0 %7585
      %7587 = vrot.lane.b32.xlu0 %v7512, 96
      %v7588 = vpop.permute.xlu0 %7587
      %7589 = vrot.lane.b32.xlu0 %v7515, 96
      %v7590 = vpop.permute.xlu0 %7589
      %7591 = vrot.lane.b32.xlu0 %v7518, 96
      %v7592 = vpop.permute.xlu0 %7591
      %7593 = vrot.lane.b32.xlu0 %v7521, 96
      %v7594 = vpop.permute.xlu0 %7593
      %7595 = vrot.lane.b32.xlu0 %v7524, 96
      %v7596 = vpop.permute.xlu0 %7595
      %7597 = vrot.lane.b32.xlu0 %v7527, 96
      %v7598 = vpop.permute.xlu0 %7597
      %7599 = vrot.lane.b32.xlu0 %v7530, 96
      %v7600 = vpop.permute.xlu0 %7599
      %7601 = vrot.lane.b32.xlu0 %v7533, 96
      %v7602 = vpop.permute.xlu0 %7601
      %7603 = vrot.lane.b32.xlu0 %v7536, 96
      %v7604 = vpop.permute.xlu0 %7603
      %7605 = vrot.lane.b32.xlu0 %v7539, 96
      %v7606 = vpop.permute.xlu0 %7605
      %7607 = vrot.lane.b32.xlu0 %v7542, 96
      %v7608 = vpop.permute.xlu0 %7607
      %7609 = vrot.lane.b32.xlu0 %v7545, 96
      %v7610 = vpop.permute.xlu0 %7609
      %7611 = vrot.lane.b32.xlu0 %v7548, 96
      %v7612 = vpop.permute.xlu0 %7611
      %vm7613 = vcmask 982016
      %v7616 = vsel %vm7613, %v6843, %v7068
      %v7620 = vsel %vm7613, %v6845, %v7070
      %v7624 = vsel %vm7613, %v6847, %v7072
      %v7628 = vsel %vm7613, %v6849, %v7074
      %v7632 = vsel %vm7613, %v6851, %v7076
      %v7636 = vsel %vm7613, %v6853, %v7078
      %v7640 = vsel %vm7613, %v6855, %v7080
      %v7644 = vsel %vm7613, %v6857, %v7082
      %v7648 = vsel %vm7613, %v6859, %v7084
      %v7652 = vsel %vm7613, %v6861, %v7086
      %v7656 = vsel %vm7613, %v6863, %v7088
      %v7660 = vsel %vm7613, %v6865, %v7090
      %v7664 = vsel %vm7613, %v6867, %v7092
      %v7668 = vsel %vm7613, %v6869, %v7094
      %v7672 = vsel %vm7613, %v6871, %v7096
      %v7676 = vsel %vm7613, %v6873, %v7098
      %v7680 = vsel %vm7613, %v6875, %v7100
      %v7684 = vsel %vm7613, %v6877, %v7102
      %v7688 = vsel %vm7613, %v6879, %v7104
      %v7692 = vsel %vm7613, %v6881, %v7106
      %v7696 = vsel %vm7613, %v6883, %v7108
      %v7700 = vsel %vm7613, %v6885, %v7110
      %v7704 = vsel %vm7613, %v6887, %v7112
      %v7708 = vsel %vm7613, %v6889, %v7114
      %v7712 = vsel %vm7613, %v6891, %v7116
      %v7716 = vsel %vm7613, %v6893, %v7118
      %v7720 = vsel %vm7613, %v6895, %v7120
      %v7724 = vsel %vm7613, %v6897, %v7122
      %v7728 = vsel %vm7613, %v6899, %v7124
      %v7732 = vsel %vm7613, %v6901, %v7126
      %v7736 = vsel %vm7613, %v6903, %v7128
      %v7740 = vsel %vm7613, %v6905, %v7130
      %v7743 = vsel %vm3303, %v7068, %v7228
      %v7746 = vsel %vm3303, %v7070, %v7230
      %v7749 = vsel %vm3303, %v7072, %v7232
      %v7752 = vsel %vm3303, %v7074, %v7234
      %v7755 = vsel %vm3303, %v7076, %v7236
      %v7758 = vsel %vm3303, %v7078, %v7238
      %v7761 = vsel %vm3303, %v7080, %v7240
      %v7764 = vsel %vm3303, %v7082, %v7242
      %v7767 = vsel %vm3303, %v7084, %v7244
      %v7770 = vsel %vm3303, %v7086, %v7246
      %v7773 = vsel %vm3303, %v7088, %v7248
      %v7776 = vsel %vm3303, %v7090, %v7250
      %v7779 = vsel %vm3303, %v7092, %v7252
      %v7782 = vsel %vm3303, %v7094, %v7254
      %v7785 = vsel %vm3303, %v7096, %v7256
      %v7788 = vsel %vm3303, %v7098, %v7258
      %v7791 = vsel %vm3303, %v7100, %v7260
      %v7794 = vsel %vm3303, %v7102, %v7262
      %v7797 = vsel %vm3303, %v7104, %v7264
      %v7800 = vsel %vm3303, %v7106, %v7266
      %v7803 = vsel %vm3303, %v7108, %v7268
      %v7806 = vsel %vm3303, %v7110, %v7270
      %v7809 = vsel %vm3303, %v7112, %v7272
      %v7812 = vsel %vm3303, %v7114, %v7274
      %v7815 = vsel %vm3303, %v7116, %v7276
      %v7818 = vsel %vm3303, %v7118, %v7278
      %v7821 = vsel %vm3303, %v7120, %v7280
      %v7824 = vsel %vm3303, %v7122, %v7282
      %v7827 = vsel %vm3303, %v7124, %v7284
      %v7830 = vsel %vm3303, %v7126, %v7286
      %v7833 = vsel %vm3303, %v7128, %v7288
      %v7836 = vsel %vm3303, %v7130, %v7290
      %vm7838 = vcmask 850944
      %v7840 = vsel %vm7838, %v7228, %v7389
      %v7843 = vsel %vm7838, %v7230, %v7391
      %v7846 = vsel %vm7838, %v7232, %v7393
      %v7849 = vsel %vm7838, %v7234, %v7395
      %v7852 = vsel %vm7838, %v7236, %v7397
      %v7855 = vsel %vm7838, %v7238, %v7399
      %v7858 = vsel %vm7838, %v7240, %v7401
      %v7861 = vsel %vm7838, %v7242, %v7403
      %v7864 = vsel %vm7838, %v7244, %v7405
      %v7867 = vsel %vm7838, %v7246, %v7407
      %v7870 = vsel %vm7838, %v7248, %v7409
      %v7873 = vsel %vm7838, %v7250, %v7411
      %v7876 = vsel %vm7838, %v7252, %v7413
      %v7879 = vsel %vm7838, %v7254, %v7415
      %v7882 = vsel %vm7838, %v7256, %v7417
      %v7885 = vsel %vm7838, %v7258, %v7419
      %v7888 = vsel %vm7838, %v7260, %v7421
      %v7891 = vsel %vm7838, %v7262, %v7423
      %v7894 = vsel %vm7838, %v7264, %v7425
      %v7897 = vsel %vm7838, %v7266, %v7427
      %v7900 = vsel %vm7838, %v7268, %v7429
      %v7903 = vsel %vm7838, %v7270, %v7431
      %v7906 = vsel %vm7838, %v7272, %v7433
      %v7909 = vsel %vm7838, %v7274, %v7435
      %v7912 = vsel %vm7838, %v7276, %v7437
      %v7915 = vsel %vm7838, %v7278, %v7439
      %v7918 = vsel %vm7838, %v7280, %v7441
      %v7921 = vsel %vm7838, %v7282, %v7443
      %v7924 = vsel %vm7838, %v7284, %v7445
      %v7927 = vsel %vm7838, %v7286, %v7447
      %v7930 = vsel %vm7838, %v7288, %v7449
      %v7933 = vsel %vm7838, %v7290, %v7451
      %vm7935 = vcmask 785408
      %v7937 = vsel %vm7935, %v7389, %v7550
      %v7940 = vsel %vm7935, %v7391, %v7552
      %v7943 = vsel %vm7935, %v7393, %v7554
      %v7946 = vsel %vm7935, %v7395, %v7556
      %v7949 = vsel %vm7935, %v7397, %v7558
      %v7952 = vsel %vm7935, %v7399, %v7560
      %v7955 = vsel %vm7935, %v7401, %v7562
      %v7958 = vsel %vm7935, %v7403, %v7564
      %v7961 = vsel %vm7935, %v7405, %v7566
      %v7964 = vsel %vm7935, %v7407, %v7568
      %v7967 = vsel %vm7935, %v7409, %v7570
      %v7970 = vsel %vm7935, %v7411, %v7572
      %v7973 = vsel %vm7935, %v7413, %v7574
      %v7976 = vsel %vm7935, %v7415, %v7576
      %v7979 = vsel %vm7935, %v7417, %v7578
      %v7982 = vsel %vm7935, %v7419, %v7580
      %v7985 = vsel %vm7935, %v7421, %v7582
      %v7988 = vsel %vm7935, %v7423, %v7584
      %v7991 = vsel %vm7935, %v7425, %v7586
      %v7994 = vsel %vm7935, %v7427, %v7588
      %v7997 = vsel %vm7935, %v7429, %v7590
      %v8000 = vsel %vm7935, %v7431, %v7592
      %v8003 = vsel %vm7935, %v7433, %v7594
      %v8006 = vsel %vm7935, %v7435, %v7596
      %v8009 = vsel %vm7935, %v7437, %v7598
      %v8012 = vsel %vm7935, %v7439, %v7600
      %v8015 = vsel %vm7935, %v7441, %v7602
      %v8018 = vsel %vm7935, %v7443, %v7604
      %v8021 = vsel %vm7935, %v7445, %v7606
      %v8024 = vsel %vm7935, %v7447, %v7608
      %v8027 = vsel %vm7935, %v7449, %v7610
      %v8030 = vsel %vm7935, %v7451, %v7612
      %v8032 = vld [vmem:[%s4] sm:$0xff]
      %v8033 = vld [vmem:[%s4 + $0x8] sm:$0xff]
      %v8034 = vld [vmem:[%s4 + $0x10] sm:$0xff]
      %v8035 = vld [vmem:[%s4 + $0x18] sm:$0xff]
      %v8036 = vld [vmem:[%s4 + $0x20] sm:$0xff]
      %v8037 = vld [vmem:[%s4 + $0x28] sm:$0xff]
      %v8038 = vld [vmem:[%s4 + $0x30] sm:$0xff]
      %v8039 = vld [vmem:[%s4 + $0x38] sm:$0xff]
      %v8040 = vld [vmem:[%s4 + $0x40] sm:$0xff]
      %v8041 = vld [vmem:[%s4 + $0x48] sm:$0xff]
      %v8042 = vld [vmem:[%s4 + $0x50] sm:$0xff]
      %v8043 = vld [vmem:[%s4 + $0x58] sm:$0xff]
      %v8044 = vld [vmem:[%s4 + $0x60] sm:$0xff]
      %v8045 = vld [vmem:[%s4 + $0x68] sm:$0xff]
      %v8046 = vld [vmem:[%s4 + $0x70] sm:$0xff]
      %v8047 = vld [vmem:[%s4 + $0x78] sm:$0xff]
      %v8048 = vld [vmem:[%s4 + $0x80] sm:$0xff]
      %v8049 = vld [vmem:[%s4 + $0x88] sm:$0xff]
      %v8050 = vld [vmem:[%s4 + $0x90] sm:$0xff]
      %v8051 = vld [vmem:[%s4 + $0x98] sm:$0xff]
      %v8052 = vld [vmem:[%s4 + $0xa0] sm:$0xff]
      %v8053 = vld [vmem:[%s4 + $0xa8] sm:$0xff]
      %v8054 = vld [vmem:[%s4 + $0xb0] sm:$0xff]
      %v8055 = vld [vmem:[%s4 + $0xb8] sm:$0xff]
      %v8056 = vld [vmem:[%s4 + $0xc0] sm:$0xff]
      %v8057 = vld [vmem:[%s4 + $0xc8] sm:$0xff]
      %v8058 = vld [vmem:[%s4 + $0xd0] sm:$0xff]
      %v8059 = vld [vmem:[%s4 + $0xd8] sm:$0xff]
      %v8060 = vld [vmem:[%s4 + $0xe0] sm:$0xff]
      %v8061 = vld [vmem:[%s4 + $0xe8] sm:$0xff]
      %v8062 = vld [vmem:[%s4 + $0xf0] sm:$0xff]
      %v8063 = vld [vmem:[%s4 + $0xf8] sm:$0xff]
      %v8064 = vld [vmem:[%s4 + $0x100] sm:$0xff]
      %v8065 = vld [vmem:[%s4 + $0x108] sm:$0xff]
      %v8066 = vld [vmem:[%s4 + $0x110] sm:$0xff]
      %v8067 = vld [vmem:[%s4 + $0x118] sm:$0xff]
      %v8068 = vld [vmem:[%s4 + $0x120] sm:$0xff]
      %v8069 = vld [vmem:[%s4 + $0x128] sm:$0xff]
      %v8070 = vld [vmem:[%s4 + $0x130] sm:$0xff]
      %v8071 = vld [vmem:[%s4 + $0x138] sm:$0xff]
      %v8072 = vld [vmem:[%s4 + $0x140] sm:$0xff]
      %v8073 = vld [vmem:[%s4 + $0x148] sm:$0xff]
      %v8074 = vld [vmem:[%s4 + $0x150] sm:$0xff]
      %v8075 = vld [vmem:[%s4 + $0x158] sm:$0xff]
      %v8076 = vld [vmem:[%s4 + $0x160] sm:$0xff]
      %v8077 = vld [vmem:[%s4 + $0x168] sm:$0xff]
      %v8078 = vld [vmem:[%s4 + $0x170] sm:$0xff]
      %v8079 = vld [vmem:[%s4 + $0x178] sm:$0xff]
      %v8080 = vld [vmem:[%s4 + $0x180] sm:$0xff]
      %v8081 = vld [vmem:[%s4 + $0x188] sm:$0xff]
      %v8082 = vld [vmem:[%s4 + $0x190] sm:$0xff]
      %v8083 = vld [vmem:[%s4 + $0x198] sm:$0xff]
      %v8084 = vld [vmem:[%s4 + $0x1a0] sm:$0xff]
      %v8085 = vld [vmem:[%s4 + $0x1a8] sm:$0xff]
      %v8086 = vld [vmem:[%s4 + $0x1b0] sm:$0xff]
      %v8087 = vld [vmem:[%s4 + $0x1b8] sm:$0xff]
      %v8088 = vld [vmem:[%s4 + $0x1c0] sm:$0xff]
      %v8089 = vld [vmem:[%s4 + $0x1c8] sm:$0xff]
      %v8090 = vld [vmem:[%s4 + $0x1d0] sm:$0xff]
      %v8091 = vld [vmem:[%s4 + $0x1d8] sm:$0xff]
      %v8092 = vld [vmem:[%s4 + $0x1e0] sm:$0xff]
      %v8093 = vld [vmem:[%s4 + $0x1e8] sm:$0xff]
      %v8094 = vld [vmem:[%s4 + $0x1f0] sm:$0xff]
      %v8095 = vld [vmem:[%s4 + $0x1f8] sm:$0xff]
      %v8096 = vld [vmem:[%s4 + $0x200] sm:$0xff]
      %v8097 = vld [vmem:[%s4 + $0x208] sm:$0xff]
      %v8098 = vld [vmem:[%s4 + $0x210] sm:$0xff]
      %v8099 = vld [vmem:[%s4 + $0x218] sm:$0xff]
      %v8100 = vld [vmem:[%s4 + $0x220] sm:$0xff]
      %v8101 = vld [vmem:[%s4 + $0x228] sm:$0xff]
      %v8102 = vld [vmem:[%s4 + $0x230] sm:$0xff]
      %v8103 = vld [vmem:[%s4 + $0x238] sm:$0xff]
      %v8104 = vld [vmem:[%s4 + $0x240] sm:$0xff]
      %v8105 = vld [vmem:[%s4 + $0x248] sm:$0xff]
      %v8106 = vld [vmem:[%s4 + $0x250] sm:$0xff]
      %v8107 = vld [vmem:[%s5] sm:$0x3]
      %v8109 = vlaneseq
      %v8110 = vshrl.u32 %v8109, 7
      %v8111 = vsub.s32 0, %v8110
      %v8112 = vrot.slane %v8107, %v8111
      %v8113 = vlaneseq
      %v8114 = vshrl.u32 %v8113, 7
      %v8115 = vsub.s32 1, %v8114
      %v8116 = vrot.slane %v8107, %v8115
      %v8194 = vunpack.c.l.b16 %v8032
      %v8195 = vunpack.c.h.b16 %v8032
      %v8196 = vunpack.c.l.b16 %v8033
      %v8197 = vunpack.c.h.b16 %v8033
      %v8198 = vunpack.c.l.b16 %v8034
      %v8199 = vunpack.c.h.b16 %v8034
      %v8200 = vunpack.c.l.b16 %v8035
      %v8201 = vunpack.c.h.b16 %v8035
      %v8202 = vunpack.c.l.b16 %v8036
      %v8203 = vunpack.c.h.b16 %v8036
      %v8204 = vunpack.c.l.b16 %v8037
      %v8205 = vunpack.c.h.b16 %v8037
      %v8206 = vunpack.c.l.b16 %v8038
      %v8207 = vunpack.c.h.b16 %v8038
      %v8208 = vunpack.c.l.b16 %v8039
      %v8209 = vunpack.c.h.b16 %v8039
      %v8210 = vunpack.c.l.b16 %v8040
      %v8211 = vunpack.c.h.b16 %v8040
      %v8212 = vunpack.c.l.b16 %v8041
      %v8213 = vunpack.c.h.b16 %v8041
      %v8214 = vunpack.c.l.b16 %v8042
      %v8215 = vunpack.c.h.b16 %v8042
      %v8216 = vunpack.c.l.b16 %v8043
      %v8217 = vunpack.c.h.b16 %v8043
      %v8218 = vunpack.c.l.b16 %v8044
      %v8219 = vunpack.c.h.b16 %v8044
      %v8220 = vunpack.c.l.b16 %v8045
      %v8221 = vunpack.c.h.b16 %v8045
      %v8222 = vunpack.c.l.b16 %v8046
      %v8223 = vunpack.c.h.b16 %v8046
      %v8224 = vunpack.c.l.b16 %v8047
      %v8225 = vunpack.c.h.b16 %v8047
      %v8226 = vunpack.c.l.b16 %v8048
      %v8227 = vunpack.c.h.b16 %v8048
      %v8228 = vunpack.c.l.b16 %v8049
      %v8229 = vunpack.c.h.b16 %v8049
      %v8230 = vunpack.c.l.b16 %v8050
      %v8231 = vunpack.c.h.b16 %v8050
      %v8232 = vunpack.c.l.b16 %v8051
      %v8233 = vunpack.c.h.b16 %v8051
      %v8234 = vunpack.c.l.b16 %v8052
      %v8235 = vunpack.c.h.b16 %v8052
      %v8236 = vunpack.c.l.b16 %v8053
      %v8237 = vunpack.c.h.b16 %v8053
      %v8238 = vunpack.c.l.b16 %v8054
      %v8239 = vunpack.c.h.b16 %v8054
      %v8240 = vunpack.c.l.b16 %v8055
      %v8241 = vunpack.c.h.b16 %v8055
      %v8242 = vunpack.c.l.b16 %v8056
      %v8243 = vunpack.c.h.b16 %v8056
      %v8244 = vunpack.c.l.b16 %v8057
      %v8245 = vunpack.c.h.b16 %v8057
      %v8246 = vunpack.c.l.b16 %v8058
      %v8247 = vunpack.c.h.b16 %v8058
      %v8248 = vunpack.c.l.b16 %v8059
      %v8249 = vunpack.c.h.b16 %v8059
      %v8250 = vunpack.c.l.b16 %v8060
      %v8251 = vunpack.c.h.b16 %v8060
      %v8252 = vunpack.c.l.b16 %v8061
      %v8253 = vunpack.c.h.b16 %v8061
      %v8254 = vunpack.c.l.b16 %v8062
      %v8255 = vunpack.c.h.b16 %v8062
      %v8256 = vunpack.c.l.b16 %v8063
      %v8257 = vunpack.c.h.b16 %v8063
      %v8258 = vunpack.c.l.b16 %v8064
      %v8259 = vunpack.c.h.b16 %v8064
      %v8260 = vunpack.c.l.b16 %v8065
      %v8261 = vunpack.c.h.b16 %v8065
      %v8262 = vunpack.c.l.b16 %v8066
      %v8263 = vunpack.c.h.b16 %v8066
      %v8264 = vunpack.c.l.b16 %v8067
      %v8265 = vunpack.c.h.b16 %v8067
      %v8266 = vunpack.c.l.b16 %v8068
      %v8267 = vunpack.c.h.b16 %v8068
      %v8268 = vunpack.c.l.b16 %v8069
      %v8269 = vunpack.c.h.b16 %v8069
      %v8270 = vunpack.c.l.b16 %v8070
      %v8271 = vunpack.c.h.b16 %v8070
      %v8272 = vunpack.c.l.b16 %v8071
      %v8273 = vunpack.c.h.b16 %v8071
      %v8274 = vunpack.c.l.b16 %v8072
      %v8275 = vunpack.c.h.b16 %v8072
      %v8276 = vunpack.c.l.b16 %v8073
      %v8277 = vunpack.c.h.b16 %v8073
      %v8278 = vunpack.c.l.b16 %v8074
      %v8279 = vunpack.c.h.b16 %v8074
      %v8280 = vunpack.c.l.b16 %v8075
      %v8281 = vunpack.c.h.b16 %v8075
      %v8282 = vunpack.c.l.b16 %v8076
      %v8283 = vunpack.c.h.b16 %v8076
      %v8284 = vunpack.c.l.b16 %v8077
      %v8285 = vunpack.c.h.b16 %v8077
      %v8286 = vunpack.c.l.b16 %v8078
      %v8287 = vunpack.c.h.b16 %v8078
      %v8288 = vunpack.c.l.b16 %v8079
      %v8289 = vunpack.c.h.b16 %v8079
      %v8290 = vunpack.c.l.b16 %v8080
      %v8291 = vunpack.c.h.b16 %v8080
      %v8292 = vunpack.c.l.b16 %v8081
      %v8293 = vunpack.c.h.b16 %v8081
      %v8294 = vunpack.c.l.b16 %v8082
      %v8295 = vunpack.c.h.b16 %v8082
      %v8296 = vunpack.c.l.b16 %v8083
      %v8297 = vunpack.c.h.b16 %v8083
      %v8298 = vunpack.c.l.b16 %v8084
      %v8299 = vunpack.c.h.b16 %v8084
      %v8300 = vunpack.c.l.b16 %v8085
      %v8301 = vunpack.c.h.b16 %v8085
      %v8302 = vunpack.c.l.b16 %v8086
      %v8303 = vunpack.c.h.b16 %v8086
      %v8304 = vunpack.c.l.b16 %v8087
      %v8305 = vunpack.c.h.b16 %v8087
      %v8306 = vunpack.c.l.b16 %v8088
      %v8307 = vunpack.c.h.b16 %v8088
      %v8308 = vunpack.c.l.b16 %v8089
      %v8309 = vunpack.c.h.b16 %v8089
      %v8310 = vunpack.c.l.b16 %v8090
      %v8311 = vunpack.c.h.b16 %v8090
      %v8312 = vunpack.c.l.b16 %v8091
      %v8313 = vunpack.c.h.b16 %v8091
      %v8314 = vunpack.c.l.b16 %v8092
      %v8315 = vunpack.c.h.b16 %v8092
      %v8316 = vunpack.c.l.b16 %v8093
      %v8317 = vunpack.c.h.b16 %v8093
      %v8318 = vunpack.c.l.b16 %v8094
      %v8319 = vunpack.c.h.b16 %v8094
      %v8320 = vunpack.c.l.b16 %v8095
      %v8321 = vunpack.c.h.b16 %v8095
      %v8322 = vunpack.c.l.b16 %v8096
      %v8323 = vunpack.c.h.b16 %v8096
      %v8324 = vunpack.c.l.b16 %v8097
      %v8325 = vunpack.c.h.b16 %v8097
      %v8326 = vunpack.c.l.b16 %v8098
      %v8327 = vunpack.c.h.b16 %v8098
      %v8328 = vunpack.c.l.b16 %v8099
      %v8329 = vunpack.c.h.b16 %v8099
      %v8330 = vunpack.c.l.b16 %v8100
      %v8331 = vunpack.c.h.b16 %v8100
      %v8332 = vunpack.c.l.b16 %v8101
      %v8333 = vunpack.c.h.b16 %v8101
      %v8334 = vunpack.c.l.b16 %v8102
      %v8335 = vunpack.c.h.b16 %v8102
      %v8336 = vunpack.c.l.b16 %v8103
      %v8337 = vunpack.c.h.b16 %v8103
      %v8338 = vunpack.c.l.b16 %v8104
      %v8339 = vunpack.c.h.b16 %v8104
      %v8340 = vunpack.c.l.b16 %v8105
      %v8341 = vunpack.c.h.b16 %v8105
      %v8342 = vunpack.c.l.b16 %v8106
      %v8343 = vunpack.c.h.b16 %v8106
      %v8344 = vpack.c.b16 %v8196, %v8194
      %v8345 = vpack.c.b16 %v8197, %v8195
      %v8346 = vpack.c.b16 %v8200, %v8198
      %v8347 = vpack.c.b16 %v8201, %v8199
      %v8348 = vpack.c.b16 %v8204, %v8202
      %v8349 = vpack.c.b16 %v8205, %v8203
      %v8350 = vpack.c.b16 %v8208, %v8206
      %v8351 = vpack.c.b16 %v8209, %v8207
      %v8352 = vpack.c.b16 %v8212, %v8210
      %v8353 = vpack.c.b16 %v8213, %v8211
      %v8354 = vpack.c.b16 %v8216, %v8214
      %v8355 = vpack.c.b16 %v8217, %v8215
      %v8356 = vpack.c.b16 %v8220, %v8218
      %v8357 = vpack.c.b16 %v8221, %v8219
      %v8358 = vpack.c.b16 %v8224, %v8222
      %v8359 = vpack.c.b16 %v8225, %v8223
      %v8360 = vpack.c.b16 %v8228, %v8226
      %v8361 = vpack.c.b16 %v8229, %v8227
      %v8362 = vpack.c.b16 %v8232, %v8230
      %v8363 = vpack.c.b16 %v8233, %v8231
      %v8364 = vpack.c.b16 %v8236, %v8234
      %v8365 = vpack.c.b16 %v8237, %v8235
      %v8366 = vpack.c.b16 %v8240, %v8238
      %v8367 = vpack.c.b16 %v8241, %v8239
      %v8368 = vpack.c.b16 %v8244, %v8242
      %v8369 = vpack.c.b16 %v8245, %v8243
      %v8370 = vpack.c.b16 %v8248, %v8246
      %v8371 = vpack.c.b16 %v8249, %v8247
      %v8372 = vpack.c.b16 %v8252, %v8250
      %v8373 = vpack.c.b16 %v8253, %v8251
      %v8374 = vpack.c.b16 %v8256, %v8254
      %v8375 = vpack.c.b16 %v8257, %v8255
      %v8376 = vpack.c.b16 %v8260, %v8258
      %v8377 = vpack.c.b16 %v8261, %v8259
      %v8378 = vpack.c.b16 %v8264, %v8262
      %v8379 = vpack.c.b16 %v8265, %v8263
      %v8380 = vpack.c.b16 %v8268, %v8266
      %v8381 = vpack.c.b16 %v8269, %v8267
      %v8382 = vpack.c.b16 %v8272, %v8270
      %v8383 = vpack.c.b16 %v8273, %v8271
      %v8384 = vpack.c.b16 %v8276, %v8274
      %v8385 = vpack.c.b16 %v8277, %v8275
      %v8386 = vpack.c.b16 %v8280, %v8278
      %v8387 = vpack.c.b16 %v8281, %v8279
      %v8388 = vpack.c.b16 %v8284, %v8282
      %v8389 = vpack.c.b16 %v8285, %v8283
      %v8390 = vpack.c.b16 %v8288, %v8286
      %v8391 = vpack.c.b16 %v8289, %v8287
      %v8392 = vpack.c.b16 %v8292, %v8290
      %v8393 = vpack.c.b16 %v8293, %v8291
      %v8394 = vpack.c.b16 %v8296, %v8294
      %v8395 = vpack.c.b16 %v8297, %v8295
      %v8396 = vpack.c.b16 %v8300, %v8298
      %v8397 = vpack.c.b16 %v8301, %v8299
      %v8398 = vpack.c.b16 %v8304, %v8302
      %v8399 = vpack.c.b16 %v8305, %v8303
      %v8400 = vpack.c.b16 %v8308, %v8306
      %v8401 = vpack.c.b16 %v8309, %v8307
      %v8402 = vpack.c.b16 %v8312, %v8310
      %v8403 = vpack.c.b16 %v8313, %v8311
      %v8404 = vpack.c.b16 %v8316, %v8314
      %v8405 = vpack.c.b16 %v8317, %v8315
      %v8406 = vpack.c.b16 %v8320, %v8318
      %v8407 = vpack.c.b16 %v8321, %v8319
      %v8408 = vpack.c.b16 %v8324, %v8322
      %v8409 = vpack.c.b16 %v8325, %v8323
      %v8410 = vpack.c.b16 %v8328, %v8326
      %v8411 = vpack.c.b16 %v8329, %v8327
      %v8412 = vpack.c.b16 %v8332, %v8330
      %v8413 = vpack.c.b16 %v8333, %v8331
      %v8414 = vpack.c.b16 %v8336, %v8334
      %v8415 = vpack.c.b16 %v8337, %v8335
      %v8416 = vpack.c.b16 %v8340, %v8338
      %v8417 = vpack.c.b16 %v8341, %v8339
      %v8418 = vpack.c.b16 %v8342, %v8342
      %v8419 = vpack.c.b16 %v8343, %v8343
      %vm8494 = vcmask 719872
      %v8495 = vsel %vm8494, %v7550, 0
      %v8497 = vsel %vm8494, %v7552, 0
      %v8499 = vsel %vm8494, %v7554, 0
      %v8501 = vsel %vm8494, %v7556, 0
      %v8503 = vsel %vm8494, %v7558, 0
      %v8505 = vsel %vm8494, %v7560, 0
      %v8507 = vsel %vm8494, %v7562, 0
      %v8509 = vsel %vm8494, %v7564, 0
      %v8511 = vsel %vm8494, %v7566, 0
      %v8513 = vsel %vm8494, %v7568, 0
      %v8515 = vsel %vm8494, %v7570, 0
      %v8517 = vsel %vm8494, %v7572, 0
      %v8519 = vsel %vm8494, %v7574, 0
      %v8521 = vsel %vm8494, %v7576, 0
      %v8523 = vsel %vm8494, %v7578, 0
      %v8525 = vsel %vm8494, %v7580, 0
      %v8527 = vsel %vm8494, %v7582, 0
      %v8529 = vsel %vm8494, %v7584, 0
      %v8531 = vsel %vm8494, %v7586, 0
      %v8533 = vsel %vm8494, %v7588, 0
      %v8535 = vsel %vm8494, %v7590, 0
      %v8537 = vsel %vm8494, %v7592, 0
      %v8539 = vsel %vm8494, %v7594, 0
      %v8541 = vsel %vm8494, %v7596, 0
      %v8543 = vsel %vm8494, %v7598, 0
      %v8545 = vsel %vm8494, %v7600, 0
      %v8547 = vsel %vm8494, %v7602, 0
      %v8549 = vsel %vm8494, %v7604, 0
      %v8551 = vsel %vm8494, %v7606, 0
      %v8553 = vsel %vm8494, %v7608, 0
      %v8555 = vsel %vm8494, %v7610, 0
      %v8557 = vsel %vm8494, %v7612, 0
      %vm8559 = vcmask 1043456
      %v8561 = vsel %vm8559, %v8418, 0
      %v8564 = vsel %vm8559, %v8419, 0
      %8566 = vmatprep.subr.bf16.mxu0 %v8345
      %8567 = vmatpush1.bf16.msra.mxu0 %v8344
      %8568 = vmatprep.subr.bf16.mxu0 %v8347
      %8569 = vmatpush1.bf16.msra.mxu0 %v8346
      %8570 = vmatprep.subr.bf16.mxu0 %v8349
      %8571 = vmatpush1.bf16.msra.mxu0 %v8348
      %8572 = vmatprep.subr.bf16.mxu0 %v8351
      %8573 = vmatpush1.bf16.msra.mxu0 %v8350
      %8574 = vmatprep.subr.bf16.mxu0 %v8353
      %8575 = vmatpush1.bf16.msra.mxu0 %v8352
      %8576 = vmatprep.subr.bf16.mxu0 %v8355
      %8577 = vmatpush1.bf16.msra.mxu0 %v8354
      %8578 = vmatprep.subr.bf16.mxu0 %v8357
      %8579 = vmatpush1.bf16.msra.mxu0 %v8356
      %8580 = vmatprep.subr.bf16.mxu0 %v8359
      %8581 = vmatpush1.bf16.msra.mxu0 %v8358
      %8582 = vmatprep.subr.bf16.mxu0 %v8361
      %8583 = vmatpush1.bf16.msra.mxu0 %v8360
      %8584 = vmatprep.subr.bf16.mxu0 %v8363
      %8585 = vmatpush1.bf16.msra.mxu0 %v8362
      %8586 = vmatprep.subr.bf16.mxu0 %v8365
      %8587 = vmatpush1.bf16.msra.mxu0 %v8364
      %8588 = vmatprep.subr.bf16.mxu0 %v8367
      %8589 = vmatpush1.bf16.msra.mxu0 %v8366
      %8590 = vmatprep.subr.bf16.mxu0 %v8369
      %8591 = vmatpush1.bf16.msra.mxu0 %v8368
      %8592 = vmatprep.subr.bf16.mxu0 %v8371
      %8593 = vmatpush1.bf16.msra.mxu0 %v8370
      %8594 = vmatprep.subr.bf16.mxu0 %v8373
      %8595 = vmatpush1.bf16.msra.mxu0 %v8372
      %8596 = vmatprep.subr.bf16.mxu0 %v8375
      %8597 = vmatpush1.bf16.msra.mxu0 %v8374
      %8598 = vmatprep.mubr.bf16.mxu0 %v7743
      %8599 = vmatmul.mubr.bf16.gmra.mrb[0].mxu0 %v7616
      %v8600 = vpop.f32.mrb[0].mxu0
      %v8601 = vadd.f32 %v8112, %v8600
      %v8602 = vpop.f32.mrb[0].mxu0
      %v8603 = vadd.f32 %v8116, %v8602
      %v8604 = vpop.f32.mrb[0].mxu0
      %v8605 = vadd.f32 %v8112, %v8604
      %v8606 = vpop.f32.mrb[0].mxu0
      %v8607 = vadd.f32 %v8116, %v8606
      %8608 = vmatprep.mubr.bf16.mxu0 %v7746
      %8609 = vmatmul.mubr.bf16.gmra.mrb[0].mxu0 %v7620
      %v8610 = vpop.f32.mrb[0].mxu0
      %v8611 = vadd.f32 %v8112, %v8610
      %v8612 = vpop.f32.mrb[0].mxu0
      %v8613 = vadd.f32 %v8116, %v8612
      %v8614 = vpop.f32.mrb[0].mxu0
      %v8615 = vadd.f32 %v8112, %v8614
      %v8616 = vpop.f32.mrb[0].mxu0
      %v8617 = vadd.f32 %v8116, %v8616
      %8618 = vmatprep.mubr.bf16.mxu0 %v7749
      %8619 = vmatmul.mubr.bf16.gmra.mrb[0].mxu0 %v7624
      %v8620 = vpop.f32.mrb[0].mxu0
      %v8621 = vadd.f32 %v8112, %v8620
      %v8622 = vpop.f32.mrb[0].mxu0
      %v8623 = vadd.f32 %v8116, %v8622
      %v8624 = vpop.f32.mrb[0].mxu0
      %v8625 = vadd.f32 %v8112, %v8624
      %v8626 = vpop.f32.mrb[0].mxu0
      %v8627 = vadd.f32 %v8116, %v8626
      %8628 = vmatprep.mubr.bf16.mxu0 %v7752
      %8629 = vmatmul.mubr.bf16.gmra.mrb[0].mxu0 %v7628
      %v8630 = vpop.f32.mrb[0].mxu0
      %v8631 = vadd.f32 %v8112, %v8630
      %v8632 = vpop.f32.mrb[0].mxu0
      %v8633 = vadd.f32 %v8116, %v8632
      %v8634 = vpop.f32.mrb[0].mxu0
      %v8635 = vadd.f32 %v8112, %v8634
      %v8636 = vpop.f32.mrb[0].mxu0
      %v8637 = vadd.f32 %v8116, %v8636
      %8638 = vmatprep.mubr.bf16.mxu0 %v7755
      %8639 = vmatmul.mubr.bf16.gmra.mrb[0].mxu0 %v7632
      %v8640 = vpop.f32.mrb[0].mxu0
      %v8641 = vadd.f32 %v8112, %v8640
      %v8642 = vpop.f32.mrb[0].mxu0
      %v8643 = vadd.f32 %v8116, %v8642
      %v8644 = vpop.f32.mrb[0].mxu0
      %v8645 = vadd.f32 %v8112, %v8644
      %v8646 = vpop.f32.mrb[0].mxu0
      %v8647 = vadd.f32 %v8116, %v8646
      %8648 = vmatprep.mubr.bf16.mxu0 %v7758
      %8649 = vmatmul.mubr.bf16.gmra.mrb[0].mxu0 %v7636
      %v8650 = vpop.f32.mrb[0].mxu0
      %v8651 = vadd.f32 %v8112, %v8650
      %v8652 = vpop.f32.mrb[0].mxu0
      %v8653 = vadd.f32 %v8116, %v8652
      %v8654 = vpop.f32.mrb[0].mxu0
      %v8655 = vadd.f32 %v8112, %v8654
      %v8656 = vpop.f32.mrb[0].mxu0
      %v8657 = vadd.f32 %v8116, %v8656
      %8658 = vmatprep.mubr.bf16.mxu0 %v7761
      %8659 = vmatmul.mubr.bf16.gmra.mrb[0].mxu0 %v7640
      %v8660 = vpop.f32.mrb[0].mxu0
      %v8661 = vadd.f32 %v8112, %v8660
      %v8662 = vpop.f32.mrb[0].mxu0
      %v8663 = vadd.f32 %v8116, %v8662
      %v8664 = vpop.f32.mrb[0].mxu0
      %v8665 = vadd.f32 %v8112, %v8664
      %v8666 = vpop.f32.mrb[0].mxu0
      %v8667 = vadd.f32 %v8116, %v8666
      %8668 = vmatprep.mubr.bf16.mxu0 %v7764
      %8669 = vmatmul.mubr.bf16.gmra.mrb[0].mxu0 %v7644
      %v8670 = vpop.f32.mrb[0].mxu0
      %v8671 = vadd.f32 %v8112, %v8670
      %v8672 = vpop.f32.mrb[0].mxu0
      %v8673 = vadd.f32 %v8116, %v8672
      %v8674 = vpop.f32.mrb[0].mxu0
      %v8675 = vadd.f32 %v8112, %v8674
      %v8676 = vpop.f32.mrb[0].mxu0
      %v8677 = vadd.f32 %v8116, %v8676
      %8678 = vmatprep.mubr.bf16.mxu0 %v7767
      %8679 = vmatmul.mubr.bf16.gmra.mrb[0].mxu0 %v7648
      %v8680 = vpop.f32.mrb[0].mxu0
      %v8681 = vadd.f32 %v8112, %v8680
      %v8682 = vpop.f32.mrb[0].mxu0
      %v8683 = vadd.f32 %v8116, %v8682
      %v8684 = vpop.f32.mrb[0].mxu0
      %v8685 = vadd.f32 %v8112, %v8684
      %v8686 = vpop.f32.mrb[0].mxu0
      %v8687 = vadd.f32 %v8116, %v8686
      %8688 = vmatprep.mubr.bf16.mxu0 %v7770
      %8689 = vmatmul.mubr.bf16.gmra.mrb[0].mxu0 %v7652
      %v8690 = vpop.f32.mrb[0].mxu0
      %v8691 = vadd.f32 %v8112, %v8690
      %v8692 = vpop.f32.mrb[0].mxu0
      %v8693 = vadd.f32 %v8116, %v8692
      %v8694 = vpop.f32.mrb[0].mxu0
      %v8695 = vadd.f32 %v8112, %v8694
      %v8696 = vpop.f32.mrb[0].mxu0
      %v8697 = vadd.f32 %v8116, %v8696
      %8698 = vmatprep.mubr.bf16.mxu0 %v7773
      %8699 = vmatmul.mubr.bf16.gmra.mrb[0].mxu0 %v7656
      %v8700 = vpop.f32.mrb[0].mxu0
      %v8701 = vadd.f32 %v8112, %v8700
      %v8702 = vpop.f32.mrb[0].mxu0
      %v8703 = vadd.f32 %v8116, %v8702
      %v8704 = vpop.f32.mrb[0].mxu0
      %v8705 = vadd.f32 %v8112, %v8704
      %v8706 = vpop.f32.mrb[0].mxu0
      %v8707 = vadd.f32 %v8116, %v8706
      %8708 = vmatprep.mubr.bf16.mxu0 %v7776
      %8709 = vmatmul.mubr.bf16.gmra.mrb[0].mxu0 %v7660
      %v8710 = vpop.f32.mrb[0].mxu0
      %v8711 = vadd.f32 %v8112, %v8710
      %v8712 = vpop.f32.mrb[0].mxu0
      %v8713 = vadd.f32 %v8116, %v8712
      %v8714 = vpop.f32.mrb[0].mxu0
      %v8715 = vadd.f32 %v8112, %v8714
      %v8716 = vpop.f32.mrb[0].mxu0
      %v8717 = vadd.f32 %v8116, %v8716
      %8718 = vmatprep.mubr.bf16.mxu0 %v7779
      %8719 = vmatmul.mubr.bf16.gmra.mrb[0].mxu0 %v7664
      %v8720 = vpop.f32.mrb[0].mxu0
      %v8721 = vadd.f32 %v8112, %v8720
      %v8722 = vpop.f32.mrb[0].mxu0
      %v8723 = vadd.f32 %v8116, %v8722
      %v8724 = vpop.f32.mrb[0].mxu0
      %v8725 = vadd.f32 %v8112, %v8724
      %v8726 = vpop.f32.mrb[0].mxu0
      %v8727 = vadd.f32 %v8116, %v8726
      %8728 = vmatprep.mubr.bf16.mxu0 %v7782
      %8729 = vmatmul.mubr.bf16.gmra.mrb[0].mxu0 %v7668
      %v8730 = vpop.f32.mrb[0].mxu0
      %v8731 = vadd.f32 %v8112, %v8730
      %v8732 = vpop.f32.mrb[0].mxu0
      %v8733 = vadd.f32 %v8116, %v8732
      %v8734 = vpop.f32.mrb[0].mxu0
      %v8735 = vadd.f32 %v8112, %v8734
      %v8736 = vpop.f32.mrb[0].mxu0
      %v8737 = vadd.f32 %v8116, %v8736
      %8738 = vmatprep.mubr.bf16.mxu0 %v7785
      %8739 = vmatmul.mubr.bf16.gmra.mrb[0].mxu0 %v7672
      %v8740 = vpop.f32.mrb[0].mxu0
      %v8741 = vadd.f32 %v8112, %v8740
      %v8742 = vpop.f32.mrb[0].mxu0
      %v8743 = vadd.f32 %v8116, %v8742
      %v8744 = vpop.f32.mrb[0].mxu0
      %v8745 = vadd.f32 %v8112, %v8744
      %v8746 = vpop.f32.mrb[0].mxu0
      %v8747 = vadd.f32 %v8116, %v8746
      %8748 = vmatprep.mubr.bf16.mxu0 %v7788
      %8749 = vmatmul.mubr.bf16.gmra.mrb[0].mxu0 %v7676
      %v8750 = vpop.f32.mrb[0].mxu0
      %v8751 = vadd.f32 %v8112, %v8750
      %v8752 = vpop.f32.mrb[0].mxu0
      %v8753 = vadd.f32 %v8116, %v8752
      %v8754 = vpop.f32.mrb[0].mxu0
      %v8755 = vadd.f32 %v8112, %v8754
      %v8756 = vpop.f32.mrb[0].mxu0
      %v8757 = vadd.f32 %v8116, %v8756
      %8758 = vmatprep.mubr.bf16.mxu0 %v7791
      %8759 = vmatmul.mubr.bf16.gmra.mrb[0].mxu0 %v7680
      %v8760 = vpop.f32.mrb[0].mxu0
      %v8761 = vadd.f32 %v8112, %v8760
      %v8762 = vpop.f32.mrb[0].mxu0
      %v8763 = vadd.f32 %v8116, %v8762
      %v8764 = vpop.f32.mrb[0].mxu0
      %v8765 = vadd.f32 %v8112, %v8764
      %v8766 = vpop.f32.mrb[0].mxu0
      %v8767 = vadd.f32 %v8116, %v8766
      %8768 = vmatprep.mubr.bf16.mxu0 %v7794
      %8769 = vmatmul.mubr.bf16.gmra.mrb[0].mxu0 %v7684
      %v8770 = vpop.f32.mrb[0].mxu0
      %v8771 = vadd.f32 %v8112, %v8770
      %v8772 = vpop.f32.mrb[0].mxu0
      %v8773 = vadd.f32 %v8116, %v8772
      %v8774 = vpop.f32.mrb[0].mxu0
      %v8775 = vadd.f32 %v8112, %v8774
      %v8776 = vpop.f32.mrb[0].mxu0
      %v8777 = vadd.f32 %v8116, %v8776
      %8778 = vmatprep.mubr.bf16.mxu0 %v7797
      %8779 = vmatmul.mubr.bf16.gmra.mrb[0].mxu0 %v7688
      %v8780 = vpop.f32.mrb[0].mxu0
      %v8781 = vadd.f32 %v8112, %v8780
      %v8782 = vpop.f32.mrb[0].mxu0
      %v8783 = vadd.f32 %v8116, %v8782
      %v8784 = vpop.f32.mrb[0].mxu0
      %v8785 = vadd.f32 %v8112, %v8784
      %v8786 = vpop.f32.mrb[0].mxu0
      %v8787 = vadd.f32 %v8116, %v8786
      %8788 = vmatprep.mubr.bf16.mxu0 %v7800
      %8789 = vmatmul.mubr.bf16.gmra.mrb[0].mxu0 %v7692
      %v8790 = vpop.f32.mrb[0].mxu0
      %v8791 = vadd.f32 %v8112, %v8790
      %v8792 = vpop.f32.mrb[0].mxu0
      %v8793 = vadd.f32 %v8116, %v8792
      %v8794 = vpop.f32.mrb[0].mxu0
      %v8795 = vadd.f32 %v8112, %v8794
      %v8796 = vpop.f32.mrb[0].mxu0
      %v8797 = vadd.f32 %v8116, %v8796
      %8798 = vmatprep.mubr.bf16.mxu0 %v7803
      %8799 = vmatmul.mubr.bf16.gmra.mrb[0].mxu0 %v7696
      %v8800 = vpop.f32.mrb[0].mxu0
      %v8801 = vadd.f32 %v8112, %v8800
      %v8802 = vpop.f32.mrb[0].mxu0
      %v8803 = vadd.f32 %v8116, %v8802
      %v8804 = vpop.f32.mrb[0].mxu0
      %v8805 = vadd.f32 %v8112, %v8804
      %v8806 = vpop.f32.mrb[0].mxu0
      %v8807 = vadd.f32 %v8116, %v8806
      %8808 = vmatprep.mubr.bf16.mxu0 %v7806
      %8809 = vmatmul.mubr.bf16.gmra.mrb[0].mxu0 %v7700
      %v8810 = vpop.f32.mrb[0].mxu0
      %v8811 = vadd.f32 %v8112, %v8810
      %v8812 = vpop.f32.mrb[0].mxu0
      %v8813 = vadd.f32 %v8116, %v8812
      %v8814 = vpop.f32.mrb[0].mxu0
      %v8815 = vadd.f32 %v8112, %v8814
      %v8816 = vpop.f32.mrb[0].mxu0
      %v8817 = vadd.f32 %v8116, %v8816
      %8818 = vmatprep.mubr.bf16.mxu0 %v7809
      %8819 = vmatmul.mubr.bf16.gmra.mrb[0].mxu0 %v7704
      %v8820 = vpop.f32.mrb[0].mxu0
      %v8821 = vadd.f32 %v8112, %v8820
      %v8822 = vpop.f32.mrb[0].mxu0
      %v8823 = vadd.f32 %v8116, %v8822
      %v8824 = vpop.f32.mrb[0].mxu0
      %v8825 = vadd.f32 %v8112, %v8824
      %v8826 = vpop.f32.mrb[0].mxu0
      %v8827 = vadd.f32 %v8116, %v8826
      %8828 = vmatprep.mubr.bf16.mxu0 %v7812
      %8829 = vmatmul.mubr.bf16.gmra.mrb[0].mxu0 %v7708
      %v8830 = vpop.f32.mrb[0].mxu0
      %v8831 = vadd.f32 %v8112, %v8830
      %v8832 = vpop.f32.mrb[0].mxu0
      %v8833 = vadd.f32 %v8116, %v8832
      %v8834 = vpop.f32.mrb[0].mxu0
      %v8835 = vadd.f32 %v8112, %v8834
      %v8836 = vpop.f32.mrb[0].mxu0
      %v8837 = vadd.f32 %v8116, %v8836
      %8838 = vmatprep.mubr.bf16.mxu0 %v7815
      %8839 = vmatmul.mubr.bf16.gmra.mrb[0].mxu0 %v7712
      %v8840 = vpop.f32.mrb[0].mxu0
      %v8841 = vadd.f32 %v8112, %v8840
      %v8842 = vpop.f32.mrb[0].mxu0
      %v8843 = vadd.f32 %v8116, %v8842
      %v8844 = vpop.f32.mrb[0].mxu0
      %v8845 = vadd.f32 %v8112, %v8844
      %v8846 = vpop.f32.mrb[0].mxu0
      %v8847 = vadd.f32 %v8116, %v8846
      %8848 = vmatprep.mubr.bf16.mxu0 %v7818
      %8849 = vmatmul.mubr.bf16.gmra.mrb[0].mxu0 %v7716
      %v8850 = vpop.f32.mrb[0].mxu0
      %v8851 = vadd.f32 %v8112, %v8850
      %v8852 = vpop.f32.mrb[0].mxu0
      %v8853 = vadd.f32 %v8116, %v8852
      %v8854 = vpop.f32.mrb[0].mxu0
      %v8855 = vadd.f32 %v8112, %v8854
      %v8856 = vpop.f32.mrb[0].mxu0
      %v8857 = vadd.f32 %v8116, %v8856
      %8858 = vmatprep.mubr.bf16.mxu0 %v7821
      %8859 = vmatmul.mubr.bf16.gmra.mrb[0].mxu0 %v7720
      %v8860 = vpop.f32.mrb[0].mxu0
      %v8861 = vadd.f32 %v8112, %v8860
      %v8862 = vpop.f32.mrb[0].mxu0
      %v8863 = vadd.f32 %v8116, %v8862
      %v8864 = vpop.f32.mrb[0].mxu0
      %v8865 = vadd.f32 %v8112, %v8864
      %v8866 = vpop.f32.mrb[0].mxu0
      %v8867 = vadd.f32 %v8116, %v8866
      %8868 = vmatprep.mubr.bf16.mxu0 %v7824
      %8869 = vmatmul.mubr.bf16.gmra.mrb[0].mxu0 %v7724
      %v8870 = vpop.f32.mrb[0].mxu0
      %v8871 = vadd.f32 %v8112, %v8870
      %v8872 = vpop.f32.mrb[0].mxu0
      %v8873 = vadd.f32 %v8116, %v8872
      %v8874 = vpop.f32.mrb[0].mxu0
      %v8875 = vadd.f32 %v8112, %v8874
      %v8876 = vpop.f32.mrb[0].mxu0
      %v8877 = vadd.f32 %v8116, %v8876
      %8878 = vmatprep.mubr.bf16.mxu0 %v7827
      %8879 = vmatmul.mubr.bf16.gmra.mrb[0].mxu0 %v7728
      %v8880 = vpop.f32.mrb[0].mxu0
      %v8881 = vadd.f32 %v8112, %v8880
      %v8882 = vpop.f32.mrb[0].mxu0
      %v8883 = vadd.f32 %v8116, %v8882
      %v8884 = vpop.f32.mrb[0].mxu0
      %v8885 = vadd.f32 %v8112, %v8884
      %v8886 = vpop.f32.mrb[0].mxu0
      %v8887 = vadd.f32 %v8116, %v8886
      %8888 = vmatprep.mubr.bf16.mxu0 %v7830
      %8889 = vmatmul.mubr.bf16.gmra.mrb[0].mxu0 %v7732
      %v8890 = vpop.f32.mrb[0].mxu0
      %v8891 = vadd.f32 %v8112, %v8890
      %v8892 = vpop.f32.mrb[0].mxu0
      %v8893 = vadd.f32 %v8116, %v8892
      %v8894 = vpop.f32.mrb[0].mxu0
      %v8895 = vadd.f32 %v8112, %v8894
      %v8896 = vpop.f32.mrb[0].mxu0
      %v8897 = vadd.f32 %v8116, %v8896
      %8898 = vmatprep.mubr.bf16.mxu0 %v7833
      %8899 = vmatmul.mubr.bf16.gmra.mrb[0].mxu0 %v7736
      %v8900 = vpop.f32.mrb[0].mxu0
      %v8901 = vadd.f32 %v8112, %v8900
      %v8902 = vpop.f32.mrb[0].mxu0
      %v8903 = vadd.f32 %v8116, %v8902
      %v8904 = vpop.f32.mrb[0].mxu0
      %v8905 = vadd.f32 %v8112, %v8904
      %v8906 = vpop.f32.mrb[0].mxu0
      %v8907 = vadd.f32 %v8116, %v8906
      %8908 = vmatprep.mubr.bf16.mxu0 %v7836
      %8909 = vmatmul.mubr.bf16.gmra.mrb[0].mxu0 %v7740
      %v8910 = vpop.f32.mrb[0].mxu0
      %v8911 = vadd.f32 %v8112, %v8910
      %v8912 = vpop.f32.mrb[0].mxu0
      %v8913 = vadd.f32 %v8116, %v8912
      %v8914 = vpop.f32.mrb[0].mxu0
      %v8915 = vadd.f32 %v8112, %v8914
      %v8916 = vpop.f32.mrb[0].mxu0
      %v8917 = vadd.f32 %v8116, %v8916
      %8918 = vdwg.mxu0
      %8919 = vmatprep.subr.bf16.mxu0 %v8377
      %8920 = vmatpush1.bf16.msra.mxu0 %v8376
      %8921 = vmatprep.subr.bf16.mxu0 %v8379
      %8922 = vmatpush1.bf16.msra.mxu0 %v8378
      %8923 = vmatprep.subr.bf16.mxu0 %v8381
      %8924 = vmatpush1.bf16.msra.mxu0 %v8380
      %8925 = vmatprep.subr.bf16.mxu0 %v8383
      %8926 = vmatpush1.bf16.msra.mxu0 %v8382
      %8927 = vmatprep.subr.bf16.mxu0 %v8385
      %8928 = vmatpush1.bf16.msra.mxu0 %v8384
      %8929 = vmatprep.subr.bf16.mxu0 %v8387
      %8930 = vmatpush1.bf16.msra.mxu0 %v8386
      %8931 = vmatprep.subr.bf16.mxu0 %v8389
      %8932 = vmatpush1.bf16.msra.mxu0 %v8388
      %8933 = vmatprep.subr.bf16.mxu0 %v8391
      %8934 = vmatpush1.bf16.msra.mxu0 %v8390
      %8935 = vmatprep.subr.bf16.mxu0 %v8393
      %8936 = vmatpush1.bf16.msra.mxu0 %v8392
      %8937 = vmatprep.subr.bf16.mxu0 %v8395
      %8938 = vmatpush1.bf16.msra.mxu0 %v8394
      %8939 = vmatprep.subr.bf16.mxu0 %v8397
      %8940 = vmatpush1.bf16.msra.mxu0 %v8396
      %8941 = vmatprep.subr.bf16.mxu0 %v8399
      %8942 = vmatpush1.bf16.msra.mxu0 %v8398
      %8943 = vmatprep.subr.bf16.mxu0 %v8401
      %8944 = vmatpush1.bf16.msra.mxu0 %v8400
      %8945 = vmatprep.subr.bf16.mxu0 %v8403
      %8946 = vmatpush1.bf16.msra.mxu0 %v8402
      %8947 = vmatprep.subr.bf16.mxu0 %v8405
      %8948 = vmatpush1.bf16.msra.mxu0 %v8404
      %8949 = vmatprep.subr.bf16.mxu0 %v8407
      %8950 = vmatpush1.bf16.msra.mxu0 %v8406
      %8951 = vmatprep.mubr.bf16.mxu0 %v7937
      %8952 = vmatmul.mubr.bf16.gmra.mrb[0].mxu0 %v7840
      %v8953 = vpop.f32.mrb[0].mxu0
      %v8954 = vadd.f32 %v8601, %v8953
      %v8955 = vpop.f32.mrb[0].mxu0
      %v8956 = vadd.f32 %v8603, %v8955
      %v8957 = vpop.f32.mrb[0].mxu0
      %v8958 = vadd.f32 %v8605, %v8957
      %v8959 = vpop.f32.mrb[0].mxu0
      %v8960 = vadd.f32 %v8607, %v8959
      %8961 = vmatprep.mubr.bf16.mxu0 %v7940
      %8962 = vmatmul.mubr.bf16.gmra.mrb[0].mxu0 %v7843
      %v8963 = vpop.f32.mrb[0].mxu0
      %v8964 = vadd.f32 %v8611, %v8963
      %v8965 = vpop.f32.mrb[0].mxu0
      %v8966 = vadd.f32 %v8613, %v8965
      %v8967 = vpop.f32.mrb[0].mxu0
      %v8968 = vadd.f32 %v8615, %v8967
      %v8969 = vpop.f32.mrb[0].mxu0
      %v8970 = vadd.f32 %v8617, %v8969
      %8971 = vmatprep.mubr.bf16.mxu0 %v7943
      %8972 = vmatmul.mubr.bf16.gmra.mrb[0].mxu0 %v7846
      %v8973 = vpop.f32.mrb[0].mxu0
      %v8974 = vadd.f32 %v8621, %v8973
      %v8975 = vpop.f32.mrb[0].mxu0
      %v8976 = vadd.f32 %v8623, %v8975
      %v8977 = vpop.f32.mrb[0].mxu0
      %v8978 = vadd.f32 %v8625, %v8977
      %v8979 = vpop.f32.mrb[0].mxu0
      %v8980 = vadd.f32 %v8627, %v8979
      %8981 = vmatprep.mubr.bf16.mxu0 %v7946
      %8982 = vmatmul.mubr.bf16.gmra.mrb[0].mxu0 %v7849
      %v8983 = vpop.f32.mrb[0].mxu0
      %v8984 = vadd.f32 %v8631, %v8983
      %v8985 = vpop.f32.mrb[0].mxu0
      %v8986 = vadd.f32 %v8633, %v8985
      %v8987 = vpop.f32.mrb[0].mxu0
      %v8988 = vadd.f32 %v8635, %v8987
      %v8989 = vpop.f32.mrb[0].mxu0
      %v8990 = vadd.f32 %v8637, %v8989
      %8991 = vmatprep.mubr.bf16.mxu0 %v7949
      %8992 = vmatmul.mubr.bf16.gmra.mrb[0].mxu0 %v7852
      %v8993 = vpop.f32.mrb[0].mxu0
      %v8994 = vadd.f32 %v8641, %v8993
      %v8995 = vpop.f32.mrb[0].mxu0
      %v8996 = vadd.f32 %v8643, %v8995
      %v8997 = vpop.f32.mrb[0].mxu0
      %v8998 = vadd.f32 %v8645, %v8997
      %v8999 = vpop.f32.mrb[0].mxu0
      %v9000 = vadd.f32 %v8647, %v8999
      %9001 = vmatprep.mubr.bf16.mxu0 %v7952
      %9002 = vmatmul.mubr.bf16.gmra.mrb[0].mxu0 %v7855
      %v9003 = vpop.f32.mrb[0].mxu0
      %v9004 = vadd.f32 %v8651, %v9003
      %v9005 = vpop.f32.mrb[0].mxu0
      %v9006 = vadd.f32 %v8653, %v9005
      %v9007 = vpop.f32.mrb[0].mxu0
      %v9008 = vadd.f32 %v8655, %v9007
      %v9009 = vpop.f32.mrb[0].mxu0
      %v9010 = vadd.f32 %v8657, %v9009
      %9011 = vmatprep.mubr.bf16.mxu0 %v7955
      %9012 = vmatmul.mubr.bf16.gmra.mrb[0].mxu0 %v7858
      %v9013 = vpop.f32.mrb[0].mxu0
      %v9014 = vadd.f32 %v8661, %v9013
      %v9015 = vpop.f32.mrb[0].mxu0
      %v9016 = vadd.f32 %v8663, %v9015
      %v9017 = vpop.f32.mrb[0].mxu0
      %v9018 = vadd.f32 %v8665, %v9017
      %v9019 = vpop.f32.mrb[0].mxu0
      %v9020 = vadd.f32 %v8667, %v9019
      %9021 = vmatprep.mubr.bf16.mxu0 %v7958
      %9022 = vmatmul.mubr.bf16.gmra.mrb[0].mxu0 %v7861
      %v9023 = vpop.f32.mrb[0].mxu0
      %v9024 = vadd.f32 %v8671, %v9023
      %v9025 = vpop.f32.mrb[0].mxu0
      %v9026 = vadd.f32 %v8673, %v9025
      %v9027 = vpop.f32.mrb[0].mxu0
      %v9028 = vadd.f32 %v8675, %v9027
      %v9029 = vpop.f32.mrb[0].mxu0
      %v9030 = vadd.f32 %v8677, %v9029
      %9031 = vmatprep.mubr.bf16.mxu0 %v7961
      %9032 = vmatmul.mubr.bf16.gmra.mrb[0].mxu0 %v7864
      %v9033 = vpop.f32.mrb[0].mxu0
      %v9034 = vadd.f32 %v8681, %v9033
      %v9035 = vpop.f32.mrb[0].mxu0
      %v9036 = vadd.f32 %v8683, %v9035
      %v9037 = vpop.f32.mrb[0].mxu0
      %v9038 = vadd.f32 %v8685, %v9037
      %v9039 = vpop.f32.mrb[0].mxu0
      %v9040 = vadd.f32 %v8687, %v9039
      %9041 = vmatprep.mubr.bf16.mxu0 %v7964
      %9042 = vmatmul.mubr.bf16.gmra.mrb[0].mxu0 %v7867
      %v9043 = vpop.f32.mrb[0].mxu0
      %v9044 = vadd.f32 %v8691, %v9043
      %v9045 = vpop.f32.mrb[0].mxu0
      %v9046 = vadd.f32 %v8693, %v9045
      %v9047 = vpop.f32.mrb[0].mxu0
      %v9048 = vadd.f32 %v8695, %v9047
      %v9049 = vpop.f32.mrb[0].mxu0
      %v9050 = vadd.f32 %v8697, %v9049
      %9051 = vmatprep.mubr.bf16.mxu0 %v7967
      %9052 = vmatmul.mubr.bf16.gmra.mrb[0].mxu0 %v7870
      %v9053 = vpop.f32.mrb[0].mxu0
      %v9054 = vadd.f32 %v8701, %v9053
      %v9055 = vpop.f32.mrb[0].mxu0
      %v9056 = vadd.f32 %v8703, %v9055
      %v9057 = vpop.f32.mrb[0].mxu0
      %v9058 = vadd.f32 %v8705, %v9057
      %v9059 = vpop.f32.mrb[0].mxu0
      %v9060 = vadd.f32 %v8707, %v9059
      %9061 = vmatprep.mubr.bf16.mxu0 %v7970
      %9062 = vmatmul.mubr.bf16.gmra.mrb[0].mxu0 %v7873
      %v9063 = vpop.f32.mrb[0].mxu0
      %v9064 = vadd.f32 %v8711, %v9063
      %v9065 = vpop.f32.mrb[0].mxu0
      %v9066 = vadd.f32 %v8713, %v9065
      %v9067 = vpop.f32.mrb[0].mxu0
      %v9068 = vadd.f32 %v8715, %v9067
      %v9069 = vpop.f32.mrb[0].mxu0
      %v9070 = vadd.f32 %v8717, %v9069
      %9071 = vmatprep.mubr.bf16.mxu0 %v7973
      %9072 = vmatmul.mubr.bf16.gmra.mrb[0].mxu0 %v7876
      %v9073 = vpop.f32.mrb[0].mxu0
      %v9074 = vadd.f32 %v8721, %v9073
      %v9075 = vpop.f32.mrb[0].mxu0
      %v9076 = vadd.f32 %v8723, %v9075
      %v9077 = vpop.f32.mrb[0].mxu0
      %v9078 = vadd.f32 %v8725, %v9077
      %v9079 = vpop.f32.mrb[0].mxu0
      %v9080 = vadd.f32 %v8727, %v9079
      %9081 = vmatprep.mubr.bf16.mxu0 %v7976
      %9082 = vmatmul.mubr.bf16.gmra.mrb[0].mxu0 %v7879
      %v9083 = vpop.f32.mrb[0].mxu0
      %v9084 = vadd.f32 %v8731, %v9083
      %v9085 = vpop.f32.mrb[0].mxu0
      %v9086 = vadd.f32 %v8733, %v9085
      %v9087 = vpop.f32.mrb[0].mxu0
      %v9088 = vadd.f32 %v8735, %v9087
      %v9089 = vpop.f32.mrb[0].mxu0
      %v9090 = vadd.f32 %v8737, %v9089
      %9091 = vmatprep.mubr.bf16.mxu0 %v7979
      %9092 = vmatmul.mubr.bf16.gmra.mrb[0].mxu0 %v7882
      %v9093 = vpop.f32.mrb[0].mxu0
      %v9094 = vadd.f32 %v8741, %v9093
      %v9095 = vpop.f32.mrb[0].mxu0
      %v9096 = vadd.f32 %v8743, %v9095
      %v9097 = vpop.f32.mrb[0].mxu0
      %v9098 = vadd.f32 %v8745, %v9097
      %v9099 = vpop.f32.mrb[0].mxu0
      %v9100 = vadd.f32 %v8747, %v9099
      %9101 = vmatprep.mubr.bf16.mxu0 %v7982
      %9102 = vmatmul.mubr.bf16.gmra.mrb[0].mxu0 %v7885
      %v9103 = vpop.f32.mrb[0].mxu0
      %v9104 = vadd.f32 %v8751, %v9103
      %v9105 = vpop.f32.mrb[0].mxu0
      %v9106 = vadd.f32 %v8753, %v9105
      %v9107 = vpop.f32.mrb[0].mxu0
      %v9108 = vadd.f32 %v8755, %v9107
      %v9109 = vpop.f32.mrb[0].mxu0
      %v9110 = vadd.f32 %v8757, %v9109
      %9111 = vmatprep.mubr.bf16.mxu0 %v7985
      %9112 = vmatmul.mubr.bf16.gmra.mrb[0].mxu0 %v7888
      %v9113 = vpop.f32.mrb[0].mxu0
      %v9114 = vadd.f32 %v8761, %v9113
      %v9115 = vpop.f32.mrb[0].mxu0
      %v9116 = vadd.f32 %v8763, %v9115
      %v9117 = vpop.f32.mrb[0].mxu0
      %v9118 = vadd.f32 %v8765, %v9117
      %v9119 = vpop.f32.mrb[0].mxu0
      %v9120 = vadd.f32 %v8767, %v9119
      %9121 = vmatprep.mubr.bf16.mxu0 %v7988
      %9122 = vmatmul.mubr.bf16.gmra.mrb[0].mxu0 %v7891
      %v9123 = vpop.f32.mrb[0].mxu0
      %v9124 = vadd.f32 %v8771, %v9123
      %v9125 = vpop.f32.mrb[0].mxu0
      %v9126 = vadd.f32 %v8773, %v9125
      %v9127 = vpop.f32.mrb[0].mxu0
      %v9128 = vadd.f32 %v8775, %v9127
      %v9129 = vpop.f32.mrb[0].mxu0
      %v9130 = vadd.f32 %v8777, %v9129
      %9131 = vmatprep.mubr.bf16.mxu0 %v7991
      %9132 = vmatmul.mubr.bf16.gmra.mrb[0].mxu0 %v7894
      %v9133 = vpop.f32.mrb[0].mxu0
      %v9134 = vadd.f32 %v8781, %v9133
      %v9135 = vpop.f32.mrb[0].mxu0
      %v9136 = vadd.f32 %v8783, %v9135
      %v9137 = vpop.f32.mrb[0].mxu0
      %v9138 = vadd.f32 %v8785, %v9137
      %v9139 = vpop.f32.mrb[0].mxu0
      %v9140 = vadd.f32 %v8787, %v9139
      %9141 = vmatprep.mubr.bf16.mxu0 %v7994
      %9142 = vmatmul.mubr.bf16.gmra.mrb[0].mxu0 %v7897
      %v9143 = vpop.f32.mrb[0].mxu0
      %v9144 = vadd.f32 %v8791, %v9143
      %v9145 = vpop.f32.mrb[0].mxu0
      %v9146 = vadd.f32 %v8793, %v9145
      %v9147 = vpop.f32.mrb[0].mxu0
      %v9148 = vadd.f32 %v8795, %v9147
      %v9149 = vpop.f32.mrb[0].mxu0
      %v9150 = vadd.f32 %v8797, %v9149
      %9151 = vmatprep.mubr.bf16.mxu0 %v7997
      %9152 = vmatmul.mubr.bf16.gmra.mrb[0].mxu0 %v7900
      %v9153 = vpop.f32.mrb[0].mxu0
      %v9154 = vadd.f32 %v8801, %v9153
      %v9155 = vpop.f32.mrb[0].mxu0
      %v9156 = vadd.f32 %v8803, %v9155
      %v9157 = vpop.f32.mrb[0].mxu0
      %v9158 = vadd.f32 %v8805, %v9157
      %v9159 = vpop.f32.mrb[0].mxu0
      %v9160 = vadd.f32 %v8807, %v9159
      %9161 = vmatprep.mubr.bf16.mxu0 %v8000
      %9162 = vmatmul.mubr.bf16.gmra.mrb[0].mxu0 %v7903
      %v9163 = vpop.f32.mrb[0].mxu0
      %v9164 = vadd.f32 %v8811, %v9163
      %v9165 = vpop.f32.mrb[0].mxu0
      %v9166 = vadd.f32 %v8813, %v9165
      %v9167 = vpop.f32.mrb[0].mxu0
      %v9168 = vadd.f32 %v8815, %v9167
      %v9169 = vpop.f32.mrb[0].mxu0
      %v9170 = vadd.f32 %v8817, %v9169
      %9171 = vmatprep.mubr.bf16.mxu0 %v8003
      %9172 = vmatmul.mubr.bf16.gmra.mrb[0].mxu0 %v7906
      %v9173 = vpop.f32.mrb[0].mxu0
      %v9174 = vadd.f32 %v8821, %v9173
      %v9175 = vpop.f32.mrb[0].mxu0
      %v9176 = vadd.f32 %v8823, %v9175
      %v9177 = vpop.f32.mrb[0].mxu0
      %v9178 = vadd.f32 %v8825, %v9177
      %v9179 = vpop.f32.mrb[0].mxu0
      %v9180 = vadd.f32 %v8827, %v9179
      %9181 = vmatprep.mubr.bf16.mxu0 %v8006
      %9182 = vmatmul.mubr.bf16.gmra.mrb[0].mxu0 %v7909
      %v9183 = vpop.f32.mrb[0].mxu0
      %v9184 = vadd.f32 %v8831, %v9183
      %v9185 = vpop.f32.mrb[0].mxu0
      %v9186 = vadd.f32 %v8833, %v9185
      %v9187 = vpop.f32.mrb[0].mxu0
      %v9188 = vadd.f32 %v8835, %v9187
      %v9189 = vpop.f32.mrb[0].mxu0
      %v9190 = vadd.f32 %v8837, %v9189
      %9191 = vmatprep.mubr.bf16.mxu0 %v8009
      %9192 = vmatmul.mubr.bf16.gmra.mrb[0].mxu0 %v7912
      %v9193 = vpop.f32.mrb[0].mxu0
      %v9194 = vadd.f32 %v8841, %v9193
      %v9195 = vpop.f32.mrb[0].mxu0
      %v9196 = vadd.f32 %v8843, %v9195
      %v9197 = vpop.f32.mrb[0].mxu0
      %v9198 = vadd.f32 %v8845, %v9197
      %v9199 = vpop.f32.mrb[0].mxu0
      %v9200 = vadd.f32 %v8847, %v9199
      %9201 = vmatprep.mubr.bf16.mxu0 %v8012
      %9202 = vmatmul.mubr.bf16.gmra.mrb[0].mxu0 %v7915
      %v9203 = vpop.f32.mrb[0].mxu0
      %v9204 = vadd.f32 %v8851, %v9203
      %v9205 = vpop.f32.mrb[0].mxu0
      %v9206 = vadd.f32 %v8853, %v9205
      %v9207 = vpop.f32.mrb[0].mxu0
      %v9208 = vadd.f32 %v8855, %v9207
      %v9209 = vpop.f32.mrb[0].mxu0
      %v9210 = vadd.f32 %v8857, %v9209
      %9211 = vmatprep.mubr.bf16.mxu0 %v8015
      %9212 = vmatmul.mubr.bf16.gmra.mrb[0].mxu0 %v7918
      %v9213 = vpop.f32.mrb[0].mxu0
      %v9214 = vadd.f32 %v8861, %v9213
      %v9215 = vpop.f32.mrb[0].mxu0
      %v9216 = vadd.f32 %v8863, %v9215
      %v9217 = vpop.f32.mrb[0].mxu0
      %v9218 = vadd.f32 %v8865, %v9217
      %v9219 = vpop.f32.mrb[0].mxu0
      %v9220 = vadd.f32 %v8867, %v9219
      %9221 = vmatprep.mubr.bf16.mxu0 %v8018
      %9222 = vmatmul.mubr.bf16.gmra.mrb[0].mxu0 %v7921
      %v9223 = vpop.f32.mrb[0].mxu0
      %v9224 = vadd.f32 %v8871, %v9223
      %v9225 = vpop.f32.mrb[0].mxu0
      %v9226 = vadd.f32 %v8873, %v9225
      %v9227 = vpop.f32.mrb[0].mxu0
      %v9228 = vadd.f32 %v8875, %v9227
      %v9229 = vpop.f32.mrb[0].mxu0
      %v9230 = vadd.f32 %v8877, %v9229
      %9231 = vmatprep.mubr.bf16.mxu0 %v8021
      %9232 = vmatmul.mubr.bf16.gmra.mrb[0].mxu0 %v7924
      %v9233 = vpop.f32.mrb[0].mxu0
      %v9234 = vadd.f32 %v8881, %v9233
      %v9235 = vpop.f32.mrb[0].mxu0
      %v9236 = vadd.f32 %v8883, %v9235
      %v9237 = vpop.f32.mrb[0].mxu0
      %v9238 = vadd.f32 %v8885, %v9237
      %v9239 = vpop.f32.mrb[0].mxu0
      %v9240 = vadd.f32 %v8887, %v9239
      %9241 = vmatprep.mubr.bf16.mxu0 %v8024
      %9242 = vmatmul.mubr.bf16.gmra.mrb[0].mxu0 %v7927
      %v9243 = vpop.f32.mrb[0].mxu0
      %v9244 = vadd.f32 %v8891, %v9243
      %v9245 = vpop.f32.mrb[0].mxu0
      %v9246 = vadd.f32 %v8893, %v9245
      %v9247 = vpop.f32.mrb[0].mxu0
      %v9248 = vadd.f32 %v8895, %v9247
      %v9249 = vpop.f32.mrb[0].mxu0
      %v9250 = vadd.f32 %v8897, %v9249
      %9251 = vmatprep.mubr.bf16.mxu0 %v8027
      %9252 = vmatmul.mubr.bf16.gmra.mrb[0].mxu0 %v7930
      %v9253 = vpop.f32.mrb[0].mxu0
      %v9254 = vadd.f32 %v8901, %v9253
      %v9255 = vpop.f32.mrb[0].mxu0
      %v9256 = vadd.f32 %v8903, %v9255
      %v9257 = vpop.f32.mrb[0].mxu0
      %v9258 = vadd.f32 %v8905, %v9257
      %v9259 = vpop.f32.mrb[0].mxu0
      %v9260 = vadd.f32 %v8907, %v9259
      %9261 = vmatprep.mubr.bf16.mxu0 %v8030
      %9262 = vmatmul.mubr.bf16.gmra.mrb[0].mxu0 %v7933
      %v9263 = vpop.f32.mrb[0].mxu0
      %v9264 = vadd.f32 %v8911, %v9263
      %v9265 = vpop.f32.mrb[0].mxu0
      %v9266 = vadd.f32 %v8913, %v9265
      %v9267 = vpop.f32.mrb[0].mxu0
      %v9268 = vadd.f32 %v8915, %v9267
      %v9269 = vpop.f32.mrb[0].mxu0
      %v9270 = vadd.f32 %v8917, %v9269
      %9271 = vdwg.mxu0
      %9272 = vmatprep.subr.bf16.mxu0 %v8409
      %9273 = vmatpush1.bf16.msra.mxu0 %v8408
      %9274 = vmatprep.subr.bf16.mxu0 %v8411
      %9275 = vmatpush1.bf16.msra.mxu0 %v8410
      %9276 = vmatprep.subr.bf16.mxu0 %v8413
      %9277 = vmatpush1.bf16.msra.mxu0 %v8412
      %9278 = vmatprep.subr.bf16.mxu0 %v8415
      %9279 = vmatpush1.bf16.msra.mxu0 %v8414
      %9280 = vmatprep.subr.bf16.mxu0 %v8417
      %9281 = vmatpush1.bf16.msra.mxu0 %v8416
      %9282 = vmatprep.subr.bf16.mxu0 %v8564
      %9283 = vmatpush1.bf16.msra.mxu0 %v8561
      %9284 = vmatprep.subr.bf16.mxu0 0
      %9285 = vmatpush1.bf16.msra.mxu0 0
      %9286 = vmatprep.subr.bf16.mxu0 0
      %9287 = vmatpush1.bf16.msra.mxu0 0
      %9288 = vmatprep.subr.bf16.mxu0 0
      %9289 = vmatpush1.bf16.msra.mxu0 0
      %9290 = vmatprep.subr.bf16.mxu0 0
      %9291 = vmatpush1.bf16.msra.mxu0 0
      %9292 = vmatprep.subr.bf16.mxu0 0
      %9293 = vmatpush1.bf16.msra.mxu0 0
      %9294 = vmatprep.subr.bf16.mxu0 0
      %9295 = vmatpush1.bf16.msra.mxu0 0
      %9296 = vmatprep.subr.bf16.mxu0 0
      %9297 = vmatpush1.bf16.msra.mxu0 0
      %9298 = vmatprep.subr.bf16.mxu0 0
      %9299 = vmatpush1.bf16.msra.mxu0 0
      %9300 = vmatprep.subr.bf16.mxu0 0
      %9301 = vmatpush1.bf16.msra.mxu0 0
      %9302 = vmatprep.subr.bf16.mxu0 0
      %9303 = vmatpush1.bf16.msra.mxu0 0
      %9304 = vmatprep.mubr.bf16.mxu0 0
      %9305 = vmatmul.mubr.bf16.gmra.mrb[0].mxu0 %v8495
      %v9306 = vpop.f32.mrb[0].mxu0
      %v9307 = vadd.f32 %v8954, %v9306
      %v9308 = vpop.f32.mrb[0].mxu0
      %v9309 = vadd.f32 %v8956, %v9308
      %v9310 = vpop.f32.mrb[0].mxu0
      %v9311 = vadd.f32 %v8958, %v9310
      %v9312 = vpop.f32.mrb[0].mxu0
      %v9313 = vadd.f32 %v8960, %v9312
      %9314 = vmatprep.mubr.bf16.mxu0 0
      %9315 = vmatmul.mubr.bf16.gmra.mrb[0].mxu0 %v8497
      %v9316 = vpop.f32.mrb[0].mxu0
      %v9317 = vadd.f32 %v8964, %v9316
      %v9318 = vpop.f32.mrb[0].mxu0
      %v9319 = vadd.f32 %v8966, %v9318
      %v9320 = vpop.f32.mrb[0].mxu0
      %v9321 = vadd.f32 %v8968, %v9320
      %v9322 = vpop.f32.mrb[0].mxu0
      %v9323 = vadd.f32 %v8970, %v9322
      %9324 = vmatprep.mubr.bf16.mxu0 0
      %9325 = vmatmul.mubr.bf16.gmra.mrb[0].mxu0 %v8499
      %v9326 = vpop.f32.mrb[0].mxu0
      %v9327 = vadd.f32 %v8974, %v9326
      %v9328 = vpop.f32.mrb[0].mxu0
      %v9329 = vadd.f32 %v8976, %v9328
      %v9330 = vpop.f32.mrb[0].mxu0
      %v9331 = vadd.f32 %v8978, %v9330
      %v9332 = vpop.f32.mrb[0].mxu0
      %v9333 = vadd.f32 %v8980, %v9332
      %9334 = vmatprep.mubr.bf16.mxu0 0
      %9335 = vmatmul.mubr.bf16.gmra.mrb[0].mxu0 %v8501
      %v9336 = vpop.f32.mrb[0].mxu0
      %v9337 = vadd.f32 %v8984, %v9336
      %v9338 = vpop.f32.mrb[0].mxu0
      %v9339 = vadd.f32 %v8986, %v9338
      %v9340 = vpop.f32.mrb[0].mxu0
      %v9341 = vadd.f32 %v8988, %v9340
      %v9342 = vpop.f32.mrb[0].mxu0
      %v9343 = vadd.f32 %v8990, %v9342
      %9344 = vmatprep.mubr.bf16.mxu0 0
      %9345 = vmatmul.mubr.bf16.gmra.mrb[0].mxu0 %v8503
      %v9346 = vpop.f32.mrb[0].mxu0
      %v9347 = vadd.f32 %v8994, %v9346
      %v9348 = vpop.f32.mrb[0].mxu0
      %v9349 = vadd.f32 %v8996, %v9348
      %v9350 = vpop.f32.mrb[0].mxu0
      %v9351 = vadd.f32 %v8998, %v9350
      %v9352 = vpop.f32.mrb[0].mxu0
      %v9353 = vadd.f32 %v9000, %v9352
      %9354 = vmatprep.mubr.bf16.mxu0 0
      %9355 = vmatmul.mubr.bf16.gmra.mrb[0].mxu0 %v8505
      %v9356 = vpop.f32.mrb[0].mxu0
      %v9357 = vadd.f32 %v9004, %v9356
      %v9358 = vpop.f32.mrb[0].mxu0
      %v9359 = vadd.f32 %v9006, %v9358
      %v9360 = vpop.f32.mrb[0].mxu0
      %v9361 = vadd.f32 %v9008, %v9360
      %v9362 = vpop.f32.mrb[0].mxu0
      %v9363 = vadd.f32 %v9010, %v9362
      %9364 = vmatprep.mubr.bf16.mxu0 0
      %9365 = vmatmul.mubr.bf16.gmra.mrb[0].mxu0 %v8507
      %v9366 = vpop.f32.mrb[0].mxu0
      %v9367 = vadd.f32 %v9014, %v9366
      %v9368 = vpop.f32.mrb[0].mxu0
      %v9369 = vadd.f32 %v9016, %v9368
      %v9370 = vpop.f32.mrb[0].mxu0
      %v9371 = vadd.f32 %v9018, %v9370
      %v9372 = vpop.f32.mrb[0].mxu0
      %v9373 = vadd.f32 %v9020, %v9372
      %9374 = vmatprep.mubr.bf16.mxu0 0
      %9375 = vmatmul.mubr.bf16.gmra.mrb[0].mxu0 %v8509
      %v9376 = vpop.f32.mrb[0].mxu0
      %v9377 = vadd.f32 %v9024, %v9376
      %v9378 = vpop.f32.mrb[0].mxu0
      %v9379 = vadd.f32 %v9026, %v9378
      %v9380 = vpop.f32.mrb[0].mxu0
      %v9381 = vadd.f32 %v9028, %v9380
      %v9382 = vpop.f32.mrb[0].mxu0
      %v9383 = vadd.f32 %v9030, %v9382
      %9384 = vmatprep.mubr.bf16.mxu0 0
      %9385 = vmatmul.mubr.bf16.gmra.mrb[0].mxu0 %v8511
      %v9386 = vpop.f32.mrb[0].mxu0
      %v9387 = vadd.f32 %v9034, %v9386
      %v9388 = vpop.f32.mrb[0].mxu0
      %v9389 = vadd.f32 %v9036, %v9388
      %v9390 = vpop.f32.mrb[0].mxu0
      %v9391 = vadd.f32 %v9038, %v9390
      %v9392 = vpop.f32.mrb[0].mxu0
      %v9393 = vadd.f32 %v9040, %v9392
      %9394 = vmatprep.mubr.bf16.mxu0 0
      %9395 = vmatmul.mubr.bf16.gmra.mrb[0].mxu0 %v8513
      %v9396 = vpop.f32.mrb[0].mxu0
      %v9397 = vadd.f32 %v9044, %v9396
      %v9398 = vpop.f32.mrb[0].mxu0
      %v9399 = vadd.f32 %v9046, %v9398
      %v9400 = vpop.f32.mrb[0].mxu0
      %v9401 = vadd.f32 %v9048, %v9400
      %v9402 = vpop.f32.mrb[0].mxu0
      %v9403 = vadd.f32 %v9050, %v9402
      %9404 = vmatprep.mubr.bf16.mxu0 0
      %9405 = vmatmul.mubr.bf16.gmra.mrb[0].mxu0 %v8515
      %v9406 = vpop.f32.mrb[0].mxu0
      %v9407 = vadd.f32 %v9054, %v9406
      %v9408 = vpop.f32.mrb[0].mxu0
      %v9409 = vadd.f32 %v9056, %v9408
      %v9410 = vpop.f32.mrb[0].mxu0
      %v9411 = vadd.f32 %v9058, %v9410
      %v9412 = vpop.f32.mrb[0].mxu0
      %v9413 = vadd.f32 %v9060, %v9412
      %9414 = vmatprep.mubr.bf16.mxu0 0
      %9415 = vmatmul.mubr.bf16.gmra.mrb[0].mxu0 %v8517
      %v9416 = vpop.f32.mrb[0].mxu0
      %v9417 = vadd.f32 %v9064, %v9416
      %v9418 = vpop.f32.mrb[0].mxu0
      %v9419 = vadd.f32 %v9066, %v9418
      %v9420 = vpop.f32.mrb[0].mxu0
      %v9421 = vadd.f32 %v9068, %v9420
      %v9422 = vpop.f32.mrb[0].mxu0
      %v9423 = vadd.f32 %v9070, %v9422
      %9424 = vmatprep.mubr.bf16.mxu0 0
      %9425 = vmatmul.mubr.bf16.gmra.mrb[0].mxu0 %v8519
      %v9426 = vpop.f32.mrb[0].mxu0
      %v9427 = vadd.f32 %v9074, %v9426
      %v9428 = vpop.f32.mrb[0].mxu0
      %v9429 = vadd.f32 %v9076, %v9428
      %v9430 = vpop.f32.mrb[0].mxu0
      %v9431 = vadd.f32 %v9078, %v9430
      %v9432 = vpop.f32.mrb[0].mxu0
      %v9433 = vadd.f32 %v9080, %v9432
      %9434 = vmatprep.mubr.bf16.mxu0 0
      %9435 = vmatmul.mubr.bf16.gmra.mrb[0].mxu0 %v8521
      %v9436 = vpop.f32.mrb[0].mxu0
      %v9437 = vadd.f32 %v9084, %v9436
      %v9438 = vpop.f32.mrb[0].mxu0
      %v9439 = vadd.f32 %v9086, %v9438
      %v9440 = vpop.f32.mrb[0].mxu0
      %v9441 = vadd.f32 %v9088, %v9440
      %v9442 = vpop.f32.mrb[0].mxu0
      %v9443 = vadd.f32 %v9090, %v9442
      %9444 = vmatprep.mubr.bf16.mxu0 0
      %9445 = vmatmul.mubr.bf16.gmra.mrb[0].mxu0 %v8523
      %v9446 = vpop.f32.mrb[0].mxu0
      %v9447 = vadd.f32 %v9094, %v9446
      %v9448 = vpop.f32.mrb[0].mxu0
      %v9449 = vadd.f32 %v9096, %v9448
      %v9450 = vpop.f32.mrb[0].mxu0
      %v9451 = vadd.f32 %v9098, %v9450
      %v9452 = vpop.f32.mrb[0].mxu0
      %v9453 = vadd.f32 %v9100, %v9452
      %9454 = vmatprep.mubr.bf16.mxu0 0
      %9455 = vmatmul.mubr.bf16.gmra.mrb[0].mxu0 %v8525
      %v9456 = vpop.f32.mrb[0].mxu0
      %v9457 = vadd.f32 %v9104, %v9456
      %v9458 = vpop.f32.mrb[0].mxu0
      %v9459 = vadd.f32 %v9106, %v9458
      %v9460 = vpop.f32.mrb[0].mxu0
      %v9461 = vadd.f32 %v9108, %v9460
      %v9462 = vpop.f32.mrb[0].mxu0
      %v9463 = vadd.f32 %v9110, %v9462
      %9464 = vmatprep.mubr.bf16.mxu0 0
      %9465 = vmatmul.mubr.bf16.gmra.mrb[0].mxu0 %v8527
      %v9466 = vpop.f32.mrb[0].mxu0
      %v9467 = vadd.f32 %v9114, %v9466
      %v9468 = vpop.f32.mrb[0].mxu0
      %v9469 = vadd.f32 %v9116, %v9468
      %v9470 = vpop.f32.mrb[0].mxu0
      %v9471 = vadd.f32 %v9118, %v9470
      %v9472 = vpop.f32.mrb[0].mxu0
      %v9473 = vadd.f32 %v9120, %v9472
      %9474 = vmatprep.mubr.bf16.mxu0 0
      %9475 = vmatmul.mubr.bf16.gmra.mrb[0].mxu0 %v8529
      %v9476 = vpop.f32.mrb[0].mxu0
      %v9477 = vadd.f32 %v9124, %v9476
      %v9478 = vpop.f32.mrb[0].mxu0
      %v9479 = vadd.f32 %v9126, %v9478
      %v9480 = vpop.f32.mrb[0].mxu0
      %v9481 = vadd.f32 %v9128, %v9480
      %v9482 = vpop.f32.mrb[0].mxu0
      %v9483 = vadd.f32 %v9130, %v9482
      %9484 = vmatprep.mubr.bf16.mxu0 0
      %9485 = vmatmul.mubr.bf16.gmra.mrb[0].mxu0 %v8531
      %v9486 = vpop.f32.mrb[0].mxu0
      %v9487 = vadd.f32 %v9134, %v9486
      %v9488 = vpop.f32.mrb[0].mxu0
      %v9489 = vadd.f32 %v9136, %v9488
      %v9490 = vpop.f32.mrb[0].mxu0
      %v9491 = vadd.f32 %v9138, %v9490
      %v9492 = vpop.f32.mrb[0].mxu0
      %v9493 = vadd.f32 %v9140, %v9492
      %9494 = vmatprep.mubr.bf16.mxu0 0
      %9495 = vmatmul.mubr.bf16.gmra.mrb[0].mxu0 %v8533
      %v9496 = vpop.f32.mrb[0].mxu0
      %v9497 = vadd.f32 %v9144, %v9496
      %v9498 = vpop.f32.mrb[0].mxu0
      %v9499 = vadd.f32 %v9146, %v9498
      %v9500 = vpop.f32.mrb[0].mxu0
      %v9501 = vadd.f32 %v9148, %v9500
      %v9502 = vpop.f32.mrb[0].mxu0
      %v9503 = vadd.f32 %v9150, %v9502
      %9504 = vmatprep.mubr.bf16.mxu0 0
      %9505 = vmatmul.mubr.bf16.gmra.mrb[0].mxu0 %v8535
      %v9506 = vpop.f32.mrb[0].mxu0
      %v9507 = vadd.f32 %v9154, %v9506
      %v9508 = vpop.f32.mrb[0].mxu0
      %v9509 = vadd.f32 %v9156, %v9508
      %v9510 = vpop.f32.mrb[0].mxu0
      %v9511 = vadd.f32 %v9158, %v9510
      %v9512 = vpop.f32.mrb[0].mxu0
      %v9513 = vadd.f32 %v9160, %v9512
      %9514 = vmatprep.mubr.bf16.mxu0 0
      %9515 = vmatmul.mubr.bf16.gmra.mrb[0].mxu0 %v8537
      %v9516 = vpop.f32.mrb[0].mxu0
      %v9517 = vadd.f32 %v9164, %v9516
      %v9518 = vpop.f32.mrb[0].mxu0
      %v9519 = vadd.f32 %v9166, %v9518
      %v9520 = vpop.f32.mrb[0].mxu0
      %v9521 = vadd.f32 %v9168, %v9520
      %v9522 = vpop.f32.mrb[0].mxu0
      %v9523 = vadd.f32 %v9170, %v9522
      %9524 = vmatprep.mubr.bf16.mxu0 0
      %9525 = vmatmul.mubr.bf16.gmra.mrb[0].mxu0 %v8539
      %v9526 = vpop.f32.mrb[0].mxu0
      %v9527 = vadd.f32 %v9174, %v9526
      %v9528 = vpop.f32.mrb[0].mxu0
      %v9529 = vadd.f32 %v9176, %v9528
      %v9530 = vpop.f32.mrb[0].mxu0
      %v9531 = vadd.f32 %v9178, %v9530
      %v9532 = vpop.f32.mrb[0].mxu0
      %v9533 = vadd.f32 %v9180, %v9532
      %9534 = vmatprep.mubr.bf16.mxu0 0
      %9535 = vmatmul.mubr.bf16.gmra.mrb[0].mxu0 %v8541
      %v9536 = vpop.f32.mrb[0].mxu0
      %v9537 = vadd.f32 %v9184, %v9536
      %v9538 = vpop.f32.mrb[0].mxu0
      %v9539 = vadd.f32 %v9186, %v9538
      %v9540 = vpop.f32.mrb[0].mxu0
      %v9541 = vadd.f32 %v9188, %v9540
      %v9542 = vpop.f32.mrb[0].mxu0
      %v9543 = vadd.f32 %v9190, %v9542
      %9544 = vmatprep.mubr.bf16.mxu0 0
      %9545 = vmatmul.mubr.bf16.gmra.mrb[0].mxu0 %v8543
      %v9546 = vpop.f32.mrb[0].mxu0
      %v9547 = vadd.f32 %v9194, %v9546
      %v9548 = vpop.f32.mrb[0].mxu0
      %v9549 = vadd.f32 %v9196, %v9548
      %v9550 = vpop.f32.mrb[0].mxu0
      %v9551 = vadd.f32 %v9198, %v9550
      %v9552 = vpop.f32.mrb[0].mxu0
      %v9553 = vadd.f32 %v9200, %v9552
      %9554 = vmatprep.mubr.bf16.mxu0 0
      %9555 = vmatmul.mubr.bf16.gmra.mrb[0].mxu0 %v8545
      %v9556 = vpop.f32.mrb[0].mxu0
      %v9557 = vadd.f32 %v9204, %v9556
      %v9558 = vpop.f32.mrb[0].mxu0
      %v9559 = vadd.f32 %v9206, %v9558
      %v9560 = vpop.f32.mrb[0].mxu0
      %v9561 = vadd.f32 %v9208, %v9560
      %v9562 = vpop.f32.mrb[0].mxu0
      %v9563 = vadd.f32 %v9210, %v9562
      %9564 = vmatprep.mubr.bf16.mxu0 0
      %9565 = vmatmul.mubr.bf16.gmra.mrb[0].mxu0 %v8547
      %v9566 = vpop.f32.mrb[0].mxu0
      %v9567 = vadd.f32 %v9214, %v9566
      %v9568 = vpop.f32.mrb[0].mxu0
      %v9569 = vadd.f32 %v9216, %v9568
      %v9570 = vpop.f32.mrb[0].mxu0
      %v9571 = vadd.f32 %v9218, %v9570
      %v9572 = vpop.f32.mrb[0].mxu0
      %v9573 = vadd.f32 %v9220, %v9572
      %9574 = vmatprep.mubr.bf16.mxu0 0
      %9575 = vmatmul.mubr.bf16.gmra.mrb[0].mxu0 %v8549
      %v9576 = vpop.f32.mrb[0].mxu0
      %v9577 = vadd.f32 %v9224, %v9576
      %v9578 = vpop.f32.mrb[0].mxu0
      %v9579 = vadd.f32 %v9226, %v9578
      %v9580 = vpop.f32.mrb[0].mxu0
      %v9581 = vadd.f32 %v9228, %v9580
      %v9582 = vpop.f32.mrb[0].mxu0
      %v9583 = vadd.f32 %v9230, %v9582
      %9584 = vmatprep.mubr.bf16.mxu0 0
      %9585 = vmatmul.mubr.bf16.gmra.mrb[0].mxu0 %v8551
      %v9586 = vpop.f32.mrb[0].mxu0
      %v9587 = vadd.f32 %v9234, %v9586
      %v9588 = vpop.f32.mrb[0].mxu0
      %v9589 = vadd.f32 %v9236, %v9588
      %v9590 = vpop.f32.mrb[0].mxu0
      %v9591 = vadd.f32 %v9238, %v9590
      %v9592 = vpop.f32.mrb[0].mxu0
      %v9593 = vadd.f32 %v9240, %v9592
      %9594 = vmatprep.mubr.bf16.mxu0 0
      %9595 = vmatmul.mubr.bf16.gmra.mrb[0].mxu0 %v8553
      %v9596 = vpop.f32.mrb[0].mxu0
      %v9597 = vadd.f32 %v9244, %v9596
      %v9598 = vpop.f32.mrb[0].mxu0
      %v9599 = vadd.f32 %v9246, %v9598
      %v9600 = vpop.f32.mrb[0].mxu0
      %v9601 = vadd.f32 %v9248, %v9600
      %v9602 = vpop.f32.mrb[0].mxu0
      %v9603 = vadd.f32 %v9250, %v9602
      %9604 = vmatprep.mubr.bf16.mxu0 0
      %9605 = vmatmul.mubr.bf16.gmra.mrb[0].mxu0 %v8555
      %v9606 = vpop.f32.mrb[0].mxu0
      %v9607 = vadd.f32 %v9254, %v9606
      %v9608 = vpop.f32.mrb[0].mxu0
      %v9609 = vadd.f32 %v9256, %v9608
      %v9610 = vpop.f32.mrb[0].mxu0
      %v9611 = vadd.f32 %v9258, %v9610
      %v9612 = vpop.f32.mrb[0].mxu0
      %v9613 = vadd.f32 %v9260, %v9612
      %9614 = vmatprep.mubr.bf16.mxu0 0
      %9615 = vmatmul.mubr.bf16.gmra.mrb[0].mxu0 %v8557
      %v9616 = vpop.f32.mrb[0].mxu0
      %v9617 = vadd.f32 %v9264, %v9616
      %v9618 = vpop.f32.mrb[0].mxu0
      %v9619 = vadd.f32 %v9266, %v9618
      %v9620 = vpop.f32.mrb[0].mxu0
      %v9621 = vadd.f32 %v9268, %v9620
      %v9622 = vpop.f32.mrb[0].mxu0
      %v9623 = vadd.f32 %v9270, %v9622
      %9624 = vdwg.mxu0
      %v9625 = vpack.c.bf16 %v9311, %v9307
      %v9626 = vpack.c.bf16 %v9313, %v9309
      %v9627 = vpack.c.bf16 %v9321, %v9317
      %v9628 = vpack.c.bf16 %v9323, %v9319
      %v9629 = vpack.c.bf16 %v9331, %v9327
      %v9630 = vpack.c.bf16 %v9333, %v9329
      %v9631 = vpack.c.bf16 %v9341, %v9337
      %v9632 = vpack.c.bf16 %v9343, %v9339
      %v9633 = vpack.c.bf16 %v9351, %v9347
      %v9634 = vpack.c.bf16 %v9353, %v9349
      %v9635 = vpack.c.bf16 %v9361, %v9357
      %v9636 = vpack.c.bf16 %v9363, %v9359
      %v9637 = vpack.c.bf16 %v9371, %v9367
      %v9638 = vpack.c.bf16 %v9373, %v9369
      %v9639 = vpack.c.bf16 %v9381, %v9377
      %v9640 = vpack.c.bf16 %v9383, %v9379
      %v9641 = vpack.c.bf16 %v9391, %v9387
      %v9642 = vpack.c.bf16 %v9393, %v9389
      %v9643 = vpack.c.bf16 %v9401, %v9397
      %v9644 = vpack.c.bf16 %v9403, %v9399
      %v9645 = vpack.c.bf16 %v9411, %v9407
      %v9646 = vpack.c.bf16 %v9413, %v9409
      %v9647 = vpack.c.bf16 %v9421, %v9417
      %v9648 = vpack.c.bf16 %v9423, %v9419
      %v9649 = vpack.c.bf16 %v9431, %v9427
      %v9650 = vpack.c.bf16 %v9433, %v9429
      %v9651 = vpack.c.bf16 %v9441, %v9437
      %v9652 = vpack.c.bf16 %v9443, %v9439
      %v9653 = vpack.c.bf16 %v9451, %v9447
      %v9654 = vpack.c.bf16 %v9453, %v9449
      %v9655 = vpack.c.bf16 %v9461, %v9457
      %v9656 = vpack.c.bf16 %v9463, %v9459
      %v9657 = vpack.c.bf16 %v9471, %v9467
      %v9658 = vpack.c.bf16 %v9473, %v9469
      %v9659 = vpack.c.bf16 %v9481, %v9477
      %v9660 = vpack.c.bf16 %v9483, %v9479
      %v9661 = vpack.c.bf16 %v9491, %v9487
      %v9662 = vpack.c.bf16 %v9493, %v9489
      %v9663 = vpack.c.bf16 %v9501, %v9497
      %v9664 = vpack.c.bf16 %v9503, %v9499
      %v9665 = vpack.c.bf16 %v9511, %v9507
      %v9666 = vpack.c.bf16 %v9513, %v9509
      %v9667 = vpack.c.bf16 %v9521, %v9517
      %v9668 = vpack.c.bf16 %v9523, %v9519
      %v9669 = vpack.c.bf16 %v9531, %v9527
      %v9670 = vpack.c.bf16 %v9533, %v9529
      %v9671 = vpack.c.bf16 %v9541, %v9537
      %v9672 = vpack.c.bf16 %v9543, %v9539
      %v9673 = vpack.c.bf16 %v9551, %v9547
      %v9674 = vpack.c.bf16 %v9553, %v9549
      %v9675 = vpack.c.bf16 %v9561, %v9557
      %v9676 = vpack.c.bf16 %v9563, %v9559
      %v9677 = vpack.c.bf16 %v9571, %v9567
      %v9678 = vpack.c.bf16 %v9573, %v9569
      %v9679 = vpack.c.bf16 %v9581, %v9577
      %v9680 = vpack.c.bf16 %v9583, %v9579
      %v9681 = vpack.c.bf16 %v9591, %v9587
      %v9682 = vpack.c.bf16 %v9593, %v9589
      %v9683 = vpack.c.bf16 %v9601, %v9597
      %v9684 = vpack.c.bf16 %v9603, %v9599
      %v9685 = vpack.c.bf16 %v9611, %v9607
      %v9686 = vpack.c.bf16 %v9613, %v9609
      %v9687 = vpack.c.bf16 %v9621, %v9617
      %v9688 = vpack.c.bf16 %v9623, %v9619
      %v9689 = vld [vmem:[%s6] sm:$0xf]
      %v9690 = vld [vmem:[%s6 + $0x4] sm:$0xf]
      %v9691 = vld [vmem:[%s6 + $0x8] sm:$0xf]
      %v9692 = vld [vmem:[%s6 + $0xc] sm:$0xf]
      %v9693 = vld [vmem:[%s6 + $0x10] sm:$0xf]
      %v9694 = vld [vmem:[%s6 + $0x14] sm:$0xf]
      %v9695 = vld [vmem:[%s6 + $0x18] sm:$0xf]
      %v9696 = vld [vmem:[%s6 + $0x1c] sm:$0xf]
      %v9697 = vld [vmem:[%s6 + $0x20] sm:$0xf]
      %v9698 = vld [vmem:[%s6 + $0x24] sm:$0xf]
      %v9699 = vld [vmem:[%s6 + $0x28] sm:$0xf]
      %v9700 = vld [vmem:[%s6 + $0x2c] sm:$0xf]
      %v9701 = vld [vmem:[%s6 + $0x30] sm:$0xf]
      %v9702 = vld [vmem:[%s6 + $0x34] sm:$0xf]
      %v9703 = vld [vmem:[%s6 + $0x38] sm:$0xf]
      %v9704 = vld [vmem:[%s6 + $0x3c] sm:$0xf]
      %v9705 = vld [vmem:[%s6 + $0x40] sm:$0xf]
      %v9706 = vld [vmem:[%s6 + $0x44] sm:$0xf]
      %v9707 = vld [vmem:[%s6 + $0x48] sm:$0xf]
      %v9708 = vld [vmem:[%s6 + $0x4c] sm:$0xf]
      %v9729 = vunpack.c.l.b16 %v9689
      %v9730 = vunpack.c.l.b16 %v9690
      %v9731 = vunpack.c.l.b16 %v9691
      %v9732 = vunpack.c.l.b16 %v9692
      %v9733 = vunpack.c.l.b16 %v9693
      %v9734 = vunpack.c.l.b16 %v9694
      %v9735 = vunpack.c.l.b16 %v9695
      %v9736 = vunpack.c.l.b16 %v9696
      %v9737 = vunpack.c.l.b16 %v9697
      %v9738 = vunpack.c.l.b16 %v9698
      %v9739 = vunpack.c.l.b16 %v9699
      %v9740 = vunpack.c.l.b16 %v9700
      %v9741 = vunpack.c.l.b16 %v9701
      %v9742 = vunpack.c.l.b16 %v9702
      %v9743 = vunpack.c.l.b16 %v9703
      %v9744 = vunpack.c.l.b16 %v9704
      %v9745 = vunpack.c.l.b16 %v9705
      %v9746 = vunpack.c.l.b16 %v9706
      %v9747 = vunpack.c.l.b16 %v9707
      %v9748 = vunpack.c.l.b16 %v9708
      %v9749 = vpack.c.b16 %v9730, %v9729
      %v9750 = vpack.c.b16 %v9732, %v9731
      %v9751 = vpack.c.b16 %v9734, %v9733
      %v9752 = vpack.c.b16 %v9736, %v9735
      %v9753 = vpack.c.b16 %v9738, %v9737
      %v9754 = vpack.c.b16 %v9740, %v9739
      %v9755 = vpack.c.b16 %v9742, %v9741
      %v9756 = vpack.c.b16 %v9744, %v9743
      %v9757 = vpack.c.b16 %v9746, %v9745
      %v9758 = vpack.c.b16 %v9748, %v9747
      %vm9769 = vcmask 261120
      %v9771 = vsel %vm9769, %v9626, 0
      %v9774 = vsel %vm9769, %v9628, 0
      %v9777 = vsel %vm9769, %v9630, 0
      %v9780 = vsel %vm9769, %v9632, 0
      %v9783 = vsel %vm9769, %v9634, 0
      %v9786 = vsel %vm9769, %v9636, 0
      %v9789 = vsel %vm9769, %v9638, 0
      %v9792 = vsel %vm9769, %v9640, 0
      %v9795 = vsel %vm9769, %v9642, 0
      %v9798 = vsel %vm9769, %v9644, 0
      %v9801 = vsel %vm9769, %v9646, 0
      %v9804 = vsel %vm9769, %v9648, 0
      %v9807 = vsel %vm9769, %v9650, 0
      %v9810 = vsel %vm9769, %v9652, 0
      %v9813 = vsel %vm9769, %v9654, 0
      %v9816 = vsel %vm9769, %v9656, 0
      %v9819 = vsel %vm9769, %v9658, 0
      %v9822 = vsel %vm9769, %v9660, 0
      %v9825 = vsel %vm9769, %v9662, 0
      %v9828 = vsel %vm9769, %v9664, 0
      %v9831 = vsel %vm9769, %v9666, 0
      %v9834 = vsel %vm9769, %v9668, 0
      %v9837 = vsel %vm9769, %v9670, 0
      %v9840 = vsel %vm9769, %v9672, 0
      %v9843 = vsel %vm9769, %v9674, 0
      %v9846 = vsel %vm9769, %v9676, 0
      %v9849 = vsel %vm9769, %v9678, 0
      %v9852 = vsel %vm9769, %v9680, 0
      %v9855 = vsel %vm9769, %v9682, 0
      %v9858 = vsel %vm9769, %v9684, 0
      %v9861 = vsel %vm9769, %v9686, 0
      %v9864 = vsel %vm9769, %v9688, 0
      %9866 = vmatprep.subr.bf16.mxu0 0
      %9867 = vmatpush1.bf16.msra.mxu0 %v9749
      %9868 = vmatprep.subr.bf16.mxu0 0
      %9869 = vmatpush1.bf16.msra.mxu0 %v9750
      %9870 = vmatprep.subr.bf16.mxu0 0
      %9871 = vmatpush1.bf16.msra.mxu0 %v9751
      %9872 = vmatprep.subr.bf16.mxu0 0
      %9873 = vmatpush1.bf16.msra.mxu0 %v9752
      %9874 = vmatprep.subr.bf16.mxu0 0
      %9875 = vmatpush1.bf16.msra.mxu0 %v9753
      %9876 = vmatprep.subr.bf16.mxu0 0
      %9877 = vmatpush1.bf16.msra.mxu0 %v9754
      %9878 = vmatprep.subr.bf16.mxu0 0
      %9879 = vmatpush1.bf16.msra.mxu0 %v9755
      %9880 = vmatprep.subr.bf16.mxu0 0
      %9881 = vmatpush1.bf16.msra.mxu0 %v9756
      %9882 = vmatprep.subr.bf16.mxu0 0
      %9883 = vmatpush1.bf16.msra.mxu0 %v9757
      %9884 = vmatprep.subr.bf16.mxu0 0
      %9885 = vmatpush1.bf16.msra.mxu0 %v9758
      %9886 = vmatprep.subr.bf16.mxu0 0
      %9887 = vmatpush1.bf16.msra.mxu0 0
      %9888 = vmatprep.subr.bf16.mxu0 0
      %9889 = vmatpush1.bf16.msra.mxu0 0
      %9890 = vmatprep.subr.bf16.mxu0 0
      %9891 = vmatpush1.bf16.msra.mxu0 0
      %9892 = vmatprep.subr.bf16.mxu0 0
      %9893 = vmatpush1.bf16.msra.mxu0 0
      %9894 = vmatprep.subr.bf16.mxu0 0
      %9895 = vmatpush1.bf16.msra.mxu0 0
      %9896 = vmatprep.subr.bf16.mxu0 0
      %9897 = vmatpush1.bf16.msra.mxu0 0
      %9898 = vmatprep.mubr.bf16.mxu0 %v9771
      %9899 = vmatmul.mubr.bf16.gmra.mrb[0].mxu0 %v9625
      %v9900 = vpop.f32.mrb[0].mxu0
      %v9901 = vadd.f32 0.0, %v9900
      %v9902 = vpop.f32.mrb[0].mxu0
      %v9903 = vpop.f32.mrb[0].mxu0
      %v9904 = vadd.f32 0.0, %v9903
      %v9905 = vpop.f32.mrb[0].mxu0
      %9906 = vmatprep.mubr.bf16.mxu0 %v9774
      %9907 = vmatmul.mubr.bf16.gmra.mrb[0].mxu0 %v9627
      %v9908 = vpop.f32.mrb[0].mxu0
      %v9909 = vadd.f32 0.0, %v9908
      %v9910 = vpop.f32.mrb[0].mxu0
      %v9911 = vpop.f32.mrb[0].mxu0
      %v9912 = vadd.f32 0.0, %v9911
      %v9913 = vpop.f32.mrb[0].mxu0
      %9914 = vmatprep.mubr.bf16.mxu0 %v9777
      %9915 = vmatmul.mubr.bf16.gmra.mrb[0].mxu0 %v9629
      %v9916 = vpop.f32.mrb[0].mxu0
      %v9917 = vadd.f32 0.0, %v9916
      %v9918 = vpop.f32.mrb[0].mxu0
      %v9919 = vpop.f32.mrb[0].mxu0
      %v9920 = vadd.f32 0.0, %v9919
      %v9921 = vpop.f32.mrb[0].mxu0
      %9922 = vmatprep.mubr.bf16.mxu0 %v9780
      %9923 = vmatmul.mubr.bf16.gmra.mrb[0].mxu0 %v9631
      %v9924 = vpop.f32.mrb[0].mxu0
      %v9925 = vadd.f32 0.0, %v9924
      %v9926 = vpop.f32.mrb[0].mxu0
      %v9927 = vpop.f32.mrb[0].mxu0
      %v9928 = vadd.f32 0.0, %v9927
      %v9929 = vpop.f32.mrb[0].mxu0
      %9930 = vmatprep.mubr.bf16.mxu0 %v9783
      %9931 = vmatmul.mubr.bf16.gmra.mrb[0].mxu0 %v9633
      %v9932 = vpop.f32.mrb[0].mxu0
      %v9933 = vadd.f32 0.0, %v9932
      %v9934 = vpop.f32.mrb[0].mxu0
      %v9935 = vpop.f32.mrb[0].mxu0
      %v9936 = vadd.f32 0.0, %v9935
      %v9937 = vpop.f32.mrb[0].mxu0
      %9938 = vmatprep.mubr.bf16.mxu0 %v9786
      %9939 = vmatmul.mubr.bf16.gmra.mrb[0].mxu0 %v9635
      %v9940 = vpop.f32.mrb[0].mxu0
      %v9941 = vadd.f32 0.0, %v9940
      %v9942 = vpop.f32.mrb[0].mxu0
      %v9943 = vpop.f32.mrb[0].mxu0
      %v9944 = vadd.f32 0.0, %v9943
      %v9945 = vpop.f32.mrb[0].mxu0
      %9946 = vmatprep.mubr.bf16.mxu0 %v9789
      %9947 = vmatmul.mubr.bf16.gmra.mrb[0].mxu0 %v9637
      %v9948 = vpop.f32.mrb[0].mxu0
      %v9949 = vadd.f32 0.0, %v9948
      %v9950 = vpop.f32.mrb[0].mxu0
      %v9951 = vpop.f32.mrb[0].mxu0
      %v9952 = vadd.f32 0.0, %v9951
      %v9953 = vpop.f32.mrb[0].mxu0
      %9954 = vmatprep.mubr.bf16.mxu0 %v9792
      %9955 = vmatmul.mubr.bf16.gmra.mrb[0].mxu0 %v9639
      %v9956 = vpop.f32.mrb[0].mxu0
      %v9957 = vadd.f32 0.0, %v9956
      %v9958 = vpop.f32.mrb[0].mxu0
      %v9959 = vpop.f32.mrb[0].mxu0
      %v9960 = vadd.f32 0.0, %v9959
      %v9961 = vpop.f32.mrb[0].mxu0
      %9962 = vmatprep.mubr.bf16.mxu0 %v9795
      %9963 = vmatmul.mubr.bf16.gmra.mrb[0].mxu0 %v9641
      %v9964 = vpop.f32.mrb[0].mxu0
      %v9965 = vadd.f32 0.0, %v9964
      %v9966 = vpop.f32.mrb[0].mxu0
      %v9967 = vpop.f32.mrb[0].mxu0
      %v9968 = vadd.f32 0.0, %v9967
      %v9969 = vpop.f32.mrb[0].mxu0
      %9970 = vmatprep.mubr.bf16.mxu0 %v9798
      %9971 = vmatmul.mubr.bf16.gmra.mrb[0].mxu0 %v9643
      %v9972 = vpop.f32.mrb[0].mxu0
      %v9973 = vadd.f32 0.0, %v9972
      %v9974 = vpop.f32.mrb[0].mxu0
      %v9975 = vpop.f32.mrb[0].mxu0
      %v9976 = vadd.f32 0.0, %v9975
      %v9977 = vpop.f32.mrb[0].mxu0
      %9978 = vmatprep.mubr.bf16.mxu0 %v9801
      %9979 = vmatmul.mubr.bf16.gmra.mrb[0].mxu0 %v9645
      %v9980 = vpop.f32.mrb[0].mxu0
      %v9981 = vadd.f32 0.0, %v9980
      %v9982 = vpop.f32.mrb[0].mxu0
      %v9983 = vpop.f32.mrb[0].mxu0
      %v9984 = vadd.f32 0.0, %v9983
      %v9985 = vpop.f32.mrb[0].mxu0
      %9986 = vmatprep.mubr.bf16.mxu0 %v9804
      %9987 = vmatmul.mubr.bf16.gmra.mrb[0].mxu0 %v9647
      %v9988 = vpop.f32.mrb[0].mxu0
      %v9989 = vadd.f32 0.0, %v9988
      %v9990 = vpop.f32.mrb[0].mxu0
      %v9991 = vpop.f32.mrb[0].mxu0
      %v9992 = vadd.f32 0.0, %v9991
      %v9993 = vpop.f32.mrb[0].mxu0
      %9994 = vmatprep.mubr.bf16.mxu0 %v9807
      %9995 = vmatmul.mubr.bf16.gmra.mrb[0].mxu0 %v9649
      %v9996 = vpop.f32.mrb[0].mxu0
      %v9997 = vadd.f32 0.0, %v9996
      %v9998 = vpop.f32.mrb[0].mxu0
      %v9999 = vpop.f32.mrb[0].mxu0
      %v10000 = vadd.f32 0.0, %v9999
      %v10001 = vpop.f32.mrb[0].mxu0
      %10002 = vmatprep.mubr.bf16.mxu0 %v9810
      %10003 = vmatmul.mubr.bf16.gmra.mrb[0].mxu0 %v9651
      %v10004 = vpop.f32.mrb[0].mxu0
      %v10005 = vadd.f32 0.0, %v10004
      %v10006 = vpop.f32.mrb[0].mxu0
      %v10007 = vpop.f32.mrb[0].mxu0
      %v10008 = vadd.f32 0.0, %v10007
      %v10009 = vpop.f32.mrb[0].mxu0
      %10010 = vmatprep.mubr.bf16.mxu0 %v9813
      %10011 = vmatmul.mubr.bf16.gmra.mrb[0].mxu0 %v9653
      %v10012 = vpop.f32.mrb[0].mxu0
      %v10013 = vadd.f32 0.0, %v10012
      %v10014 = vpop.f32.mrb[0].mxu0
      %v10015 = vpop.f32.mrb[0].mxu0
      %v10016 = vadd.f32 0.0, %v10015
      %v10017 = vpop.f32.mrb[0].mxu0
      %10018 = vmatprep.mubr.bf16.mxu0 %v9816
      %10019 = vmatmul.mubr.bf16.gmra.mrb[0].mxu0 %v9655
      %v10020 = vpop.f32.mrb[0].mxu0
      %v10021 = vadd.f32 0.0, %v10020
      %v10022 = vpop.f32.mrb[0].mxu0
      %v10023 = vpop.f32.mrb[0].mxu0
      %v10024 = vadd.f32 0.0, %v10023
      %v10025 = vpop.f32.mrb[0].mxu0
      %10026 = vmatprep.mubr.bf16.mxu0 %v9819
      %10027 = vmatmul.mubr.bf16.gmra.mrb[0].mxu0 %v9657
      %v10028 = vpop.f32.mrb[0].mxu0
      %v10029 = vadd.f32 0.0, %v10028
      %v10030 = vpop.f32.mrb[0].mxu0
      %v10031 = vpop.f32.mrb[0].mxu0
      %v10032 = vadd.f32 0.0, %v10031
      %v10033 = vpop.f32.mrb[0].mxu0
      %10034 = vmatprep.mubr.bf16.mxu0 %v9822
      %10035 = vmatmul.mubr.bf16.gmra.mrb[0].mxu0 %v9659
      %v10036 = vpop.f32.mrb[0].mxu0
      %v10037 = vadd.f32 0.0, %v10036
      %v10038 = vpop.f32.mrb[0].mxu0
      %v10039 = vpop.f32.mrb[0].mxu0
      %v10040 = vadd.f32 0.0, %v10039
      %v10041 = vpop.f32.mrb[0].mxu0
      %10042 = vmatprep.mubr.bf16.mxu0 %v9825
      %10043 = vmatmul.mubr.bf16.gmra.mrb[0].mxu0 %v9661
      %v10044 = vpop.f32.mrb[0].mxu0
      %v10045 = vadd.f32 0.0, %v10044
      %v10046 = vpop.f32.mrb[0].mxu0
      %v10047 = vpop.f32.mrb[0].mxu0
      %v10048 = vadd.f32 0.0, %v10047
      %v10049 = vpop.f32.mrb[0].mxu0
      %10050 = vmatprep.mubr.bf16.mxu0 %v9828
      %10051 = vmatmul.mubr.bf16.gmra.mrb[0].mxu0 %v9663
      %v10052 = vpop.f32.mrb[0].mxu0
      %v10053 = vadd.f32 0.0, %v10052
      %v10054 = vpop.f32.mrb[0].mxu0
      %v10055 = vpop.f32.mrb[0].mxu0
      %v10056 = vadd.f32 0.0, %v10055
      %v10057 = vpop.f32.mrb[0].mxu0
      %10058 = vmatprep.mubr.bf16.mxu0 %v9831
      %10059 = vmatmul.mubr.bf16.gmra.mrb[0].mxu0 %v9665
      %v10060 = vpop.f32.mrb[0].mxu0
      %v10061 = vadd.f32 0.0, %v10060
      %v10062 = vpop.f32.mrb[0].mxu0
      %v10063 = vpop.f32.mrb[0].mxu0
      %v10064 = vadd.f32 0.0, %v10063
      %v10065 = vpop.f32.mrb[0].mxu0
      %10066 = vmatprep.mubr.bf16.mxu0 %v9834
      %10067 = vmatmul.mubr.bf16.gmra.mrb[0].mxu0 %v9667
      %v10068 = vpop.f32.mrb[0].mxu0
      %v10069 = vadd.f32 0.0, %v10068
      %v10070 = vpop.f32.mrb[0].mxu0
      %v10071 = vpop.f32.mrb[0].mxu0
      %v10072 = vadd.f32 0.0, %v10071
      %v10073 = vpop.f32.mrb[0].mxu0
      %10074 = vmatprep.mubr.bf16.mxu0 %v9837
      %10075 = vmatmul.mubr.bf16.gmra.mrb[0].mxu0 %v9669
      %v10076 = vpop.f32.mrb[0].mxu0
      %v10077 = vadd.f32 0.0, %v10076
      %v10078 = vpop.f32.mrb[0].mxu0
      %v10079 = vpop.f32.mrb[0].mxu0
      %v10080 = vadd.f32 0.0, %v10079
      %v10081 = vpop.f32.mrb[0].mxu0
      %10082 = vmatprep.mubr.bf16.mxu0 %v9840
      %10083 = vmatmul.mubr.bf16.gmra.mrb[0].mxu0 %v9671
      %v10084 = vpop.f32.mrb[0].mxu0
      %v10085 = vadd.f32 0.0, %v10084
      %v10086 = vpop.f32.mrb[0].mxu0
      %v10087 = vpop.f32.mrb[0].mxu0
      %v10088 = vadd.f32 0.0, %v10087
      %v10089 = vpop.f32.mrb[0].mxu0
      %10090 = vmatprep.mubr.bf16.mxu0 %v9843
      %10091 = vmatmul.mubr.bf16.gmra.mrb[0].mxu0 %v9673
      %v10092 = vpop.f32.mrb[0].mxu0
      %v10093 = vadd.f32 0.0, %v10092
      %v10094 = vpop.f32.mrb[0].mxu0
      %v10095 = vpop.f32.mrb[0].mxu0
      %v10096 = vadd.f32 0.0, %v10095
      %v10097 = vpop.f32.mrb[0].mxu0
      %10098 = vmatprep.mubr.bf16.mxu0 %v9846
      %10099 = vmatmul.mubr.bf16.gmra.mrb[0].mxu0 %v9675
      %v10100 = vpop.f32.mrb[0].mxu0
      %v10101 = vadd.f32 0.0, %v10100
      %v10102 = vpop.f32.mrb[0].mxu0
      %v10103 = vpop.f32.mrb[0].mxu0
      %v10104 = vadd.f32 0.0, %v10103
      %v10105 = vpop.f32.mrb[0].mxu0
      %10106 = vmatprep.mubr.bf16.mxu0 %v9849
      %10107 = vmatmul.mubr.bf16.gmra.mrb[0].mxu0 %v9677
      %v10108 = vpop.f32.mrb[0].mxu0
      %v10109 = vadd.f32 0.0, %v10108
      %v10110 = vpop.f32.mrb[0].mxu0
      %v10111 = vpop.f32.mrb[0].mxu0
      %v10112 = vadd.f32 0.0, %v10111
      %v10113 = vpop.f32.mrb[0].mxu0
      %10114 = vmatprep.mubr.bf16.mxu0 %v9852
      %10115 = vmatmul.mubr.bf16.gmra.mrb[0].mxu0 %v9679
      %v10116 = vpop.f32.mrb[0].mxu0
      %v10117 = vadd.f32 0.0, %v10116
      %v10118 = vpop.f32.mrb[0].mxu0
      %v10119 = vpop.f32.mrb[0].mxu0
      %v10120 = vadd.f32 0.0, %v10119
      %v10121 = vpop.f32.mrb[0].mxu0
      %10122 = vmatprep.mubr.bf16.mxu0 %v9855
      %10123 = vmatmul.mubr.bf16.gmra.mrb[0].mxu0 %v9681
      %v10124 = vpop.f32.mrb[0].mxu0
      %v10125 = vadd.f32 0.0, %v10124
      %v10126 = vpop.f32.mrb[0].mxu0
      %v10127 = vpop.f32.mrb[0].mxu0
      %v10128 = vadd.f32 0.0, %v10127
      %v10129 = vpop.f32.mrb[0].mxu0
      %10130 = vmatprep.mubr.bf16.mxu0 %v9858
      %10131 = vmatmul.mubr.bf16.gmra.mrb[0].mxu0 %v9683
      %v10132 = vpop.f32.mrb[0].mxu0
      %v10133 = vadd.f32 0.0, %v10132
      %v10134 = vpop.f32.mrb[0].mxu0
      %v10135 = vpop.f32.mrb[0].mxu0
      %v10136 = vadd.f32 0.0, %v10135
      %v10137 = vpop.f32.mrb[0].mxu0
      %10138 = vmatprep.mubr.bf16.mxu0 %v9861
      %10139 = vmatmul.mubr.bf16.gmra.mrb[0].mxu0 %v9685
      %v10140 = vpop.f32.mrb[0].mxu0
      %v10141 = vadd.f32 0.0, %v10140
      %v10142 = vpop.f32.mrb[0].mxu0
      %v10143 = vpop.f32.mrb[0].mxu0
      %v10144 = vadd.f32 0.0, %v10143
      %v10145 = vpop.f32.mrb[0].mxu0
      %10146 = vmatprep.mubr.bf16.mxu0 %v9864
      %10147 = vmatmul.mubr.bf16.gmra.mrb[0].mxu0 %v9687
      %v10148 = vpop.f32.mrb[0].mxu0
      %v10149 = vadd.f32 0.0, %v10148
      %v10150 = vpop.f32.mrb[0].mxu0
      %v10151 = vpop.f32.mrb[0].mxu0
      %v10152 = vadd.f32 0.0, %v10151
      %v10153 = vpop.f32.mrb[0].mxu0
      %10154 = vdwg.mxu0
      %s10155 = scalar_lea.vmem %s6, 80
      %v10156 = vld [vmem:[%s10155] sm:$0xf]
      %v10157 = vld [vmem:[%s10155 + $0x4] sm:$0xf]
      %v10158 = vld [vmem:[%s10155 + $0x8] sm:$0xf]
      %v10159 = vld [vmem:[%s10155 + $0xc] sm:$0xf]
      %v10160 = vld [vmem:[%s10155 + $0x10] sm:$0xf]
      %v10161 = vld [vmem:[%s10155 + $0x14] sm:$0xf]
      %v10162 = vld [vmem:[%s10155 + $0x18] sm:$0xf]
      %v10163 = vld [vmem:[%s10155 + $0x1c] sm:$0xf]
      %v10164 = vld [vmem:[%s10155 + $0x20] sm:$0xf]
      %v10165 = vld [vmem:[%s10155 + $0x24] sm:$0xf]
      %v10166 = vld [vmem:[%s10155 + $0x28] sm:$0xf]
      %v10167 = vld [vmem:[%s10155 + $0x2c] sm:$0xf]
      %v10168 = vld [vmem:[%s10155 + $0x30] sm:$0xf]
      %v10169 = vld [vmem:[%s10155 + $0x34] sm:$0xf]
      %v10170 = vld [vmem:[%s10155 + $0x38] sm:$0xf]
      %v10171 = vld [vmem:[%s10155 + $0x3c] sm:$0xf]
      %v10172 = vld [vmem:[%s10155 + $0x40] sm:$0xf]
      %v10173 = vld [vmem:[%s10155 + $0x44] sm:$0xf]
      %v10174 = vld [vmem:[%s10155 + $0x48] sm:$0xf]
      %v10175 = vld [vmem:[%s10155 + $0x4c] sm:$0xf]
      %v10196 = vunpack.c.l.b16 %v10156
      %v10197 = vunpack.c.l.b16 %v10157
      %v10198 = vunpack.c.l.b16 %v10158
      %v10199 = vunpack.c.l.b16 %v10159
      %v10200 = vunpack.c.l.b16 %v10160
      %v10201 = vunpack.c.l.b16 %v10161
      %v10202 = vunpack.c.l.b16 %v10162
      %v10203 = vunpack.c.l.b16 %v10163
      %v10204 = vunpack.c.l.b16 %v10164
      %v10205 = vunpack.c.l.b16 %v10165
      %v10206 = vunpack.c.l.b16 %v10166
      %v10207 = vunpack.c.l.b16 %v10167
      %v10208 = vunpack.c.l.b16 %v10168
      %v10209 = vunpack.c.l.b16 %v10169
      %v10210 = vunpack.c.l.b16 %v10170
      %v10211 = vunpack.c.l.b16 %v10171
      %v10212 = vunpack.c.l.b16 %v10172
      %v10213 = vunpack.c.l.b16 %v10173
      %v10214 = vunpack.c.l.b16 %v10174
      %v10215 = vunpack.c.l.b16 %v10175
      %v10216 = vpack.c.b16 %v10197, %v10196
      %v10217 = vpack.c.b16 %v10199, %v10198
      %v10218 = vpack.c.b16 %v10201, %v10200
      %v10219 = vpack.c.b16 %v10203, %v10202
      %v10220 = vpack.c.b16 %v10205, %v10204
      %v10221 = vpack.c.b16 %v10207, %v10206
      %v10222 = vpack.c.b16 %v10209, %v10208
      %v10223 = vpack.c.b16 %v10211, %v10210
      %v10224 = vpack.c.b16 %v10213, %v10212
      %v10225 = vpack.c.b16 %v10215, %v10214
      %10236 = vmatprep.subr.bf16.mxu0 0
      %10237 = vmatpush1.bf16.msra.mxu0 %v10216
      %10238 = vmatprep.subr.bf16.mxu0 0
      %10239 = vmatpush1.bf16.msra.mxu0 %v10217
      %10240 = vmatprep.subr.bf16.mxu0 0
      %10241 = vmatpush1.bf16.msra.mxu0 %v10218
      %10242 = vmatprep.subr.bf16.mxu0 0
      %10243 = vmatpush1.bf16.msra.mxu0 %v10219
      %10244 = vmatprep.subr.bf16.mxu0 0
      %10245 = vmatpush1.bf16.msra.mxu0 %v10220
      %10246 = vmatprep.subr.bf16.mxu0 0
      %10247 = vmatpush1.bf16.msra.mxu0 %v10221
      %10248 = vmatprep.subr.bf16.mxu0 0
      %10249 = vmatpush1.bf16.msra.mxu0 %v10222
      %10250 = vmatprep.subr.bf16.mxu0 0
      %10251 = vmatpush1.bf16.msra.mxu0 %v10223
      %10252 = vmatprep.subr.bf16.mxu0 0
      %10253 = vmatpush1.bf16.msra.mxu0 %v10224
      %10254 = vmatprep.subr.bf16.mxu0 0
      %10255 = vmatpush1.bf16.msra.mxu0 %v10225
      %10256 = vmatprep.subr.bf16.mxu0 0
      %10257 = vmatpush1.bf16.msra.mxu0 0
      %10258 = vmatprep.subr.bf16.mxu0 0
      %10259 = vmatpush1.bf16.msra.mxu0 0
      %10260 = vmatprep.subr.bf16.mxu0 0
      %10261 = vmatpush1.bf16.msra.mxu0 0
      %10262 = vmatprep.subr.bf16.mxu0 0
      %10263 = vmatpush1.bf16.msra.mxu0 0
      %10264 = vmatprep.subr.bf16.mxu0 0
      %10265 = vmatpush1.bf16.msra.mxu0 0
      %10266 = vmatprep.subr.bf16.mxu0 0
      %10267 = vmatpush1.bf16.msra.mxu0 0
      %10268 = vmatprep.mubr.bf16.mxu0 %v9771
      %10269 = vmatmul.mubr.bf16.gmra.mrb[0].mxu0 %v9625
      %v10270 = vpop.f32.mrb[0].mxu0
      %v10271 = vadd.f32 0.0, %v10270
      %v10272 = vpop.f32.mrb[0].mxu0
      %v10273 = vpop.f32.mrb[0].mxu0
      %v10274 = vadd.f32 0.0, %v10273
      %v10275 = vpop.f32.mrb[0].mxu0
      %10276 = vmatprep.mubr.bf16.mxu0 %v9774
      %10277 = vmatmul.mubr.bf16.gmra.mrb[0].mxu0 %v9627
      %v10278 = vpop.f32.mrb[0].mxu0
      %v10279 = vadd.f32 0.0, %v10278
      %v10280 = vpop.f32.mrb[0].mxu0
      %v10281 = vpop.f32.mrb[0].mxu0
      %v10282 = vadd.f32 0.0, %v10281
      %v10283 = vpop.f32.mrb[0].mxu0
      %10284 = vmatprep.mubr.bf16.mxu0 %v9777
      %10285 = vmatmul.mubr.bf16.gmra.mrb[0].mxu0 %v9629
      %v10286 = vpop.f32.mrb[0].mxu0
      %v10287 = vadd.f32 0.0, %v10286
      %v10288 = vpop.f32.mrb[0].mxu0
      %v10289 = vpop.f32.mrb[0].mxu0
      %v10290 = vadd.f32 0.0, %v10289
      %v10291 = vpop.f32.mrb[0].mxu0
      %10292 = vmatprep.mubr.bf16.mxu0 %v9780
      %10293 = vmatmul.mubr.bf16.gmra.mrb[0].mxu0 %v9631
      %v10294 = vpop.f32.mrb[0].mxu0
      %v10295 = vadd.f32 0.0, %v10294
      %v10296 = vpop.f32.mrb[0].mxu0
      %v10297 = vpop.f32.mrb[0].mxu0
      %v10298 = vadd.f32 0.0, %v10297
      %v10299 = vpop.f32.mrb[0].mxu0
      %10300 = vmatprep.mubr.bf16.mxu0 %v9783
      %10301 = vmatmul.mubr.bf16.gmra.mrb[0].mxu0 %v9633
      %v10302 = vpop.f32.mrb[0].mxu0
      %v10303 = vadd.f32 0.0, %v10302
      %v10304 = vpop.f32.mrb[0].mxu0
      %v10305 = vpop.f32.mrb[0].mxu0
      %v10306 = vadd.f32 0.0, %v10305
      %v10307 = vpop.f32.mrb[0].mxu0
      %10308 = vmatprep.mubr.bf16.mxu0 %v9786
      %10309 = vmatmul.mubr.bf16.gmra.mrb[0].mxu0 %v9635
      %v10310 = vpop.f32.mrb[0].mxu0
      %v10311 = vadd.f32 0.0, %v10310
      %v10312 = vpop.f32.mrb[0].mxu0
      %v10313 = vpop.f32.mrb[0].mxu0
      %v10314 = vadd.f32 0.0, %v10313
      %v10315 = vpop.f32.mrb[0].mxu0
      %10316 = vmatprep.mubr.bf16.mxu0 %v9789
      %10317 = vmatmul.mubr.bf16.gmra.mrb[0].mxu0 %v9637
      %v10318 = vpop.f32.mrb[0].mxu0
      %v10319 = vadd.f32 0.0, %v10318
      %v10320 = vpop.f32.mrb[0].mxu0
      %v10321 = vpop.f32.mrb[0].mxu0
      %v10322 = vadd.f32 0.0, %v10321
      %v10323 = vpop.f32.mrb[0].mxu0
      %10324 = vmatprep.mubr.bf16.mxu0 %v9792
      %10325 = vmatmul.mubr.bf16.gmra.mrb[0].mxu0 %v9639
      %v10326 = vpop.f32.mrb[0].mxu0
      %v10327 = vadd.f32 0.0, %v10326
      %v10328 = vpop.f32.mrb[0].mxu0
      %v10329 = vpop.f32.mrb[0].mxu0
      %v10330 = vadd.f32 0.0, %v10329
      %v10331 = vpop.f32.mrb[0].mxu0
      %10332 = vmatprep.mubr.bf16.mxu0 %v9795
      %10333 = vmatmul.mubr.bf16.gmra.mrb[0].mxu0 %v9641
      %v10334 = vpop.f32.mrb[0].mxu0
      %v10335 = vadd.f32 0.0, %v10334
      %v10336 = vpop.f32.mrb[0].mxu0
      %v10337 = vpop.f32.mrb[0].mxu0
      %v10338 = vadd.f32 0.0, %v10337
      %v10339 = vpop.f32.mrb[0].mxu0
      %10340 = vmatprep.mubr.bf16.mxu0 %v9798
      %10341 = vmatmul.mubr.bf16.gmra.mrb[0].mxu0 %v9643
      %v10342 = vpop.f32.mrb[0].mxu0
      %v10343 = vadd.f32 0.0, %v10342
      %v10344 = vpop.f32.mrb[0].mxu0
      %v10345 = vpop.f32.mrb[0].mxu0
      %v10346 = vadd.f32 0.0, %v10345
      %v10347 = vpop.f32.mrb[0].mxu0
      %10348 = vmatprep.mubr.bf16.mxu0 %v9801
      %10349 = vmatmul.mubr.bf16.gmra.mrb[0].mxu0 %v9645
      %v10350 = vpop.f32.mrb[0].mxu0
      %v10351 = vadd.f32 0.0, %v10350
      %v10352 = vpop.f32.mrb[0].mxu0
      %v10353 = vpop.f32.mrb[0].mxu0
      %v10354 = vadd.f32 0.0, %v10353
      %v10355 = vpop.f32.mrb[0].mxu0
      %10356 = vmatprep.mubr.bf16.mxu0 %v9804
      %10357 = vmatmul.mubr.bf16.gmra.mrb[0].mxu0 %v9647
      %v10358 = vpop.f32.mrb[0].mxu0
      %v10359 = vadd.f32 0.0, %v10358
      %v10360 = vpop.f32.mrb[0].mxu0
      %v10361 = vpop.f32.mrb[0].mxu0
      %v10362 = vadd.f32 0.0, %v10361
      %v10363 = vpop.f32.mrb[0].mxu0
      %10364 = vmatprep.mubr.bf16.mxu0 %v9807
      %10365 = vmatmul.mubr.bf16.gmra.mrb[0].mxu0 %v9649
      %v10366 = vpop.f32.mrb[0].mxu0
      %v10367 = vadd.f32 0.0, %v10366
      %v10368 = vpop.f32.mrb[0].mxu0
      %v10369 = vpop.f32.mrb[0].mxu0
      %v10370 = vadd.f32 0.0, %v10369
      %v10371 = vpop.f32.mrb[0].mxu0
      %10372 = vmatprep.mubr.bf16.mxu0 %v9810
      %10373 = vmatmul.mubr.bf16.gmra.mrb[0].mxu0 %v9651
      %v10374 = vpop.f32.mrb[0].mxu0
      %v10375 = vadd.f32 0.0, %v10374
      %v10376 = vpop.f32.mrb[0].mxu0
      %v10377 = vpop.f32.mrb[0].mxu0
      %v10378 = vadd.f32 0.0, %v10377
      %v10379 = vpop.f32.mrb[0].mxu0
      %10380 = vmatprep.mubr.bf16.mxu0 %v9813
      %10381 = vmatmul.mubr.bf16.gmra.mrb[0].mxu0 %v9653
      %v10382 = vpop.f32.mrb[0].mxu0
      %v10383 = vadd.f32 0.0, %v10382
      %v10384 = vpop.f32.mrb[0].mxu0
      %v10385 = vpop.f32.mrb[0].mxu0
      %v10386 = vadd.f32 0.0, %v10385
      %v10387 = vpop.f32.mrb[0].mxu0
      %10388 = vmatprep.mubr.bf16.mxu0 %v9816
      %10389 = vmatmul.mubr.bf16.gmra.mrb[0].mxu0 %v9655
      %v10390 = vpop.f32.mrb[0].mxu0
      %v10391 = vadd.f32 0.0, %v10390
      %v10392 = vpop.f32.mrb[0].mxu0
      %v10393 = vpop.f32.mrb[0].mxu0
      %v10394 = vadd.f32 0.0, %v10393
      %v10395 = vpop.f32.mrb[0].mxu0
      %10396 = vmatprep.mubr.bf16.mxu0 %v9819
      %10397 = vmatmul.mubr.bf16.gmra.mrb[0].mxu0 %v9657
      %v10398 = vpop.f32.mrb[0].mxu0
      %v10399 = vadd.f32 0.0, %v10398
      %v10400 = vpop.f32.mrb[0].mxu0
      %v10401 = vpop.f32.mrb[0].mxu0
      %v10402 = vadd.f32 0.0, %v10401
      %v10403 = vpop.f32.mrb[0].mxu0
      %10404 = vmatprep.mubr.bf16.mxu0 %v9822
      %10405 = vmatmul.mubr.bf16.gmra.mrb[0].mxu0 %v9659
      %v10406 = vpop.f32.mrb[0].mxu0
      %v10407 = vadd.f32 0.0, %v10406
      %v10408 = vpop.f32.mrb[0].mxu0
      %v10409 = vpop.f32.mrb[0].mxu0
      %v10410 = vadd.f32 0.0, %v10409
      %v10411 = vpop.f32.mrb[0].mxu0
      %10412 = vmatprep.mubr.bf16.mxu0 %v9825
      %10413 = vmatmul.mubr.bf16.gmra.mrb[0].mxu0 %v9661
      %v10414 = vpop.f32.mrb[0].mxu0
      %v10415 = vadd.f32 0.0, %v10414
      %v10416 = vpop.f32.mrb[0].mxu0
      %v10417 = vpop.f32.mrb[0].mxu0
      %v10418 = vadd.f32 0.0, %v10417
      %v10419 = vpop.f32.mrb[0].mxu0
      %10420 = vmatprep.mubr.bf16.mxu0 %v9828
      %10421 = vmatmul.mubr.bf16.gmra.mrb[0].mxu0 %v9663
      %v10422 = vpop.f32.mrb[0].mxu0
      %v10423 = vadd.f32 0.0, %v10422
      %v10424 = vpop.f32.mrb[0].mxu0
      %v10425 = vpop.f32.mrb[0].mxu0
      %v10426 = vadd.f32 0.0, %v10425
      %v10427 = vpop.f32.mrb[0].mxu0
      %10428 = vmatprep.mubr.bf16.mxu0 %v9831
      %10429 = vmatmul.mubr.bf16.gmra.mrb[0].mxu0 %v9665
      %v10430 = vpop.f32.mrb[0].mxu0
      %v10431 = vadd.f32 0.0, %v10430
      %v10432 = vpop.f32.mrb[0].mxu0
      %v10433 = vpop.f32.mrb[0].mxu0
      %v10434 = vadd.f32 0.0, %v10433
      %v10435 = vpop.f32.mrb[0].mxu0
      %10436 = vmatprep.mubr.bf16.mxu0 %v9834
      %10437 = vmatmul.mubr.bf16.gmra.mrb[0].mxu0 %v9667
      %v10438 = vpop.f32.mrb[0].mxu0
      %v10439 = vadd.f32 0.0, %v10438
      %v10440 = vpop.f32.mrb[0].mxu0
      %v10441 = vpop.f32.mrb[0].mxu0
      %v10442 = vadd.f32 0.0, %v10441
      %v10443 = vpop.f32.mrb[0].mxu0
      %10444 = vmatprep.mubr.bf16.mxu0 %v9837
      %10445 = vmatmul.mubr.bf16.gmra.mrb[0].mxu0 %v9669
      %v10446 = vpop.f32.mrb[0].mxu0
      %v10447 = vadd.f32 0.0, %v10446
      %v10448 = vpop.f32.mrb[0].mxu0
      %v10449 = vpop.f32.mrb[0].mxu0
      %v10450 = vadd.f32 0.0, %v10449
      %v10451 = vpop.f32.mrb[0].mxu0
      %10452 = vmatprep.mubr.bf16.mxu0 %v9840
      %10453 = vmatmul.mubr.bf16.gmra.mrb[0].mxu0 %v9671
      %v10454 = vpop.f32.mrb[0].mxu0
      %v10455 = vadd.f32 0.0, %v10454
      %v10456 = vpop.f32.mrb[0].mxu0
      %v10457 = vpop.f32.mrb[0].mxu0
      %v10458 = vadd.f32 0.0, %v10457
      %v10459 = vpop.f32.mrb[0].mxu0
      %10460 = vmatprep.mubr.bf16.mxu0 %v9843
      %10461 = vmatmul.mubr.bf16.gmra.mrb[0].mxu0 %v9673
      %v10462 = vpop.f32.mrb[0].mxu0
      %v10463 = vadd.f32 0.0, %v10462
      %v10464 = vpop.f32.mrb[0].mxu0
      %v10465 = vpop.f32.mrb[0].mxu0
      %v10466 = vadd.f32 0.0, %v10465
      %v10467 = vpop.f32.mrb[0].mxu0
      %10468 = vmatprep.mubr.bf16.mxu0 %v9846
      %10469 = vmatmul.mubr.bf16.gmra.mrb[0].mxu0 %v9675
      %v10470 = vpop.f32.mrb[0].mxu0
      %v10471 = vadd.f32 0.0, %v10470
      %v10472 = vpop.f32.mrb[0].mxu0
      %v10473 = vpop.f32.mrb[0].mxu0
      %v10474 = vadd.f32 0.0, %v10473
      %v10475 = vpop.f32.mrb[0].mxu0
      %10476 = vmatprep.mubr.bf16.mxu0 %v9849
      %10477 = vmatmul.mubr.bf16.gmra.mrb[0].mxu0 %v9677
      %v10478 = vpop.f32.mrb[0].mxu0
      %v10479 = vadd.f32 0.0, %v10478
      %v10480 = vpop.f32.mrb[0].mxu0
      %v10481 = vpop.f32.mrb[0].mxu0
      %v10482 = vadd.f32 0.0, %v10481
      %v10483 = vpop.f32.mrb[0].mxu0
      %10484 = vmatprep.mubr.bf16.mxu0 %v9852
      %10485 = vmatmul.mubr.bf16.gmra.mrb[0].mxu0 %v9679
      %v10486 = vpop.f32.mrb[0].mxu0
      %v10487 = vadd.f32 0.0, %v10486
      %v10488 = vpop.f32.mrb[0].mxu0
      %v10489 = vpop.f32.mrb[0].mxu0
      %v10490 = vadd.f32 0.0, %v10489
      %v10491 = vpop.f32.mrb[0].mxu0
      %10492 = vmatprep.mubr.bf16.mxu0 %v9855
      %10493 = vmatmul.mubr.bf16.gmra.mrb[0].mxu0 %v9681
      %v10494 = vpop.f32.mrb[0].mxu0
      %v10495 = vadd.f32 0.0, %v10494
      %v10496 = vpop.f32.mrb[0].mxu0
      %v10497 = vpop.f32.mrb[0].mxu0
      %v10498 = vadd.f32 0.0, %v10497
      %v10499 = vpop.f32.mrb[0].mxu0
      %10500 = vmatprep.mubr.bf16.mxu0 %v9858
      %10501 = vmatmul.mubr.bf16.gmra.mrb[0].mxu0 %v9683
      %v10502 = vpop.f32.mrb[0].mxu0
      %v10503 = vadd.f32 0.0, %v10502
      %v10504 = vpop.f32.mrb[0].mxu0
      %v10505 = vpop.f32.mrb[0].mxu0
      %v10506 = vadd.f32 0.0, %v10505
      %v10507 = vpop.f32.mrb[0].mxu0
      %10508 = vmatprep.mubr.bf16.mxu0 %v9861
      %10509 = vmatmul.mubr.bf16.gmra.mrb[0].mxu0 %v9685
      %v10510 = vpop.f32.mrb[0].mxu0
      %v10511 = vadd.f32 0.0, %v10510
      %v10512 = vpop.f32.mrb[0].mxu0
      %v10513 = vpop.f32.mrb[0].mxu0
      %v10514 = vadd.f32 0.0, %v10513
      %v10515 = vpop.f32.mrb[0].mxu0
      %10516 = vmatprep.mubr.bf16.mxu0 %v9864
      %10517 = vmatmul.mubr.bf16.gmra.mrb[0].mxu0 %v9687
      %v10518 = vpop.f32.mrb[0].mxu0
      %v10519 = vadd.f32 0.0, %v10518
      %v10520 = vpop.f32.mrb[0].mxu0
      %v10521 = vpop.f32.mrb[0].mxu0
      %v10522 = vadd.f32 0.0, %v10521
      %v10523 = vpop.f32.mrb[0].mxu0
      %10524 = vdwg.mxu0
      %v10525 = vmax.f32 %v9901, %v10271
      %v10526 = vmax.f32 %v9904, %v10274
      %v10527 = vmax.f32 %v9909, %v10279
      %v10528 = vmax.f32 %v9912, %v10282
      %v10529 = vmax.f32 %v9917, %v10287
      %v10530 = vmax.f32 %v9920, %v10290
      %v10531 = vmax.f32 %v9925, %v10295
      %v10532 = vmax.f32 %v9928, %v10298
      %v10533 = vmax.f32 %v9933, %v10303
      %v10534 = vmax.f32 %v9936, %v10306
      %v10535 = vmax.f32 %v9941, %v10311
      %v10536 = vmax.f32 %v9944, %v10314
      %v10537 = vmax.f32 %v9949, %v10319
      %v10538 = vmax.f32 %v9952, %v10322
      %v10539 = vmax.f32 %v9957, %v10327
      %v10540 = vmax.f32 %v9960, %v10330
      %v10541 = vmax.f32 %v9965, %v10335
      %v10542 = vmax.f32 %v9968, %v10338
      %v10543 = vmax.f32 %v9973, %v10343
      %v10544 = vmax.f32 %v9976, %v10346
      %v10545 = vmax.f32 %v9981, %v10351
      %v10546 = vmax.f32 %v9984, %v10354
      %v10547 = vmax.f32 %v9989, %v10359
      %v10548 = vmax.f32 %v9992, %v10362
      %v10549 = vmax.f32 %v9997, %v10367
      %v10550 = vmax.f32 %v10000, %v10370
      %v10551 = vmax.f32 %v10005, %v10375
      %v10552 = vmax.f32 %v10008, %v10378
      %v10553 = vmax.f32 %v10013, %v10383
      %v10554 = vmax.f32 %v10016, %v10386
      %v10555 = vmax.f32 %v10021, %v10391
      %v10556 = vmax.f32 %v10024, %v10394
      %v10557 = vmax.f32 %v10029, %v10399
      %v10558 = vmax.f32 %v10032, %v10402
      %v10559 = vmax.f32 %v10037, %v10407
      %v10560 = vmax.f32 %v10040, %v10410
      %v10561 = vmax.f32 %v10045, %v10415
      %v10562 = vmax.f32 %v10048, %v10418
      %v10563 = vmax.f32 %v10053, %v10423
      %v10564 = vmax.f32 %v10056, %v10426
      %v10565 = vmax.f32 %v10061, %v10431
      %v10566 = vmax.f32 %v10064, %v10434
      %v10567 = vmax.f32 %v10069, %v10439
      %v10568 = vmax.f32 %v10072, %v10442
      %v10569 = vmax.f32 %v10077, %v10447
      %v10570 = vmax.f32 %v10080, %v10450
      %v10571 = vmax.f32 %v10085, %v10455
      %v10572 = vmax.f32 %v10088, %v10458
      %v10573 = vmax.f32 %v10093, %v10463
      %v10574 = vmax.f32 %v10096, %v10466
      %v10575 = vmax.f32 %v10101, %v10471
      %v10576 = vmax.f32 %v10104, %v10474
      %v10577 = vmax.f32 %v10109, %v10479
      %v10578 = vmax.f32 %v10112, %v10482
      %v10579 = vmax.f32 %v10117, %v10487
      %v10580 = vmax.f32 %v10120, %v10490
      %v10581 = vmax.f32 %v10125, %v10495
      %v10582 = vmax.f32 %v10128, %v10498
      %v10583 = vmax.f32 %v10133, %v10503
      %v10584 = vmax.f32 %v10136, %v10506
      %v10585 = vmax.f32 %v10141, %v10511
      %v10586 = vmax.f32 %v10144, %v10514
      %v10587 = vmax.f32 %v10149, %v10519
      %v10588 = vmax.f32 %v10152, %v10522
      %v10589 = vpack.c.bf16 %v10526, %v10525
      %v10590 = vpack.c.bf16 %v10528, %v10527
      %v10591 = vpack.c.bf16 %v10530, %v10529
      %v10592 = vpack.c.bf16 %v10532, %v10531
      %v10593 = vpack.c.bf16 %v10534, %v10533
      %v10594 = vpack.c.bf16 %v10536, %v10535
      %v10595 = vpack.c.bf16 %v10538, %v10537
      %v10596 = vpack.c.bf16 %v10540, %v10539
      %v10597 = vpack.c.bf16 %v10542, %v10541
      %v10598 = vpack.c.bf16 %v10544, %v10543
      %v10599 = vpack.c.bf16 %v10546, %v10545
      %v10600 = vpack.c.bf16 %v10548, %v10547
      %v10601 = vpack.c.bf16 %v10550, %v10549
      %v10602 = vpack.c.bf16 %v10552, %v10551
      %v10603 = vpack.c.bf16 %v10554, %v10553
      %v10604 = vpack.c.bf16 %v10556, %v10555
      %v10605 = vpack.c.bf16 %v10558, %v10557
      %v10606 = vpack.c.bf16 %v10560, %v10559
      %v10607 = vpack.c.bf16 %v10562, %v10561
      %v10608 = vpack.c.bf16 %v10564, %v10563
      %v10609 = vpack.c.bf16 %v10566, %v10565
      %v10610 = vpack.c.bf16 %v10568, %v10567
      %v10611 = vpack.c.bf16 %v10570, %v10569
      %v10612 = vpack.c.bf16 %v10572, %v10571
      %v10613 = vpack.c.bf16 %v10574, %v10573
      %v10614 = vpack.c.bf16 %v10576, %v10575
      %v10615 = vpack.c.bf16 %v10578, %v10577
      %v10616 = vpack.c.bf16 %v10580, %v10579
      %v10617 = vpack.c.bf16 %v10582, %v10581
      %v10618 = vpack.c.bf16 %v10584, %v10583
      %v10619 = vpack.c.bf16 %v10586, %v10585
      %v10620 = vpack.c.bf16 %v10588, %v10587
      %v10621 = vld [vmem:[%s11] sm:$0xff]
      %v10622 = vld [vmem:[%s11 + $0x8] sm:$0xff]
      %v10623 = vld [vmem:[%s11 + $0x10] sm:$0xff]
      %v10624 = vld [vmem:[%s11 + $0x18] sm:$0xff]
      %v10625 = vld [vmem:[%s11 + $0x20] sm:$0xff]
      %v10626 = vld [vmem:[%s11 + $0x28] sm:$0xff]
      %v10627 = vld [vmem:[%s11 + $0x30] sm:$0xff]
      %v10628 = vld [vmem:[%s11 + $0x38] sm:$0xff]
      %v10629 = vld [vmem:[%s11 + $0x40] sm:$0xff]
      %v10630 = vld [vmem:[%s11 + $0x48] sm:$0xff]
      %v10631 = vld [vmem:[%s11 + $0x50] sm:$0xff]
      %v10632 = vld [vmem:[%s11 + $0x58] sm:$0xff]
      %v10633 = vld [vmem:[%s11 + $0x60] sm:$0xff]
      %v10634 = vld [vmem:[%s11 + $0x68] sm:$0xff]
      %v10635 = vld [vmem:[%s11 + $0x70] sm:$0xff]
      %v10636 = vld [vmem:[%s11 + $0x78] sm:$0xff]
      %v10637 = vld [vmem:[%s11 + $0x80] sm:$0xff]
      %v10638 = vld [vmem:[%s11 + $0x88] sm:$0xff]
      %v10639 = vld [vmem:[%s11 + $0x90] sm:$0xff]
      %v10640 = vld [vmem:[%s11 + $0x98] sm:$0xff]
      %v10641 = vld [vmem:[%s11 + $0xa0] sm:$0xff]
      %v10642 = vld [vmem:[%s11 + $0xa8] sm:$0xff]
      %v10643 = vld [vmem:[%s11 + $0xb0] sm:$0xff]
      %v10644 = vld [vmem:[%s11 + $0xb8] sm:$0xff]
      %v10645 = vld [vmem:[%s11 + $0xc0] sm:$0xff]
      %v10646 = vld [vmem:[%s11 + $0xc8] sm:$0xff]
      %v10647 = vld [vmem:[%s11 + $0xd0] sm:$0xff]
      %v10648 = vld [vmem:[%s11 + $0xd8] sm:$0xff]
      %v10649 = vld [vmem:[%s11 + $0xe0] sm:$0xff]
      %v10650 = vld [vmem:[%s11 + $0xe8] sm:$0xff]
      %v10651 = vld [vmem:[%s11 + $0xf0] sm:$0xff]
      %v10652 = vld [vmem:[%s11 + $0xf8] sm:$0xff]
      %v10685 = vunpack.c.l.b16 %v10621
      %v10686 = vunpack.c.h.b16 %v10621
      %v10687 = vunpack.c.l.b16 %v10622
      %v10688 = vunpack.c.h.b16 %v10622
      %v10689 = vunpack.c.l.b16 %v10623
      %v10690 = vunpack.c.h.b16 %v10623
      %v10691 = vunpack.c.l.b16 %v10624
      %v10692 = vunpack.c.h.b16 %v10624
      %v10693 = vunpack.c.l.b16 %v10625
      %v10694 = vunpack.c.h.b16 %v10625
      %v10695 = vunpack.c.l.b16 %v10626
      %v10696 = vunpack.c.h.b16 %v10626
      %v10697 = vunpack.c.l.b16 %v10627
      %v10698 = vunpack.c.h.b16 %v10627
      %v10699 = vunpack.c.l.b16 %v10628
      %v10700 = vunpack.c.h.b16 %v10628
      %v10701 = vunpack.c.l.b16 %v10629
      %v10702 = vunpack.c.h.b16 %v10629
      %v10703 = vunpack.c.l.b16 %v10630
      %v10704 = vunpack.c.h.b16 %v10630
      %v10705 = vunpack.c.l.b16 %v10631
      %v10706 = vunpack.c.h.b16 %v10631
      %v10707 = vunpack.c.l.b16 %v10632
      %v10708 = vunpack.c.h.b16 %v10632
      %v10709 = vunpack.c.l.b16 %v10633
      %v10710 = vunpack.c.h.b16 %v10633
      %v10711 = vunpack.c.l.b16 %v10634
      %v10712 = vunpack.c.h.b16 %v10634
      %v10713 = vunpack.c.l.b16 %v10635
      %v10714 = vunpack.c.h.b16 %v10635
      %v10715 = vunpack.c.l.b16 %v10636
      %v10716 = vunpack.c.h.b16 %v10636
      %v10717 = vunpack.c.l.b16 %v10637
      %v10718 = vunpack.c.h.b16 %v10637
      %v10719 = vunpack.c.l.b16 %v10638
      %v10720 = vunpack.c.h.b16 %v10638
      %v10721 = vunpack.c.l.b16 %v10639
      %v10722 = vunpack.c.h.b16 %v10639
      %v10723 = vunpack.c.l.b16 %v10640
      %v10724 = vunpack.c.h.b16 %v10640
      %v10725 = vunpack.c.l.b16 %v10641
      %v10726 = vunpack.c.h.b16 %v10641
      %v10727 = vunpack.c.l.b16 %v10642
      %v10728 = vunpack.c.h.b16 %v10642
      %v10729 = vunpack.c.l.b16 %v10643
      %v10730 = vunpack.c.h.b16 %v10643
      %v10731 = vunpack.c.l.b16 %v10644
      %v10732 = vunpack.c.h.b16 %v10644
      %v10733 = vunpack.c.l.b16 %v10645
      %v10734 = vunpack.c.h.b16 %v10645
      %v10735 = vunpack.c.l.b16 %v10646
      %v10736 = vunpack.c.h.b16 %v10646
      %v10737 = vunpack.c.l.b16 %v10647
      %v10738 = vunpack.c.h.b16 %v10647
      %v10739 = vunpack.c.l.b16 %v10648
      %v10740 = vunpack.c.h.b16 %v10648
      %v10741 = vunpack.c.l.b16 %v10649
      %v10742 = vunpack.c.h.b16 %v10649
      %v10743 = vunpack.c.l.b16 %v10650
      %v10744 = vunpack.c.h.b16 %v10650
      %v10745 = vunpack.c.l.b16 %v10651
      %v10746 = vunpack.c.h.b16 %v10651
      %v10747 = vunpack.c.l.b16 %v10652
      %v10748 = vunpack.c.h.b16 %v10652
      %v10749 = vpack.c.b16 %v10689, %v10685
      %v10750 = vpack.c.b16 %v10690, %v10686
      %v10751 = vpack.c.b16 %v10691, %v10687
      %v10752 = vpack.c.b16 %v10692, %v10688
      %v10753 = vpack.c.b16 %v10697, %v10693
      %v10754 = vpack.c.b16 %v10698, %v10694
      %v10755 = vpack.c.b16 %v10699, %v10695
      %v10756 = vpack.c.b16 %v10700, %v10696
      %v10757 = vpack.c.b16 %v10705, %v10701
      %v10758 = vpack.c.b16 %v10706, %v10702
      %v10759 = vpack.c.b16 %v10707, %v10703
      %v10760 = vpack.c.b16 %v10708, %v10704
      %v10761 = vpack.c.b16 %v10713, %v10709
      %v10762 = vpack.c.b16 %v10714, %v10710
      %v10763 = vpack.c.b16 %v10715, %v10711
      %v10764 = vpack.c.b16 %v10716, %v10712
      %v10765 = vpack.c.b16 %v10721, %v10717
      %v10766 = vpack.c.b16 %v10722, %v10718
      %v10767 = vpack.c.b16 %v10723, %v10719
      %v10768 = vpack.c.b16 %v10724, %v10720
      %v10769 = vpack.c.b16 %v10729, %v10725
      %v10770 = vpack.c.b16 %v10730, %v10726
      %v10771 = vpack.c.b16 %v10731, %v10727
      %v10772 = vpack.c.b16 %v10732, %v10728
      %v10773 = vpack.c.b16 %v10737, %v10733
      %v10774 = vpack.c.b16 %v10738, %v10734
      %v10775 = vpack.c.b16 %v10739, %v10735
      %v10776 = vpack.c.b16 %v10740, %v10736
      %v10777 = vpack.c.b16 %v10745, %v10741
      %v10778 = vpack.c.b16 %v10746, %v10742
      %v10779 = vpack.c.b16 %v10747, %v10743
      %v10780 = vpack.c.b16 %v10748, %v10744
      %10813 = vmatprep.subr.bf16.mxu0 0
      %10814 = vmatpush1.bf16.msra.mxu0 %v10589
      %10815 = vmatprep.subr.bf16.mxu0 0
      %10816 = vmatpush1.bf16.msra.mxu0 %v10590
      %10817 = vmatprep.subr.bf16.mxu0 0
      %10818 = vmatpush1.bf16.msra.mxu0 %v10591
      %10819 = vmatprep.subr.bf16.mxu0 0
      %10820 = vmatpush1.bf16.msra.mxu0 %v10592
      %10821 = vmatprep.subr.bf16.mxu0 0
      %10822 = vmatpush1.bf16.msra.mxu0 %v10593
      %10823 = vmatprep.subr.bf16.mxu0 0
      %10824 = vmatpush1.bf16.msra.mxu0 %v10594
      %10825 = vmatprep.subr.bf16.mxu0 0
      %10826 = vmatpush1.bf16.msra.mxu0 %v10595
      %10827 = vmatprep.subr.bf16.mxu0 0
      %10828 = vmatpush1.bf16.msra.mxu0 %v10596
      %10829 = vmatprep.subr.bf16.mxu0 0
      %10830 = vmatpush1.bf16.msra.mxu0 %v10597
      %10831 = vmatprep.subr.bf16.mxu0 0
      %10832 = vmatpush1.bf16.msra.mxu0 %v10598
      %10833 = vmatprep.subr.bf16.mxu0 0
      %10834 = vmatpush1.bf16.msra.mxu0 %v10599
      %10835 = vmatprep.subr.bf16.mxu0 0
      %10836 = vmatpush1.bf16.msra.mxu0 %v10600
      %10837 = vmatprep.subr.bf16.mxu0 0
      %10838 = vmatpush1.bf16.msra.mxu0 %v10601
      %10839 = vmatprep.subr.bf16.mxu0 0
      %10840 = vmatpush1.bf16.msra.mxu0 %v10602
      %10841 = vmatprep.subr.bf16.mxu0 0
      %10842 = vmatpush1.bf16.msra.mxu0 %v10603
      %10843 = vmatprep.subr.bf16.mxu0 0
      %10844 = vmatpush1.bf16.msra.mxu0 %v10604
      %10845 = vmatprep.mubr.bf16.mxu0 %v10750
      %10846 = vmatmul.mubr.bf16.gmra.mrb[0].mxu0 %v10749
      %v10847 = vpop.f32.mrb[0].mxu0
      %v10848 = vadd.f32 0.0, %v10847
      %v10849 = vpop.f32.mrb[0].mxu0
      %v10850 = vpop.f32.mrb[0].mxu0
      %v10851 = vadd.f32 0.0, %v10850
      %v10852 = vpop.f32.mrb[0].mxu0
      %10853 = vmatprep.mubr.bf16.mxu0 %v10754
      %10854 = vmatmul.mubr.bf16.gmra.mrb[0].mxu0 %v10753
      %v10855 = vpop.f32.mrb[0].mxu0
      %v10856 = vadd.f32 0.0, %v10855
      %v10857 = vpop.f32.mrb[0].mxu0
      %v10858 = vpop.f32.mrb[0].mxu0
      %v10859 = vadd.f32 0.0, %v10858
      %v10860 = vpop.f32.mrb[0].mxu0
      %10861 = vmatprep.mubr.bf16.mxu0 %v10758
      %10862 = vmatmul.mubr.bf16.gmra.mrb[0].mxu0 %v10757
      %v10863 = vpop.f32.mrb[0].mxu0
      %v10864 = vadd.f32 0.0, %v10863
      %v10865 = vpop.f32.mrb[0].mxu0
      %v10866 = vpop.f32.mrb[0].mxu0
      %v10867 = vadd.f32 0.0, %v10866
      %v10868 = vpop.f32.mrb[0].mxu0
      %10869 = vmatprep.mubr.bf16.mxu0 %v10762
      %10870 = vmatmul.mubr.bf16.gmra.mrb[0].mxu0 %v10761
      %v10871 = vpop.f32.mrb[0].mxu0
      %v10872 = vadd.f32 0.0, %v10871
      %v10873 = vpop.f32.mrb[0].mxu0
      %v10874 = vpop.f32.mrb[0].mxu0
      %v10875 = vadd.f32 0.0, %v10874
      %v10876 = vpop.f32.mrb[0].mxu0
      %10877 = vmatprep.mubr.bf16.mxu0 %v10766
      %10878 = vmatmul.mubr.bf16.gmra.mrb[0].mxu0 %v10765
      %v10879 = vpop.f32.mrb[0].mxu0
      %v10880 = vadd.f32 0.0, %v10879
      %v10881 = vpop.f32.mrb[0].mxu0
      %v10882 = vpop.f32.mrb[0].mxu0
      %v10883 = vadd.f32 0.0, %v10882
      %v10884 = vpop.f32.mrb[0].mxu0
      %10885 = vmatprep.mubr.bf16.mxu0 %v10770
      %10886 = vmatmul.mubr.bf16.gmra.mrb[0].mxu0 %v10769
      %v10887 = vpop.f32.mrb[0].mxu0
      %v10888 = vadd.f32 0.0, %v10887
      %v10889 = vpop.f32.mrb[0].mxu0
      %v10890 = vpop.f32.mrb[0].mxu0
      %v10891 = vadd.f32 0.0, %v10890
      %v10892 = vpop.f32.mrb[0].mxu0
      %10893 = vmatprep.mubr.bf16.mxu0 %v10774
      %10894 = vmatmul.mubr.bf16.gmra.mrb[0].mxu0 %v10773
      %v10895 = vpop.f32.mrb[0].mxu0
      %v10896 = vadd.f32 0.0, %v10895
      %v10897 = vpop.f32.mrb[0].mxu0
      %v10898 = vpop.f32.mrb[0].mxu0
      %v10899 = vadd.f32 0.0, %v10898
      %v10900 = vpop.f32.mrb[0].mxu0
      %10901 = vmatprep.mubr.bf16.mxu0 %v10778
      %10902 = vmatmul.mubr.bf16.gmra.mrb[0].mxu0 %v10777
      %v10903 = vpop.f32.mrb[0].mxu0
      %v10904 = vadd.f32 0.0, %v10903
      %v10905 = vpop.f32.mrb[0].mxu0
      %v10906 = vpop.f32.mrb[0].mxu0
      %v10907 = vadd.f32 0.0, %v10906
      %v10908 = vpop.f32.mrb[0].mxu0
      %10909 = vdwg.mxu0
      %10910 = vmatprep.subr.bf16.mxu0 0
      %10911 = vmatpush1.bf16.msra.mxu0 %v10605
      %10912 = vmatprep.subr.bf16.mxu0 0
      %10913 = vmatpush1.bf16.msra.mxu0 %v10606
      %10914 = vmatprep.subr.bf16.mxu0 0
      %10915 = vmatpush1.bf16.msra.mxu0 %v10607
      %10916 = vmatprep.subr.bf16.mxu0 0
      %10917 = vmatpush1.bf16.msra.mxu0 %v10608
      %10918 = vmatprep.subr.bf16.mxu0 0
      %10919 = vmatpush1.bf16.msra.mxu0 %v10609
      %10920 = vmatprep.subr.bf16.mxu0 0
      %10921 = vmatpush1.bf16.msra.mxu0 %v10610
      %10922 = vmatprep.subr.bf16.mxu0 0
      %10923 = vmatpush1.bf16.msra.mxu0 %v10611
      %10924 = vmatprep.subr.bf16.mxu0 0
      %10925 = vmatpush1.bf16.msra.mxu0 %v10612
      %10926 = vmatprep.subr.bf16.mxu0 0
      %10927 = vmatpush1.bf16.msra.mxu0 %v10613
      %10928 = vmatprep.subr.bf16.mxu0 0
      %10929 = vmatpush1.bf16.msra.mxu0 %v10614
      %10930 = vmatprep.subr.bf16.mxu0 0
      %10931 = vmatpush1.bf16.msra.mxu0 %v10615
      %10932 = vmatprep.subr.bf16.mxu0 0
      %10933 = vmatpush1.bf16.msra.mxu0 %v10616
      %10934 = vmatprep.subr.bf16.mxu0 0
      %10935 = vmatpush1.bf16.msra.mxu0 %v10617
      %10936 = vmatprep.subr.bf16.mxu0 0
      %10937 = vmatpush1.bf16.msra.mxu0 %v10618
      %10938 = vmatprep.subr.bf16.mxu0 0
      %10939 = vmatpush1.bf16.msra.mxu0 %v10619
      %10940 = vmatprep.subr.bf16.mxu0 0
      %10941 = vmatpush1.bf16.msra.mxu0 %v10620
      %10942 = vmatprep.mubr.bf16.mxu0 %v10752
      %10943 = vmatmul.mubr.bf16.gmra.mrb[0].mxu0 %v10751
      %v10944 = vpop.f32.mrb[0].mxu0
      %v10945 = vadd.f32 %v10848, %v10944
      %v10946 = vpop.f32.mrb[0].mxu0
      %v10947 = vpop.f32.mrb[0].mxu0
      %v10948 = vadd.f32 %v10851, %v10947
      %v10949 = vpop.f32.mrb[0].mxu0
      %10950 = vmatprep.mubr.bf16.mxu0 %v10756
      %10951 = vmatmul.mubr.bf16.gmra.mrb[0].mxu0 %v10755
      %v10952 = vpop.f32.mrb[0].mxu0
      %v10953 = vadd.f32 %v10856, %v10952
      %v10954 = vpop.f32.mrb[0].mxu0
      %v10955 = vpop.f32.mrb[0].mxu0
      %v10956 = vadd.f32 %v10859, %v10955
      %v10957 = vpop.f32.mrb[0].mxu0
      %10958 = vmatprep.mubr.bf16.mxu0 %v10760
      %10959 = vmatmul.mubr.bf16.gmra.mrb[0].mxu0 %v10759
      %v10960 = vpop.f32.mrb[0].mxu0
      %v10961 = vadd.f32 %v10864, %v10960
      %v10962 = vpop.f32.mrb[0].mxu0
      %v10963 = vpop.f32.mrb[0].mxu0
      %v10964 = vadd.f32 %v10867, %v10963
      %v10965 = vpop.f32.mrb[0].mxu0
      %10966 = vmatprep.mubr.bf16.mxu0 %v10764
      %10967 = vmatmul.mubr.bf16.gmra.mrb[0].mxu0 %v10763
      %v10968 = vpop.f32.mrb[0].mxu0
      %v10969 = vadd.f32 %v10872, %v10968
      %v10970 = vpop.f32.mrb[0].mxu0
      %v10971 = vpop.f32.mrb[0].mxu0
      %v10972 = vadd.f32 %v10875, %v10971
      %v10973 = vpop.f32.mrb[0].mxu0
      %10974 = vmatprep.mubr.bf16.mxu0 %v10768
      %10975 = vmatmul.mubr.bf16.gmra.mrb[0].mxu0 %v10767
      %v10976 = vpop.f32.mrb[0].mxu0
      %v10977 = vadd.f32 %v10880, %v10976
      %v10978 = vpop.f32.mrb[0].mxu0
      %v10979 = vpop.f32.mrb[0].mxu0
      %v10980 = vadd.f32 %v10883, %v10979
      %v10981 = vpop.f32.mrb[0].mxu0
      %10982 = vmatprep.mubr.bf16.mxu0 %v10772
      %10983 = vmatmul.mubr.bf16.gmra.mrb[0].mxu0 %v10771
      %v10984 = vpop.f32.mrb[0].mxu0
      %v10985 = vadd.f32 %v10888, %v10984
      %v10986 = vpop.f32.mrb[0].mxu0
      %v10987 = vpop.f32.mrb[0].mxu0
      %v10988 = vadd.f32 %v10891, %v10987
      %v10989 = vpop.f32.mrb[0].mxu0
      %10990 = vmatprep.mubr.bf16.mxu0 %v10776
      %10991 = vmatmul.mubr.bf16.gmra.mrb[0].mxu0 %v10775
      %v10992 = vpop.f32.mrb[0].mxu0
      %v10993 = vadd.f32 %v10896, %v10992
      %v10994 = vpop.f32.mrb[0].mxu0
      %v10995 = vpop.f32.mrb[0].mxu0
      %v10996 = vadd.f32 %v10899, %v10995
      %v10997 = vpop.f32.mrb[0].mxu0
      %10998 = vmatprep.mubr.bf16.mxu0 %v10780
      %10999 = vmatmul.mubr.bf16.gmra.mrb[0].mxu0 %v10779
      %v11000 = vpop.f32.mrb[0].mxu0
      %v11001 = vadd.f32 %v10904, %v11000
      %v11002 = vpop.f32.mrb[0].mxu0
      %v11003 = vpop.f32.mrb[0].mxu0
      %v11004 = vadd.f32 %v10907, %v11003
      %v11005 = vpop.f32.mrb[0].mxu0
      %11006 = vdwg.mxu0
      %v11007 = vld [vmem:[%s12] sm:$0xff]
      %v11008 = vld [vmem:[%s12 + $0x8] sm:$0xff]
      %v11009 = vld [vmem:[%s12 + $0x10] sm:$0xff]
      %v11010 = vld [vmem:[%s12 + $0x18] sm:$0xff]
      %v11011 = vld [vmem:[%s12 + $0x20] sm:$0xff]
      %v11012 = vld [vmem:[%s12 + $0x28] sm:$0xff]
      %v11013 = vld [vmem:[%s12 + $0x30] sm:$0xff]
      %v11014 = vld [vmem:[%s12 + $0x38] sm:$0xff]
      %v11015 = vld [vmem:[%s12 + $0x40] sm:$0xff]
      %v11016 = vld [vmem:[%s12 + $0x48] sm:$0xff]
      %v11017 = vld [vmem:[%s12 + $0x50] sm:$0xff]
      %v11018 = vld [vmem:[%s12 + $0x58] sm:$0xff]
      %v11019 = vld [vmem:[%s12 + $0x60] sm:$0xff]
      %v11020 = vld [vmem:[%s12 + $0x68] sm:$0xff]
      %v11021 = vld [vmem:[%s12 + $0x70] sm:$0xff]
      %v11022 = vld [vmem:[%s12 + $0x78] sm:$0xff]
      %v11023 = vld [vmem:[%s12 + $0x80] sm:$0xff]
      %v11024 = vld [vmem:[%s12 + $0x88] sm:$0xff]
      %v11025 = vld [vmem:[%s12 + $0x90] sm:$0xff]
      %v11026 = vld [vmem:[%s12 + $0x98] sm:$0xff]
      %v11027 = vld [vmem:[%s12 + $0xa0] sm:$0xff]
      %v11028 = vld [vmem:[%s12 + $0xa8] sm:$0xff]
      %v11029 = vld [vmem:[%s12 + $0xb0] sm:$0xff]
      %v11030 = vld [vmem:[%s12 + $0xb8] sm:$0xff]
      %v11031 = vld [vmem:[%s12 + $0xc0] sm:$0xff]
      %v11032 = vld [vmem:[%s12 + $0xc8] sm:$0xff]
      %v11033 = vld [vmem:[%s12 + $0xd0] sm:$0xff]
      %v11034 = vld [vmem:[%s12 + $0xd8] sm:$0xff]
      %v11035 = vld [vmem:[%s12 + $0xe0] sm:$0xff]
      %v11036 = vld [vmem:[%s12 + $0xe8] sm:$0xff]
      %v11037 = vld [vmem:[%s12 + $0xf0] sm:$0xff]
      %v11038 = vld [vmem:[%s12 + $0xf8] sm:$0xff]
      %v11071 = vunpack.c.l.b16 %v11007
      %v11072 = vunpack.c.h.b16 %v11007
      %v11073 = vunpack.c.l.b16 %v11008
      %v11074 = vunpack.c.h.b16 %v11008
      %v11075 = vunpack.c.l.b16 %v11009
      %v11076 = vunpack.c.h.b16 %v11009
      %v11077 = vunpack.c.l.b16 %v11010
      %v11078 = vunpack.c.h.b16 %v11010
      %v11079 = vunpack.c.l.b16 %v11011
      %v11080 = vunpack.c.h.b16 %v11011
      %v11081 = vunpack.c.l.b16 %v11012
      %v11082 = vunpack.c.h.b16 %v11012
      %v11083 = vunpack.c.l.b16 %v11013
      %v11084 = vunpack.c.h.b16 %v11013
      %v11085 = vunpack.c.l.b16 %v11014
      %v11086 = vunpack.c.h.b16 %v11014
      %v11087 = vunpack.c.l.b16 %v11015
      %v11088 = vunpack.c.h.b16 %v11015
      %v11089 = vunpack.c.l.b16 %v11016
      %v11090 = vunpack.c.h.b16 %v11016
      %v11091 = vunpack.c.l.b16 %v11017
      %v11092 = vunpack.c.h.b16 %v11017
      %v11093 = vunpack.c.l.b16 %v11018
      %v11094 = vunpack.c.h.b16 %v11018
      %v11095 = vunpack.c.l.b16 %v11019
      %v11096 = vunpack.c.h.b16 %v11019
      %v11097 = vunpack.c.l.b16 %v11020
      %v11098 = vunpack.c.h.b16 %v11020
      %v11099 = vunpack.c.l.b16 %v11021
      %v11100 = vunpack.c.h.b16 %v11021
      %v11101 = vunpack.c.l.b16 %v11022
      %v11102 = vunpack.c.h.b16 %v11022
      %v11103 = vunpack.c.l.b16 %v11023
      %v11104 = vunpack.c.h.b16 %v11023
      %v11105 = vunpack.c.l.b16 %v11024
      %v11106 = vunpack.c.h.b16 %v11024
      %v11107 = vunpack.c.l.b16 %v11025
      %v11108 = vunpack.c.h.b16 %v11025
      %v11109 = vunpack.c.l.b16 %v11026
      %v11110 = vunpack.c.h.b16 %v11026
      %v11111 = vunpack.c.l.b16 %v11027
      %v11112 = vunpack.c.h.b16 %v11027
      %v11113 = vunpack.c.l.b16 %v11028
      %v11114 = vunpack.c.h.b16 %v11028
      %v11115 = vunpack.c.l.b16 %v11029
      %v11116 = vunpack.c.h.b16 %v11029
      %v11117 = vunpack.c.l.b16 %v11030
      %v11118 = vunpack.c.h.b16 %v11030
      %v11119 = vunpack.c.l.b16 %v11031
      %v11120 = vunpack.c.h.b16 %v11031
      %v11121 = vunpack.c.l.b16 %v11032
      %v11122 = vunpack.c.h.b16 %v11032
      %v11123 = vunpack.c.l.b16 %v11033
      %v11124 = vunpack.c.h.b16 %v11033
      %v11125 = vunpack.c.l.b16 %v11034
      %v11126 = vunpack.c.h.b16 %v11034
      %v11127 = vunpack.c.l.b16 %v11035
      %v11128 = vunpack.c.h.b16 %v11035
      %v11129 = vunpack.c.l.b16 %v11036
      %v11130 = vunpack.c.h.b16 %v11036
      %v11131 = vunpack.c.l.b16 %v11037
      %v11132 = vunpack.c.h.b16 %v11037
      %v11133 = vunpack.c.l.b16 %v11038
      %v11134 = vunpack.c.h.b16 %v11038
      %v11135 = vpack.c.b16 %v11075, %v11071
      %v11136 = vpack.c.b16 %v11076, %v11072
      %v11137 = vpack.c.b16 %v11077, %v11073
      %v11138 = vpack.c.b16 %v11078, %v11074
      %v11139 = vpack.c.b16 %v11083, %v11079
      %v11140 = vpack.c.b16 %v11084, %v11080
      %v11141 = vpack.c.b16 %v11085, %v11081
      %v11142 = vpack.c.b16 %v11086, %v11082
      %v11143 = vpack.c.b16 %v11091, %v11087
      %v11144 = vpack.c.b16 %v11092, %v11088
      %v11145 = vpack.c.b16 %v11093, %v11089
      %v11146 = vpack.c.b16 %v11094, %v11090
      %v11147 = vpack.c.b16 %v11099, %v11095
      %v11148 = vpack.c.b16 %v11100, %v11096
      %v11149 = vpack.c.b16 %v11101, %v11097
      %v11150 = vpack.c.b16 %v11102, %v11098
      %v11151 = vpack.c.b16 %v11107, %v11103
      %v11152 = vpack.c.b16 %v11108, %v11104
      %v11153 = vpack.c.b16 %v11109, %v11105
      %v11154 = vpack.c.b16 %v11110, %v11106
      %v11155 = vpack.c.b16 %v11115, %v11111
      %v11156 = vpack.c.b16 %v11116, %v11112
      %v11157 = vpack.c.b16 %v11117, %v11113
      %v11158 = vpack.c.b16 %v11118, %v11114
      %v11159 = vpack.c.b16 %v11123, %v11119
      %v11160 = vpack.c.b16 %v11124, %v11120
      %v11161 = vpack.c.b16 %v11125, %v11121
      %v11162 = vpack.c.b16 %v11126, %v11122
      %v11163 = vpack.c.b16 %v11131, %v11127
      %v11164 = vpack.c.b16 %v11132, %v11128
      %v11165 = vpack.c.b16 %v11133, %v11129
      %v11166 = vpack.c.b16 %v11134, %v11130
      %11199 = vmatprep.subr.bf16.mxu0 0
      %11200 = vmatpush1.bf16.msra.mxu0 %v10589
      %11201 = vmatprep.subr.bf16.mxu0 0
      %11202 = vmatpush1.bf16.msra.mxu0 %v10590
      %11203 = vmatprep.subr.bf16.mxu0 0
      %11204 = vmatpush1.bf16.msra.mxu0 %v10591
      %11205 = vmatprep.subr.bf16.mxu0 0
      %11206 = vmatpush1.bf16.msra.mxu0 %v10592
      %11207 = vmatprep.subr.bf16.mxu0 0
      %11208 = vmatpush1.bf16.msra.mxu0 %v10593
      %11209 = vmatprep.subr.bf16.mxu0 0
      %11210 = vmatpush1.bf16.msra.mxu0 %v10594
      %11211 = vmatprep.subr.bf16.mxu0 0
      %11212 = vmatpush1.bf16.msra.mxu0 %v10595
      %11213 = vmatprep.subr.bf16.mxu0 0
      %11214 = vmatpush1.bf16.msra.mxu0 %v10596
      %11215 = vmatprep.subr.bf16.mxu0 0
      %11216 = vmatpush1.bf16.msra.mxu0 %v10597
      %11217 = vmatprep.subr.bf16.mxu0 0
      %11218 = vmatpush1.bf16.msra.mxu0 %v10598
      %11219 = vmatprep.subr.bf16.mxu0 0
      %11220 = vmatpush1.bf16.msra.mxu0 %v10599
      %11221 = vmatprep.subr.bf16.mxu0 0
      %11222 = vmatpush1.bf16.msra.mxu0 %v10600
      %11223 = vmatprep.subr.bf16.mxu0 0
      %11224 = vmatpush1.bf16.msra.mxu0 %v10601
      %11225 = vmatprep.subr.bf16.mxu0 0
      %11226 = vmatpush1.bf16.msra.mxu0 %v10602
      %11227 = vmatprep.subr.bf16.mxu0 0
      %11228 = vmatpush1.bf16.msra.mxu0 %v10603
      %11229 = vmatprep.subr.bf16.mxu0 0
      %11230 = vmatpush1.bf16.msra.mxu0 %v10604
      %11231 = vmatprep.mubr.bf16.mxu0 %v11136
      %11232 = vmatmul.mubr.bf16.gmra.mrb[0].mxu0 %v11135
      %v11233 = vpop.f32.mrb[0].mxu0
      %v11234 = vadd.f32 0.0, %v11233
      %v11235 = vpop.f32.mrb[0].mxu0
      %v11236 = vpop.f32.mrb[0].mxu0
      %v11237 = vadd.f32 0.0, %v11236
      %v11238 = vpop.f32.mrb[0].mxu0
      %11239 = vmatprep.mubr.bf16.mxu0 %v11140
      %11240 = vmatmul.mubr.bf16.gmra.mrb[0].mxu0 %v11139
      %v11241 = vpop.f32.mrb[0].mxu0
      %v11242 = vadd.f32 0.0, %v11241
      %v11243 = vpop.f32.mrb[0].mxu0
      %v11244 = vpop.f32.mrb[0].mxu0
      %v11245 = vadd.f32 0.0, %v11244
      %v11246 = vpop.f32.mrb[0].mxu0
      %11247 = vmatprep.mubr.bf16.mxu0 %v11144
      %11248 = vmatmul.mubr.bf16.gmra.mrb[0].mxu0 %v11143
      %v11249 = vpop.f32.mrb[0].mxu0
      %v11250 = vadd.f32 0.0, %v11249
      %v11251 = vpop.f32.mrb[0].mxu0
      %v11252 = vpop.f32.mrb[0].mxu0
      %v11253 = vadd.f32 0.0, %v11252
      %v11254 = vpop.f32.mrb[0].mxu0
      %11255 = vmatprep.mubr.bf16.mxu0 %v11148
      %11256 = vmatmul.mubr.bf16.gmra.mrb[0].mxu0 %v11147
      %v11257 = vpop.f32.mrb[0].mxu0
      %v11258 = vadd.f32 0.0, %v11257
      %v11259 = vpop.f32.mrb[0].mxu0
      %v11260 = vpop.f32.mrb[0].mxu0
      %v11261 = vadd.f32 0.0, %v11260
      %v11262 = vpop.f32.mrb[0].mxu0
      %11263 = vmatprep.mubr.bf16.mxu0 %v11152
      %11264 = vmatmul.mubr.bf16.gmra.mrb[0].mxu0 %v11151
      %v11265 = vpop.f32.mrb[0].mxu0
      %v11266 = vadd.f32 0.0, %v11265
      %v11267 = vpop.f32.mrb[0].mxu0
      %v11268 = vpop.f32.mrb[0].mxu0
      %v11269 = vadd.f32 0.0, %v11268
      %v11270 = vpop.f32.mrb[0].mxu0
      %11271 = vmatprep.mubr.bf16.mxu0 %v11156
      %11272 = vmatmul.mubr.bf16.gmra.mrb[0].mxu0 %v11155
      %v11273 = vpop.f32.mrb[0].mxu0
      %v11274 = vadd.f32 0.0, %v11273
      %v11275 = vpop.f32.mrb[0].mxu0
      %v11276 = vpop.f32.mrb[0].mxu0
      %v11277 = vadd.f32 0.0, %v11276
      %v11278 = vpop.f32.mrb[0].mxu0
      %11279 = vmatprep.mubr.bf16.mxu0 %v11160
      %11280 = vmatmul.mubr.bf16.gmra.mrb[0].mxu0 %v11159
      %v11281 = vpop.f32.mrb[0].mxu0
      %v11282 = vadd.f32 0.0, %v11281
      %v11283 = vpop.f32.mrb[0].mxu0
      %v11284 = vpop.f32.mrb[0].mxu0
      %v11285 = vadd.f32 0.0, %v11284
      %v11286 = vpop.f32.mrb[0].mxu0
      %11287 = vmatprep.mubr.bf16.mxu0 %v11164
      %11288 = vmatmul.mubr.bf16.gmra.mrb[0].mxu0 %v11163
      %v11289 = vpop.f32.mrb[0].mxu0
      %v11290 = vadd.f32 0.0, %v11289
      %v11291 = vpop.f32.mrb[0].mxu0
      %v11292 = vpop.f32.mrb[0].mxu0
      %v11293 = vadd.f32 0.0, %v11292
      %v11294 = vpop.f32.mrb[0].mxu0
      %11295 = vdwg.mxu0
      %11296 = vmatprep.subr.bf16.mxu0 0
      %11297 = vmatpush1.bf16.msra.mxu0 %v10605
      %11298 = vmatprep.subr.bf16.mxu0 0
      %11299 = vmatpush1.bf16.msra.mxu0 %v10606
      %11300 = vmatprep.subr.bf16.mxu0 0
      %11301 = vmatpush1.bf16.msra.mxu0 %v10607
      %11302 = vmatprep.subr.bf16.mxu0 0
      %11303 = vmatpush1.bf16.msra.mxu0 %v10608
      %11304 = vmatprep.subr.bf16.mxu0 0
      %11305 = vmatpush1.bf16.msra.mxu0 %v10609
      %11306 = vmatprep.subr.bf16.mxu0 0
      %11307 = vmatpush1.bf16.msra.mxu0 %v10610
      %11308 = vmatprep.subr.bf16.mxu0 0
      %11309 = vmatpush1.bf16.msra.mxu0 %v10611
      %11310 = vmatprep.subr.bf16.mxu0 0
      %11311 = vmatpush1.bf16.msra.mxu0 %v10612
      %11312 = vmatprep.subr.bf16.mxu0 0
      %11313 = vmatpush1.bf16.msra.mxu0 %v10613
      %11314 = vmatprep.subr.bf16.mxu0 0
      %11315 = vmatpush1.bf16.msra.mxu0 %v10614
      %11316 = vmatprep.subr.bf16.mxu0 0
      %11317 = vmatpush1.bf16.msra.mxu0 %v10615
      %11318 = vmatprep.subr.bf16.mxu0 0
      %11319 = vmatpush1.bf16.msra.mxu0 %v10616
      %11320 = vmatprep.subr.bf16.mxu0 0
      %11321 = vmatpush1.bf16.msra.mxu0 %v10617
      %11322 = vmatprep.subr.bf16.mxu0 0
      %11323 = vmatpush1.bf16.msra.mxu0 %v10618
      %11324 = vmatprep.subr.bf16.mxu0 0
      %11325 = vmatpush1.bf16.msra.mxu0 %v10619
      %11326 = vmatprep.subr.bf16.mxu0 0
      %11327 = vmatpush1.bf16.msra.mxu0 %v10620
      %11328 = vmatprep.mubr.bf16.mxu0 %v11138
      %11329 = vmatmul.mubr.bf16.gmra.mrb[0].mxu0 %v11137
      %v11330 = vpop.f32.mrb[0].mxu0
      %v11331 = vadd.f32 %v11234, %v11330
      %v11332 = vpop.f32.mrb[0].mxu0
      %v11333 = vpop.f32.mrb[0].mxu0
      %v11334 = vadd.f32 %v11237, %v11333
      %v11335 = vpop.f32.mrb[0].mxu0
      %11336 = vmatprep.mubr.bf16.mxu0 %v11142
      %11337 = vmatmul.mubr.bf16.gmra.mrb[0].mxu0 %v11141
      %v11338 = vpop.f32.mrb[0].mxu0
      %v11339 = vadd.f32 %v11242, %v11338
      %v11340 = vpop.f32.mrb[0].mxu0
      %v11341 = vpop.f32.mrb[0].mxu0
      %v11342 = vadd.f32 %v11245, %v11341
      %v11343 = vpop.f32.mrb[0].mxu0
      %11344 = vmatprep.mubr.bf16.mxu0 %v11146
      %11345 = vmatmul.mubr.bf16.gmra.mrb[0].mxu0 %v11145
      %v11346 = vpop.f32.mrb[0].mxu0
      %v11347 = vadd.f32 %v11250, %v11346
      %v11348 = vpop.f32.mrb[0].mxu0
      %v11349 = vpop.f32.mrb[0].mxu0
      %v11350 = vadd.f32 %v11253, %v11349
      %v11351 = vpop.f32.mrb[0].mxu0
      %11352 = vmatprep.mubr.bf16.mxu0 %v11150
      %11353 = vmatmul.mubr.bf16.gmra.mrb[0].mxu0 %v11149
      %v11354 = vpop.f32.mrb[0].mxu0
      %v11355 = vadd.f32 %v11258, %v11354
      %v11356 = vpop.f32.mrb[0].mxu0
      %v11357 = vpop.f32.mrb[0].mxu0
      %v11358 = vadd.f32 %v11261, %v11357
      %v11359 = vpop.f32.mrb[0].mxu0
      %11360 = vmatprep.mubr.bf16.mxu0 %v11154
      %11361 = vmatmul.mubr.bf16.gmra.mrb[0].mxu0 %v11153
      %v11362 = vpop.f32.mrb[0].mxu0
      %v11363 = vadd.f32 %v11266, %v11362
      %v11364 = vpop.f32.mrb[0].mxu0
      %v11365 = vpop.f32.mrb[0].mxu0
      %v11366 = vadd.f32 %v11269, %v11365
      %v11367 = vpop.f32.mrb[0].mxu0
      %11368 = vmatprep.mubr.bf16.mxu0 %v11158
      %11369 = vmatmul.mubr.bf16.gmra.mrb[0].mxu0 %v11157
      %v11370 = vpop.f32.mrb[0].mxu0
      %v11371 = vadd.f32 %v11274, %v11370
      %v11372 = vpop.f32.mrb[0].mxu0
      %v11373 = vpop.f32.mrb[0].mxu0
      %v11374 = vadd.f32 %v11277, %v11373
      %v11375 = vpop.f32.mrb[0].mxu0
      %11376 = vmatprep.mubr.bf16.mxu0 %v11162
      %11377 = vmatmul.mubr.bf16.gmra.mrb[0].mxu0 %v11161
      %v11378 = vpop.f32.mrb[0].mxu0
      %v11379 = vadd.f32 %v11282, %v11378
      %v11380 = vpop.f32.mrb[0].mxu0
      %v11381 = vpop.f32.mrb[0].mxu0
      %v11382 = vadd.f32 %v11285, %v11381
      %v11383 = vpop.f32.mrb[0].mxu0
      %11384 = vmatprep.mubr.bf16.mxu0 %v11166
      %11385 = vmatmul.mubr.bf16.gmra.mrb[0].mxu0 %v11165
      %v11386 = vpop.f32.mrb[0].mxu0
      %v11387 = vadd.f32 %v11290, %v11386
      %v11388 = vpop.f32.mrb[0].mxu0
      %v11389 = vpop.f32.mrb[0].mxu0
      %v11390 = vadd.f32 %v11293, %v11389
      %v11391 = vpop.f32.mrb[0].mxu0
      %11392 = vdwg.mxu0
      %v11393 = vmax.f32 %v10945, %v11331
      %v11394 = vmax.f32 %v10948, %v11334
      %v11395 = vmax.f32 %v10953, %v11339
      %v11396 = vmax.f32 %v10956, %v11342
      %v11397 = vmax.f32 %v10961, %v11347
      %v11398 = vmax.f32 %v10964, %v11350
      %v11399 = vmax.f32 %v10969, %v11355
      %v11400 = vmax.f32 %v10972, %v11358
      %v11401 = vmax.f32 %v10977, %v11363
      %v11402 = vmax.f32 %v10980, %v11366
      %v11403 = vmax.f32 %v10985, %v11371
      %v11404 = vmax.f32 %v10988, %v11374
      %v11405 = vmax.f32 %v10993, %v11379
      %v11406 = vmax.f32 %v10996, %v11382
      %v11407 = vmax.f32 %v11001, %v11387
      %v11408 = vmax.f32 %v11004, %v11390
      %v11409 = vmax.f32 %v11393, 0.0
      %v11410 = vmax.f32 %v11394, 0.0
      %v11411 = vmax.f32 %v11395, 0.0
      %v11412 = vmax.f32 %v11396, 0.0
      %v11413 = vmax.f32 %v11397, 0.0
      %v11414 = vmax.f32 %v11398, 0.0
      %v11415 = vmax.f32 %v11399, 0.0
      %v11416 = vmax.f32 %v11400, 0.0
      %v11417 = vmax.f32 %v11401, 0.0
      %v11418 = vmax.f32 %v11402, 0.0
      %v11419 = vmax.f32 %v11403, 0.0
      %v11420 = vmax.f32 %v11404, 0.0
      %v11421 = vmax.f32 %v11405, 0.0
      %v11422 = vmax.f32 %v11406, 0.0
      %v11423 = vmax.f32 %v11407, 0.0
      %v11424 = vmax.f32 %v11408, 0.0
      %v11425 = vpack.c.bf16 %v11410, %v11409
      %v11426 = vpack.c.bf16 %v11412, %v11411
      %v11427 = vpack.c.bf16 %v11414, %v11413
      %v11428 = vpack.c.bf16 %v11416, %v11415
      %v11429 = vpack.c.bf16 %v11418, %v11417
      %v11430 = vpack.c.bf16 %v11420, %v11419
      %v11431 = vpack.c.bf16 %v11422, %v11421
      %v11432 = vpack.c.bf16 %v11424, %v11423
      %11435 = vrot.lane.b32.xlu0 %v11427, 80
      %v11436 = vpop.permute.xlu0 %11435
      %11437 = vrot.lane.b32.xlu0 %v11428, 80
      %v11438 = vpop.permute.xlu0 %11437
      %11441 = vrot.lane.b32.xlu0 %v11429, 32
      %v11442 = vpop.permute.xlu0 %11441
      %11443 = vrot.lane.b32.xlu0 %v11430, 32
      %v11444 = vpop.permute.xlu0 %11443
      %11447 = vrot.lane.b32.xlu0 %v11431, 112
      %v11448 = vpop.permute.xlu0 %11447
      %11449 = vrot.lane.b32.xlu0 %v11432, 112
      %v11450 = vpop.permute.xlu0 %11449
      %vm11451 = vcmask 654336
      %v11454 = vsel %vm11451, %v11425, %v11436
      %v11458 = vsel %vm11451, %v11426, %v11438
      %v11461 = vsel %vm9769, %v11436, %v11442
      %v11463 = vsel %vm9769, %v11438, %v11444
      %v11465 = vsel %vm3303, %v11461, %v11448
      %v11468 = vsel %vm3303, %v11463, %v11450
      %v11470 = vld [vmem:[%s7] sm:$0xf]
      %v11471 = vld [vmem:[%s7 + $0x4] sm:$0xf]
      %v11472 = vld [vmem:[%s7 + $0x8] sm:$0xf]
      %v11473 = vld [vmem:[%s7 + $0xc] sm:$0xf]
      %v11474 = vld [vmem:[%s7 + $0x10] sm:$0xf]
      %v11475 = vld [vmem:[%s7 + $0x14] sm:$0xf]
      %v11476 = vld [vmem:[%s7 + $0x18] sm:$0xf]
      %v11477 = vld [vmem:[%s7 + $0x1c] sm:$0xf]
      %v11478 = vld [vmem:[%s7 + $0x20] sm:$0xf]
      %v11479 = vld [vmem:[%s7 + $0x24] sm:$0xf]
      %v11480 = vld [vmem:[%s7 + $0x28] sm:$0xf]
      %v11481 = vld [vmem:[%s7 + $0x2c] sm:$0xf]
      %v11482 = vld [vmem:[%s7 + $0x30] sm:$0xf]
      %v11483 = vld [vmem:[%s7 + $0x34] sm:$0xf]
      %v11484 = vld [vmem:[%s7 + $0x38] sm:$0xf]
      %v11485 = vld [vmem:[%s7 + $0x3c] sm:$0xf]
      %v11486 = vld [vmem:[%s7 + $0x40] sm:$0xf]
      %v11487 = vld [vmem:[%s7 + $0x44] sm:$0xf]
      %v11488 = vld [vmem:[%s7 + $0x48] sm:$0xf]
      %v11489 = vld [vmem:[%s7 + $0x4c] sm:$0xf]
      %v11490 = vld [vmem:[%s7 + $0x50] sm:$0xf]
      %v11491 = vld [vmem:[%s7 + $0x54] sm:$0xf]
      %v11492 = vld [vmem:[%s7 + $0x58] sm:$0xf]
      %v11493 = vld [vmem:[%s7 + $0x5c] sm:$0xf]
      %v11494 = vld [vmem:[%s7 + $0x60] sm:$0xf]
      %v11495 = vld [vmem:[%s7 + $0x64] sm:$0xf]
      %v11496 = vld [vmem:[%s7 + $0x68] sm:$0xf]
      %v11497 = vld [vmem:[%s7 + $0x6c] sm:$0xf]
      %v11498 = vld [vmem:[%s7 + $0x70] sm:$0xf]
      %v11499 = vld [vmem:[%s7 + $0x74] sm:$0xf]
      %v11500 = vld [vmem:[%s7 + $0x78] sm:$0xf]
      %v11501 = vld [vmem:[%s7 + $0x7c] sm:$0xf]
      %v11502 = vld [vmem:[%s7 + $0x80] sm:$0xf]
      %v11503 = vld [vmem:[%s7 + $0x84] sm:$0xf]
      %v11504 = vld [vmem:[%s7 + $0x88] sm:$0xf]
      %v11505 = vld [vmem:[%s7 + $0x8c] sm:$0xf]
      %v11506 = vld [vmem:[%s7 + $0x90] sm:$0xf]
      %v11507 = vld [vmem:[%s7 + $0x94] sm:$0xf]
      %v11508 = vld [vmem:[%s7 + $0x98] sm:$0xf]
      %v11509 = vld [vmem:[%s7 + $0x9c] sm:$0xf]
      %v11510 = vld [vmem:[%s8] sm:$0x1]
      %v11512 = vlaneseq
      %v11513 = vshrl.u32 %v11512, 7
      %v11514 = vsub.s32 0, %v11513
      %v11515 = vrot.slane %v11510, %v11514
      %v11557 = vunpack.c.l.b16 %v11470
      %v11558 = vunpack.c.l.b16 %v11471
      %v11559 = vunpack.c.l.b16 %v11472
      %v11560 = vunpack.c.l.b16 %v11473
      %v11561 = vunpack.c.l.b16 %v11474
      %v11562 = vunpack.c.l.b16 %v11475
      %v11563 = vunpack.c.l.b16 %v11476
      %v11564 = vunpack.c.l.b16 %v11477
      %v11565 = vunpack.c.l.b16 %v11478
      %v11566 = vunpack.c.l.b16 %v11479
      %v11567 = vunpack.c.l.b16 %v11480
      %v11568 = vunpack.c.l.b16 %v11481
      %v11569 = vunpack.c.l.b16 %v11482
      %v11570 = vunpack.c.l.b16 %v11483
      %v11571 = vunpack.c.l.b16 %v11484
      %v11572 = vunpack.c.l.b16 %v11485
      %v11573 = vunpack.c.l.b16 %v11486
      %v11574 = vunpack.c.l.b16 %v11487
      %v11575 = vunpack.c.l.b16 %v11488
      %v11576 = vunpack.c.l.b16 %v11489
      %v11577 = vunpack.c.l.b16 %v11490
      %v11578 = vunpack.c.l.b16 %v11491
      %v11579 = vunpack.c.l.b16 %v11492
      %v11580 = vunpack.c.l.b16 %v11493
      %v11581 = vunpack.c.l.b16 %v11494
      %v11582 = vunpack.c.l.b16 %v11495
      %v11583 = vunpack.c.l.b16 %v11496
      %v11584 = vunpack.c.l.b16 %v11497
      %v11585 = vunpack.c.l.b16 %v11498
      %v11586 = vunpack.c.l.b16 %v11499
      %v11587 = vunpack.c.l.b16 %v11500
      %v11588 = vunpack.c.l.b16 %v11501
      %v11589 = vunpack.c.l.b16 %v11502
      %v11590 = vunpack.c.l.b16 %v11503
      %v11591 = vunpack.c.l.b16 %v11504
      %v11592 = vunpack.c.l.b16 %v11505
      %v11593 = vunpack.c.l.b16 %v11506
      %v11594 = vunpack.c.l.b16 %v11507
      %v11595 = vunpack.c.l.b16 %v11508
      %v11596 = vunpack.c.l.b16 %v11509
      %v11597 = vpack.c.b16 %v11558, %v11557
      %v11598 = vpack.c.b16 %v11560, %v11559
      %v11599 = vpack.c.b16 %v11562, %v11561
      %v11600 = vpack.c.b16 %v11564, %v11563
      %v11601 = vpack.c.b16 %v11566, %v11565
      %v11602 = vpack.c.b16 %v11568, %v11567
      %v11603 = vpack.c.b16 %v11570, %v11569
      %v11604 = vpack.c.b16 %v11572, %v11571
      %v11605 = vpack.c.b16 %v11574, %v11573
      %v11606 = vpack.c.b16 %v11576, %v11575
      %v11607 = vpack.c.b16 %v11578, %v11577
      %v11608 = vpack.c.b16 %v11580, %v11579
      %v11609 = vpack.c.b16 %v11582, %v11581
      %v11610 = vpack.c.b16 %v11584, %v11583
      %v11611 = vpack.c.b16 %v11586, %v11585
      %v11612 = vpack.c.b16 %v11588, %v11587
      %v11613 = vpack.c.b16 %v11590, %v11589
      %v11614 = vpack.c.b16 %v11592, %v11591
      %v11615 = vpack.c.b16 %v11594, %v11593
      %v11616 = vpack.c.b16 %v11596, %v11595
      %vm11637 = vcmask 523264
      %v11638 = vsel %vm11637, %v11448, 0
      %v11640 = vsel %vm11637, %v11450, 0
      %11642 = vmatprep.subr.bf16.mxu0 0
      %11643 = vmatpush1.bf16.msra.mxu0 %v11597
      %11644 = vmatprep.subr.bf16.mxu0 0
      %11645 = vmatpush1.bf16.msra.mxu0 %v11598
      %11646 = vmatprep.subr.bf16.mxu0 0
      %11647 = vmatpush1.bf16.msra.mxu0 %v11599
      %11648 = vmatprep.subr.bf16.mxu0 0
      %11649 = vmatpush1.bf16.msra.mxu0 %v11600
      %11650 = vmatprep.subr.bf16.mxu0 0
      %11651 = vmatpush1.bf16.msra.mxu0 %v11601
      %11652 = vmatprep.subr.bf16.mxu0 0
      %11653 = vmatpush1.bf16.msra.mxu0 %v11602
      %11654 = vmatprep.subr.bf16.mxu0 0
      %11655 = vmatpush1.bf16.msra.mxu0 %v11603
      %11656 = vmatprep.subr.bf16.mxu0 0
      %11657 = vmatpush1.bf16.msra.mxu0 %v11604
      %11658 = vmatprep.subr.bf16.mxu0 0
      %11659 = vmatpush1.bf16.msra.mxu0 %v11605
      %11660 = vmatprep.subr.bf16.mxu0 0
      %11661 = vmatpush1.bf16.msra.mxu0 %v11606
      %11662 = vmatprep.subr.bf16.mxu0 0
      %11663 = vmatpush1.bf16.msra.mxu0 %v11607
      %11664 = vmatprep.subr.bf16.mxu0 0
      %11665 = vmatpush1.bf16.msra.mxu0 %v11608
      %11666 = vmatprep.subr.bf16.mxu0 0
      %11667 = vmatpush1.bf16.msra.mxu0 %v11609
      %11668 = vmatprep.subr.bf16.mxu0 0
      %11669 = vmatpush1.bf16.msra.mxu0 %v11610
      %11670 = vmatprep.subr.bf16.mxu0 0
      %11671 = vmatpush1.bf16.msra.mxu0 %v11611
      %11672 = vmatprep.subr.bf16.mxu0 0
      %11673 = vmatpush1.bf16.msra.mxu0 %v11612
      %11674 = vmatprep.mubr.bf16.mxu0 %v11465
      %11675 = vmatmul.mubr.bf16.gmra.mrb[0].mxu0 %v11454
      %v11676 = vpop.f32.mrb[0].mxu0
      %v11677 = vadd.f32 %v11515, %v11676
      %v11678 = vpop.f32.mrb[0].mxu0
      %v11679 = vpop.f32.mrb[0].mxu0
      %v11680 = vadd.f32 %v11515, %v11679
      %v11681 = vpop.f32.mrb[0].mxu0
      %11682 = vmatprep.mubr.bf16.mxu0 %v11468
      %11683 = vmatmul.mubr.bf16.gmra.mrb[0].mxu0 %v11458
      %v11684 = vpop.f32.mrb[0].mxu0
      %v11685 = vadd.f32 %v11515, %v11684
      %v11686 = vpop.f32.mrb[0].mxu0
      %v11687 = vpop.f32.mrb[0].mxu0
      %v11688 = vadd.f32 %v11515, %v11687
      %v11689 = vpop.f32.mrb[0].mxu0
      %11690 = vdwg.mxu0
      %11691 = vmatprep.subr.bf16.mxu0 0
      %11692 = vmatpush1.bf16.msra.mxu0 %v11613
      %11693 = vmatprep.subr.bf16.mxu0 0
      %11694 = vmatpush1.bf16.msra.mxu0 %v11614
      %11695 = vmatprep.subr.bf16.mxu0 0
      %11696 = vmatpush1.bf16.msra.mxu0 %v11615
      %11697 = vmatprep.subr.bf16.mxu0 0
      %11698 = vmatpush1.bf16.msra.mxu0 %v11616
      %11699 = vmatprep.subr.bf16.mxu0 0
      %11700 = vmatpush1.bf16.msra.mxu0 0
      %11701 = vmatprep.subr.bf16.mxu0 0
      %11702 = vmatpush1.bf16.msra.mxu0 0
      %11703 = vmatprep.subr.bf16.mxu0 0
      %11704 = vmatpush1.bf16.msra.mxu0 0
      %11705 = vmatprep.subr.bf16.mxu0 0
      %11706 = vmatpush1.bf16.msra.mxu0 0
      %11707 = vmatprep.subr.bf16.mxu0 0
      %11708 = vmatpush1.bf16.msra.mxu0 0
      %11709 = vmatprep.subr.bf16.mxu0 0
      %11710 = vmatpush1.bf16.msra.mxu0 0
      %11711 = vmatprep.subr.bf16.mxu0 0
      %11712 = vmatpush1.bf16.msra.mxu0 0
      %11713 = vmatprep.subr.bf16.mxu0 0
      %11714 = vmatpush1.bf16.msra.mxu0 0
      %11715 = vmatprep.subr.bf16.mxu0 0
      %11716 = vmatpush1.bf16.msra.mxu0 0
      %11717 = vmatprep.subr.bf16.mxu0 0
      %11718 = vmatpush1.bf16.msra.mxu0 0
      %11719 = vmatprep.subr.bf16.mxu0 0
      %11720 = vmatpush1.bf16.msra.mxu0 0
      %11721 = vmatprep.subr.bf16.mxu0 0
      %11722 = vmatpush1.bf16.msra.mxu0 0
      %11723 = vmatprep.mubr.bf16.mxu0 0
      %11724 = vmatmul.mubr.bf16.gmra.mrb[0].mxu0 %v11638
      %v11725 = vpop.f32.mrb[0].mxu0
      %v11726 = vadd.f32 %v11677, %v11725
      %v11727 = vpop.f32.mrb[0].mxu0
      %v11728 = vpop.f32.mrb[0].mxu0
      %v11729 = vadd.f32 %v11680, %v11728
      %v11730 = vpop.f32.mrb[0].mxu0
      %11731 = vmatprep.mubr.bf16.mxu0 0
      %11732 = vmatmul.mubr.bf16.gmra.mrb[0].mxu0 %v11640
      %v11733 = vpop.f32.mrb[0].mxu0
      %v11734 = vadd.f32 %v11685, %v11733
      %v11735 = vpop.f32.mrb[0].mxu0
      %v11736 = vpop.f32.mrb[0].mxu0
      %v11737 = vadd.f32 %v11688, %v11736
      %v11738 = vpop.f32.mrb[0].mxu0
      %11739 = vdwg.mxu0
      %v11740 = vmax.f32 %v11726, 0.0
      %v11741 = vmax.f32 %v11729, 0.0
      %v11742 = vmax.f32 %v11734, 0.0
      %v11743 = vmax.f32 %v11737, 0.0
      %v11744 = vpack.c.bf16 %v11741, %v11740
      %v11745 = vpack.c.bf16 %v11743, %v11742
      %v11746 = vld [vmem:[%s9] sm:$0xf]
      %v11747 = vld [vmem:[%s9 + $0x4] sm:$0xf]
      %v11748 = vld [vmem:[%s9 + $0x8] sm:$0xf]
      %v11749 = vld [vmem:[%s9 + $0xc] sm:$0xf]
      %v11750 = vld [vmem:[%s9 + $0x10] sm:$0xf]
      %v11751 = vld [vmem:[%s9 + $0x14] sm:$0xf]
      %v11752 = vld [vmem:[%s9 + $0x18] sm:$0x1]
      %v11753 = vld [vmem:[%s10] sm:$0x1]
      %v11755 = vlaneseq
      %v11756 = vshrl.u32 %v11755, 7
      %v11757 = vsub.s32 0, %v11756
      %v11758 = vrot.slane %v11753, %v11757
      %v11767 = vunpack.c.l.b16 %v11746
      %v11768 = vunpack.c.l.b16 %v11747
      %v11769 = vunpack.c.l.b16 %v11748
      %v11770 = vunpack.c.l.b16 %v11749
      %v11771 = vunpack.c.l.b16 %v11750
      %v11772 = vunpack.c.l.b16 %v11751
      %v11773 = vunpack.c.l.b16 %v11752
      %v11774 = vpack.c.b16 %v11768, %v11767
      %v11775 = vpack.c.b16 %v11770, %v11769
      %v11776 = vpack.c.b16 %v11772, %v11771
      %v11777 = vpack.c.b16 %v11773, %v11773
      %vm11781 = vcmask 408576
      %v11783 = vsel %vm11781, %v11744, 0
      %v11786 = vsel %vm11781, %v11745, 0
      %vm11788 = vcmask 1040384
      %v11790 = vsel %vm11788, %v11777, 0
      %11792 = vmatprep.subr.bf16.mxu0 0
      %11793 = vmatpush1.bf16.msra.mxu0 %v11774
      %11794 = vmatprep.subr.bf16.mxu0 0
      %11795 = vmatpush1.bf16.msra.mxu0 %v11775
      %11796 = vmatprep.subr.bf16.mxu0 0
      %11797 = vmatpush1.bf16.msra.mxu0 %v11776
      %11798 = vmatprep.subr.bf16.mxu0 0
      %11799 = vmatpush1.bf16.msra.mxu0 %v11790
      %11800 = vmatprep.subr.bf16.mxu0 0
      %11801 = vmatpush1.bf16.msra.mxu0 0
      %11802 = vmatprep.subr.bf16.mxu0 0
      %11803 = vmatpush1.bf16.msra.mxu0 0
      %11804 = vmatprep.subr.bf16.mxu0 0
      %11805 = vmatpush1.bf16.msra.mxu0 0
      %11806 = vmatprep.subr.bf16.mxu0 0
      %11807 = vmatpush1.bf16.msra.mxu0 0
      %11808 = vmatprep.subr.bf16.mxu0 0
      %11809 = vmatpush1.bf16.msra.mxu0 0
      %11810 = vmatprep.subr.bf16.mxu0 0
      %11811 = vmatpush1.bf16.msra.mxu0 0
      %11812 = vmatprep.subr.bf16.mxu0 0
      %11813 = vmatpush1.bf16.msra.mxu0 0
      %11814 = vmatprep.subr.bf16.mxu0 0
      %11815 = vmatpush1.bf16.msra.mxu0 0
      %11816 = vmatprep.subr.bf16.mxu0 0
      %11817 = vmatpush1.bf16.msra.mxu0 0
      %11818 = vmatprep.subr.bf16.mxu0 0
      %11819 = vmatpush1.bf16.msra.mxu0 0
      %11820 = vmatprep.subr.bf16.mxu0 0
      %11821 = vmatpush1.bf16.msra.mxu0 0
      %11822 = vmatprep.subr.bf16.mxu0 0
      %11823 = vmatpush1.bf16.msra.mxu0 0
      %11824 = vmatprep.mubr.bf16.mxu0 0
      %11825 = vmatmul.mubr.bf16.gmra.mrb[0].mxu0 %v11783
      %v11826 = vpop.f32.mrb[0].mxu0
      %v11827 = vadd.f32 %v11758, %v11826
      %v11828 = vpop.f32.mrb[0].mxu0
      %v11829 = vpop.f32.mrb[0].mxu0
      %v11830 = vadd.f32 %v11758, %v11829
      %v11831 = vpop.f32.mrb[0].mxu0
      %11832 = vmatprep.mubr.bf16.mxu0 0
      %11833 = vmatmul.mubr.bf16.gmra.mrb[0].mxu0 %v11786
      %v11834 = vpop.f32.mrb[0].mxu0
      %v11835 = vadd.f32 %v11758, %v11834
      %v11836 = vpop.f32.mrb[0].mxu0
      %v11837 = vpop.f32.mrb[0].mxu0
      %v11838 = vadd.f32 %v11758, %v11837
      %v11839 = vpop.f32.mrb[0].mxu0
      %11840 = vdwg.mxu0
      %vm11841 = vcmask 80896
      %v11842 = vsel %vm11841, %v11827, -inf
      %11843 = vmax.xlane.f32.xlu0 %v11842
      %v11844 = vpop.xlane.xlu0 %11843
      %v11845 = vsel %vm11841, %v11830, -inf
      %11846 = vmax.xlane.f32.xlu0 %v11845
      %v11847 = vpop.xlane.xlu0 %11846
      %v11848 = vsel %vm11841, %v11835, -inf
      %11849 = vmax.xlane.f32.xlu0 %v11848
      %v11850 = vpop.xlane.xlu0 %11849
      %v11851 = vsel %vm11841, %v11838, -inf
      %11852 = vmax.xlane.f32.xlu0 %v11851
      %v11853 = vpop.xlane.xlu0 %11852
      %v11854 = vsub.f32 %v11827, %v11844
      %v11855 = vsub.f32 %v11830, %v11847
      %v11856 = vsub.f32 %v11835, %v11850
      %v11857 = vsub.f32 %v11838, %v11853
      %v11858 = vmul.f32 %v11854, 1.442695
      %v11859 = vpow.pop %v11858
      %v11860 = vmul.f32 %v11855, 1.442695
      %v11861 = vpow.pop %v11860
      %v11862 = vmul.f32 %v11856, 1.442695
      %v11863 = vpow.pop %v11862
      %v11864 = vmul.f32 %v11857, 1.442695
      %v11865 = vpow.pop %v11864
      %v11866 = vsel %vm11841, %v11859, 0.0
      %11867 = vadd.xlane.f32.xlu0 %v11866
      %v11868 = vpop.xlane.xlu0 %11867
      %v11869 = vsel %vm11841, %v11861, 0.0
      %11870 = vadd.xlane.f32.xlu0 %v11869
      %v11871 = vpop.xlane.xlu0 %11870
      %v11872 = vsel %vm11841, %v11863, 0.0
      %11873 = vadd.xlane.f32.xlu0 %v11872
      %v11874 = vpop.xlane.xlu0 %11873
      %v11875 = vsel %vm11841, %v11865, 0.0
      %11876 = vadd.xlane.f32.xlu0 %v11875
      %v11877 = vpop.xlane.xlu0 %11876
      %v11878 = vlog2.pop %v11868
      %v11879 = vmul.f32 %v11878, 0.6931472
      %v11880 = vlog2.pop %v11871
      %v11881 = vmul.f32 %v11880, 0.6931472
      %v11882 = vlog2.pop %v11874
      %v11883 = vmul.f32 %v11882, 0.6931472
      %v11884 = vlog2.pop %v11877
      %v11885 = vmul.f32 %v11884, 0.6931472
      %v11886 = vadd.f32 %v11879, %v11844
      %v11887 = vadd.f32 %v11881, %v11847
      %v11888 = vadd.f32 %v11883, %v11850
      %v11889 = vadd.f32 %v11885, %v11853
      %v11890 = vsub.f32 %v11827, %v11886
      %v11891 = vsub.f32 %v11830, %v11887
      %v11892 = vsub.f32 %v11835, %v11888
      %v11893 = vsub.f32 %v11838, %v11889
      %11894 = vst [vmem:[%s445] sm:$0xff] %v11890
      %11895 = vst [vmem:[%s445 + $0x8] sm:$0xff] %v11891
      %11896 = vst [vmem:[%s445 + $0x10] sm:$0xff] %v11892
      %11897 = vst [vmem:[%s445 + $0x18] sm:$0xff] %v11893
      %s11898 = smul.u32 4, %s24
      %p11899 = scmp.lt.s32.totalorder %s11898, 7
      %s11900 = scalar_select %p11899, %s11898, 7
      %s11901 = smul.addr %s11900, 8
      %s11902 = scalar_lea.vmem %s13, %s11901
      // Predicated region
      $region73: #{mycnn_forward.1} parent=71 // pred_check
        %p11903 = pneg %p320
      $region74: #{mycnn_forward.1} parent=71 // pred_check_branch
        %11905 = sbr.rel (%p11903) target = $region76
      $region75: #{mycnn_forward.1} parent=71 // pred_region
        %s11906 = smul.u32 4, %s24
      $region76: #{mycnn_forward.1} parent=71 // pred_fallthru
        _
    $region72: #{mycnn_forward.1} parent=5 // pred_fallthru
      _
    %p11907 = scmp.le.s32.totalorder 2, %s19
    // Predicated region
    $region77: #{mycnn_forward.1} parent=5 // pred_check
      %p11908 = pneg %p11907
    $region78: #{mycnn_forward.1} parent=5 // pred_check_branch
      %11910 = sbr.rel (%p11908) target = $region80
    $region79: #{mycnn_forward.1} parent=5 // pred_region
      %s11911 = ssub.s32 %s19, 2
      // Predicated region
      $region81: #{mycnn_forward.1} parent=79 // pred_check
        %p11912 = pneg %p326
      $region82: #{mycnn_forward.1} parent=79 // pred_check_branch
        %11914 = sbr.rel (%p11912) target = $region84
      $region83: #{mycnn_forward.1} parent=79 // pred_region
        %s11915 = smul.u32 4, %s25
        %p11916 = scmp.lt.s32.totalorder %s11915, 7
        %s11917 = scalar_select %p11916, %s11915, 7
        %s11918 = smul.addr %s11917, 8
        %s11919 = scalar_lea.vmem %s13, %s11918
      $region84: #{mycnn_forward.1} parent=79 // pred_fallthru
        _
    $region80: #{mycnn_forward.1} parent=5 // pred_fallthru
      _
  $region6: #{mycnn_forward.1} parent=0 // loop_footer
    %s23 = sadd.s32 1, %s19
  $region7: #{mycnn_forward.1} parent=0 // loop_footer_branch
    %18 = sbr.rel target = $region3
  $region8: #{mycnn_forward.1} parent=0 // loop_exit
    _

</llo_original>
